<compile_context>
chip_gen: v6e
topology: v6e:2x2x1
jax: 0.10.0
libtpu: 0.0.40
codegen_flags: <defaults>
</compile_context>

<pallas_src>
import jax
import jax.numpy as jnp
from jax.experimental import pallas as pl
from jax.experimental.pallas import tpu as pltpu

NOISE_CHANNELS = 100
AVATAR_CHANNELS = 3
BASE_CHANNELS = 64
BN_EPS = 1e-5


def _pick_tile(dim, pref, quantum):
    """Largest tile <= pref that divides dim and is a multiple of `quantum`;
    falls back to the full dim (always legal for the (8,128) constraint)."""
    if dim <= pref:
        return dim
    t = pref
    while t >= quantum:
        if dim % t == 0:
            return t
        t //= 2
    return dim


# ---------------------------------------------------------------------------
# Pallas kernel 1: batched (per-phase) matmul, f32 accumulator, fused epilogue
#   - optional tanh in the epilogue (final layer)
#   - per-block partial BatchNorm statistics (sum / sum of squares) computed
#     from the f32 accumulator and written as (8, tn) blocks (sublane-legal).
# ---------------------------------------------------------------------------
def _make_matmul_kernel(act):
    def kernel(a_ref, b_ref, y_ref, s_ref, q_ref, acc_ref):
        @pl.when(pl.program_id(3) == 0)
        def _():
            acc_ref[...] = jnp.zeros_like(acc_ref)

        acc_ref[...] += jnp.dot(a_ref[...], b_ref[...],
                                preferred_element_type=jnp.float32)

        @pl.when(pl.program_id(3) == pl.num_programs(3) - 1)
        def _():
            acc = acc_ref[...]
            if act == "tanh":
                acc = jnp.tanh(acc)
            y_ref[...] = acc.astype(y_ref.dtype)
            tn = acc.shape[1]
            s = jnp.sum(acc, axis=0, keepdims=True)
            q = jnp.sum(acc * acc, axis=0, keepdims=True)
            s_ref[...] = jnp.broadcast_to(s, (8, tn))
            q_ref[...] = jnp.broadcast_to(q, (8, tn))

    return kernel


def pallas_matmul_fused(a, b, act=None):
    """a: (G, M, K) bf16, b: (G, K, N) bf16 ->
       y: (G, M, N) bf16, sum/sumsq partials: (G, 8*Mblocks, N) f32
       (row 0 of every 8-row block holds the partial; rows are replicated)."""
    G, M, K = a.shape
    G2, K2, N = b.shape
    assert G == G2 and K == K2
    tm = _pick_tile(M, 256, 8)
    tn = _pick_tile(N, 512, 128)
    tk = _pick_tile(K, 2048, 128)        # K stays resident for every layer here
    gm, gn, gk = M // tm, N // tn, K // tk

    y, s, q = pl.pallas_call(
        _make_matmul_kernel(act),
        out_shape=(jax.ShapeDtypeStruct((G, M, N), jnp.bfloat16),
                   jax.ShapeDtypeStruct((G, 8 * gm, N), jnp.float32),
                   jax.ShapeDtypeStruct((G, 8 * gm, N), jnp.float32)),
        grid_spec=pltpu.PrefetchScalarGridSpec(
            num_scalar_prefetch=0,
            grid=(G, gm, gn, gk),
            in_specs=[pl.BlockSpec((None, tm, tk), lambda g, i, j, k: (g, i, k)),
                      pl.BlockSpec((None, tk, tn), lambda g, i, j, k: (g, k, j))],
            out_specs=(pl.BlockSpec((None, tm, tn), lambda g, i, j, k: (g, i, j)),
                       pl.BlockSpec((None, 8, tn), lambda g, i, j, k: (g, i, j)),
                       pl.BlockSpec((None, 8, tn), lambda g, i, j, k: (g, i, j))),
            scratch_shapes=[pltpu.VMEM((tm, tn), jnp.float32)]),
        compiler_params=pltpu.CompilerParams(
            dimension_semantics=("parallel", "parallel", "parallel", "arbitrary")),
    )(a, b)
    return y, s, q


# ---------------------------------------------------------------------------
# Pallas kernel 2: fused per-channel affine (BN apply) + ReLU.
#   bf16 in/out (halves HBM traffic); math in f32 in-register.
#   Rows are folded into lanes when C < 128 so stores stay 128-lane dense.
# ---------------------------------------------------------------------------
def _affine_relu_kernel(x_ref, sc_ref, sh_ref, o_ref):
    x = x_ref[...].astype(jnp.float32)
    y = jnp.maximum(x * sc_ref[...] + sh_ref[...], 0.0)
    o_ref[...] = y.astype(o_ref.dtype)


def pallas_affine_relu(x, scale, shift):
    R, C = x.shape
    fold = 1
    if C % 128 != 0 and 128 % C == 0 and R % (128 // C) == 0:
        fold = 128 // C
    if fold > 1:
        x = x.reshape(R // fold, C * fold)
        scale = jnp.tile(scale, fold)
        shift = jnp.tile(shift, fold)
    M, Cc = x.shape
    tm = _pick_tile(M, 1024, 8)
    out = pl.pallas_call(
        _affine_relu_kernel,
        out_shape=jax.ShapeDtypeStruct((M, Cc), jnp.bfloat16),
        grid_spec=pltpu.PrefetchScalarGridSpec(
            num_scalar_prefetch=0,
            grid=(M // tm,),
            in_specs=[pl.BlockSpec((tm, Cc), lambda i: (i, 0)),
                      pl.BlockSpec((1, Cc), lambda i: (0, 0)),
                      pl.BlockSpec((1, Cc), lambda i: (0, 0))],
            out_specs=pl.BlockSpec((tm, Cc), lambda i: (i, 0))),
        compiler_params=pltpu.CompilerParams(dimension_semantics=("parallel",)),
    )(x, scale.reshape(1, Cc).astype(jnp.float32),
      shift.reshape(1, Cc).astype(jnp.float32))
    if fold > 1:
        out = out.reshape(R, C)
    return out


# ---------------------------------------------------------------------------
# JAX glue: polyphase decomposition of ConvTranspose2d(k=4, s=2, p=1).
# Each of the 4 output-pixel phases is a dense 2x2 "regular" conv over the
# 1-padded input, i.e. a matmul with K = 4*Cin.
# TODO(synk): the phase patch gather / phase interleave stay as XLA data
# movement; expressing the shifted-window gather inside the matmul BlockSpec
# would need a true halo-handling conv kernel.
# ---------------------------------------------------------------------------
def _phase_weights(w):
    """w: (Cin, Cout, 4, 4) PyTorch ConvTranspose2d layout -> (4, 4*Cin, Cout)."""
    Cin, Cout = w.shape[0], w.shape[1]
    wf = jnp.flip(w, axis=(2, 3)).transpose(2, 3, 0, 1)   # (kh, kw, Cin, Cout)
    return jnp.stack([wf[ph::2, pw::2].reshape(4 * Cin, Cout)
                      for ph in (0, 1) for pw in (0, 1)], axis=0)


def _phase_patches(x):
    """x: (B, H, W, Cin) -> (4, B*H*W, 4*Cin) dense per-phase patches."""
    B, H, W, C = x.shape
    xp = jnp.pad(x, ((0, 0), (1, 1), (1, 1), (0, 0)))

    def one(ph, pw):
        win = [xp[:, ph + dr:ph + dr + H, pw + dc:pw + dc + W, :]
               for dr in (0, 1) for dc in (0, 1)]
        return jnp.stack(win, axis=3).reshape(B * H * W, 4 * C)

    return jnp.stack([one(ph, pw) for ph in (0, 1) for pw in (0, 1)], axis=0)


def _interleave_phases(yph, B, H, W, C):
    """yph: (4, B*H*W, C) phase-major -> (B, 2H, 2W, C)."""
    y = yph.reshape(2, 2, B, H, W, C)
    return y.transpose(2, 3, 0, 4, 1, 5).reshape(B, 2 * H, 2 * W, C)


def _bn_scale_shift(ch_sum, ch_sq, n, gamma, beta):
    mean = ch_sum / n
    var = jnp.maximum(ch_sq / n - mean * mean, 0.0)   # biased variance, clamped
    scale = gamma / jnp.sqrt(var + BN_EPS)
    shift = beta - mean * scale
    return scale, shift


def deconv_s2_bn_relu(x, w, gamma, beta):
    """ConvTranspose2d(k=4,s=2,p=1,bias=False) + BatchNorm2d(batch stats) + ReLU."""
    B, H, W, Cin = x.shape
    Cout = w.shape[1]
    a = _phase_patches(x).astype(jnp.bfloat16)
    wph = _phase_weights(w).astype(jnp.bfloat16)
    y, s, q = pallas_matmul_fused(a, wph)
    n = 4.0 * B * H * W
    ch_sum = s[:, ::8, :].sum(axis=(0, 1))
    ch_sq = q[:, ::8, :].sum(axis=(0, 1))
    scale, shift = _bn_scale_shift(ch_sum, ch_sq, n, gamma, beta)
    flat = pallas_affine_relu(y.reshape(4 * B * H * W, Cout), scale, shift)
    return _interleave_phases(flat.reshape(4, B * H * W, Cout), B, H, W, Cout)


def deconv_s2_tanh(x, w):
    """Final ConvTranspose2d(k=4,s=2,p=1,bias=False) + Tanh (fused, padded N)."""
    B, H, W, Cin = x.shape
    Cout = w.shape[1]
    n_pad = ((Cout + 127) // 128) * 128
    a = _phase_patches(x).astype(jnp.bfloat16)
    wph = _phase_weights(w)
    wph = jnp.pad(wph, ((0, 0), (0, 0), (0, n_pad - Cout))).astype(jnp.bfloat16)
    y, _, _ = pallas_matmul_fused(a, wph, act="tanh")      # (4, BHW, n_pad)
    y = y[:, :, :Cout]
    return _interleave_phases(y, B, H, W, Cout)


# ---------------------------------------------------------------------------
# Generator forward
# ---------------------------------------------------------------------------
def init_params(key):
    ks = jax.random.split(key, 5)
    c = BASE_CHANNELS

    def w(k, cin, cout):
        return (0.02 * jax.random.normal(k, (cin, cout, 4, 4))).astype(jnp.float32)

    params = {
        "w1": w(ks[0], NOISE_CHANNELS, c * 8),
        "w2": w(ks[1], c * 8, c * 4),
        "w3": w(ks[2], c * 4, c * 2),
        "w4": w(ks[3], c * 2, c),
        "w5": w(ks[4], c, AVATAR_CHANNELS),
    }
    for i, ch in enumerate([c * 8, c * 4, c * 2, c], start=1):
        params[f"g{i}"] = jnp.ones((ch,), jnp.float32)    # BN weight default
        params[f"b{i}"] = jnp.zeros((ch,), jnp.float32)   # BN bias default
    return params


@jax.jit
def generator_forward(params, z_nchw):
    B = z_nchw.shape[0]
    c8 = BASE_CHANNELS * 8

    # Layer 1: ConvTranspose2d(NZ, 8c, 4, 1, 0) on a 1x1 input == FC.
    # Columns ordered (kh, kw, cout) so the result reshapes straight to NHWC.
    z = z_nchw.reshape(B, NOISE_CHANNELS).astype(jnp.bfloat16)
    w1m = params["w1"].transpose(0, 2, 3, 1).reshape(NOISE_CHANNELS, 16 * c8)
    y, s, q = pallas_matmul_fused(z[None], w1m.astype(jnp.bfloat16)[None])
    ch_sum = s[:, ::8, :].sum(axis=(0, 1)).reshape(16, c8).sum(axis=0)
    ch_sq = q[:, ::8, :].sum(axis=(0, 1)).reshape(16, c8).sum(axis=0)
    scale, shift = _bn_scale_shift(ch_sum, ch_sq, float(B * 16),
                                   params["g1"], params["b1"])
    flat = pallas_affine_relu(y.reshape(B * 16, c8), scale, shift)
    h = flat.reshape(B, 4, 4, c8)                          # NHWC (B, 4, 4, 512)

    # Layers 2-4: ConvTranspose2d(k=4, s=2, p=1) + BN + ReLU
    h = deconv_s2_bn_relu(h, params["w2"], params["g2"], params["b2"])
    h = deconv_s2_bn_relu(h, params["w3"], params["g3"], params["b3"])
    h = deconv_s2_bn_relu(h, params["w4"], params["g4"], params["b4"])

    # Layer 5: ConvTranspose2d(c, 3, k=4, s=2, p=1) + Tanh (fused)
    img = deconv_s2_tanh(h, params["w5"])                  # (B, 64, 64, 3) bf16

    # Back to PyTorch NCHW, f32
    return img.astype(jnp.float32).transpose(0, 3, 1, 2)


# ---------------------------------------------------------------------------
# Pure-XLA reference (uses the same bf16-rounded weights) for a sanity check.
# ---------------------------------------------------------------------------
@jax.jit
def reference_forward(params, z_nchw):
    def convT(x, w, stride, pad):
        k = w.shape[2]
        rhs = jnp.flip(w, (2, 3)).transpose(1, 0, 2, 3)    # (Cout, Cin, kh, kw)
        return jax.lax.conv_general_dilated(
            x, rhs, window_strides=(1, 1),
            padding=((k - 1 - pad, k - 1 - pad), (k - 1 - pad, k - 1 - pad)),
            lhs_dilation=(stride, stride),
            dimension_numbers=("NCHW", "OIHW", "NCHW"))

    def bn_relu(x, g, b):
        mean = x.mean(axis=(0, 2, 3), keepdims=True)
        var = x.var(axis=(0, 2, 3), keepdims=True)         # biased
        xh = (x - mean) / jnp.sqrt(var + BN_EPS)
        return jnp.maximum(xh * g.reshape(1, -1, 1, 1) + b.reshape(1, -1, 1, 1), 0.0)

    wq = {k: (v.astype(jnp.bfloat16).astype(jnp.float32) if k.startswith("w") else v)
          for k, v in params.items()}
    x = convT(z_nchw.astype(jnp.bfloat16).astype(jnp.float32), wq["w1"], 1, 0)
    x = bn_relu(x, wq["g1"], wq["b1"])
    x = bn_relu(convT(x, wq["w2"], 2, 1), wq["g2"], wq["b2"])
    x = bn_relu(convT(x, wq["w3"], 2, 1), wq["g3"], wq["b3"])
    x = bn_relu(convT(x, wq["w4"], 2, 1), wq["g4"], wq["b4"])
    return jnp.tanh(convT(x, wq["w5"], 2, 1))


if __name__ == "__main__":
    params = init_params(jax.random.PRNGKey(1))
    z = jax.random.normal(jax.random.PRNGKey(0),
                          (2, NOISE_CHANNELS, 1, 1), jnp.float32)

    img = jax.block_until_ready(generator_forward(params, z))

    assert img.shape == (2, AVATAR_CHANNELS, 64, 64), img.shape
    assert img.dtype == jnp.float32
    assert bool(jnp.all(jnp.isfinite(img)))
    assert bool(jnp.all(jnp.abs(img) <= 1.0))              # tanh range

    ref = jax.block_until_ready(reference_forward(params, z))
    err = float(jnp.max(jnp.abs(img - ref)))
    assert err < 0.15, f"max |pallas - reference| = {err}"

    print("KERNEL_OK")
</pallas_src>

<mosaic_0001>
module attributes {stable_mosaic.version = 11 : i64} {
  func.func @kernel(%arg0: i32, %arg1: i32, %arg2: i32, %arg3: i32, %arg4: memref<1x2x100xbf16, #tpu.memory_space<vmem>>, %arg5: memref<1x100x512xbf16, #tpu.memory_space<vmem>>, %arg6: memref<1x2x512xbf16, #tpu.memory_space<vmem>>, %arg7: memref<1x8x512xf32, #tpu.memory_space<vmem>>, %arg8: memref<1x8x512xf32, #tpu.memory_space<vmem>>, %arg9: memref<2x512xf32, #tpu.memory_space<vmem>>) attributes {dimension_semantics = [#tpu.dimension_semantics<parallel>, #tpu.dimension_semantics<parallel>, #tpu.dimension_semantics<parallel>, #tpu.dimension_semantics<arbitrary>], iteration_bounds = array<i64: 1, 1, 16, 1>, scalar_prefetch = 0 : i64, scratch_operands = 1 : i64, tpu.core_type = #tpu.core_type<tc>, window_params = [{transform_indices = @transform_0, window_bounds = array<i64: 1, 2, 100>}, {transform_indices = @transform_1, window_bounds = array<i64: 1, 100, 512>}, {transform_indices = @transform_2, window_bounds = array<i64: 1, 2, 512>}, {transform_indices = @transform_3, window_bounds = array<i64: 1, 8, 512>}, {transform_indices = @transform_4, window_bounds = array<i64: 1, 8, 512>}]} {
    %c0_i32 = arith.constant 0 : i32
    %0 = arith.cmpi eq, %arg3, %c0_i32 : i32
    %1 = arith.extui %0 : i1 to i32
    %c0_i32_0 = arith.constant 0 : i32
    %2 = arith.cmpi ne, %1, %c0_i32_0 : i32
    scf.if %2 {
      %cst_12 = arith.constant 0.000000e+00 : f32
      %14 = vector.broadcast %cst_12 : f32 to vector<2x512xf32>
      %c0_13 = arith.constant 0 : index
      %c0_14 = arith.constant 0 : index
      %15 = vector.load %arg9[%c0_13, %c0_14] : memref<2x512xf32, #tpu.memory_space<vmem>>, vector<2x512xf32>
      tpu.vector_store %arg9[%c0_13, %c0_14], %14 {strides = array<i32>} : memref<2x512xf32, #tpu.memory_space<vmem>>, vector<2x512xf32>,
    } else {
    }
    %c0 = arith.constant 0 : index
    %c0_1 = arith.constant 0 : index
    %3 = vector.load %arg9[%c0, %c0_1] : memref<2x512xf32, #tpu.memory_space<vmem>>, vector<2x512xf32>
    %c0_2 = arith.constant 0 : index
    %c0_3 = arith.constant 0 : index
    %c0_4 = arith.constant 0 : index
    %4 = vector.load %arg4[%c0_2, %c0_3, %c0_4] : memref<1x2x100xbf16, #tpu.memory_space<vmem>>, vector<1x2x100xbf16>
    %5 = vector.shape_cast %4 : vector<1x2x100xbf16> to vector<2x100xbf16>
    %c0_5 = arith.constant 0 : index
    %c0_6 = arith.constant 0 : index
    %c0_7 = arith.constant 0 : index
    %6 = vector.load %arg5[%c0_5, %c0_6, %c0_7] : memref<1x100x512xbf16, #tpu.memory_space<vmem>>, vector<1x100x512xbf16>
    %7 = vector.shape_cast %6 : vector<1x100x512xbf16> to vector<100x512xbf16>
    %cst = arith.constant dense<0.000000e+00> : vector<2x512xf32>
    %8 = tpu.matmul %5, %7, %cst {dimension_numbers = #tpu.dot_dimension_numbers<[1], [0], [0], [1], [0, 0, 1, 1], [], []>} : vector<2x100xbf16>, vector<100x512xbf16>, vector<2x512xf32> -> vector<2x512xf32>
    %9 = arith.addf %3, %8 : vector<2x512xf32>
    %c0_8 = arith.constant 0 : index
    %c0_9 = arith.constant 0 : index
    %10 = vector.load %arg9[%c0_8, %c0_9] : memref<2x512xf32, #tpu.memory_space<vmem>>, vector<2x512xf32>
    tpu.vector_store %arg9[%c0_8, %c0_9], %9 {strides = array<i32>} : memref<2x512xf32, #tpu.memory_space<vmem>>, vector<2x512xf32>,
    %c0_i32_10 = arith.constant 0 : i32
    %11 = arith.cmpi eq, %arg3, %c0_i32_10 : i32
    %12 = arith.extui %11 : i1 to i32
    %c0_i32_11 = arith.constant 0 : i32
    %13 = arith.cmpi ne, %12, %c0_i32_11 : i32
    scf.if %13 {
      %c0_12 = arith.constant 0 : index
      %c0_13 = arith.constant 0 : index
      %14 = vector.load %arg9[%c0_12, %c0_13] : memref<2x512xf32, #tpu.memory_space<vmem>>, vector<2x512xf32>
      %15 = arith.truncf %14 : vector<2x512xf32> to vector<2x512xbf16>
      %c0_14 = arith.constant 0 : index
      %c0_15 = arith.constant 0 : index
      %c0_16 = arith.constant 0 : index
      %16 = vector.load %arg6[%c0_14, %c0_15, %c0_16] : memref<1x2x512xbf16, #tpu.memory_space<vmem>>, vector<1x2x512xbf16>
      %17 = vector.shape_cast %16 : vector<1x2x512xbf16> to vector<2x512xbf16>
      %18 = vector.shape_cast %15 : vector<2x512xbf16> to vector<1x2x512xbf16>
      tpu.vector_store %arg6[%c0_14, %c0_15, %c0_16], %18 {strides = array<i32>} : memref<1x2x512xbf16, #tpu.memory_space<vmem>>, vector<1x2x512xbf16>,
      %cst_17 = arith.constant dense<0.000000e+00> : vector<512xf32>
      %19 = vector.multi_reduction <add>, %14, %cst_17 [0] : vector<2x512xf32> to vector<512xf32>
      %20 = vector.shape_cast %19 : vector<512xf32> to vector<1x512xf32>
      %21 = arith.mulf %14, %14 : vector<2x512xf32>
      %cst_18 = arith.constant dense<0.000000e+00> : vector<512xf32>
      %22 = vector.multi_reduction <add>, %21, %cst_18 [0] : vector<2x512xf32> to vector<512xf32>
      %23 = vector.shape_cast %22 : vector<512xf32> to vector<1x512xf32>
      %24 = vector.shape_cast %20 : vector<1x512xf32> to vector<1x512xf32>
      %25 = vector.broadcast %24 : vector<1x512xf32> to vector<8x512xf32>
      %c0_19 = arith.constant 0 : index
      %c0_20 = arith.constant 0 : index
      %c0_21 = arith.constant 0 : index
      %26 = vector.load %arg7[%c0_19, %c0_20, %c0_21] : memref<1x8x512xf32, #tpu.memory_space<vmem>>, vector<1x8x512xf32>
      %27 = vector.shape_cast %26 : vector<1x8x512xf32> to vector<8x512xf32>
      %28 = vector.shape_cast %25 : vector<8x512xf32> to vector<1x8x512xf32>
      tpu.vector_store %arg7[%c0_19, %c0_20, %c0_21], %28 {strides = array<i32>} : memref<1x8x512xf32, #tpu.memory_space<vmem>>, vector<1x8x512xf32>,
      %29 = vector.shape_cast %23 : vector<1x512xf32> to vector<1x512xf32>
      %30 = vector.broadcast %29 : vector<1x512xf32> to vector<8x512xf32>
      %c0_22 = arith.constant 0 : index
      %c0_23 = arith.constant 0 : index
      %c0_24 = arith.constant 0 : index
      %31 = vector.load %arg8[%c0_22, %c0_23, %c0_24] : memref<1x8x512xf32, #tpu.memory_space<vmem>>, vector<1x8x512xf32>
      %32 = vector.shape_cast %31 : vector<1x8x512xf32> to vector<8x512xf32>
      %33 = vector.shape_cast %30 : vector<8x512xf32> to vector<1x8x512xf32>
      tpu.vector_store %arg8[%c0_22, %c0_23, %c0_24], %33 {strides = array<i32>} : memref<1x8x512xf32, #tpu.memory_space<vmem>>, vector<1x8x512xf32>,
    } else {
    }
    return
  }
  func.func @transform_0(%arg0: i32, %arg1: i32, %arg2: i32, %arg3: i32) -> (i32, i32, i32) {
    %c0_i32 = arith.constant 0 : i32
    return %arg0, %arg1, %arg3 : i32, i32, i32
  }
  func.func @transform_1(%arg0: i32, %arg1: i32, %arg2: i32, %arg3: i32) -> (i32, i32, i32) {
    %c0_i32 = arith.constant 0 : i32
    return %arg0, %arg3, %arg2 : i32, i32, i32
  }
  func.func @transform_2(%arg0: i32, %arg1: i32, %arg2: i32, %arg3: i32) -> (i32, i32, i32) {
    %c0_i32 = arith.constant 0 : i32
    return %arg0, %arg1, %arg2 : i32, i32, i32
  }
  func.func @transform_3(%arg0: i32, %arg1: i32, %arg2: i32, %arg3: i32) -> (i32, i32, i32) {
    %c0_i32 = arith.constant 0 : i32
    return %arg0, %arg1, %arg2 : i32, i32, i32
  }
  func.func @transform_4(%arg0: i32, %arg1: i32, %arg2: i32, %arg3: i32) -> (i32, i32, i32) {
    %c0_i32 = arith.constant 0 : i32
    return %arg0, %arg1, %arg2 : i32, i32, i32
  }
}

module attributes {stable_mosaic.version = 11 : i64} {
  func.func @_affine_relu_kernel(%arg0: i32, %arg1: memref<32x512xbf16, #tpu.memory_space<vmem>>, %arg2: memref<1x512xf32, #tpu.memory_space<vmem>>, %arg3: memref<1x512xf32, #tpu.memory_space<vmem>>, %arg4: memref<32x512xbf16, #tpu.memory_space<vmem>>) attributes {dimension_semantics = [#tpu.dimension_semantics<parallel>], iteration_bounds = array<i64: 1>, scalar_prefetch = 0 : i64, scratch_operands = 0 : i64, tpu.core_type = #tpu.core_type<tc>, window_params = [{transform_indices = @transform_0, window_bounds = array<i64: 32, 512>}, {pipeline_mode = #tpu.pipeline_mode<synchronous>, transform_indices = @transform_1, window_bounds = array<i64: 1, 512>}, {pipeline_mode = #tpu.pipeline_mode<synchronous>, transform_indices = @transform_2, window_bounds = array<i64: 1, 512>}, {transform_indices = @transform_3, window_bounds = array<i64: 32, 512>}]} {
    %c0 = arith.constant 0 : index
    %c0_0 = arith.constant 0 : index
    %0 = vector.load %arg1[%c0, %c0_0] : memref<32x512xbf16, #tpu.memory_space<vmem>>, vector<32x512xbf16>
    %1 = arith.extf %0 : vector<32x512xbf16> to vector<32x512xf32>
    %c0_1 = arith.constant 0 : index
    %c0_2 = arith.constant 0 : index
    %2 = vector.load %arg2[%c0_1, %c0_2] : memref<1x512xf32, #tpu.memory_space<vmem>>, vector<1x512xf32>
    %3 = vector.broadcast %2 : vector<1x512xf32> to vector<32x512xf32>
    %4 = arith.mulf %1, %3 : vector<32x512xf32>
    %c0_3 = arith.constant 0 : index
    %c0_4 = arith.constant 0 : index
    %5 = vector.load %arg3[%c0_3, %c0_4] : memref<1x512xf32, #tpu.memory_space<vmem>>, vector<1x512xf32>
    %6 = vector.broadcast %5 : vector<1x512xf32> to vector<32x512xf32>
    %7 = arith.addf %4, %6 : vector<32x512xf32>
    %cst = arith.constant 0.000000e+00 : f32
    %8 = vector.broadcast %cst : f32 to vector<32x512xf32>
    %9 = arith.maximumf %7, %8 : vector<32x512xf32>
    %10 = arith.truncf %9 : vector<32x512xf32> to vector<32x512xbf16>
    %c0_5 = arith.constant 0 : index
    %c0_6 = arith.constant 0 : index
    %11 = vector.load %arg4[%c0_5, %c0_6] : memref<32x512xbf16, #tpu.memory_space<vmem>>, vector<32x512xbf16>
    tpu.vector_store %arg4[%c0_5, %c0_6], %10 {strides = array<i32>} : memref<32x512xbf16, #tpu.memory_space<vmem>>, vector<32x512xbf16>,
    return
  }
  func.func @transform_0(%arg0: i32) -> (i32, i32) {
    %c0_i32 = arith.constant 0 : i32
    %c0_i32_0 = arith.constant 0 : i32
    return %arg0, %c0_i32 : i32, i32
  }
  func.func @transform_1(%arg0: i32) -> (i32, i32) {
    %c0_i32 = arith.constant 0 : i32
    %c0_i32_0 = arith.constant 0 : i32
    %c0_i32_1 = arith.constant 0 : i32
    return %c0_i32, %c0_i32_0 : i32, i32
  }
  func.func @transform_2(%arg0: i32) -> (i32, i32) {
    %c0_i32 = arith.constant 0 : i32
    %c0_i32_0 = arith.constant 0 : i32
    %c0_i32_1 = arith.constant 0 : i32
    return %c0_i32, %c0_i32_0 : i32, i32
  }
  func.func @transform_3(%arg0: i32) -> (i32, i32) {
    %c0_i32 = arith.constant 0 : i32
    %c0_i32_0 = arith.constant 0 : i32
    return %arg0, %c0_i32 : i32, i32
  }
}

module attributes {stable_mosaic.version = 11 : i64} {
  func.func @kernel(%arg0: i32, %arg1: i32, %arg2: i32, %arg3: i32, %arg4: memref<1x32x2048xbf16, #tpu.memory_space<vmem>>, %arg5: memref<1x2048x256xbf16, #tpu.memory_space<vmem>>, %arg6: memref<1x32x256xbf16, #tpu.memory_space<vmem>>, %arg7: memref<1x8x256xf32, #tpu.memory_space<vmem>>, %arg8: memref<1x8x256xf32, #tpu.memory_space<vmem>>, %arg9: memref<32x256xf32, #tpu.memory_space<vmem>>) attributes {dimension_semantics = [#tpu.dimension_semantics<parallel>, #tpu.dimension_semantics<parallel>, #tpu.dimension_semantics<parallel>, #tpu.dimension_semantics<arbitrary>], iteration_bounds = array<i64: 4, 1, 1, 1>, scalar_prefetch = 0 : i64, scratch_operands = 1 : i64, tpu.core_type = #tpu.core_type<tc>, window_params = [{transform_indices = @transform_0, window_bounds = array<i64: 1, 32, 2048>}, {transform_indices = @transform_1, window_bounds = array<i64: 1, 2048, 256>}, {transform_indices = @transform_2, window_bounds = array<i64: 1, 32, 256>}, {transform_indices = @transform_3, window_bounds = array<i64: 1, 8, 256>}, {transform_indices = @transform_4, window_bounds = array<i64: 1, 8, 256>}]} {
    %c0_i32 = arith.constant 0 : i32
    %0 = arith.cmpi eq, %arg3, %c0_i32 : i32
    %1 = arith.extui %0 : i1 to i32
    %c0_i32_0 = arith.constant 0 : i32
    %2 = arith.cmpi ne, %1, %c0_i32_0 : i32
    scf.if %2 {
      %cst_12 = arith.constant 0.000000e+00 : f32
      %14 = vector.broadcast %cst_12 : f32 to vector<32x256xf32>
      %c0_13 = arith.constant 0 : index
      %c0_14 = arith.constant 0 : index
      %15 = vector.load %arg9[%c0_13, %c0_14] : memref<32x256xf32, #tpu.memory_space<vmem>>, vector<32x256xf32>
      tpu.vector_store %arg9[%c0_13, %c0_14], %14 {strides = array<i32>} : memref<32x256xf32, #tpu.memory_space<vmem>>, vector<32x256xf32>,
    } else {
    }
    %c0 = arith.constant 0 : index
    %c0_1 = arith.constant 0 : index
    %3 = vector.load %arg9[%c0, %c0_1] : memref<32x256xf32, #tpu.memory_space<vmem>>, vector<32x256xf32>
    %c0_2 = arith.constant 0 : index
    %c0_3 = arith.constant 0 : index
    %c0_4 = arith.constant 0 : index
    %4 = vector.load %arg4[%c0_2, %c0_3, %c0_4] : memref<1x32x2048xbf16, #tpu.memory_space<vmem>>, vector<1x32x2048xbf16>
    %5 = vector.shape_cast %4 : vector<1x32x2048xbf16> to vector<32x2048xbf16>
    %c0_5 = arith.constant 0 : index
    %c0_6 = arith.constant 0 : index
    %c0_7 = arith.constant 0 : index
    %6 = vector.load %arg5[%c0_5, %c0_6, %c0_7] : memref<1x2048x256xbf16, #tpu.memory_space<vmem>>, vector<1x2048x256xbf16>
    %7 = vector.shape_cast %6 : vector<1x2048x256xbf16> to vector<2048x256xbf16>
    %cst = arith.constant dense<0.000000e+00> : vector<32x256xf32>
    %8 = tpu.matmul %5, %7, %cst {dimension_numbers = #tpu.dot_dimension_numbers<[1], [0], [0], [1], [0, 0, 1, 1], [], []>} : vector<32x2048xbf16>, vector<2048x256xbf16>, vector<32x256xf32> -> vector<32x256xf32>
    %9 = arith.addf %3, %8 : vector<32x256xf32>
    %c0_8 = arith.constant 0 : index
    %c0_9 = arith.constant 0 : index
    %10 = vector.load %arg9[%c0_8, %c0_9] : memref<32x256xf32, #tpu.memory_space<vmem>>, vector<32x256xf32>
    tpu.vector_store %arg9[%c0_8, %c0_9], %9 {strides = array<i32>} : memref<32x256xf32, #tpu.memory_space<vmem>>, vector<32x256xf32>,
    %c0_i32_10 = arith.constant 0 : i32
    %11 = arith.cmpi eq, %arg3, %c0_i32_10 : i32
    %12 = arith.extui %11 : i1 to i32
    %c0_i32_11 = arith.constant 0 : i32
    %13 = arith.cmpi ne, %12, %c0_i32_11 : i32
    scf.if %13 {
      %c0_12 = arith.constant 0 : index
      %c0_13 = arith.constant 0 : index
      %14 = vector.load %arg9[%c0_12, %c0_13] : memref<32x256xf32, #tpu.memory_space<vmem>>, vector<32x256xf32>
      %15 = arith.truncf %14 : vector<32x256xf32> to vector<32x256xbf16>
      %c0_14 = arith.constant 0 : index
      %c0_15 = arith.constant 0 : index
      %c0_16 = arith.constant 0 : index
      %16 = vector.load %arg6[%c0_14, %c0_15, %c0_16] : memref<1x32x256xbf16, #tpu.memory_space<vmem>>, vector<1x32x256xbf16>
      %17 = vector.shape_cast %16 : vector<1x32x256xbf16> to vector<32x256xbf16>
      %18 = vector.shape_cast %15 : vector<32x256xbf16> to vector<1x32x256xbf16>
      tpu.vector_store %arg6[%c0_14, %c0_15, %c0_16], %18 {strides = array<i32>} : memref<1x32x256xbf16, #tpu.memory_space<vmem>>, vector<1x32x256xbf16>,
      %cst_17 = arith.constant dense<0.000000e+00> : vector<256xf32>
      %19 = vector.multi_reduction <add>, %14, %cst_17 [0] : vector<32x256xf32> to vector<256xf32>
      %20 = vector.shape_cast %19 : vector<256xf32> to vector<1x256xf32>
      %21 = arith.mulf %14, %14 : vector<32x256xf32>
      %cst_18 = arith.constant dense<0.000000e+00> : vector<256xf32>
      %22 = vector.multi_reduction <add>, %21, %cst_18 [0] : vector<32x256xf32> to vector<256xf32>
      %23 = vector.shape_cast %22 : vector<256xf32> to vector<1x256xf32>
      %24 = vector.shape_cast %20 : vector<1x256xf32> to vector<1x256xf32>
      %25 = vector.broadcast %24 : vector<1x256xf32> to vector<8x256xf32>
      %c0_19 = arith.constant 0 : index
      %c0_20 = arith.constant 0 : index
      %c0_21 = arith.constant 0 : index
      %26 = vector.load %arg7[%c0_19, %c0_20, %c0_21] : memref<1x8x256xf32, #tpu.memory_space<vmem>>, vector<1x8x256xf32>
      %27 = vector.shape_cast %26 : vector<1x8x256xf32> to vector<8x256xf32>
      %28 = vector.shape_cast %25 : vector<8x256xf32> to vector<1x8x256xf32>
      tpu.vector_store %arg7[%c0_19, %c0_20, %c0_21], %28 {strides = array<i32>} : memref<1x8x256xf32, #tpu.memory_space<vmem>>, vector<1x8x256xf32>,
      %29 = vector.shape_cast %23 : vector<1x256xf32> to vector<1x256xf32>
      %30 = vector.broadcast %29 : vector<1x256xf32> to vector<8x256xf32>
      %c0_22 = arith.constant 0 : index
      %c0_23 = arith.constant 0 : index
      %c0_24 = arith.constant 0 : index
      %31 = vector.load %arg8[%c0_22, %c0_23, %c0_24] : memref<1x8x256xf32, #tpu.memory_space<vmem>>, vector<1x8x256xf32>
      %32 = vector.shape_cast %31 : vector<1x8x256xf32> to vector<8x256xf32>
      %33 = vector.shape_cast %30 : vector<8x256xf32> to vector<1x8x256xf32>
      tpu.vector_store %arg8[%c0_22, %c0_23, %c0_24], %33 {strides = array<i32>} : memref<1x8x256xf32, #tpu.memory_space<vmem>>, vector<1x8x256xf32>,
    } else {
    }
    return
  }
  func.func @transform_0(%arg0: i32, %arg1: i32, %arg2: i32, %arg3: i32) -> (i32, i32, i32) {
    %c0_i32 = arith.constant 0 : i32
    return %arg0, %arg1, %arg3 : i32, i32, i32
  }
  func.func @transform_1(%arg0: i32, %arg1: i32, %arg2: i32, %arg3: i32) -> (i32, i32, i32) {
    %c0_i32 = arith.constant 0 : i32
    return %arg0, %arg3, %arg2 : i32, i32, i32
  }
  func.func @transform_2(%arg0: i32, %arg1: i32, %arg2: i32, %arg3: i32) -> (i32, i32, i32) {
    %c0_i32 = arith.constant 0 : i32
    return %arg0, %arg1, %arg2 : i32, i32, i32
  }
  func.func @transform_3(%arg0: i32, %arg1: i32, %arg2: i32, %arg3: i32) -> (i32, i32, i32) {
    %c0_i32 = arith.constant 0 : i32
    return %arg0, %arg1, %arg2 : i32, i32, i32
  }
  func.func @transform_4(%arg0: i32, %arg1: i32, %arg2: i32, %arg3: i32) -> (i32, i32, i32) {
    %c0_i32 = arith.constant 0 : i32
    return %arg0, %arg1, %arg2 : i32, i32, i32
  }
}

module attributes {stable_mosaic.version = 11 : i64} {
  func.func @_affine_relu_kernel(%arg0: i32, %arg1: memref<128x256xbf16, #tpu.memory_space<vmem>>, %arg2: memref<1x256xf32, #tpu.memory_space<vmem>>, %arg3: memref<1x256xf32, #tpu.memory_space<vmem>>, %arg4: memref<128x256xbf16, #tpu.memory_space<vmem>>) attributes {dimension_semantics = [#tpu.dimension_semantics<parallel>], iteration_bounds = array<i64: 1>, scalar_prefetch = 0 : i64, scratch_operands = 0 : i64, tpu.core_type = #tpu.core_type<tc>, window_params = [{transform_indices = @transform_0, window_bounds = array<i64: 128, 256>}, {pipeline_mode = #tpu.pipeline_mode<synchronous>, transform_indices = @transform_1, window_bounds = array<i64: 1, 256>}, {pipeline_mode = #tpu.pipeline_mode<synchronous>, transform_indices = @transform_2, window_bounds = array<i64: 1, 256>}, {transform_indices = @transform_3, window_bounds = array<i64: 128, 256>}]} {
    %c0 = arith.constant 0 : index
    %c0_0 = arith.constant 0 : index
    %0 = vector.load %arg1[%c0, %c0_0] : memref<128x256xbf16, #tpu.memory_space<vmem>>, vector<128x256xbf16>
    %1 = arith.extf %0 : vector<128x256xbf16> to vector<128x256xf32>
    %c0_1 = arith.constant 0 : index
    %c0_2 = arith.constant 0 : index
    %2 = vector.load %arg2[%c0_1, %c0_2] : memref<1x256xf32, #tpu.memory_space<vmem>>, vector<1x256xf32>
    %3 = vector.broadcast %2 : vector<1x256xf32> to vector<128x256xf32>
    %4 = arith.mulf %1, %3 : vector<128x256xf32>
    %c0_3 = arith.constant 0 : index
    %c0_4 = arith.constant 0 : index
    %5 = vector.load %arg3[%c0_3, %c0_4] : memref<1x256xf32, #tpu.memory_space<vmem>>, vector<1x256xf32>
    %6 = vector.broadcast %5 : vector<1x256xf32> to vector<128x256xf32>
    %7 = arith.addf %4, %6 : vector<128x256xf32>
    %cst = arith.constant 0.000000e+00 : f32
    %8 = vector.broadcast %cst : f32 to vector<128x256xf32>
    %9 = arith.maximumf %7, %8 : vector<128x256xf32>
    %10 = arith.truncf %9 : vector<128x256xf32> to vector<128x256xbf16>
    %c0_5 = arith.constant 0 : index
    %c0_6 = arith.constant 0 : index
    %11 = vector.load %arg4[%c0_5, %c0_6] : memref<128x256xbf16, #tpu.memory_space<vmem>>, vector<128x256xbf16>
    tpu.vector_store %arg4[%c0_5, %c0_6], %10 {strides = array<i32>} : memref<128x256xbf16, #tpu.memory_space<vmem>>, vector<128x256xbf16>,
    return
  }
  func.func @transform_0(%arg0: i32) -> (i32, i32) {
    %c0_i32 = arith.constant 0 : i32
    %c0_i32_0 = arith.constant 0 : i32
    return %arg0, %c0_i32 : i32, i32
  }
  func.func @transform_1(%arg0: i32) -> (i32, i32) {
    %c0_i32 = arith.constant 0 : i32
    %c0_i32_0 = arith.constant 0 : i32
    %c0_i32_1 = arith.constant 0 : i32
    return %c0_i32, %c0_i32_0 : i32, i32
  }
  func.func @transform_2(%arg0: i32) -> (i32, i32) {
    %c0_i32 = arith.constant 0 : i32
    %c0_i32_0 = arith.constant 0 : i32
    %c0_i32_1 = arith.constant 0 : i32
    return %c0_i32, %c0_i32_0 : i32, i32
  }
  func.func @transform_3(%arg0: i32) -> (i32, i32) {
    %c0_i32 = arith.constant 0 : i32
    %c0_i32_0 = arith.constant 0 : i32
    return %arg0, %c0_i32 : i32, i32
  }
}

module attributes {stable_mosaic.version = 11 : i64} {
  func.func @kernel(%arg0: i32, %arg1: i32, %arg2: i32, %arg3: i32, %arg4: memref<1x128x1024xbf16, #tpu.memory_space<vmem>>, %arg5: memref<1x1024x128xbf16, #tpu.memory_space<vmem>>, %arg6: memref<1x128x128xbf16, #tpu.memory_space<vmem>>, %arg7: memref<1x8x128xf32, #tpu.memory_space<vmem>>, %arg8: memref<1x8x128xf32, #tpu.memory_space<vmem>>, %arg9: memref<128x128xf32, #tpu.memory_space<vmem>>) attributes {dimension_semantics = [#tpu.dimension_semantics<parallel>, #tpu.dimension_semantics<parallel>, #tpu.dimension_semantics<parallel>, #tpu.dimension_semantics<arbitrary>], iteration_bounds = array<i64: 4, 1, 1, 1>, scalar_prefetch = 0 : i64, scratch_operands = 1 : i64, tpu.core_type = #tpu.core_type<tc>, window_params = [{transform_indices = @transform_0, window_bounds = array<i64: 1, 128, 1024>}, {transform_indices = @transform_1, window_bounds = array<i64: 1, 1024, 128>}, {transform_indices = @transform_2, window_bounds = array<i64: 1, 128, 128>}, {transform_indices = @transform_3, window_bounds = array<i64: 1, 8, 128>}, {transform_indices = @transform_4, window_bounds = array<i64: 1, 8, 128>}]} {
    %c0_i32 = arith.constant 0 : i32
    %0 = arith.cmpi eq, %arg3, %c0_i32 : i32
    %1 = arith.extui %0 : i1 to i32
    %c0_i32_0 = arith.constant 0 : i32
    %2 = arith.cmpi ne, %1, %c0_i32_0 : i32
    scf.if %2 {
      %cst_12 = arith.constant 0.000000e+00 : f32
      %14 = vector.broadcast %cst_12 : f32 to vector<128x128xf32>
      %c0_13 = arith.constant 0 : index
      %c0_14 = arith.constant 0 : index
      %15 = vector.load %arg9[%c0_13, %c0_14] : memref<128x128xf32, #tpu.memory_space<vmem>>, vector<128x128xf32>
      tpu.vector_store %arg9[%c0_13, %c0_14], %14 {strides = array<i32>} : memref<128x128xf32, #tpu.memory_space<vmem>>, vector<128x128xf32>,
    } else {
    }
    %c0 = arith.constant 0 : index
    %c0_1 = arith.constant 0 : index
    %3 = vector.load %arg9[%c0, %c0_1] : memref<128x128xf32, #tpu.memory_space<vmem>>, vector<128x128xf32>
    %c0_2 = arith.constant 0 : index
    %c0_3 = arith.constant 0 : index
    %c0_4 = arith.constant 0 : index
    %4 = vector.load %arg4[%c0_2, %c0_3, %c0_4] : memref<1x128x1024xbf16, #tpu.memory_space<vmem>>, vector<1x128x1024xbf16>
    %5 = vector.shape_cast %4 : vector<1x128x1024xbf16> to vector<128x1024xbf16>
    %c0_5 = arith.constant 0 : index
    %c0_6 = arith.constant 0 : index
    %c0_7 = arith.constant 0 : index
    %6 = vector.load %arg5[%c0_5, %c0_6, %c0_7] : memref<1x1024x128xbf16, #tpu.memory_space<vmem>>, vector<1x1024x128xbf16>
    %7 = vector.shape_cast %6 : vector<1x1024x128xbf16> to vector<1024x128xbf16>
    %cst = arith.constant dense<0.000000e+00> : vector<128x128xf32>
    %8 = tpu.matmul %5, %7, %cst {dimension_numbers = #tpu.dot_dimension_numbers<[1], [0], [0], [1], [0, 0, 1, 1], [], []>} : vector<128x1024xbf16>, vector<1024x128xbf16>, vector<128x128xf32> -> vector<128x128xf32>
    %9 = arith.addf %3, %8 : vector<128x128xf32>
    %c0_8 = arith.constant 0 : index
    %c0_9 = arith.constant 0 : index
    %10 = vector.load %arg9[%c0_8, %c0_9] : memref<128x128xf32, #tpu.memory_space<vmem>>, vector<128x128xf32>
    tpu.vector_store %arg9[%c0_8, %c0_9], %9 {strides = array<i32>} : memref<128x128xf32, #tpu.memory_space<vmem>>, vector<128x128xf32>,
    %c0_i32_10 = arith.constant 0 : i32
    %11 = arith.cmpi eq, %arg3, %c0_i32_10 : i32
    %12 = arith.extui %11 : i1 to i32
    %c0_i32_11 = arith.constant 0 : i32
    %13 = arith.cmpi ne, %12, %c0_i32_11 : i32
    scf.if %13 {
      %c0_12 = arith.constant 0 : index
      %c0_13 = arith.constant 0 : index
      %14 = vector.load %arg9[%c0_12, %c0_13] : memref<128x128xf32, #tpu.memory_space<vmem>>, vector<128x128xf32>
      %15 = arith.truncf %14 : vector<128x128xf32> to vector<128x128xbf16>
      %c0_14 = arith.constant 0 : index
      %c0_15 = arith.constant 0 : index
      %c0_16 = arith.constant 0 : index
      %16 = vector.load %arg6[%c0_14, %c0_15, %c0_16] : memref<1x128x128xbf16, #tpu.memory_space<vmem>>, vector<1x128x128xbf16>
      %17 = vector.shape_cast %16 : vector<1x128x128xbf16> to vector<128x128xbf16>
      %18 = vector.shape_cast %15 : vector<128x128xbf16> to vector<1x128x128xbf16>
      tpu.vector_store %arg6[%c0_14, %c0_15, %c0_16], %18 {strides = array<i32>} : memref<1x128x128xbf16, #tpu.memory_space<vmem>>, vector<1x128x128xbf16>,
      %cst_17 = arith.constant dense<0.000000e+00> : vector<128xf32>
      %19 = vector.multi_reduction <add>, %14, %cst_17 [0] : vector<128x128xf32> to vector<128xf32>
      %20 = vector.shape_cast %19 : vector<128xf32> to vector<1x128xf32>
      %21 = arith.mulf %14, %14 : vector<128x128xf32>
      %cst_18 = arith.constant dense<0.000000e+00> : vector<128xf32>
      %22 = vector.multi_reduction <add>, %21, %cst_18 [0] : vector<128x128xf32> to vector<128xf32>
      %23 = vector.shape_cast %22 : vector<128xf32> to vector<1x128xf32>
      %24 = vector.shape_cast %20 : vector<1x128xf32> to vector<1x128xf32>
      %25 = vector.broadcast %24 : vector<1x128xf32> to vector<8x128xf32>
      %c0_19 = arith.constant 0 : index
      %c0_20 = arith.constant 0 : index
      %c0_21 = arith.constant 0 : index
      %26 = vector.load %arg7[%c0_19, %c0_20, %c0_21] : memref<1x8x128xf32, #tpu.memory_space<vmem>>, vector<1x8x128xf32>
      %27 = vector.shape_cast %26 : vector<1x8x128xf32> to vector<8x128xf32>
      %28 = vector.shape_cast %25 : vector<8x128xf32> to vector<1x8x128xf32>
      tpu.vector_store %arg7[%c0_19, %c0_20, %c0_21], %28 {strides = array<i32>} : memref<1x8x128xf32, #tpu.memory_space<vmem>>, vector<1x8x128xf32>,
      %29 = vector.shape_cast %23 : vector<1x128xf32> to vector<1x128xf32>
      %30 = vector.broadcast %29 : vector<1x128xf32> to vector<8x128xf32>
      %c0_22 = arith.constant 0 : index
      %c0_23 = arith.constant 0 : index
      %c0_24 = arith.constant 0 : index
      %31 = vector.load %arg8[%c0_22, %c0_23, %c0_24] : memref<1x8x128xf32, #tpu.memory_space<vmem>>, vector<1x8x128xf32>
      %32 = vector.shape_cast %31 : vector<1x8x128xf32> to vector<8x128xf32>
      %33 = vector.shape_cast %30 : vector<8x128xf32> to vector<1x8x128xf32>
      tpu.vector_store %arg8[%c0_22, %c0_23, %c0_24], %33 {strides = array<i32>} : memref<1x8x128xf32, #tpu.memory_space<vmem>>, vector<1x8x128xf32>,
    } else {
    }
    return
  }
  func.func @transform_0(%arg0: i32, %arg1: i32, %arg2: i32, %arg3: i32) -> (i32, i32, i32) {
    %c0_i32 = arith.constant 0 : i32
    return %arg0, %arg1, %arg3 : i32, i32, i32
  }
  func.func @transform_1(%arg0: i32, %arg1: i32, %arg2: i32, %arg3: i32) -> (i32, i32, i32) {
    %c0_i32 = arith.constant 0 : i32
    return %arg0, %arg3, %arg2 : i32, i32, i32
  }
  func.func @transform_2(%arg0: i32, %arg1: i32, %arg2: i32, %arg3: i32) -> (i32, i32, i32) {
    %c0_i32 = arith.constant 0 : i32
    return %arg0, %arg1, %arg2 : i32, i32, i32
  }
  func.func @transform_3(%arg0: i32, %arg1: i32, %arg2: i32, %arg3: i32) -> (i32, i32, i32) {
    %c0_i32 = arith.constant 0 : i32
    return %arg0, %arg1, %arg2 : i32, i32, i32
  }
  func.func @transform_4(%arg0: i32, %arg1: i32, %arg2: i32, %arg3: i32) -> (i32, i32, i32) {
    %c0_i32 = arith.constant 0 : i32
    return %arg0, %arg1, %arg2 : i32, i32, i32
  }
}

module attributes {stable_mosaic.version = 11 : i64} {
  func.func @_affine_relu_kernel(%arg0: i32, %arg1: memref<512x128xbf16, #tpu.memory_space<vmem>>, %arg2: memref<1x128xf32, #tpu.memory_space<vmem>>, %arg3: memref<1x128xf32, #tpu.memory_space<vmem>>, %arg4: memref<512x128xbf16, #tpu.memory_space<vmem>>) attributes {dimension_semantics = [#tpu.dimension_semantics<parallel>], iteration_bounds = array<i64: 1>, scalar_prefetch = 0 : i64, scratch_operands = 0 : i64, tpu.core_type = #tpu.core_type<tc>, window_params = [{transform_indices = @transform_0, window_bounds = array<i64: 512, 128>}, {pipeline_mode = #tpu.pipeline_mode<synchronous>, transform_indices = @transform_1, window_bounds = array<i64: 1, 128>}, {pipeline_mode = #tpu.pipeline_mode<synchronous>, transform_indices = @transform_2, window_bounds = array<i64: 1, 128>}, {transform_indices = @transform_3, window_bounds = array<i64: 512, 128>}]} {
    %c0 = arith.constant 0 : index
    %c0_0 = arith.constant 0 : index
    %0 = vector.load %arg1[%c0, %c0_0] : memref<512x128xbf16, #tpu.memory_space<vmem>>, vector<512x128xbf16>
    %1 = arith.extf %0 : vector<512x128xbf16> to vector<512x128xf32>
    %c0_1 = arith.constant 0 : index
    %c0_2 = arith.constant 0 : index
    %2 = vector.load %arg2[%c0_1, %c0_2] : memref<1x128xf32, #tpu.memory_space<vmem>>, vector<1x128xf32>
    %3 = vector.broadcast %2 : vector<1x128xf32> to vector<512x128xf32>
    %4 = arith.mulf %1, %3 : vector<512x128xf32>
    %c0_3 = arith.constant 0 : index
    %c0_4 = arith.constant 0 : index
    %5 = vector.load %arg3[%c0_3, %c0_4] : memref<1x128xf32, #tpu.memory_space<vmem>>, vector<1x128xf32>
    %6 = vector.broadcast %5 : vector<1x128xf32> to vector<512x128xf32>
    %7 = arith.addf %4, %6 : vector<512x128xf32>
    %cst = arith.constant 0.000000e+00 : f32
    %8 = vector.broadcast %cst : f32 to vector<512x128xf32>
    %9 = arith.maximumf %7, %8 : vector<512x128xf32>
    %10 = arith.truncf %9 : vector<512x128xf32> to vector<512x128xbf16>
    %c0_5 = arith.constant 0 : index
    %c0_6 = arith.constant 0 : index
    %11 = vector.load %arg4[%c0_5, %c0_6] : memref<512x128xbf16, #tpu.memory_space<vmem>>, vector<512x128xbf16>
    tpu.vector_store %arg4[%c0_5, %c0_6], %10 {strides = array<i32>} : memref<512x128xbf16, #tpu.memory_space<vmem>>, vector<512x128xbf16>,
    return
  }
  func.func @transform_0(%arg0: i32) -> (i32, i32) {
    %c0_i32 = arith.constant 0 : i32
    %c0_i32_0 = arith.constant 0 : i32
    return %arg0, %c0_i32 : i32, i32
  }
  func.func @transform_1(%arg0: i32) -> (i32, i32) {
    %c0_i32 = arith.constant 0 : i32
    %c0_i32_0 = arith.constant 0 : i32
    %c0_i32_1 = arith.constant 0 : i32
    return %c0_i32, %c0_i32_0 : i32, i32
  }
  func.func @transform_2(%arg0: i32) -> (i32, i32) {
    %c0_i32 = arith.constant 0 : i32
    %c0_i32_0 = arith.constant 0 : i32
    %c0_i32_1 = arith.constant 0 : i32
    return %c0_i32, %c0_i32_0 : i32, i32
  }
  func.func @transform_3(%arg0: i32) -> (i32, i32) {
    %c0_i32 = arith.constant 0 : i32
    %c0_i32_0 = arith.constant 0 : i32
    return %arg0, %c0_i32 : i32, i32
  }
}

module attributes {stable_mosaic.version = 11 : i64} {
  func.func @kernel(%arg0: i32, %arg1: i32, %arg2: i32, %arg3: i32, %arg4: memref<1x256x512xbf16, #tpu.memory_space<vmem>>, %arg5: memref<1x512x64xbf16, #tpu.memory_space<vmem>>, %arg6: memref<1x256x64xbf16, #tpu.memory_space<vmem>>, %arg7: memref<1x8x64xf32, #tpu.memory_space<vmem>>, %arg8: memref<1x8x64xf32, #tpu.memory_space<vmem>>, %arg9: memref<256x64xf32, #tpu.memory_space<vmem>>) attributes {dimension_semantics = [#tpu.dimension_semantics<parallel>, #tpu.dimension_semantics<parallel>, #tpu.dimension_semantics<parallel>, #tpu.dimension_semantics<arbitrary>], iteration_bounds = array<i64: 4, 2, 1, 1>, scalar_prefetch = 0 : i64, scratch_operands = 1 : i64, tpu.core_type = #tpu.core_type<tc>, window_params = [{transform_indices = @transform_0, window_bounds = array<i64: 1, 256, 512>}, {transform_indices = @transform_1, window_bounds = array<i64: 1, 512, 64>}, {transform_indices = @transform_2, window_bounds = array<i64: 1, 256, 64>}, {transform_indices = @transform_3, window_bounds = array<i64: 1, 8, 64>}, {transform_indices = @transform_4, window_bounds = array<i64: 1, 8, 64>}]} {
    %c0_i32 = arith.constant 0 : i32
    %0 = arith.cmpi eq, %arg3, %c0_i32 : i32
    %1 = arith.extui %0 : i1 to i32
    %c0_i32_0 = arith.constant 0 : i32
    %2 = arith.cmpi ne, %1, %c0_i32_0 : i32
    scf.if %2 {
      %cst_12 = arith.constant 0.000000e+00 : f32
      %14 = vector.broadcast %cst_12 : f32 to vector<256x64xf32>
      %c0_13 = arith.constant 0 : index
      %c0_14 = arith.constant 0 : index
      %15 = vector.load %arg9[%c0_13, %c0_14] : memref<256x64xf32, #tpu.memory_space<vmem>>, vector<256x64xf32>
      tpu.vector_store %arg9[%c0_13, %c0_14], %14 {strides = array<i32>} : memref<256x64xf32, #tpu.memory_space<vmem>>, vector<256x64xf32>,
    } else {
    }
    %c0 = arith.constant 0 : index
    %c0_1 = arith.constant 0 : index
    %3 = vector.load %arg9[%c0, %c0_1] : memref<256x64xf32, #tpu.memory_space<vmem>>, vector<256x64xf32>
    %c0_2 = arith.constant 0 : index
    %c0_3 = arith.constant 0 : index
    %c0_4 = arith.constant 0 : index
    %4 = vector.load %arg4[%c0_2, %c0_3, %c0_4] : memref<1x256x512xbf16, #tpu.memory_space<vmem>>, vector<1x256x512xbf16>
    %5 = vector.shape_cast %4 : vector<1x256x512xbf16> to vector<256x512xbf16>
    %c0_5 = arith.constant 0 : index
    %c0_6 = arith.constant 0 : index
    %c0_7 = arith.constant 0 : index
    %6 = vector.load %arg5[%c0_5, %c0_6, %c0_7] : memref<1x512x64xbf16, #tpu.memory_space<vmem>>, vector<1x512x64xbf16>
    %7 = vector.shape_cast %6 : vector<1x512x64xbf16> to vector<512x64xbf16>
    %cst = arith.constant dense<0.000000e+00> : vector<256x64xf32>
    %8 = tpu.matmul %5, %7, %cst {dimension_numbers = #tpu.dot_dimension_numbers<[1], [0], [0], [1], [0, 0, 1, 1], [], []>} : vector<256x512xbf16>, vector<512x64xbf16>, vector<256x64xf32> -> vector<256x64xf32>
    %9 = arith.addf %3, %8 : vector<256x64xf32>
    %c0_8 = arith.constant 0 : index
    %c0_9 = arith.constant 0 : index
    %10 = vector.load %arg9[%c0_8, %c0_9] : memref<256x64xf32, #tpu.memory_space<vmem>>, vector<256x64xf32>
    tpu.vector_store %arg9[%c0_8, %c0_9], %9 {strides = array<i32>} : memref<256x64xf32, #tpu.memory_space<vmem>>, vector<256x64xf32>,
    %c0_i32_10 = arith.constant 0 : i32
    %11 = arith.cmpi eq, %arg3, %c0_i32_10 : i32
    %12 = arith.extui %11 : i1 to i32
    %c0_i32_11 = arith.constant 0 : i32
    %13 = arith.cmpi ne, %12, %c0_i32_11 : i32
    scf.if %13 {
      %c0_12 = arith.constant 0 : index
      %c0_13 = arith.constant 0 : index
      %14 = vector.load %arg9[%c0_12, %c0_13] : memref<256x64xf32, #tpu.memory_space<vmem>>, vector<256x64xf32>
      %15 = arith.truncf %14 : vector<256x64xf32> to vector<256x64xbf16>
      %c0_14 = arith.constant 0 : index
      %c0_15 = arith.constant 0 : index
      %c0_16 = arith.constant 0 : index
      %16 = vector.load %arg6[%c0_14, %c0_15, %c0_16] : memref<1x256x64xbf16, #tpu.memory_space<vmem>>, vector<1x256x64xbf16>
      %17 = vector.shape_cast %16 : vector<1x256x64xbf16> to vector<256x64xbf16>
      %18 = vector.shape_cast %15 : vector<256x64xbf16> to vector<1x256x64xbf16>
      tpu.vector_store %arg6[%c0_14, %c0_15, %c0_16], %18 {strides = array<i32>} : memref<1x256x64xbf16, #tpu.memory_space<vmem>>, vector<1x256x64xbf16>,
      %cst_17 = arith.constant dense<0.000000e+00> : vector<64xf32>
      %19 = vector.multi_reduction <add>, %14, %cst_17 [0] : vector<256x64xf32> to vector<64xf32>
      %20 = vector.shape_cast %19 : vector<64xf32> to vector<1x64xf32>
      %21 = arith.mulf %14, %14 : vector<256x64xf32>
      %cst_18 = arith.constant dense<0.000000e+00> : vector<64xf32>
      %22 = vector.multi_reduction <add>, %21, %cst_18 [0] : vector<256x64xf32> to vector<64xf32>
      %23 = vector.shape_cast %22 : vector<64xf32> to vector<1x64xf32>
      %24 = vector.shape_cast %20 : vector<1x64xf32> to vector<1x64xf32>
      %25 = vector.broadcast %24 : vector<1x64xf32> to vector<8x64xf32>
      %c0_19 = arith.constant 0 : index
      %c0_20 = arith.constant 0 : index
      %c0_21 = arith.constant 0 : index
      %26 = vector.load %arg7[%c0_19, %c0_20, %c0_21] : memref<1x8x64xf32, #tpu.memory_space<vmem>>, vector<1x8x64xf32>
      %27 = vector.shape_cast %26 : vector<1x8x64xf32> to vector<8x64xf32>
      %28 = vector.shape_cast %25 : vector<8x64xf32> to vector<1x8x64xf32>
      tpu.vector_store %arg7[%c0_19, %c0_20, %c0_21], %28 {strides = array<i32>} : memref<1x8x64xf32, #tpu.memory_space<vmem>>, vector<1x8x64xf32>,
      %29 = vector.shape_cast %23 : vector<1x64xf32> to vector<1x64xf32>
      %30 = vector.broadcast %29 : vector<1x64xf32> to vector<8x64xf32>
      %c0_22 = arith.constant 0 : index
      %c0_23 = arith.constant 0 : index
      %c0_24 = arith.constant 0 : index
      %31 = vector.load %arg8[%c0_22, %c0_23, %c0_24] : memref<1x8x64xf32, #tpu.memory_space<vmem>>, vector<1x8x64xf32>
      %32 = vector.shape_cast %31 : vector<1x8x64xf32> to vector<8x64xf32>
      %33 = vector.shape_cast %30 : vector<8x64xf32> to vector<1x8x64xf32>
      tpu.vector_store %arg8[%c0_22, %c0_23, %c0_24], %33 {strides = array<i32>} : memref<1x8x64xf32, #tpu.memory_space<vmem>>, vector<1x8x64xf32>,
    } else {
    }
    return
  }
  func.func @transform_0(%arg0: i32, %arg1: i32, %arg2: i32, %arg3: i32) -> (i32, i32, i32) {
    %c0_i32 = arith.constant 0 : i32
    return %arg0, %arg1, %arg3 : i32, i32, i32
  }
  func.func @transform_1(%arg0: i32, %arg1: i32, %arg2: i32, %arg3: i32) -> (i32, i32, i32) {
    %c0_i32 = arith.constant 0 : i32
    return %arg0, %arg3, %arg2 : i32, i32, i32
  }
  func.func @transform_2(%arg0: i32, %arg1: i32, %arg2: i32, %arg3: i32) -> (i32, i32, i32) {
    %c0_i32 = arith.constant 0 : i32
    return %arg0, %arg1, %arg2 : i32, i32, i32
  }
  func.func @transform_3(%arg0: i32, %arg1: i32, %arg2: i32, %arg3: i32) -> (i32, i32, i32) {
    %c0_i32 = arith.constant 0 : i32
    return %arg0, %arg1, %arg2 : i32, i32, i32
  }
  func.func @transform_4(%arg0: i32, %arg1: i32, %arg2: i32, %arg3: i32) -> (i32, i32, i32) {
    %c0_i32 = arith.constant 0 : i32
    return %arg0, %arg1, %arg2 : i32, i32, i32
  }
}

module attributes {stable_mosaic.version = 11 : i64} {
  func.func @_affine_relu_kernel(%arg0: i32, %arg1: memref<1024x128xbf16, #tpu.memory_space<vmem>>, %arg2: memref<1x128xf32, #tpu.memory_space<vmem>>, %arg3: memref<1x128xf32, #tpu.memory_space<vmem>>, %arg4: memref<1024x128xbf16, #tpu.memory_space<vmem>>) attributes {dimension_semantics = [#tpu.dimension_semantics<parallel>], iteration_bounds = array<i64: 1>, scalar_prefetch = 0 : i64, scratch_operands = 0 : i64, tpu.core_type = #tpu.core_type<tc>, window_params = [{transform_indices = @transform_0, window_bounds = array<i64: 1024, 128>}, {pipeline_mode = #tpu.pipeline_mode<synchronous>, transform_indices = @transform_1, window_bounds = array<i64: 1, 128>}, {pipeline_mode = #tpu.pipeline_mode<synchronous>, transform_indices = @transform_2, window_bounds = array<i64: 1, 128>}, {transform_indices = @transform_3, window_bounds = array<i64: 1024, 128>}]} {
    %c0 = arith.constant 0 : index
    %c0_0 = arith.constant 0 : index
    %0 = vector.load %arg1[%c0, %c0_0] : memref<1024x128xbf16, #tpu.memory_space<vmem>>, vector<1024x128xbf16>
    %1 = arith.extf %0 : vector<1024x128xbf16> to vector<1024x128xf32>
    %c0_1 = arith.constant 0 : index
    %c0_2 = arith.constant 0 : index
    %2 = vector.load %arg2[%c0_1, %c0_2] : memref<1x128xf32, #tpu.memory_space<vmem>>, vector<1x128xf32>
    %3 = vector.broadcast %2 : vector<1x128xf32> to vector<1024x128xf32>
    %4 = arith.mulf %1, %3 : vector<1024x128xf32>
    %c0_3 = arith.constant 0 : index
    %c0_4 = arith.constant 0 : index
    %5 = vector.load %arg3[%c0_3, %c0_4] : memref<1x128xf32, #tpu.memory_space<vmem>>, vector<1x128xf32>
    %6 = vector.broadcast %5 : vector<1x128xf32> to vector<1024x128xf32>
    %7 = arith.addf %4, %6 : vector<1024x128xf32>
    %cst = arith.constant 0.000000e+00 : f32
    %8 = vector.broadcast %cst : f32 to vector<1024x128xf32>
    %9 = arith.maximumf %7, %8 : vector<1024x128xf32>
    %10 = arith.truncf %9 : vector<1024x128xf32> to vector<1024x128xbf16>
    %c0_5 = arith.constant 0 : index
    %c0_6 = arith.constant 0 : index
    %11 = vector.load %arg4[%c0_5, %c0_6] : memref<1024x128xbf16, #tpu.memory_space<vmem>>, vector<1024x128xbf16>
    tpu.vector_store %arg4[%c0_5, %c0_6], %10 {strides = array<i32>} : memref<1024x128xbf16, #tpu.memory_space<vmem>>, vector<1024x128xbf16>,
    return
  }
  func.func @transform_0(%arg0: i32) -> (i32, i32) {
    %c0_i32 = arith.constant 0 : i32
    %c0_i32_0 = arith.constant 0 : i32
    return %arg0, %c0_i32 : i32, i32
  }
  func.func @transform_1(%arg0: i32) -> (i32, i32) {
    %c0_i32 = arith.constant 0 : i32
    %c0_i32_0 = arith.constant 0 : i32
    %c0_i32_1 = arith.constant 0 : i32
    return %c0_i32, %c0_i32_0 : i32, i32
  }
  func.func @transform_2(%arg0: i32) -> (i32, i32) {
    %c0_i32 = arith.constant 0 : i32
    %c0_i32_0 = arith.constant 0 : i32
    %c0_i32_1 = arith.constant 0 : i32
    return %c0_i32, %c0_i32_0 : i32, i32
  }
  func.func @transform_3(%arg0: i32) -> (i32, i32) {
    %c0_i32 = arith.constant 0 : i32
    %c0_i32_0 = arith.constant 0 : i32
    return %arg0, %c0_i32 : i32, i32
  }
}

module attributes {stable_mosaic.version = 11 : i64} {
  func.func @kernel(%arg0: i32, %arg1: i32, %arg2: i32, %arg3: i32, %arg4: memref<1x256x256xbf16, #tpu.memory_space<vmem>>, %arg5: memref<1x256x128xbf16, #tpu.memory_space<vmem>>, %arg6: memref<1x256x128xbf16, #tpu.memory_space<vmem>>, %arg7: memref<1x8x128xf32, #tpu.memory_space<vmem>>, %arg8: memref<1x8x128xf32, #tpu.memory_space<vmem>>, %arg9: memref<256x128xf32, #tpu.memory_space<vmem>>) attributes {dimension_semantics = [#tpu.dimension_semantics<parallel>, #tpu.dimension_semantics<parallel>, #tpu.dimension_semantics<parallel>, #tpu.dimension_semantics<arbitrary>], iteration_bounds = array<i64: 4, 8, 1, 1>, scalar_prefetch = 0 : i64, scratch_operands = 1 : i64, tpu.core_type = #tpu.core_type<tc>, window_params = [{transform_indices = @transform_0, window_bounds = array<i64: 1, 256, 256>}, {transform_indices = @transform_1, window_bounds = array<i64: 1, 256, 128>}, {transform_indices = @transform_2, window_bounds = array<i64: 1, 256, 128>}, {transform_indices = @transform_3, window_bounds = array<i64: 1, 8, 128>}, {transform_indices = @transform_4, window_bounds = array<i64: 1, 8, 128>}]} {
    %c0_i32 = arith.constant 0 : i32
    %0 = arith.cmpi eq, %arg3, %c0_i32 : i32
    %1 = arith.extui %0 : i1 to i32
    %c0_i32_0 = arith.constant 0 : i32
    %2 = arith.cmpi ne, %1, %c0_i32_0 : i32
    scf.if %2 {
      %cst_12 = arith.constant 0.000000e+00 : f32
      %14 = vector.broadcast %cst_12 : f32 to vector<256x128xf32>
      %c0_13 = arith.constant 0 : index
      %c0_14 = arith.constant 0 : index
      %15 = vector.load %arg9[%c0_13, %c0_14] : memref<256x128xf32, #tpu.memory_space<vmem>>, vector<256x128xf32>
      tpu.vector_store %arg9[%c0_13, %c0_14], %14 {strides = array<i32>} : memref<256x128xf32, #tpu.memory_space<vmem>>, vector<256x128xf32>,
    } else {
    }
    %c0 = arith.constant 0 : index
    %c0_1 = arith.constant 0 : index
    %3 = vector.load %arg9[%c0, %c0_1] : memref<256x128xf32, #tpu.memory_space<vmem>>, vector<256x128xf32>
    %c0_2 = arith.constant 0 : index
    %c0_3 = arith.constant 0 : index
    %c0_4 = arith.constant 0 : index
    %4 = vector.load %arg4[%c0_2, %c0_3, %c0_4] : memref<1x256x256xbf16, #tpu.memory_space<vmem>>, vector<1x256x256xbf16>
    %5 = vector.shape_cast %4 : vector<1x256x256xbf16> to vector<256x256xbf16>
    %c0_5 = arith.constant 0 : index
    %c0_6 = arith.constant 0 : index
    %c0_7 = arith.constant 0 : index
    %6 = vector.load %arg5[%c0_5, %c0_6, %c0_7] : memref<1x256x128xbf16, #tpu.memory_space<vmem>>, vector<1x256x128xbf16>
    %7 = vector.shape_cast %6 : vector<1x256x128xbf16> to vector<256x128xbf16>
    %cst = arith.constant dense<0.000000e+00> : vector<256x128xf32>
    %8 = tpu.matmul %5, %7, %cst {dimension_numbers = #tpu.dot_dimension_numbers<[1], [0], [0], [1], [0, 0, 1, 1], [], []>} : vector<256x256xbf16>, vector<256x128xbf16>, vector<256x128xf32> -> vector<256x128xf32>
    %9 = arith.addf %3, %8 : vector<256x128xf32>
    %c0_8 = arith.constant 0 : index
    %c0_9 = arith.constant 0 : index
    %10 = vector.load %arg9[%c0_8, %c0_9] : memref<256x128xf32, #tpu.memory_space<vmem>>, vector<256x128xf32>
    tpu.vector_store %arg9[%c0_8, %c0_9], %9 {strides = array<i32>} : memref<256x128xf32, #tpu.memory_space<vmem>>, vector<256x128xf32>,
    %c0_i32_10 = arith.constant 0 : i32
    %11 = arith.cmpi eq, %arg3, %c0_i32_10 : i32
    %12 = arith.extui %11 : i1 to i32
    %c0_i32_11 = arith.constant 0 : i32
    %13 = arith.cmpi ne, %12, %c0_i32_11 : i32
    scf.if %13 {
      %c0_12 = arith.constant 0 : index
      %c0_13 = arith.constant 0 : index
      %14 = vector.load %arg9[%c0_12, %c0_13] : memref<256x128xf32, #tpu.memory_space<vmem>>, vector<256x128xf32>
      %15 = math.tanh %14 : vector<256x128xf32>
      %16 = arith.truncf %15 : vector<256x128xf32> to vector<256x128xbf16>
      %c0_14 = arith.constant 0 : index
      %c0_15 = arith.constant 0 : index
      %c0_16 = arith.constant 0 : index
      %17 = vector.load %arg6[%c0_14, %c0_15, %c0_16] : memref<1x256x128xbf16, #tpu.memory_space<vmem>>, vector<1x256x128xbf16>
      %18 = vector.shape_cast %17 : vector<1x256x128xbf16> to vector<256x128xbf16>
      %19 = vector.shape_cast %16 : vector<256x128xbf16> to vector<1x256x128xbf16>
      tpu.vector_store %arg6[%c0_14, %c0_15, %c0_16], %19 {strides = array<i32>} : memref<1x256x128xbf16, #tpu.memory_space<vmem>>, vector<1x256x128xbf16>,
      %cst_17 = arith.constant dense<0.000000e+00> : vector<128xf32>
      %20 = vector.multi_reduction <add>, %15, %cst_17 [0] : vector<256x128xf32> to vector<128xf32>
      %21 = vector.shape_cast %20 : vector<128xf32> to vector<1x128xf32>
      %22 = arith.mulf %15, %15 : vector<256x128xf32>
      %cst_18 = arith.constant dense<0.000000e+00> : vector<128xf32>
      %23 = vector.multi_reduction <add>, %22, %cst_18 [0] : vector<256x128xf32> to vector<128xf32>
      %24 = vector.shape_cast %23 : vector<128xf32> to vector<1x128xf32>
      %25 = vector.shape_cast %21 : vector<1x128xf32> to vector<1x128xf32>
      %26 = vector.broadcast %25 : vector<1x128xf32> to vector<8x128xf32>
      %c0_19 = arith.constant 0 : index
      %c0_20 = arith.constant 0 : index
      %c0_21 = arith.constant 0 : index
      %27 = vector.load %arg7[%c0_19, %c0_20, %c0_21] : memref<1x8x128xf32, #tpu.memory_space<vmem>>, vector<1x8x128xf32>
      %28 = vector.shape_cast %27 : vector<1x8x128xf32> to vector<8x128xf32>
      %29 = vector.shape_cast %26 : vector<8x128xf32> to vector<1x8x128xf32>
      tpu.vector_store %arg7[%c0_19, %c0_20, %c0_21], %29 {strides = array<i32>} : memref<1x8x128xf32, #tpu.memory_space<vmem>>, vector<1x8x128xf32>,
      %30 = vector.shape_cast %24 : vector<1x128xf32> to vector<1x128xf32>
      %31 = vector.broadcast %30 : vector<1x128xf32> to vector<8x128xf32>
      %c0_22 = arith.constant 0 : index
      %c0_23 = arith.constant 0 : index
      %c0_24 = arith.constant 0 : index
      %32 = vector.load %arg8[%c0_22, %c0_23, %c0_24] : memref<1x8x128xf32, #tpu.memory_space<vmem>>, vector<1x8x128xf32>
      %33 = vector.shape_cast %32 : vector<1x8x128xf32> to vector<8x128xf32>
      %34 = vector.shape_cast %31 : vector<8x128xf32> to vector<1x8x128xf32>
      tpu.vector_store %arg8[%c0_22, %c0_23, %c0_24], %34 {strides = array<i32>} : memref<1x8x128xf32, #tpu.memory_space<vmem>>, vector<1x8x128xf32>,
    } else {
    }
    return
  }
  func.func @transform_0(%arg0: i32, %arg1: i32, %arg2: i32, %arg3: i32) -> (i32, i32, i32) {
    %c0_i32 = arith.constant 0 : i32
    return %arg0, %arg1, %arg3 : i32, i32, i32
  }
  func.func @transform_1(%arg0: i32, %arg1: i32, %arg2: i32, %arg3: i32) -> (i32, i32, i32) {
    %c0_i32 = arith.constant 0 : i32
    return %arg0, %arg3, %arg2 : i32, i32, i32
  }
  func.func @transform_2(%arg0: i32, %arg1: i32, %arg2: i32, %arg3: i32) -> (i32, i32, i32) {
    %c0_i32 = arith.constant 0 : i32
    return %arg0, %arg1, %arg2 : i32, i32, i32
  }
  func.func @transform_3(%arg0: i32, %arg1: i32, %arg2: i32, %arg3: i32) -> (i32, i32, i32) {
    %c0_i32 = arith.constant 0 : i32
    return %arg0, %arg1, %arg2 : i32, i32, i32
  }
  func.func @transform_4(%arg0: i32, %arg1: i32, %arg2: i32, %arg3: i32) -> (i32, i32, i32) {
    %c0_i32 = arith.constant 0 : i32
    return %arg0, %arg1, %arg2 : i32, i32, i32
  }
}

</mosaic_0001>

<llo_original>
// kernel: generator_forward.9
$region0: #{generator_forward.9}
  #allocation0 [shape = 'u32[]', space=smem, size = 0x4, offset = 0x4, fixed_abs, tag = 'smem constant byte address 0x4 - core index']
  #allocation1 [shape = 'u32[144,128]{1,0:T(1,128)}', space=vmem, size = 0x12000, scoped, tag = 'internal scratch']
  #allocation2 [shape = 'f32[2,512]{1,0:T(2,128)}', space=vmem, size = 0x1000, scoped, tag = 'scratch operand']
  %s0 = inlined_call_operand.vmem [shape: bf16[1,2,100], index: 0, kind: input, shape index: {}]
  %s1 = inlined_call_operand.vmem [shape: bf16[1,100,8192], index: 1, kind: input, shape index: {}]
  %s2 = inlined_call_operand.vmem [shape: bf16[1,2,8192], index: 2, kind: output, shape index: {0}]
  %s3 = inlined_call_operand.vmem [shape: f32[1,8,8192], index: 3, kind: output, shape index: {1}]
  %s4 = inlined_call_operand.vmem [shape: f32[1,8,8192], index: 4, kind: output, shape index: {2}]
  %5 = xla_tuple %s2, %s3, %s4
  %s6 = sld [smem:[#allocation0]]
  $region88: #{generator_forward.9} parent=0
    _
  %s8 = ssub.s32 1, %s6
  %s9 = scalar_select 0, %s8, %s6
  $region1: #{generator_forward.9} parent=0
    #allocation3 [shape = 'u8[212992]{0}', space=vmem, size = 0x34000, scoped, tag = 'input window, operand 1']
    loop: start=0, step=1, limit=18
    $region2: #{generator_forward.9} parent=1 // loop_pre_header
      _
    $region3: #{generator_forward.9} parent=1 // loop_header
      %s11 = sphi 0, %s15
      %p12 = scmp.ge.s32.totalorder %s11, 18
      %s18 = sphi 0, %s44
      %s19 = sphi 0, %s40
      %s20 = sphi 0, %s36
      %s21 = sphi 0, %s32
      %s22 = sphi 0, %s18
      %s23 = sphi 0, %s19
      %s24 = sphi 0, %s20
      %s25 = sphi 0, %s21
      %s26 = sphi 0, %s22
      %s27 = sphi 0, %s23
      %s28 = sphi 0, %s24
      %s29 = sphi 0, %s25
      %s51 = sphi 0, %s53
      %s54 = sphi 0, %s51
      %s55 = sphi 0, %s54
      %s71 = sphi 0, %s55
      %s81 = sphi 0, %s83
      %s84 = sphi 0, %s81
      %s85 = sphi 0, %s84
      %s101 = sphi 0, %s85
      %s111 = sphi 0, %s113
      %s114 = sphi 0, %s111
      %s115 = sphi 0, %s114
      %s131 = sphi 0, %s115
      %s141 = sphi 0, %s143
      %s144 = sphi 0, %s141
      %s145 = sphi 0, %s144
      %s161 = sphi 0, %s145
      %s171 = sphi 0, %s173
      %s174 = sphi 0, %s171
      %s175 = sphi 0, %s174
      %s191 = sphi 0, %s175
    $region4: #{generator_forward.9} parent=1 // loop_header_branch
      %14 = sbr.rel (%p12) target = $region8
    $region5: #{generator_forward.9} parent=1 // loop_body
      %s16 = ssub.s32 %s11, 1
      %s17 = ssub.s32 %s11, 2
      %s30 = sadd.s32 1, %s21
      %p31 = scmp.ge.s32.totalorder %s30, 1
      %s32 = scalar_select %p31, 0, %s30
      %s33 = sadd.s32 1, %s20
      %s34 = scalar_select %p31, %s33, %s20
      %p35 = scmp.ge.s32.totalorder %s34, 16
      %s36 = scalar_select %p35, 0, %s34
      %s37 = sadd.s32 1, %s19
      %s38 = scalar_select %p35, %s37, %s19
      %p39 = scmp.ge.s32.totalorder %s38, 1
      %s40 = scalar_select %p39, 0, %s38
      %s41 = sadd.s32 1, %s18
      %s42 = scalar_select %p39, %s41, %s18
      %p43 = scmp.ge.s32.totalorder %s42, 1
      %s44 = scalar_select %p43, 0, %s42
      %s45 = ssub.s32 %s18, %s44
      %s46 = ssub.s32 %s19, %s40
      %s47 = sor.u32 %s45, %s46
      %s48 = ssub.s32 %s21, %s32
      %s49 = sor.u32 %s47, %s48
      %p50 = scmp.eq.s32.totalorder %s49, 0
      %s52 = sadd.s32 %s51, 1
      %s53 = scalar_select %p50, %s51, %s52
      %p56 = pneg %p50
      %p57 = scmp.eq.s32.totalorder %s11, 15
      %p58 = por %p56, %p57
      %p59 = scmp.ne.s32.totalorder %s51, %s54
      %p60 = scmp.eq.s32.totalorder %s11, 0
      %p61 = por %p59, %p60
      %p62 = scmp.ne.s32.totalorder %s51, %s54
      %p63 = scmp.eq.s32.totalorder %s16, 15
      %p64 = por %p62, %p63
      %p65 = scmp.ne.s32.totalorder %s54, %s55
      %p66 = scmp.eq.s32.totalorder %s16, 0
      %p67 = por %p65, %p66
      %p68 = scmp.ne.s32.totalorder %s54, %s55
      %p69 = scmp.eq.s32.totalorder %s17, 15
      %p70 = por %p68, %p69
      %p72 = scmp.ne.s32.totalorder %s55, %s71
      %p73 = scmp.eq.s32.totalorder %s17, 0
      %p74 = por %p72, %p73
      %s75 = ssub.s32 %s18, %s44
      %s76 = ssub.s32 %s21, %s32
      %s77 = sor.u32 %s75, %s76
      %s78 = ssub.s32 %s20, %s36
      %s79 = sor.u32 %s77, %s78
      %p80 = scmp.eq.s32.totalorder %s79, 0
      %s82 = sadd.s32 %s81, 1
      %s83 = scalar_select %p80, %s81, %s82
      %p86 = pneg %p80
      %p87 = scmp.eq.s32.totalorder %s11, 15
      %p88 = por %p86, %p87
      %p89 = scmp.ne.s32.totalorder %s81, %s84
      %p90 = scmp.eq.s32.totalorder %s11, 0
      %p91 = por %p89, %p90
      %p92 = scmp.ne.s32.totalorder %s81, %s84
      %p93 = scmp.eq.s32.totalorder %s16, 15
      %p94 = por %p92, %p93
      %p95 = scmp.ne.s32.totalorder %s84, %s85
      %p96 = scmp.eq.s32.totalorder %s16, 0
      %p97 = por %p95, %p96
      %p98 = scmp.ne.s32.totalorder %s84, %s85
      %p99 = scmp.eq.s32.totalorder %s17, 15
      %p100 = por %p98, %p99
      %p102 = scmp.ne.s32.totalorder %s85, %s101
      %p103 = scmp.eq.s32.totalorder %s17, 0
      %p104 = por %p102, %p103
      %s105 = ssub.s32 %s18, %s44
      %s106 = ssub.s32 %s19, %s40
      %s107 = sor.u32 %s105, %s106
      %s108 = ssub.s32 %s20, %s36
      %s109 = sor.u32 %s107, %s108
      %p110 = scmp.eq.s32.totalorder %s109, 0
      %s112 = sadd.s32 %s111, 1
      %s113 = scalar_select %p110, %s111, %s112
      %p116 = pneg %p110
      %p117 = scmp.eq.s32.totalorder %s11, 15
      %p118 = por %p116, %p117
      %p119 = scmp.ne.s32.totalorder %s111, %s114
      %p120 = scmp.eq.s32.totalorder %s11, 0
      %p121 = por %p119, %p120
      %p122 = scmp.ne.s32.totalorder %s111, %s114
      %p123 = scmp.eq.s32.totalorder %s16, 15
      %p124 = por %p122, %p123
      %p125 = scmp.ne.s32.totalorder %s114, %s115
      %p126 = scmp.eq.s32.totalorder %s16, 0
      %p127 = por %p125, %p126
      %p128 = scmp.ne.s32.totalorder %s114, %s115
      %p129 = scmp.eq.s32.totalorder %s17, 15
      %p130 = por %p128, %p129
      %p132 = scmp.ne.s32.totalorder %s115, %s131
      %p133 = scmp.eq.s32.totalorder %s17, 0
      %p134 = por %p132, %p133
      %s135 = ssub.s32 %s18, %s44
      %s136 = ssub.s32 %s19, %s40
      %s137 = sor.u32 %s135, %s136
      %s138 = ssub.s32 %s20, %s36
      %s139 = sor.u32 %s137, %s138
      %p140 = scmp.eq.s32.totalorder %s139, 0
      %s142 = sadd.s32 %s141, 1
      %s143 = scalar_select %p140, %s141, %s142
      %p146 = pneg %p140
      %p147 = scmp.eq.s32.totalorder %s11, 15
      %p148 = por %p146, %p147
      %p149 = scmp.ne.s32.totalorder %s141, %s144
      %p150 = scmp.eq.s32.totalorder %s11, 0
      %p151 = por %p149, %p150
      %p152 = scmp.ne.s32.totalorder %s141, %s144
      %p153 = scmp.eq.s32.totalorder %s16, 15
      %p154 = por %p152, %p153
      %p155 = scmp.ne.s32.totalorder %s144, %s145
      %p156 = scmp.eq.s32.totalorder %s16, 0
      %p157 = por %p155, %p156
      %p158 = scmp.ne.s32.totalorder %s144, %s145
      %p159 = scmp.eq.s32.totalorder %s17, 15
      %p160 = por %p158, %p159
      %p162 = scmp.ne.s32.totalorder %s145, %s161
      %p163 = scmp.eq.s32.totalorder %s17, 0
      %p164 = por %p162, %p163
      %s165 = ssub.s32 %s18, %s44
      %s166 = ssub.s32 %s19, %s40
      %s167 = sor.u32 %s165, %s166
      %s168 = ssub.s32 %s20, %s36
      %s169 = sor.u32 %s167, %s168
      %p170 = scmp.eq.s32.totalorder %s169, 0
      %s172 = sadd.s32 %s171, 1
      %s173 = scalar_select %p170, %s171, %s172
      %p176 = pneg %p170
      %p177 = scmp.eq.s32.totalorder %s11, 15
      %p178 = por %p176, %p177
      %p179 = scmp.ne.s32.totalorder %s171, %s174
      %p180 = scmp.eq.s32.totalorder %s11, 0
      %p181 = por %p179, %p180
      %p182 = scmp.ne.s32.totalorder %s171, %s174
      %p183 = scmp.eq.s32.totalorder %s16, 15
      %p184 = por %p182, %p183
      %p185 = scmp.ne.s32.totalorder %s174, %s175
      %p186 = scmp.eq.s32.totalorder %s16, 0
      %p187 = por %p185, %p186
      %p188 = scmp.ne.s32.totalorder %s174, %s175
      %p189 = scmp.eq.s32.totalorder %s17, 15
      %p190 = por %p188, %p189
      %p192 = scmp.ne.s32.totalorder %s175, %s191
      %p193 = scmp.eq.s32.totalorder %s17, 0
      %p194 = por %p192, %p193
      %p195 = scmp.le.s32.totalorder 1, %s11
      %p196 = scmp.lt.s32.totalorder %s11, 17
      %p197 = pnand %p195, %p196
      %p198 = pneg %p197
      // Predicated region
      $region9: #{generator_forward.9} parent=5 // pred_check
        _
      $region10: #{generator_forward.9} parent=5 // pred_check_branch
        %200 = sbr.rel (%p197) target = $region12
      $region11: #{generator_forward.9} parent=5 // pred_region
        %s201 = ssub.s32 %s11, 1
        // Predicated region
        $region13: #{generator_forward.9} parent=11 // pred_check
          %p202 = pneg %p67
        $region14: #{generator_forward.9} parent=11 // pred_check_branch
          %204 = sbr.rel (%p202) target = $region16
        $region15: #{generator_forward.9} parent=11 // pred_region
          %p205 = scmp.lt.s32.totalorder %s22, 0
          %s206 = scalar_select %p205, %s22, 0
          %p207 = scmp.lt.s32.totalorder %s23, 0
          %s208 = scalar_select %p207, %s23, 0
          %p209 = scmp.lt.s32.totalorder %s25, 0
          %s210 = scalar_select %p209, %s25, 0
          %s211 = sadd.s32 %s210, %s208
          %s212 = sadd.s32 %s211, %s206
          %s213 = scalar_lea.vmem %s0, %s212
        $region16: #{generator_forward.9} parent=11 // pred_fallthru
          _
      $region12: #{generator_forward.9} parent=5 // pred_fallthru
        _
      %p214 = scmp.lt.s32.totalorder %s11, 16
      // Predicated region
      $region17: #{generator_forward.9} parent=5 // pred_check
        %p215 = pneg %p214
      $region18: #{generator_forward.9} parent=5 // pred_check_branch
        %217 = sbr.rel (%p215) target = $region20
      $region19: #{generator_forward.9} parent=5 // pred_region
        // Predicated region
        $region21: #{generator_forward.9} parent=19 // pred_check
          %p218 = pneg %p91
        $region22: #{generator_forward.9} parent=19 // pred_check_branch
          %220 = sbr.rel (%p218) target = $region24
        $region23: #{generator_forward.9} parent=19 // pred_region
          %s221 = sand.u32 %s81, 1
          %s222 = sand.u32 %s81, 1
          %s223 = smul.addr %s222, 208
          %s224 = scalar_lea.vmem [#allocation3], %s223
          %s225 = smul.u32 13, %s21
          %s226 = smul.u32 4, %s20
          %s227 = smul.addr %s225, 64
          %s228 = sadd.s32 %s226, %s227
          %s229 = smul.addr %s18, 832
          %s230 = sadd.s32 %s228, %s229
          %s231 = smul.addr %s230, 4
          %s232 = scalar_lea.vmem %s1, %s231
          // Predicated region
          $region25: #{generator_forward.9} parent=23 // pred_check
            _
          $region26: #{generator_forward.9} parent=23 // pred_check_branch
            %234 = sbr.rel (0) target = $region28
          $region27: #{generator_forward.9} parent=23 // pred_region
            // Predicated region
            $region29: #{generator_forward.9} parent=27 // pred_check
              _
            $region30: #{generator_forward.9} parent=27 // pred_check_branch
              %236 = sbr.rel (0) target = $region32
            $region31: #{generator_forward.9} parent=27 // pred_region
              loop: start=0, step=1, limit=1
              $region33: #{generator_forward.9} parent=31 // loop_pre_header
                _
              $region34: #{generator_forward.9} parent=31 // loop_header
                %s238 = sphi 0, %s242
                %p239 = scmp.ge.s32.totalorder %s238, 1
                %s243 = sphi %s232, %s232
                %s244 = sphi %s224, %s224
              $region35: #{generator_forward.9} parent=31 // loop_header_branch
                %241 = sbr.rel (%p239) target = $region39
              $region36: #{generator_forward.9} parent=31 // loop_body
                %v245 = vld [vmem:[%s243] sm:$0xff]
                %246 = vst [vmem:[%s244] sm:$0xff] %v245
                %v247 = vld [vmem:[%s243 + $0x8] sm:$0xff]
                %248 = vst [vmem:[%s244 + $0x8] sm:$0xff] %v247
                %v249 = vld [vmem:[%s243 + $0x100] sm:$0xff]
                %250 = vst [vmem:[%s244 + $0x10] sm:$0xff] %v249
                %v251 = vld [vmem:[%s243 + $0x108] sm:$0xff]
                %252 = vst [vmem:[%s244 + $0x18] sm:$0xff] %v251
                %v253 = vld [vmem:[%s243 + $0x200] sm:$0xff]
                %254 = vst [vmem:[%s244 + $0x20] sm:$0xff] %v253
                %v255 = vld [vmem:[%s243 + $0x208] sm:$0xff]
                %256 = vst [vmem:[%s244 + $0x28] sm:$0xff] %v255
                %v257 = vld [vmem:[%s243 + $0x300] sm:$0xff]
                %258 = vst [vmem:[%s244 + $0x30] sm:$0xff] %v257
                %v259 = vld [vmem:[%s243 + $0x308] sm:$0xff]
                %260 = vst [vmem:[%s244 + $0x38] sm:$0xff] %v259
                %v261 = vld [vmem:[%s243 + $0x400] sm:$0xff]
                %262 = vst [vmem:[%s244 + $0x40] sm:$0xff] %v261
                %v263 = vld [vmem:[%s243 + $0x408] sm:$0xff]
                %264 = vst [vmem:[%s244 + $0x48] sm:$0xff] %v263
                %v265 = vld [vmem:[%s243 + $0x500] sm:$0xff]
                %266 = vst [vmem:[%s244 + $0x50] sm:$0xff] %v265
                %v267 = vld [vmem:[%s243 + $0x508] sm:$0xff]
                %268 = vst [vmem:[%s244 + $0x58] sm:$0xff] %v267
                %v269 = vld [vmem:[%s243 + $0x600] sm:$0xff]
                %270 = vst [vmem:[%s244 + $0x60] sm:$0xff] %v269
                %v271 = vld [vmem:[%s243 + $0x608] sm:$0xff]
                %272 = vst [vmem:[%s244 + $0x68] sm:$0xff] %v271
                %v273 = vld [vmem:[%s243 + $0x700] sm:$0xff]
                %274 = vst [vmem:[%s244 + $0x70] sm:$0xff] %v273
                %v275 = vld [vmem:[%s243 + $0x708] sm:$0xff]
                %276 = vst [vmem:[%s244 + $0x78] sm:$0xff] %v275
                %v277 = vld [vmem:[%s243 + $0x800] sm:$0xff]
                %278 = vst [vmem:[%s244 + $0x80] sm:$0xff] %v277
                %v279 = vld [vmem:[%s243 + $0x808] sm:$0xff]
                %280 = vst [vmem:[%s244 + $0x88] sm:$0xff] %v279
                %v281 = vld [vmem:[%s243 + $0x900] sm:$0xff]
                %282 = vst [vmem:[%s244 + $0x90] sm:$0xff] %v281
                %v283 = vld [vmem:[%s243 + $0x908] sm:$0xff]
                %284 = vst [vmem:[%s244 + $0x98] sm:$0xff] %v283
                %v285 = vld [vmem:[%s243 + $0xa00] sm:$0xff]
                %286 = vst [vmem:[%s244 + $0xa0] sm:$0xff] %v285
                %v287 = vld [vmem:[%s243 + $0xa08] sm:$0xff]
                %288 = vst [vmem:[%s244 + $0xa8] sm:$0xff] %v287
                %v289 = vld [vmem:[%s243 + $0xb00] sm:$0xff]
                %290 = vst [vmem:[%s244 + $0xb0] sm:$0xff] %v289
                %v291 = vld [vmem:[%s243 + $0xb08] sm:$0xff]
                %292 = vst [vmem:[%s244 + $0xb8] sm:$0xff] %v291
                %v293 = vld [vmem:[%s243 + $0xc00] sm:$0xff]
                %294 = vst [vmem:[%s244 + $0xc0] sm:$0xff] %v293
                %v295 = vld [vmem:[%s243 + $0xc08] sm:$0xff]
                %296 = vst [vmem:[%s244 + $0xc8] sm:$0xff] %v295
              $region37: #{generator_forward.9} parent=31 // loop_footer
                %s242 = sadd.s32 1, %s238
              $region38: #{generator_forward.9} parent=31 // loop_footer_branch
                %237 = sbr.rel target = $region34
              $region39: #{generator_forward.9} parent=31 // loop_exit
                _
            $region32: #{generator_forward.9} parent=27 // pred_fallthru
              _
            // Predicated region
            $region40: #{generator_forward.9} parent=27 // pred_check
              _
            $region41: #{generator_forward.9} parent=27 // pred_check_branch
              %298 = sbr.rel target = $region43
            $region42: #{generator_forward.9} parent=27 // pred_region
              _
            $region43: #{generator_forward.9} parent=27 // pred_fallthru
              _
          $region28: #{generator_forward.9} parent=23 // pred_fallthru
            _
          %299 = vnop
        $region24: #{generator_forward.9} parent=19 // pred_fallthru
          _
      $region20: #{generator_forward.9} parent=5 // pred_fallthru
        _
      %p300 = scmp.le.s32.totalorder 1, %s11
      %p301 = scmp.lt.s32.totalorder %s11, 17
      %p302 = pnand %p300, %p301
      %p303 = pneg %p302
      // Predicated region
      $region44: #{generator_forward.9} parent=5 // pred_check
        _
      $region45: #{generator_forward.9} parent=5 // pred_check_branch
        %305 = sbr.rel (%p302) target = $region47
      $region46: #{generator_forward.9} parent=5 // pred_region
        %s306 = ssub.s32 %s11, 1
        %s307 = sand.u32 %s84, 1
        %s308 = sand.u32 %s84, 1
        %s309 = smul.addr %s308, 208
        %s310 = scalar_lea.vmem [#allocation3], %s309
        // Predicated region
        $region48: #{generator_forward.9} parent=46 // pred_check
          %p311 = pneg %p97
        $region49: #{generator_forward.9} parent=46 // pred_check_branch
          %313 = sbr.rel (%p311) target = $region51
        $region50: #{generator_forward.9} parent=46 // pred_region
          _
        $region51: #{generator_forward.9} parent=46 // pred_fallthru
          _
        %p314 = scmp.lt.s32.totalorder %s22, 0
        %s315 = scalar_select %p314, %s22, 0
        %p316 = scmp.lt.s32.totalorder %s23, 0
        %s317 = scalar_select %p316, %s23, 0
        %p318 = scmp.lt.s32.totalorder %s25, 0
        %s319 = scalar_select %p318, %s25, 0
        %s320 = sadd.s32 %s319, %s317
        %s321 = sadd.s32 %s320, %s315
        %s322 = scalar_lea.vmem %s0, %s321
        %p323 = pneg %p67
        %p324 = pneg %p64
        %s325 = sand.u32 %s84, 1
        %s326 = sand.u32 %s84, 1
        %s327 = smul.addr %s326, 208
        %s328 = scalar_lea.vmem [#allocation3], %s327
        %p329 = pneg %p97
        %p330 = pneg %p94
        %p331 = pneg %p127
        %p332 = pneg %p124
        %s333 = smul.u32 4, %s24
        %p334 = scmp.lt.s32.totalorder %s22, 0
        %s335 = scalar_select %p334, %s22, 0
        %p336 = scmp.lt.s32.totalorder %s23, 0
        %s337 = scalar_select %p336, %s23, 0
        %p338 = scmp.lt.s32.totalorder %s333, 63
        %s339 = scalar_select %p338, %s333, 63
        %s340 = smul.addr %s337, 64
        %s341 = sadd.s32 %s339, %s340
        %s342 = smul.addr %s335, 64
        %s343 = sadd.s32 %s341, %s342
        %s344 = scalar_lea.vmem %s2, %s343
        %p345 = pneg %p157
        %p346 = pneg %p154
        %s347 = smul.u32 4, %s24
        %p348 = scmp.lt.s32.totalorder %s22, 0
        %s349 = scalar_select %p348, %s22, 0
        %p350 = scmp.lt.s32.totalorder %s23, 0
        %s351 = scalar_select %p350, %s23, 0
        %p352 = scmp.lt.s32.totalorder %s347, 63
        %s353 = scalar_select %p352, %s347, 63
        %s354 = smul.addr %s351, 64
        %s355 = sadd.s32 %s353, %s354
        %s356 = smul.addr %s349, 64
        %s357 = sadd.s32 %s355, %s356
        %s358 = smul.addr %s357, 8
        %s359 = scalar_lea.vmem %s3, %s358
        %p360 = pneg %p187
        %p361 = pneg %p184
        %s362 = smul.u32 4, %s24
        %p363 = scmp.lt.s32.totalorder %s22, 0
        %s364 = scalar_select %p363, %s22, 0
        %p365 = scmp.lt.s32.totalorder %s23, 0
        %s366 = scalar_select %p365, %s23, 0
        %p367 = scmp.lt.s32.totalorder %s362, 63
        %s368 = scalar_select %p367, %s362, 63
        %s369 = smul.addr %s366, 64
        %s370 = sadd.s32 %s368, %s369
        %s371 = smul.addr %s364, 64
        %s372 = sadd.s32 %s370, %s371
        %s373 = smul.addr %s372, 8
        %s374 = scalar_lea.vmem %s4, %s373
        %p375 = scmp.lt.s32.totalorder %s22, 0
        %s376 = scalar_select %p375, %s22, 0
        %p377 = scmp.lt.s32.totalorder %s23, 0
        %s378 = scalar_select %p377, %s23, 0
        %p379 = scmp.lt.s32.totalorder %s25, 0
        %s380 = scalar_select %p379, %s25, 0
        %s381 = sadd.s32 %s380, %s378
        %s382 = sadd.s32 %s381, %s376
        %s383 = scalar_lea.vmem %s0, %s382
        %s384 = smul.u32 13, %s25
        %s385 = smul.u32 4, %s24
        %s386 = smul.u32 4, %s24
        %p387 = scmp.lt.s32.totalorder %s22, 0
        %s388 = scalar_select %p387, %s22, 0
        %p389 = scmp.lt.s32.totalorder %s23, 0
        %s390 = scalar_select %p389, %s23, 0
        %p391 = scmp.lt.s32.totalorder %s386, 63
        %s392 = scalar_select %p391, %s386, 63
        %s393 = smul.addr %s390, 64
        %s394 = sadd.s32 %s392, %s393
        %s395 = smul.addr %s388, 64
        %s396 = sadd.s32 %s394, %s395
        %s397 = scalar_lea.vmem %s2, %s396
        %s398 = smul.u32 4, %s24
        %s399 = smul.u32 4, %s24
        %p400 = scmp.lt.s32.totalorder %s22, 0
        %s401 = scalar_select %p400, %s22, 0
        %p402 = scmp.lt.s32.totalorder %s23, 0
        %s403 = scalar_select %p402, %s23, 0
        %p404 = scmp.lt.s32.totalorder %s399, 63
        %s405 = scalar_select %p404, %s399, 63
        %s406 = smul.addr %s403, 64
        %s407 = sadd.s32 %s405, %s406
        %s408 = smul.addr %s401, 64
        %s409 = sadd.s32 %s407, %s408
        %s410 = smul.addr %s409, 8
        %s411 = scalar_lea.vmem %s3, %s410
        %s412 = smul.u32 4, %s24
        %s413 = smul.u32 4, %s24
        %p414 = scmp.lt.s32.totalorder %s22, 0
        %s415 = scalar_select %p414, %s22, 0
        %p416 = scmp.lt.s32.totalorder %s23, 0
        %s417 = scalar_select %p416, %s23, 0
        %p418 = scmp.lt.s32.totalorder %s413, 63
        %s419 = scalar_select %p418, %s413, 63
        %s420 = smul.addr %s417, 64
        %s421 = sadd.s32 %s419, %s420
        %s422 = smul.addr %s415, 64
        %s423 = sadd.s32 %s421, %s422
        %s424 = smul.addr %s423, 8
        %s425 = scalar_lea.vmem %s4, %s424
        %s426 = smul.u32 4, %s24
        %p428 = scmp.eq.s32.totalorder %s25, 0
        // Predicated region
        $region52: #{generator_forward.9} parent=46 // pred_check
          %p429 = pneg %p428
        $region53: #{generator_forward.9} parent=46 // pred_check_branch
          %431 = sbr.rel (%p429) target = $region55
        $region54: #{generator_forward.9} parent=46 // pred_region
          %432 = vst [vmem:[#allocation2] sm:$0xff] 0.0
        $region55: #{generator_forward.9} parent=46 // pred_fallthru
          _
        %v433 = vld [vmem:[#allocation2] sm:$0xff]
        %v434 = vld [vmem:[%s383] sm:$0x1]
        %v435 = vld [vmem:[%s310] sm:$0xff]
        %v436 = vld [vmem:[%s310 + $0x8] sm:$0xff]
        %v437 = vld [vmem:[%s310 + $0x10] sm:$0xff]
        %v438 = vld [vmem:[%s310 + $0x18] sm:$0xff]
        %v439 = vld [vmem:[%s310 + $0x20] sm:$0xff]
        %v440 = vld [vmem:[%s310 + $0x28] sm:$0xff]
        %v441 = vld [vmem:[%s310 + $0x30] sm:$0xff]
        %v442 = vld [vmem:[%s310 + $0x38] sm:$0xff]
        %v443 = vld [vmem:[%s310 + $0x40] sm:$0xff]
        %v444 = vld [vmem:[%s310 + $0x48] sm:$0xff]
        %v445 = vld [vmem:[%s310 + $0x50] sm:$0xff]
        %v446 = vld [vmem:[%s310 + $0x58] sm:$0xff]
        %v447 = vld [vmem:[%s310 + $0x60] sm:$0xff]
        %v448 = vld [vmem:[%s310 + $0x68] sm:$0xff]
        %v449 = vld [vmem:[%s310 + $0x70] sm:$0xff]
        %v450 = vld [vmem:[%s310 + $0x78] sm:$0xff]
        %v451 = vld [vmem:[%s310 + $0x80] sm:$0xff]
        %v452 = vld [vmem:[%s310 + $0x88] sm:$0xff]
        %v453 = vld [vmem:[%s310 + $0x90] sm:$0xff]
        %v454 = vld [vmem:[%s310 + $0x98] sm:$0xff]
        %v455 = vld [vmem:[%s310 + $0xa0] sm:$0xff]
        %v456 = vld [vmem:[%s310 + $0xa8] sm:$0xff]
        %v457 = vld [vmem:[%s310 + $0xb0] sm:$0xff]
        %v458 = vld [vmem:[%s310 + $0xb8] sm:$0xff]
        %v459 = vld [vmem:[%s310 + $0xc0] sm:$0x33]
        %v460 = vld [vmem:[%s310 + $0xc8] sm:$0x33]
        %v487 = vunpack.c.l.b16 %v435
        %v488 = vunpack.c.h.b16 %v435
        %v489 = vunpack.c.l.b16 %v436
        %v490 = vunpack.c.h.b16 %v436
        %v491 = vunpack.c.l.b16 %v437
        %v492 = vunpack.c.h.b16 %v437
        %v493 = vunpack.c.l.b16 %v438
        %v494 = vunpack.c.h.b16 %v438
        %v495 = vunpack.c.l.b16 %v439
        %v496 = vunpack.c.h.b16 %v439
        %v497 = vunpack.c.l.b16 %v440
        %v498 = vunpack.c.h.b16 %v440
        %v499 = vunpack.c.l.b16 %v441
        %v500 = vunpack.c.h.b16 %v441
        %v501 = vunpack.c.l.b16 %v442
        %v502 = vunpack.c.h.b16 %v442
        %v503 = vunpack.c.l.b16 %v443
        %v504 = vunpack.c.h.b16 %v443
        %v505 = vunpack.c.l.b16 %v444
        %v506 = vunpack.c.h.b16 %v444
        %v507 = vunpack.c.l.b16 %v445
        %v508 = vunpack.c.h.b16 %v445
        %v509 = vunpack.c.l.b16 %v446
        %v510 = vunpack.c.h.b16 %v446
        %v511 = vunpack.c.l.b16 %v447
        %v512 = vunpack.c.h.b16 %v447
        %v513 = vunpack.c.l.b16 %v448
        %v514 = vunpack.c.h.b16 %v448
        %v515 = vunpack.c.l.b16 %v449
        %v516 = vunpack.c.h.b16 %v449
        %v517 = vunpack.c.l.b16 %v450
        %v518 = vunpack.c.h.b16 %v450
        %v519 = vunpack.c.l.b16 %v451
        %v520 = vunpack.c.h.b16 %v451
        %v521 = vunpack.c.l.b16 %v452
        %v522 = vunpack.c.h.b16 %v452
        %v523 = vunpack.c.l.b16 %v453
        %v524 = vunpack.c.h.b16 %v453
        %v525 = vunpack.c.l.b16 %v454
        %v526 = vunpack.c.h.b16 %v454
        %v527 = vunpack.c.l.b16 %v455
        %v528 = vunpack.c.h.b16 %v455
        %v529 = vunpack.c.l.b16 %v456
        %v530 = vunpack.c.h.b16 %v456
        %v531 = vunpack.c.l.b16 %v457
        %v532 = vunpack.c.h.b16 %v457
        %v533 = vunpack.c.l.b16 %v458
        %v534 = vunpack.c.h.b16 %v458
        %v535 = vunpack.c.l.b16 %v459
        %v536 = vunpack.c.h.b16 %v459
        %v537 = vunpack.c.l.b16 %v460
        %v538 = vunpack.c.h.b16 %v460
        %v539 = vpack.c.b16 %v491, %v487
        %v540 = vpack.c.b16 %v492, %v488
        %v541 = vpack.c.b16 %v493, %v489
        %v542 = vpack.c.b16 %v494, %v490
        %v543 = vpack.c.b16 %v499, %v495
        %v544 = vpack.c.b16 %v500, %v496
        %v545 = vpack.c.b16 %v501, %v497
        %v546 = vpack.c.b16 %v502, %v498
        %v547 = vpack.c.b16 %v507, %v503
        %v548 = vpack.c.b16 %v508, %v504
        %v549 = vpack.c.b16 %v509, %v505
        %v550 = vpack.c.b16 %v510, %v506
        %v551 = vpack.c.b16 %v515, %v511
        %v552 = vpack.c.b16 %v516, %v512
        %v553 = vpack.c.b16 %v517, %v513
        %v554 = vpack.c.b16 %v518, %v514
        %v555 = vpack.c.b16 %v523, %v519
        %v556 = vpack.c.b16 %v524, %v520
        %v557 = vpack.c.b16 %v525, %v521
        %v558 = vpack.c.b16 %v526, %v522
        %v559 = vpack.c.b16 %v531, %v527
        %v560 = vpack.c.b16 %v532, %v528
        %v561 = vpack.c.b16 %v533, %v529
        %v562 = vpack.c.b16 %v534, %v530
        %v563 = vpack.c.b16 %v535, %v535
        %v564 = vpack.c.b16 %v536, %v536
        %v565 = vpack.c.b16 %v537, %v537
        %v566 = vpack.c.b16 %v538, %v538
        %vm591 = vcmask 818176
        %v593 = vsel %vm591, %v434, 0
        %vm595 = vcmask 1041408
        %v597 = vsel %vm595, %v563, 0
        %v600 = vsel %vm595, %v564, 0
        %v603 = vsel %vm595, %v565, 0
        %v606 = vsel %vm595, %v566, 0
        %608 = vmatprep.subr.bf16.mxu0 0
        %609 = vmatpush1.bf16.msra.mxu0 0
        %610 = vmatprep.subr.bf16.mxu0 %v600
        %611 = vmatpush1.bf16.msra.mxu0 %v597
        %612 = vmatprep.subr.bf16.mxu0 %v560
        %613 = vmatpush1.bf16.msra.mxu0 %v559
        %614 = vmatprep.subr.bf16.mxu0 %v556
        %615 = vmatpush1.bf16.msra.mxu0 %v555
        %616 = vmatprep.subr.bf16.mxu0 %v552
        %617 = vmatpush1.bf16.msra.mxu0 %v551
        %618 = vmatprep.subr.bf16.mxu0 %v548
        %619 = vmatpush1.bf16.msra.mxu0 %v547
        %620 = vmatprep.subr.bf16.mxu0 %v544
        %621 = vmatpush1.bf16.msra.mxu0 %v543
        %622 = vmatprep.subr.bf16.mxu0 %v540
        %623 = vmatpush1.bf16.msra.mxu0 %v539
        %624 = vmatprep.subr.bf16.mxu0 0
        %625 = vmatpush2.bf16.msra.mxu0 0
        %626 = vmatprep.subr.bf16.mxu0 0
        %627 = vmatpush2.bf16.msra.mxu0 0
        %628 = vmatprep.subr.bf16.mxu0 0
        %629 = vmatpush2.bf16.msra.mxu0 0
        %630 = vmatprep.subr.bf16.mxu0 0
        %631 = vmatpush2.bf16.msra.mxu0 0
        %632 = vmatprep.subr.bf16.mxu0 0
        %633 = vmatpush2.bf16.msra.mxu0 0
        %634 = vmatprep.subr.bf16.mxu0 0
        %635 = vmatpush2.bf16.msra.mxu0 0
        %636 = vmatprep.subr.bf16.mxu0 0
        %637 = vmatpush2.bf16.msra.mxu0 0
        %638 = vmatprep.subr.bf16.mxu0 0
        %639 = vmatpush2.bf16.msra.mxu0 0
        %640 = vmatprep.mubr.bf16.mxu0 0
        %641 = vmatmul.mubr.bf16.gmra.mxu0 %v593
        %v642 = vpop.f32.mrf.mxu0
        %v643 = vadd.f32 0.0, %v642
        %v644 = vpop.f32.mrf.mxu0
        %v645 = vadd.f32 0.0, %v644
        %v646 = vpop.f32.mrf.mxu0
        %v647 = vpop.f32.mrf.mxu0
        %648 = vdwg.mxu0
        %649 = vmatprep.subr.bf16.mxu0 0
        %650 = vmatpush1.bf16.msra.mxu0 0
        %651 = vmatprep.subr.bf16.mxu0 %v606
        %652 = vmatpush1.bf16.msra.mxu0 %v603
        %653 = vmatprep.subr.bf16.mxu0 %v562
        %654 = vmatpush1.bf16.msra.mxu0 %v561
        %655 = vmatprep.subr.bf16.mxu0 %v558
        %656 = vmatpush1.bf16.msra.mxu0 %v557
        %657 = vmatprep.subr.bf16.mxu0 %v554
        %658 = vmatpush1.bf16.msra.mxu0 %v553
        %659 = vmatprep.subr.bf16.mxu0 %v550
        %660 = vmatpush1.bf16.msra.mxu0 %v549
        %661 = vmatprep.subr.bf16.mxu0 %v546
        %662 = vmatpush1.bf16.msra.mxu0 %v545
        %663 = vmatprep.subr.bf16.mxu0 %v542
        %664 = vmatpush1.bf16.msra.mxu0 %v541
        %665 = vmatprep.subr.bf16.mxu0 0
        %666 = vmatpush2.bf16.msra.mxu0 0
        %667 = vmatprep.subr.bf16.mxu0 0
        %668 = vmatpush2.bf16.msra.mxu0 0
        %669 = vmatprep.subr.bf16.mxu0 0
        %670 = vmatpush2.bf16.msra.mxu0 0
        %671 = vmatprep.subr.bf16.mxu0 0
        %672 = vmatpush2.bf16.msra.mxu0 0
        %673 = vmatprep.subr.bf16.mxu0 0
        %674 = vmatpush2.bf16.msra.mxu0 0
        %675 = vmatprep.subr.bf16.mxu0 0
        %676 = vmatpush2.bf16.msra.mxu0 0
        %677 = vmatprep.subr.bf16.mxu0 0
        %678 = vmatpush2.bf16.msra.mxu0 0
        %679 = vmatprep.subr.bf16.mxu0 0
        %680 = vmatpush2.bf16.msra.mxu0 0
        %681 = vmatprep.mubr.bf16.mxu0 0
        %682 = vmatmul.mubr.bf16.gmra.mxu0 %v593
        %v683 = vpop.f32.mrf.mxu0
        %v684 = vadd.f32 0.0, %v683
        %v685 = vpop.f32.mrf.mxu0
        %v686 = vadd.f32 0.0, %v685
        %v687 = vpop.f32.mrf.mxu0
        %v688 = vpop.f32.mrf.mxu0
        %689 = vdwg.mxu0
        %v694 = vcombine.low %v643, %v645
        %v695 = vcombine.low %v684, %v686
        %v697 = vunpack.c.l.s4 1983009808
        %v698 = vunpack.c.0.s8 %v697
        %v699 = vlaneseq
        %v700 = vshrl.u32 %v699, 7
        %v701 = vsub.s32 %v698, %v700
        %v702 = vrot.slane %v694, %v701
        %v704 = vunpack.c.l.s4 1983009808
        %v705 = vunpack.c.0.s8 %v704
        %v706 = vlaneseq
        %v707 = vshrl.u32 %v706, 7
        %v708 = vsub.s32 %v705, %v707
        %v709 = vrot.slane %v695, %v708
        %v710 = vcombine.low %v702, %v709
        %v712 = vadd.f32 %v433, %v710
        %713 = vst [vmem:[#allocation2] sm:$0xff] %v712
        // Predicated region
        $region56: #{generator_forward.9} parent=46 // pred_check
          %p714 = pneg %p428
        $region57: #{generator_forward.9} parent=46 // pred_check_branch
          %716 = sbr.rel (%p714) target = $region59
        $region58: #{generator_forward.9} parent=46 // pred_region
          %v717 = vld [vmem:[#allocation2] sm:$0xff]
          %v719 = vcombine.high %v717, %v717
          %v721 = vunpack.c.l.s4 1983009808
          %v722 = vunpack.c.0.s8 %v721
          %v723 = vlaneseq
          %v724 = vshrl.u32 %v723, 7
          %v725 = vsub.s32 %v722, %v724
          %v726 = vrot.slane %v717, %v725
          %v728 = vunpack.c.l.s4 1983009808
          %v729 = vunpack.c.0.s8 %v728
          %v730 = vlaneseq
          %v731 = vshrl.u32 %v730, 7
          %v732 = vsub.s32 %v729, %v731
          %v733 = vrot.slane %v719, %v732
          %v734 = vcombine.high %v726, %v726
          %v735 = vcombine.high %v733, %v733
          %v740 = vpack.c.bf16 %v726, %v726
          %v741 = vpack.c.bf16 %v734, %v734
          %v742 = vpack.c.bf16 %v733, %v733
          %v743 = vpack.c.bf16 %v735, %v735
          %v748 = vcombine.low %v740, %v741
          %v749 = vcombine.low %v742, %v743
          %v751 = vunpack.c.l.s4 1966171168
          %v752 = vunpack.c.0.s8 %v751
          %v753 = vlaneseq
          %v754 = vshrl.u32 %v753, 7
          %v755 = vsub.s32 %v752, %v754
          %v756 = vrot.slane %v748, %v755
          %v758 = vunpack.c.l.s4 1966171168
          %v759 = vunpack.c.0.s8 %v758
          %v760 = vlaneseq
          %v761 = vshrl.u32 %v760, 7
          %v762 = vsub.s32 %v759, %v761
          %v763 = vrot.slane %v749, %v762
          %v764 = vcombine.low %v756, %v763
          %v766 = vunpack.c.l.s4 1966171168
          %v767 = vunpack.c.0.s8 %v766
          %v768 = vlaneseq
          %v769 = vshrl.u32 %v768, 7
          %v770 = vsub.s32 %v767, %v769
          %v771 = vrot.slane %v764, %v770
          %773 = vst [vmem:[%s397] sm:$0xf] %v771
          %v774 = vsel %vm595, %v726, 0.0
          %v775 = vrot.slane %v774, 4
          %v776 = vadd.f32 %v774, %v775
          %v777 = vrot.slane %v776, 2
          %v778 = vadd.f32 %v776, %v777
          %v779 = vrot.slane %v778, 1
          %v780 = vadd.f32 %v778, %v779
          %v781 = vsel %vm595, %v734, 0.0
          %v782 = vrot.slane %v781, 4
          %v783 = vadd.f32 %v781, %v782
          %v784 = vrot.slane %v783, 2
          %v785 = vadd.f32 %v783, %v784
          %v786 = vrot.slane %v785, 1
          %v787 = vadd.f32 %v785, %v786
          %v788 = vsel %vm595, %v733, 0.0
          %v789 = vrot.slane %v788, 4
          %v790 = vadd.f32 %v788, %v789
          %v791 = vrot.slane %v790, 2
          %v792 = vadd.f32 %v790, %v791
          %v793 = vrot.slane %v792, 1
          %v794 = vadd.f32 %v792, %v793
          %v795 = vsel %vm595, %v735, 0.0
          %v796 = vrot.slane %v795, 4
          %v797 = vadd.f32 %v795, %v796
          %v798 = vrot.slane %v797, 2
          %v799 = vadd.f32 %v797, %v798
          %v800 = vrot.slane %v799, 1
          %v801 = vadd.f32 %v799, %v800
          %v802 = vmul.f32 %v717, %v717
          %v804 = vcombine.high %v802, %v802
          %v806 = vunpack.c.l.s4 1983009808
          %v807 = vunpack.c.0.s8 %v806
          %v808 = vlaneseq
          %v809 = vshrl.u32 %v808, 7
          %v810 = vsub.s32 %v807, %v809
          %v811 = vrot.slane %v802, %v810
          %v813 = vunpack.c.l.s4 1983009808
          %v814 = vunpack.c.0.s8 %v813
          %v815 = vlaneseq
          %v816 = vshrl.u32 %v815, 7
          %v817 = vsub.s32 %v814, %v816
          %v818 = vrot.slane %v804, %v817
          %v819 = vcombine.high %v811, %v811
          %v820 = vcombine.high %v818, %v818
          %v825 = vsel %vm595, %v811, 0.0
          %v826 = vrot.slane %v825, 4
          %v827 = vadd.f32 %v825, %v826
          %v828 = vrot.slane %v827, 2
          %v829 = vadd.f32 %v827, %v828
          %v830 = vrot.slane %v829, 1
          %v831 = vadd.f32 %v829, %v830
          %v832 = vsel %vm595, %v819, 0.0
          %v833 = vrot.slane %v832, 4
          %v834 = vadd.f32 %v832, %v833
          %v835 = vrot.slane %v834, 2
          %v836 = vadd.f32 %v834, %v835
          %v837 = vrot.slane %v836, 1
          %v838 = vadd.f32 %v836, %v837
          %v839 = vsel %vm595, %v818, 0.0
          %v840 = vrot.slane %v839, 4
          %v841 = vadd.f32 %v839, %v840
          %v842 = vrot.slane %v841, 2
          %v843 = vadd.f32 %v841, %v842
          %v844 = vrot.slane %v843, 1
          %v845 = vadd.f32 %v843, %v844
          %v846 = vsel %vm595, %v820, 0.0
          %v847 = vrot.slane %v846, 4
          %v848 = vadd.f32 %v846, %v847
          %v849 = vrot.slane %v848, 2
          %v850 = vadd.f32 %v848, %v849
          %v851 = vrot.slane %v850, 1
          %v852 = vadd.f32 %v850, %v851
          %853 = vst [vmem:[%s411] sm:$0xff] %v780
          %854 = vst [vmem:[%s411 + $0x8] sm:$0xff] %v787
          %855 = vst [vmem:[%s411 + $0x10] sm:$0xff] %v794
          %856 = vst [vmem:[%s411 + $0x18] sm:$0xff] %v801
          %857 = vst [vmem:[%s425] sm:$0xff] %v831
          %858 = vst [vmem:[%s425 + $0x8] sm:$0xff] %v838
          %859 = vst [vmem:[%s425 + $0x10] sm:$0xff] %v845
          %860 = vst [vmem:[%s425 + $0x18] sm:$0xff] %v852
        $region59: #{generator_forward.9} parent=46 // pred_fallthru
          _
        %s861 = smul.u32 4, %s24
        %p862 = scmp.lt.s32.totalorder %s22, 0
        %s863 = scalar_select %p862, %s22, 0
        %p864 = scmp.lt.s32.totalorder %s23, 0
        %s865 = scalar_select %p864, %s23, 0
        %p866 = scmp.lt.s32.totalorder %s861, 63
        %s867 = scalar_select %p866, %s861, 63
        %s868 = smul.addr %s865, 64
        %s869 = sadd.s32 %s867, %s868
        %s870 = smul.addr %s863, 64
        %s871 = sadd.s32 %s869, %s870
        %s872 = scalar_lea.vmem %s2, %s871
        %s873 = smul.u32 4, %s24
        %p874 = scmp.lt.s32.totalorder %s22, 0
        %s875 = scalar_select %p874, %s22, 0
        %p876 = scmp.lt.s32.totalorder %s23, 0
        %s877 = scalar_select %p876, %s23, 0
        %p878 = scmp.lt.s32.totalorder %s873, 63
        %s879 = scalar_select %p878, %s873, 63
        %s880 = smul.addr %s877, 64
        %s881 = sadd.s32 %s879, %s880
        %s882 = smul.addr %s875, 64
        %s883 = sadd.s32 %s881, %s882
        %s884 = smul.addr %s883, 8
        %s885 = scalar_lea.vmem %s3, %s884
        %s886 = smul.u32 4, %s24
        %p887 = scmp.lt.s32.totalorder %s22, 0
        %s888 = scalar_select %p887, %s22, 0
        %p889 = scmp.lt.s32.totalorder %s23, 0
        %s890 = scalar_select %p889, %s23, 0
        %p891 = scmp.lt.s32.totalorder %s886, 63
        %s892 = scalar_select %p891, %s886, 63
        %s893 = smul.addr %s890, 64
        %s894 = sadd.s32 %s892, %s893
        %s895 = smul.addr %s888, 64
        %s896 = sadd.s32 %s894, %s895
        %s897 = smul.addr %s896, 8
        %s898 = scalar_lea.vmem %s4, %s897
        // Predicated region
        $region60: #{generator_forward.9} parent=46 // pred_check
          %p899 = pneg %p124
        $region61: #{generator_forward.9} parent=46 // pred_check_branch
          %901 = sbr.rel (%p899) target = $region63
        $region62: #{generator_forward.9} parent=46 // pred_region
          %s902 = smul.u32 4, %s24
        $region63: #{generator_forward.9} parent=46 // pred_fallthru
          _
        // Predicated region
        $region64: #{generator_forward.9} parent=46 // pred_check
          %p903 = pneg %p154
        $region65: #{generator_forward.9} parent=46 // pred_check_branch
          %905 = sbr.rel (%p903) target = $region67
        $region66: #{generator_forward.9} parent=46 // pred_region
          %s906 = smul.u32 4, %s24
        $region67: #{generator_forward.9} parent=46 // pred_fallthru
          _
        // Predicated region
        $region68: #{generator_forward.9} parent=46 // pred_check
          %p907 = pneg %p184
        $region69: #{generator_forward.9} parent=46 // pred_check_branch
          %909 = sbr.rel (%p907) target = $region71
        $region70: #{generator_forward.9} parent=46 // pred_region
          %s910 = smul.u32 4, %s24
        $region71: #{generator_forward.9} parent=46 // pred_fallthru
          _
      $region47: #{generator_forward.9} parent=5 // pred_fallthru
        _
      %p911 = scmp.le.s32.totalorder 2, %s11
      // Predicated region
      $region72: #{generator_forward.9} parent=5 // pred_check
        %p912 = pneg %p911
      $region73: #{generator_forward.9} parent=5 // pred_check_branch
        %914 = sbr.rel (%p912) target = $region75
      $region74: #{generator_forward.9} parent=5 // pred_region
        %s915 = ssub.s32 %s11, 2
        // Predicated region
        $region76: #{generator_forward.9} parent=74 // pred_check
          %p916 = pneg %p130
        $region77: #{generator_forward.9} parent=74 // pred_check_branch
          %918 = sbr.rel (%p916) target = $region79
        $region78: #{generator_forward.9} parent=74 // pred_region
          %s919 = smul.u32 4, %s28
          %p920 = scmp.lt.s32.totalorder %s26, 0
          %s921 = scalar_select %p920, %s26, 0
          %p922 = scmp.lt.s32.totalorder %s27, 0
          %s923 = scalar_select %p922, %s27, 0
          %p924 = scmp.lt.s32.totalorder %s919, 63
          %s925 = scalar_select %p924, %s919, 63
          %s926 = smul.addr %s923, 64
          %s927 = sadd.s32 %s925, %s926
          %s928 = smul.addr %s921, 64
          %s929 = sadd.s32 %s927, %s928
          %s930 = scalar_lea.vmem %s2, %s929
        $region79: #{generator_forward.9} parent=74 // pred_fallthru
          _
        // Predicated region
        $region80: #{generator_forward.9} parent=74 // pred_check
          %p931 = pneg %p160
        $region81: #{generator_forward.9} parent=74 // pred_check_branch
          %933 = sbr.rel (%p931) target = $region83
        $region82: #{generator_forward.9} parent=74 // pred_region
          %s934 = smul.u32 4, %s28
          %p935 = scmp.lt.s32.totalorder %s26, 0
          %s936 = scalar_select %p935, %s26, 0
          %p937 = scmp.lt.s32.totalorder %s27, 0
          %s938 = scalar_select %p937, %s27, 0
          %p939 = scmp.lt.s32.totalorder %s934, 63
          %s940 = scalar_select %p939, %s934, 63
          %s941 = smul.addr %s938, 64
          %s942 = sadd.s32 %s940, %s941
          %s943 = smul.addr %s936, 64
          %s944 = sadd.s32 %s942, %s943
          %s945 = smul.addr %s944, 8
          %s946 = scalar_lea.vmem %s3, %s945
        $region83: #{generator_forward.9} parent=74 // pred_fallthru
          _
        // Predicated region
        $region84: #{generator_forward.9} parent=74 // pred_check
          %p947 = pneg %p190
        $region85: #{generator_forward.9} parent=74 // pred_check_branch
          %949 = sbr.rel (%p947) target = $region87
        $region86: #{generator_forward.9} parent=74 // pred_region
          %s950 = smul.u32 4, %s28
          %p951 = scmp.lt.s32.totalorder %s26, 0
          %s952 = scalar_select %p951, %s26, 0
          %p953 = scmp.lt.s32.totalorder %s27, 0
          %s954 = scalar_select %p953, %s27, 0
          %p955 = scmp.lt.s32.totalorder %s950, 63
          %s956 = scalar_select %p955, %s950, 63
          %s957 = smul.addr %s954, 64
          %s958 = sadd.s32 %s956, %s957
          %s959 = smul.addr %s952, 64
          %s960 = sadd.s32 %s958, %s959
          %s961 = smul.addr %s960, 8
          %s962 = scalar_lea.vmem %s4, %s961
        $region87: #{generator_forward.9} parent=74 // pred_fallthru
          _
      $region75: #{generator_forward.9} parent=5 // pred_fallthru
        _
    $region6: #{generator_forward.9} parent=1 // loop_footer
      %s15 = sadd.s32 1, %s11
    $region7: #{generator_forward.9} parent=1 // loop_footer_branch
      %10 = sbr.rel target = $region3
    $region8: #{generator_forward.9} parent=1 // loop_exit
      _

// kernel: generator_forward.10
$region0: #{generator_forward.10}
  #allocation0 [shape = 'u32[]', space=smem, size = 0x4, offset = 0x4, fixed_abs, tag = 'smem constant byte address 0x4 - core index']
  #allocation1 [shape = 'u32[144,128]{1,0:T(1,128)}', space=vmem, size = 0x12000, scoped, tag = 'internal scratch']
  %s0 = inlined_call_operand.vmem [shape: bf16[32,512], index: 0, kind: input, shape index: {}]
  %s1 = inlined_call_operand.vmem [shape: f32[1,512], index: 1, kind: input, shape index: {}]
  %s2 = inlined_call_operand.vmem [shape: f32[1,512], index: 2, kind: input, shape index: {}]
  %s3 = inlined_call_operand.vmem [shape: bf16[32,512], index: 3, kind: output, shape index: {}]
  %s4 = sld [smem:[#allocation0]]
  $region22: #{generator_forward.10} parent=0
    _
  %s6 = ssub.s32 1, %s4
  %s7 = scalar_select 0, %s6, %s4
  // Predicated region
  $region2: #{generator_forward.10} parent=0 // pred_check
    _
  $region3: #{generator_forward.10} parent=0 // pred_check_branch
    %9 = sbr.rel (0) target = $region5
  $region4: #{generator_forward.10} parent=0 // pred_region
    _
  $region5: #{generator_forward.10} parent=0 // pred_fallthru
    _
  // Predicated region
  $region6: #{generator_forward.10} parent=0 // pred_check
    _
  $region7: #{generator_forward.10} parent=0 // pred_check_branch
    %11 = sbr.rel (0) target = $region9
  $region8: #{generator_forward.10} parent=0 // pred_region
    _
  $region9: #{generator_forward.10} parent=0 // pred_fallthru
    _
  // Predicated region
  $region10: #{generator_forward.10} parent=0 // pred_check
    _
  $region11: #{generator_forward.10} parent=0 // pred_check_branch
    %13 = sbr.rel (0) target = $region13
  $region12: #{generator_forward.10} parent=0 // pred_region
    _
  $region13: #{generator_forward.10} parent=0 // pred_fallthru
    _
  %v14 = vld [vmem:[%s0] sm:$0xff]
  %v15 = vld [vmem:[%s0 + $0x8] sm:$0xff]
  %v16 = vld [vmem:[%s0 + $0x10] sm:$0xff]
  %v17 = vld [vmem:[%s0 + $0x18] sm:$0xff]
  %v18 = vld [vmem:[%s0 + $0x20] sm:$0xff]
  %v19 = vld [vmem:[%s0 + $0x28] sm:$0xff]
  %v20 = vld [vmem:[%s0 + $0x30] sm:$0xff]
  %v21 = vld [vmem:[%s0 + $0x38] sm:$0xff]
  %v22 = vunpack.c.l.bf16 %v14
  %v23 = vunpack.c.h.bf16 %v14
  %v24 = vunpack.c.l.bf16 %v15
  %v25 = vunpack.c.h.bf16 %v15
  %v26 = vunpack.c.l.bf16 %v16
  %v27 = vunpack.c.h.bf16 %v16
  %v28 = vunpack.c.l.bf16 %v17
  %v29 = vunpack.c.h.bf16 %v17
  %v30 = vunpack.c.l.bf16 %v18
  %v31 = vunpack.c.h.bf16 %v18
  %v32 = vunpack.c.l.bf16 %v19
  %v33 = vunpack.c.h.bf16 %v19
  %v34 = vunpack.c.l.bf16 %v20
  %v35 = vunpack.c.h.bf16 %v20
  %v36 = vunpack.c.l.bf16 %v21
  %v37 = vunpack.c.h.bf16 %v21
  %v38 = vld [vmem:[%s1] sm:$0xf]
  %v40 = vlaneseq
  %v41 = vshrl.u32 %v40, 7
  %v42 = vsub.s32 0, %v41
  %v43 = vrot.slane %v38, %v42
  %v44 = vlaneseq
  %v45 = vshrl.u32 %v44, 7
  %v46 = vsub.s32 1, %v45
  %v47 = vrot.slane %v38, %v46
  %v48 = vlaneseq
  %v49 = vshrl.u32 %v48, 7
  %v50 = vsub.s32 2, %v49
  %v51 = vrot.slane %v38, %v50
  %v52 = vlaneseq
  %v53 = vshrl.u32 %v52, 7
  %v54 = vsub.s32 3, %v53
  %v55 = vrot.slane %v38, %v54
  %v60 = vmul.f32 %v22, %v43
  %v61 = vmul.f32 %v23, %v47
  %v62 = vmul.f32 %v24, %v51
  %v63 = vmul.f32 %v25, %v55
  %v64 = vmul.f32 %v26, %v43
  %v65 = vmul.f32 %v27, %v47
  %v66 = vmul.f32 %v28, %v51
  %v67 = vmul.f32 %v29, %v55
  %v68 = vmul.f32 %v30, %v43
  %v69 = vmul.f32 %v31, %v47
  %v70 = vmul.f32 %v32, %v51
  %v71 = vmul.f32 %v33, %v55
  %v72 = vmul.f32 %v34, %v43
  %v73 = vmul.f32 %v35, %v47
  %v74 = vmul.f32 %v36, %v51
  %v75 = vmul.f32 %v37, %v55
  %v76 = vld [vmem:[%s2] sm:$0xf]
  %v78 = vlaneseq
  %v79 = vshrl.u32 %v78, 7
  %v80 = vsub.s32 0, %v79
  %v81 = vrot.slane %v76, %v80
  %v82 = vlaneseq
  %v83 = vshrl.u32 %v82, 7
  %v84 = vsub.s32 1, %v83
  %v85 = vrot.slane %v76, %v84
  %v86 = vlaneseq
  %v87 = vshrl.u32 %v86, 7
  %v88 = vsub.s32 2, %v87
  %v89 = vrot.slane %v76, %v88
  %v90 = vlaneseq
  %v91 = vshrl.u32 %v90, 7
  %v92 = vsub.s32 3, %v91
  %v93 = vrot.slane %v76, %v92
  %v98 = vadd.f32 %v60, %v81
  %v99 = vadd.f32 %v61, %v85
  %v100 = vadd.f32 %v62, %v89
  %v101 = vadd.f32 %v63, %v93
  %v102 = vadd.f32 %v64, %v81
  %v103 = vadd.f32 %v65, %v85
  %v104 = vadd.f32 %v66, %v89
  %v105 = vadd.f32 %v67, %v93
  %v106 = vadd.f32 %v68, %v81
  %v107 = vadd.f32 %v69, %v85
  %v108 = vadd.f32 %v70, %v89
  %v109 = vadd.f32 %v71, %v93
  %v110 = vadd.f32 %v72, %v81
  %v111 = vadd.f32 %v73, %v85
  %v112 = vadd.f32 %v74, %v89
  %v113 = vadd.f32 %v75, %v93
  %v114 = vmax.f32 %v98, 0.0
  %v115 = vmax.f32 %v99, 0.0
  %v116 = vmax.f32 %v100, 0.0
  %v117 = vmax.f32 %v101, 0.0
  %v118 = vmax.f32 %v102, 0.0
  %v119 = vmax.f32 %v103, 0.0
  %v120 = vmax.f32 %v104, 0.0
  %v121 = vmax.f32 %v105, 0.0
  %v122 = vmax.f32 %v106, 0.0
  %v123 = vmax.f32 %v107, 0.0
  %v124 = vmax.f32 %v108, 0.0
  %v125 = vmax.f32 %v109, 0.0
  %v126 = vmax.f32 %v110, 0.0
  %v127 = vmax.f32 %v111, 0.0
  %v128 = vmax.f32 %v112, 0.0
  %v129 = vmax.f32 %v113, 0.0
  %v130 = vpack.c.bf16 %v118, %v114
  %v131 = vpack.c.bf16 %v119, %v115
  %v132 = vpack.c.bf16 %v120, %v116
  %v133 = vpack.c.bf16 %v121, %v117
  %v134 = vpack.c.bf16 %v126, %v122
  %v135 = vpack.c.bf16 %v127, %v123
  %v136 = vpack.c.bf16 %v128, %v124
  %v137 = vpack.c.bf16 %v129, %v125
  %v146 = vunpack.c.l.b16 %v130
  %v147 = vunpack.c.l.b16 %v131
  %v148 = vunpack.c.l.b16 %v132
  %v149 = vunpack.c.l.b16 %v133
  %v150 = vunpack.c.h.b16 %v130
  %v151 = vunpack.c.h.b16 %v131
  %v152 = vunpack.c.h.b16 %v132
  %v153 = vunpack.c.h.b16 %v133
  %v154 = vunpack.c.l.b16 %v134
  %v155 = vunpack.c.l.b16 %v135
  %v156 = vunpack.c.l.b16 %v136
  %v157 = vunpack.c.l.b16 %v137
  %v158 = vunpack.c.h.b16 %v134
  %v159 = vunpack.c.h.b16 %v135
  %v160 = vunpack.c.h.b16 %v136
  %v161 = vunpack.c.h.b16 %v137
  %v162 = vpack.c.b16 %v147, %v146
  %v163 = vpack.c.b16 %v149, %v148
  %v164 = vpack.c.b16 %v151, %v150
  %v165 = vpack.c.b16 %v153, %v152
  %v166 = vpack.c.b16 %v155, %v154
  %v167 = vpack.c.b16 %v157, %v156
  %v168 = vpack.c.b16 %v159, %v158
  %v169 = vpack.c.b16 %v161, %v160
  %178 = vst [vmem:[%s3] sm:$0xff] %v162
  %179 = vst [vmem:[%s3 + $0x8] sm:$0xff] %v163
  %180 = vst [vmem:[%s3 + $0x10] sm:$0xff] %v164
  %181 = vst [vmem:[%s3 + $0x18] sm:$0xff] %v165
  %182 = vst [vmem:[%s3 + $0x20] sm:$0xff] %v166
  %183 = vst [vmem:[%s3 + $0x28] sm:$0xff] %v167
  %184 = vst [vmem:[%s3 + $0x30] sm:$0xff] %v168
  %185 = vst [vmem:[%s3 + $0x38] sm:$0xff] %v169
  // Predicated region
  $region14: #{generator_forward.10} parent=0 // pred_check
    _
  $region15: #{generator_forward.10} parent=0 // pred_check_branch
    %187 = sbr.rel (0) target = $region17
  $region16: #{generator_forward.10} parent=0 // pred_region
    _
  $region17: #{generator_forward.10} parent=0 // pred_fallthru
    _
  // Predicated region
  $region18: #{generator_forward.10} parent=0 // pred_check
    _
  $region19: #{generator_forward.10} parent=0 // pred_check_branch
    %189 = sbr.rel (0) target = $region21
  $region20: #{generator_forward.10} parent=0 // pred_region
    _
  $region21: #{generator_forward.10} parent=0 // pred_fallthru
    _

// kernel: generator_forward.12
$region0: #{generator_forward.12}
  #allocation0 [shape = 'u32[]', space=smem, size = 0x4, offset = 0x4, fixed_abs, tag = 'smem constant byte address 0x4 - core index']
  #allocation1 [shape = 'u32[144,128]{1,0:T(1,128)}', space=vmem, size = 0x12000, scoped, tag = 'internal scratch']
  %s0 = inlined_call_operand.vmem [shape: bf16[128,256], index: 0, kind: input, shape index: {}]
  %s1 = inlined_call_operand.vmem [shape: f32[1,256], index: 1, kind: input, shape index: {}]
  %s2 = inlined_call_operand.vmem [shape: f32[1,256], index: 2, kind: input, shape index: {}]
  %s3 = inlined_call_operand.vmem [shape: bf16[128,256], index: 3, kind: output, shape index: {}]
  %s4 = sld [smem:[#allocation0]]
  $region22: #{generator_forward.12} parent=0
    _
  %s6 = ssub.s32 1, %s4
  %s7 = scalar_select 0, %s6, %s4
  // Predicated region
  $region2: #{generator_forward.12} parent=0 // pred_check
    _
  $region3: #{generator_forward.12} parent=0 // pred_check_branch
    %9 = sbr.rel (0) target = $region5
  $region4: #{generator_forward.12} parent=0 // pred_region
    _
  $region5: #{generator_forward.12} parent=0 // pred_fallthru
    _
  // Predicated region
  $region6: #{generator_forward.12} parent=0 // pred_check
    _
  $region7: #{generator_forward.12} parent=0 // pred_check_branch
    %11 = sbr.rel (0) target = $region9
  $region8: #{generator_forward.12} parent=0 // pred_region
    _
  $region9: #{generator_forward.12} parent=0 // pred_fallthru
    _
  // Predicated region
  $region10: #{generator_forward.12} parent=0 // pred_check
    _
  $region11: #{generator_forward.12} parent=0 // pred_check_branch
    %13 = sbr.rel (0) target = $region13
  $region12: #{generator_forward.12} parent=0 // pred_region
    _
  $region13: #{generator_forward.12} parent=0 // pred_fallthru
    _
  %v14 = vld [vmem:[%s0] sm:$0xff]
  %v15 = vld [vmem:[%s0 + $0x8] sm:$0xff]
  %v16 = vld [vmem:[%s0 + $0x10] sm:$0xff]
  %v17 = vld [vmem:[%s0 + $0x18] sm:$0xff]
  %v18 = vld [vmem:[%s0 + $0x20] sm:$0xff]
  %v19 = vld [vmem:[%s0 + $0x28] sm:$0xff]
  %v20 = vld [vmem:[%s0 + $0x30] sm:$0xff]
  %v21 = vld [vmem:[%s0 + $0x38] sm:$0xff]
  %v22 = vld [vmem:[%s0 + $0x40] sm:$0xff]
  %v23 = vld [vmem:[%s0 + $0x48] sm:$0xff]
  %v24 = vld [vmem:[%s0 + $0x50] sm:$0xff]
  %v25 = vld [vmem:[%s0 + $0x58] sm:$0xff]
  %v26 = vld [vmem:[%s0 + $0x60] sm:$0xff]
  %v27 = vld [vmem:[%s0 + $0x68] sm:$0xff]
  %v28 = vld [vmem:[%s0 + $0x70] sm:$0xff]
  %v29 = vld [vmem:[%s0 + $0x78] sm:$0xff]
  %v30 = vunpack.c.l.bf16 %v14
  %v31 = vunpack.c.h.bf16 %v14
  %v32 = vunpack.c.l.bf16 %v15
  %v33 = vunpack.c.h.bf16 %v15
  %v34 = vunpack.c.l.bf16 %v16
  %v35 = vunpack.c.h.bf16 %v16
  %v36 = vunpack.c.l.bf16 %v17
  %v37 = vunpack.c.h.bf16 %v17
  %v38 = vunpack.c.l.bf16 %v18
  %v39 = vunpack.c.h.bf16 %v18
  %v40 = vunpack.c.l.bf16 %v19
  %v41 = vunpack.c.h.bf16 %v19
  %v42 = vunpack.c.l.bf16 %v20
  %v43 = vunpack.c.h.bf16 %v20
  %v44 = vunpack.c.l.bf16 %v21
  %v45 = vunpack.c.h.bf16 %v21
  %v46 = vunpack.c.l.bf16 %v22
  %v47 = vunpack.c.h.bf16 %v22
  %v48 = vunpack.c.l.bf16 %v23
  %v49 = vunpack.c.h.bf16 %v23
  %v50 = vunpack.c.l.bf16 %v24
  %v51 = vunpack.c.h.bf16 %v24
  %v52 = vunpack.c.l.bf16 %v25
  %v53 = vunpack.c.h.bf16 %v25
  %v54 = vunpack.c.l.bf16 %v26
  %v55 = vunpack.c.h.bf16 %v26
  %v56 = vunpack.c.l.bf16 %v27
  %v57 = vunpack.c.h.bf16 %v27
  %v58 = vunpack.c.l.bf16 %v28
  %v59 = vunpack.c.h.bf16 %v28
  %v60 = vunpack.c.l.bf16 %v29
  %v61 = vunpack.c.h.bf16 %v29
  %v62 = vld [vmem:[%s1] sm:$0x3]
  %v64 = vlaneseq
  %v65 = vshrl.u32 %v64, 7
  %v66 = vsub.s32 0, %v65
  %v67 = vrot.slane %v62, %v66
  %v68 = vlaneseq
  %v69 = vshrl.u32 %v68, 7
  %v70 = vsub.s32 1, %v69
  %v71 = vrot.slane %v62, %v70
  %v74 = vmul.f32 %v30, %v67
  %v75 = vmul.f32 %v31, %v71
  %v76 = vmul.f32 %v32, %v67
  %v77 = vmul.f32 %v33, %v71
  %v78 = vmul.f32 %v34, %v67
  %v79 = vmul.f32 %v35, %v71
  %v80 = vmul.f32 %v36, %v67
  %v81 = vmul.f32 %v37, %v71
  %v82 = vmul.f32 %v38, %v67
  %v83 = vmul.f32 %v39, %v71
  %v84 = vmul.f32 %v40, %v67
  %v85 = vmul.f32 %v41, %v71
  %v86 = vmul.f32 %v42, %v67
  %v87 = vmul.f32 %v43, %v71
  %v88 = vmul.f32 %v44, %v67
  %v89 = vmul.f32 %v45, %v71
  %v90 = vmul.f32 %v46, %v67
  %v91 = vmul.f32 %v47, %v71
  %v92 = vmul.f32 %v48, %v67
  %v93 = vmul.f32 %v49, %v71
  %v94 = vmul.f32 %v50, %v67
  %v95 = vmul.f32 %v51, %v71
  %v96 = vmul.f32 %v52, %v67
  %v97 = vmul.f32 %v53, %v71
  %v98 = vmul.f32 %v54, %v67
  %v99 = vmul.f32 %v55, %v71
  %v100 = vmul.f32 %v56, %v67
  %v101 = vmul.f32 %v57, %v71
  %v102 = vmul.f32 %v58, %v67
  %v103 = vmul.f32 %v59, %v71
  %v104 = vmul.f32 %v60, %v67
  %v105 = vmul.f32 %v61, %v71
  %v106 = vld [vmem:[%s2] sm:$0x3]
  %v108 = vlaneseq
  %v109 = vshrl.u32 %v108, 7
  %v110 = vsub.s32 0, %v109
  %v111 = vrot.slane %v106, %v110
  %v112 = vlaneseq
  %v113 = vshrl.u32 %v112, 7
  %v114 = vsub.s32 1, %v113
  %v115 = vrot.slane %v106, %v114
  %v118 = vadd.f32 %v74, %v111
  %v119 = vadd.f32 %v75, %v115
  %v120 = vadd.f32 %v76, %v111
  %v121 = vadd.f32 %v77, %v115
  %v122 = vadd.f32 %v78, %v111
  %v123 = vadd.f32 %v79, %v115
  %v124 = vadd.f32 %v80, %v111
  %v125 = vadd.f32 %v81, %v115
  %v126 = vadd.f32 %v82, %v111
  %v127 = vadd.f32 %v83, %v115
  %v128 = vadd.f32 %v84, %v111
  %v129 = vadd.f32 %v85, %v115
  %v130 = vadd.f32 %v86, %v111
  %v131 = vadd.f32 %v87, %v115
  %v132 = vadd.f32 %v88, %v111
  %v133 = vadd.f32 %v89, %v115
  %v134 = vadd.f32 %v90, %v111
  %v135 = vadd.f32 %v91, %v115
  %v136 = vadd.f32 %v92, %v111
  %v137 = vadd.f32 %v93, %v115
  %v138 = vadd.f32 %v94, %v111
  %v139 = vadd.f32 %v95, %v115
  %v140 = vadd.f32 %v96, %v111
  %v141 = vadd.f32 %v97, %v115
  %v142 = vadd.f32 %v98, %v111
  %v143 = vadd.f32 %v99, %v115
  %v144 = vadd.f32 %v100, %v111
  %v145 = vadd.f32 %v101, %v115
  %v146 = vadd.f32 %v102, %v111
  %v147 = vadd.f32 %v103, %v115
  %v148 = vadd.f32 %v104, %v111
  %v149 = vadd.f32 %v105, %v115
  %v150 = vmax.f32 %v118, 0.0
  %v151 = vmax.f32 %v119, 0.0
  %v152 = vmax.f32 %v120, 0.0
  %v153 = vmax.f32 %v121, 0.0
  %v154 = vmax.f32 %v122, 0.0
  %v155 = vmax.f32 %v123, 0.0
  %v156 = vmax.f32 %v124, 0.0
  %v157 = vmax.f32 %v125, 0.0
  %v158 = vmax.f32 %v126, 0.0
  %v159 = vmax.f32 %v127, 0.0
  %v160 = vmax.f32 %v128, 0.0
  %v161 = vmax.f32 %v129, 0.0
  %v162 = vmax.f32 %v130, 0.0
  %v163 = vmax.f32 %v131, 0.0
  %v164 = vmax.f32 %v132, 0.0
  %v165 = vmax.f32 %v133, 0.0
  %v166 = vmax.f32 %v134, 0.0
  %v167 = vmax.f32 %v135, 0.0
  %v168 = vmax.f32 %v136, 0.0
  %v169 = vmax.f32 %v137, 0.0
  %v170 = vmax.f32 %v138, 0.0
  %v171 = vmax.f32 %v139, 0.0
  %v172 = vmax.f32 %v140, 0.0
  %v173 = vmax.f32 %v141, 0.0
  %v174 = vmax.f32 %v142, 0.0
  %v175 = vmax.f32 %v143, 0.0
  %v176 = vmax.f32 %v144, 0.0
  %v177 = vmax.f32 %v145, 0.0
  %v178 = vmax.f32 %v146, 0.0
  %v179 = vmax.f32 %v147, 0.0
  %v180 = vmax.f32 %v148, 0.0
  %v181 = vmax.f32 %v149, 0.0
  %v182 = vpack.c.bf16 %v152, %v150
  %v183 = vpack.c.bf16 %v153, %v151
  %v184 = vpack.c.bf16 %v156, %v154
  %v185 = vpack.c.bf16 %v157, %v155
  %v186 = vpack.c.bf16 %v160, %v158
  %v187 = vpack.c.bf16 %v161, %v159
  %v188 = vpack.c.bf16 %v164, %v162
  %v189 = vpack.c.bf16 %v165, %v163
  %v190 = vpack.c.bf16 %v168, %v166
  %v191 = vpack.c.bf16 %v169, %v167
  %v192 = vpack.c.bf16 %v172, %v170
  %v193 = vpack.c.bf16 %v173, %v171
  %v194 = vpack.c.bf16 %v176, %v174
  %v195 = vpack.c.bf16 %v177, %v175
  %v196 = vpack.c.bf16 %v180, %v178
  %v197 = vpack.c.bf16 %v181, %v179
  %v214 = vunpack.c.l.b16 %v182
  %v215 = vunpack.c.l.b16 %v183
  %v216 = vunpack.c.h.b16 %v182
  %v217 = vunpack.c.h.b16 %v183
  %v218 = vunpack.c.l.b16 %v184
  %v219 = vunpack.c.l.b16 %v185
  %v220 = vunpack.c.h.b16 %v184
  %v221 = vunpack.c.h.b16 %v185
  %v222 = vunpack.c.l.b16 %v186
  %v223 = vunpack.c.l.b16 %v187
  %v224 = vunpack.c.h.b16 %v186
  %v225 = vunpack.c.h.b16 %v187
  %v226 = vunpack.c.l.b16 %v188
  %v227 = vunpack.c.l.b16 %v189
  %v228 = vunpack.c.h.b16 %v188
  %v229 = vunpack.c.h.b16 %v189
  %v230 = vunpack.c.l.b16 %v190
  %v231 = vunpack.c.l.b16 %v191
  %v232 = vunpack.c.h.b16 %v190
  %v233 = vunpack.c.h.b16 %v191
  %v234 = vunpack.c.l.b16 %v192
  %v235 = vunpack.c.l.b16 %v193
  %v236 = vunpack.c.h.b16 %v192
  %v237 = vunpack.c.h.b16 %v193
  %v238 = vunpack.c.l.b16 %v194
  %v239 = vunpack.c.l.b16 %v195
  %v240 = vunpack.c.h.b16 %v194
  %v241 = vunpack.c.h.b16 %v195
  %v242 = vunpack.c.l.b16 %v196
  %v243 = vunpack.c.l.b16 %v197
  %v244 = vunpack.c.h.b16 %v196
  %v245 = vunpack.c.h.b16 %v197
  %v246 = vpack.c.b16 %v215, %v214
  %v247 = vpack.c.b16 %v217, %v216
  %v248 = vpack.c.b16 %v219, %v218
  %v249 = vpack.c.b16 %v221, %v220
  %v250 = vpack.c.b16 %v223, %v222
  %v251 = vpack.c.b16 %v225, %v224
  %v252 = vpack.c.b16 %v227, %v226
  %v253 = vpack.c.b16 %v229, %v228
  %v254 = vpack.c.b16 %v231, %v230
  %v255 = vpack.c.b16 %v233, %v232
  %v256 = vpack.c.b16 %v235, %v234
  %v257 = vpack.c.b16 %v237, %v236
  %v258 = vpack.c.b16 %v239, %v238
  %v259 = vpack.c.b16 %v241, %v240
  %v260 = vpack.c.b16 %v243, %v242
  %v261 = vpack.c.b16 %v245, %v244
  %278 = vst [vmem:[%s3] sm:$0xff] %v246
  %279 = vst [vmem:[%s3 + $0x8] sm:$0xff] %v247
  %280 = vst [vmem:[%s3 + $0x10] sm:$0xff] %v248
  %281 = vst [vmem:[%s3 + $0x18] sm:$0xff] %v249
  %282 = vst [vmem:[%s3 + $0x20] sm:$0xff] %v250
  %283 = vst [vmem:[%s3 + $0x28] sm:$0xff] %v251
  %284 = vst [vmem:[%s3 + $0x30] sm:$0xff] %v252
  %285 = vst [vmem:[%s3 + $0x38] sm:$0xff] %v253
  %286 = vst [vmem:[%s3 + $0x40] sm:$0xff] %v254
  %287 = vst [vmem:[%s3 + $0x48] sm:$0xff] %v255
  %288 = vst [vmem:[%s3 + $0x50] sm:$0xff] %v256
  %289 = vst [vmem:[%s3 + $0x58] sm:$0xff] %v257
  %290 = vst [vmem:[%s3 + $0x60] sm:$0xff] %v258
  %291 = vst [vmem:[%s3 + $0x68] sm:$0xff] %v259
  %292 = vst [vmem:[%s3 + $0x70] sm:$0xff] %v260
  %293 = vst [vmem:[%s3 + $0x78] sm:$0xff] %v261
  // Predicated region
  $region14: #{generator_forward.12} parent=0 // pred_check
    _
  $region15: #{generator_forward.12} parent=0 // pred_check_branch
    %295 = sbr.rel (0) target = $region17
  $region16: #{generator_forward.12} parent=0 // pred_region
    _
  $region17: #{generator_forward.12} parent=0 // pred_fallthru
    _
  // Predicated region
  $region18: #{generator_forward.12} parent=0 // pred_check
    _
  $region19: #{generator_forward.12} parent=0 // pred_check_branch
    %297 = sbr.rel (0) target = $region21
  $region20: #{generator_forward.12} parent=0 // pred_region
    _
  $region21: #{generator_forward.12} parent=0 // pred_fallthru
    _

// kernel: generator_forward.11
$region0: #{generator_forward.11}
  #allocation0 [shape = 'u32[]', space=smem, size = 0x4, offset = 0x4, fixed_abs, tag = 'smem constant byte address 0x4 - core index']
  #allocation1 [shape = 'u32[144,128]{1,0:T(1,128)}', space=vmem, size = 0x12000, scoped, tag = 'internal scratch']
  #allocation2 [shape = 'f32[32,256]{1,0:T(8,128)}', space=vmem, size = 0x8000, scoped, tag = 'scratch operand']
  %s0 = inlined_call_operand.vmem [shape: bf16[4,32,2048], index: 0, kind: input, shape index: {}]
  %s1 = inlined_call_operand.vmem [shape: bf16[4,2048,256], index: 1, kind: input, shape index: {}]
  %s2 = inlined_call_operand.vmem [shape: bf16[4,32,256], index: 2, kind: output, shape index: {0}]
  %s3 = inlined_call_operand.vmem [shape: f32[4,8,256], index: 3, kind: output, shape index: {1}]
  %s4 = inlined_call_operand.vmem [shape: f32[4,8,256], index: 4, kind: output, shape index: {2}]
  %5 = xla_tuple %s2, %s3, %s4
  %s6 = sld [smem:[#allocation0]]
  $region65: #{generator_forward.11} parent=0
    _
  %s8 = ssub.s32 1, %s6
  %s9 = scalar_select 0, %s8, %s6
  loop: start=0, step=1, limit=6
  $region2: #{generator_forward.11} parent=0 // loop_pre_header
    _
  $region3: #{generator_forward.11} parent=0 // loop_header
    %s11 = sphi 0, %s15
    %p12 = scmp.ge.s32.totalorder %s11, 6
    %s18 = sphi 0, %s44
    %s19 = sphi 0, %s40
    %s20 = sphi 0, %s36
    %s21 = sphi 0, %s32
    %s22 = sphi 0, %s18
    %s23 = sphi 0, %s19
    %s24 = sphi 0, %s20
    %s25 = sphi 0, %s21
    %s26 = sphi 0, %s22
    %s27 = sphi 0, %s23
    %s28 = sphi 0, %s24
    %s29 = sphi 0, %s25
    %s51 = sphi 0, %s53
    %s54 = sphi 0, %s51
    %s55 = sphi 0, %s54
    %s71 = sphi 0, %s55
    %s81 = sphi 0, %s83
    %s84 = sphi 0, %s81
    %s85 = sphi 0, %s84
    %s101 = sphi 0, %s85
    %s111 = sphi 0, %s113
    %s114 = sphi 0, %s111
    %s115 = sphi 0, %s114
    %s131 = sphi 0, %s115
    %s141 = sphi 0, %s143
    %s144 = sphi 0, %s141
    %s145 = sphi 0, %s144
    %s161 = sphi 0, %s145
    %s171 = sphi 0, %s173
    %s174 = sphi 0, %s171
    %s175 = sphi 0, %s174
    %s191 = sphi 0, %s175
  $region4: #{generator_forward.11} parent=0 // loop_header_branch
    %14 = sbr.rel (%p12) target = $region8
  $region5: #{generator_forward.11} parent=0 // loop_body
    %s16 = ssub.s32 %s11, 1
    %s17 = ssub.s32 %s11, 2
    %s30 = sadd.s32 1, %s21
    %p31 = scmp.ge.s32.totalorder %s30, 1
    %s32 = scalar_select %p31, 0, %s30
    %s33 = sadd.s32 1, %s20
    %s34 = scalar_select %p31, %s33, %s20
    %p35 = scmp.ge.s32.totalorder %s34, 1
    %s36 = scalar_select %p35, 0, %s34
    %s37 = sadd.s32 1, %s19
    %s38 = scalar_select %p35, %s37, %s19
    %p39 = scmp.ge.s32.totalorder %s38, 1
    %s40 = scalar_select %p39, 0, %s38
    %s41 = sadd.s32 1, %s18
    %s42 = scalar_select %p39, %s41, %s18
    %p43 = scmp.ge.s32.totalorder %s42, 4
    %s44 = scalar_select %p43, 0, %s42
    %s45 = ssub.s32 %s18, %s44
    %s46 = ssub.s32 %s19, %s40
    %s47 = sor.u32 %s45, %s46
    %s48 = ssub.s32 %s21, %s32
    %s49 = sor.u32 %s47, %s48
    %p50 = scmp.eq.s32.totalorder %s49, 0
    %s52 = sadd.s32 %s51, 1
    %s53 = scalar_select %p50, %s51, %s52
    %p56 = pneg %p50
    %p57 = scmp.eq.s32.totalorder %s11, 3
    %p58 = por %p56, %p57
    %p59 = scmp.ne.s32.totalorder %s51, %s54
    %p60 = scmp.eq.s32.totalorder %s11, 0
    %p61 = por %p59, %p60
    %p62 = scmp.ne.s32.totalorder %s51, %s54
    %p63 = scmp.eq.s32.totalorder %s16, 3
    %p64 = por %p62, %p63
    %p65 = scmp.ne.s32.totalorder %s54, %s55
    %p66 = scmp.eq.s32.totalorder %s16, 0
    %p67 = por %p65, %p66
    %p68 = scmp.ne.s32.totalorder %s54, %s55
    %p69 = scmp.eq.s32.totalorder %s17, 3
    %p70 = por %p68, %p69
    %p72 = scmp.ne.s32.totalorder %s55, %s71
    %p73 = scmp.eq.s32.totalorder %s17, 0
    %p74 = por %p72, %p73
    %s75 = ssub.s32 %s18, %s44
    %s76 = ssub.s32 %s21, %s32
    %s77 = sor.u32 %s75, %s76
    %s78 = ssub.s32 %s20, %s36
    %s79 = sor.u32 %s77, %s78
    %p80 = scmp.eq.s32.totalorder %s79, 0
    %s82 = sadd.s32 %s81, 1
    %s83 = scalar_select %p80, %s81, %s82
    %p86 = pneg %p80
    %p87 = scmp.eq.s32.totalorder %s11, 3
    %p88 = por %p86, %p87
    %p89 = scmp.ne.s32.totalorder %s81, %s84
    %p90 = scmp.eq.s32.totalorder %s11, 0
    %p91 = por %p89, %p90
    %p92 = scmp.ne.s32.totalorder %s81, %s84
    %p93 = scmp.eq.s32.totalorder %s16, 3
    %p94 = por %p92, %p93
    %p95 = scmp.ne.s32.totalorder %s84, %s85
    %p96 = scmp.eq.s32.totalorder %s16, 0
    %p97 = por %p95, %p96
    %p98 = scmp.ne.s32.totalorder %s84, %s85
    %p99 = scmp.eq.s32.totalorder %s17, 3
    %p100 = por %p98, %p99
    %p102 = scmp.ne.s32.totalorder %s85, %s101
    %p103 = scmp.eq.s32.totalorder %s17, 0
    %p104 = por %p102, %p103
    %s105 = ssub.s32 %s18, %s44
    %s106 = ssub.s32 %s19, %s40
    %s107 = sor.u32 %s105, %s106
    %s108 = ssub.s32 %s20, %s36
    %s109 = sor.u32 %s107, %s108
    %p110 = scmp.eq.s32.totalorder %s109, 0
    %s112 = sadd.s32 %s111, 1
    %s113 = scalar_select %p110, %s111, %s112
    %p116 = pneg %p110
    %p117 = scmp.eq.s32.totalorder %s11, 3
    %p118 = por %p116, %p117
    %p119 = scmp.ne.s32.totalorder %s111, %s114
    %p120 = scmp.eq.s32.totalorder %s11, 0
    %p121 = por %p119, %p120
    %p122 = scmp.ne.s32.totalorder %s111, %s114
    %p123 = scmp.eq.s32.totalorder %s16, 3
    %p124 = por %p122, %p123
    %p125 = scmp.ne.s32.totalorder %s114, %s115
    %p126 = scmp.eq.s32.totalorder %s16, 0
    %p127 = por %p125, %p126
    %p128 = scmp.ne.s32.totalorder %s114, %s115
    %p129 = scmp.eq.s32.totalorder %s17, 3
    %p130 = por %p128, %p129
    %p132 = scmp.ne.s32.totalorder %s115, %s131
    %p133 = scmp.eq.s32.totalorder %s17, 0
    %p134 = por %p132, %p133
    %s135 = ssub.s32 %s18, %s44
    %s136 = ssub.s32 %s19, %s40
    %s137 = sor.u32 %s135, %s136
    %s138 = ssub.s32 %s20, %s36
    %s139 = sor.u32 %s137, %s138
    %p140 = scmp.eq.s32.totalorder %s139, 0
    %s142 = sadd.s32 %s141, 1
    %s143 = scalar_select %p140, %s141, %s142
    %p146 = pneg %p140
    %p147 = scmp.eq.s32.totalorder %s11, 3
    %p148 = por %p146, %p147
    %p149 = scmp.ne.s32.totalorder %s141, %s144
    %p150 = scmp.eq.s32.totalorder %s11, 0
    %p151 = por %p149, %p150
    %p152 = scmp.ne.s32.totalorder %s141, %s144
    %p153 = scmp.eq.s32.totalorder %s16, 3
    %p154 = por %p152, %p153
    %p155 = scmp.ne.s32.totalorder %s144, %s145
    %p156 = scmp.eq.s32.totalorder %s16, 0
    %p157 = por %p155, %p156
    %p158 = scmp.ne.s32.totalorder %s144, %s145
    %p159 = scmp.eq.s32.totalorder %s17, 3
    %p160 = por %p158, %p159
    %p162 = scmp.ne.s32.totalorder %s145, %s161
    %p163 = scmp.eq.s32.totalorder %s17, 0
    %p164 = por %p162, %p163
    %s165 = ssub.s32 %s18, %s44
    %s166 = ssub.s32 %s19, %s40
    %s167 = sor.u32 %s165, %s166
    %s168 = ssub.s32 %s20, %s36
    %s169 = sor.u32 %s167, %s168
    %p170 = scmp.eq.s32.totalorder %s169, 0
    %s172 = sadd.s32 %s171, 1
    %s173 = scalar_select %p170, %s171, %s172
    %p176 = pneg %p170
    %p177 = scmp.eq.s32.totalorder %s11, 3
    %p178 = por %p176, %p177
    %p179 = scmp.ne.s32.totalorder %s171, %s174
    %p180 = scmp.eq.s32.totalorder %s11, 0
    %p181 = por %p179, %p180
    %p182 = scmp.ne.s32.totalorder %s171, %s174
    %p183 = scmp.eq.s32.totalorder %s16, 3
    %p184 = por %p182, %p183
    %p185 = scmp.ne.s32.totalorder %s174, %s175
    %p186 = scmp.eq.s32.totalorder %s16, 0
    %p187 = por %p185, %p186
    %p188 = scmp.ne.s32.totalorder %s174, %s175
    %p189 = scmp.eq.s32.totalorder %s17, 3
    %p190 = por %p188, %p189
    %p192 = scmp.ne.s32.totalorder %s175, %s191
    %p193 = scmp.eq.s32.totalorder %s17, 0
    %p194 = por %p192, %p193
    %p195 = scmp.le.s32.totalorder 1, %s11
    %p196 = scmp.lt.s32.totalorder %s11, 5
    %p197 = pnand %p195, %p196
    %p198 = pneg %p197
    // Predicated region
    $region9: #{generator_forward.11} parent=5 // pred_check
      _
    $region10: #{generator_forward.11} parent=5 // pred_check_branch
      %200 = sbr.rel (%p197) target = $region12
    $region11: #{generator_forward.11} parent=5 // pred_region
      %s201 = ssub.s32 %s11, 1
    $region12: #{generator_forward.11} parent=5 // pred_fallthru
      _
    %p202 = scmp.lt.s32.totalorder %s11, 4
    // Predicated region
    $region13: #{generator_forward.11} parent=5 // pred_check
      %p203 = pneg %p202
    $region14: #{generator_forward.11} parent=5 // pred_check_branch
      %205 = sbr.rel (%p203) target = $region16
    $region15: #{generator_forward.11} parent=5 // pred_region
      // Predicated region
      $region17: #{generator_forward.11} parent=15 // pred_check
        %p206 = pneg %p61
      $region18: #{generator_forward.11} parent=15 // pred_check_branch
        %208 = sbr.rel (%p206) target = $region20
      $region19: #{generator_forward.11} parent=15 // pred_region
        %s209 = smul.u32 4, %s19
        %s210 = smul.u32 16, %s21
        %p211 = scmp.lt.s32.totalorder %s18, 3
        %s212 = scalar_select %p211, %s18, 3
        %p213 = scmp.lt.s32.totalorder %s209, 3
        %s214 = scalar_select %p213, %s209, 3
        %p215 = scmp.lt.s32.totalorder %s210, 15
        %s216 = scalar_select %p215, %s210, 15
        %s217 = smul.addr %s214, 16
        %s218 = sadd.s32 %s216, %s217
        %s219 = smul.addr %s212, 64
        %s220 = sadd.s32 %s218, %s219
        %s221 = smul.addr %s220, 4
        %s222 = scalar_lea.vmem %s0, %s221
        %s223 = smul.u32 4, %s19
        %s224 = smul.u32 16, %s21
      $region20: #{generator_forward.11} parent=15 // pred_fallthru
        _
      // Predicated region
      $region21: #{generator_forward.11} parent=15 // pred_check
        %p225 = pneg %p91
      $region22: #{generator_forward.11} parent=15 // pred_check_branch
        %227 = sbr.rel (%p225) target = $region24
      $region23: #{generator_forward.11} parent=15 // pred_region
        %s228 = smul.u32 256, %s21
        %s229 = smul.u32 2, %s20
        %p230 = scmp.lt.s32.totalorder %s18, 3
        %s231 = scalar_select %p230, %s18, 3
        %p232 = scmp.lt.s32.totalorder %s228, 255
        %s233 = scalar_select %p232, %s228, 255
        %p234 = scmp.lt.s32.totalorder %s229, 1
        %s235 = scalar_select %p234, %s229, 1
        %s236 = smul.addr %s233, 2
        %s237 = sadd.s32 %s235, %s236
        %s238 = smul.addr %s231, 512
        %s239 = sadd.s32 %s237, %s238
        %s240 = smul.addr %s239, 4
        %s241 = scalar_lea.vmem %s1, %s240
        %s242 = smul.u32 256, %s21
        %s243 = smul.u32 2, %s20
      $region24: #{generator_forward.11} parent=15 // pred_fallthru
        _
    $region16: #{generator_forward.11} parent=5 // pred_fallthru
      _
    %p244 = scmp.le.s32.totalorder 1, %s11
    %p245 = scmp.lt.s32.totalorder %s11, 5
    %p246 = pnand %p244, %p245
    %p247 = pneg %p246
    // Predicated region
    $region25: #{generator_forward.11} parent=5 // pred_check
      _
    $region26: #{generator_forward.11} parent=5 // pred_check_branch
      %249 = sbr.rel (%p246) target = $region28
    $region27: #{generator_forward.11} parent=5 // pred_region
      %s250 = ssub.s32 %s11, 1
      %s251 = smul.u32 4, %s23
      %s252 = smul.u32 16, %s25
      %p253 = scmp.lt.s32.totalorder %s22, 3
      %s254 = scalar_select %p253, %s22, 3
      %p255 = scmp.lt.s32.totalorder %s251, 3
      %s256 = scalar_select %p255, %s251, 3
      %p257 = scmp.lt.s32.totalorder %s252, 15
      %s258 = scalar_select %p257, %s252, 15
      %s259 = smul.addr %s256, 16
      %s260 = sadd.s32 %s258, %s259
      %s261 = smul.addr %s254, 64
      %s262 = sadd.s32 %s260, %s261
      %s263 = smul.addr %s262, 4
      %s264 = scalar_lea.vmem %s0, %s263
      %p265 = pneg %p67
      %p266 = pneg %p64
      %s267 = smul.u32 256, %s25
      %s268 = smul.u32 2, %s24
      %p269 = scmp.lt.s32.totalorder %s22, 3
      %s270 = scalar_select %p269, %s22, 3
      %p271 = scmp.lt.s32.totalorder %s267, 255
      %s272 = scalar_select %p271, %s267, 255
      %p273 = scmp.lt.s32.totalorder %s268, 1
      %s274 = scalar_select %p273, %s268, 1
      %s275 = smul.addr %s272, 2
      %s276 = sadd.s32 %s274, %s275
      %s277 = smul.addr %s270, 512
      %s278 = sadd.s32 %s276, %s277
      %s279 = smul.addr %s278, 4
      %s280 = scalar_lea.vmem %s1, %s279
      %p281 = pneg %p97
      %p282 = pneg %p94
      %p283 = pneg %p127
      %p284 = pneg %p124
      %s285 = smul.u32 4, %s23
      %s286 = smul.u32 2, %s24
      %p287 = scmp.lt.s32.totalorder %s22, 3
      %s288 = scalar_select %p287, %s22, 3
      %p289 = scmp.lt.s32.totalorder %s285, 3
      %s290 = scalar_select %p289, %s285, 3
      %p291 = scmp.lt.s32.totalorder %s286, 1
      %s292 = scalar_select %p291, %s286, 1
      %s293 = smul.addr %s290, 2
      %s294 = sadd.s32 %s292, %s293
      %s295 = smul.addr %s288, 8
      %s296 = sadd.s32 %s294, %s295
      %s297 = smul.addr %s296, 4
      %s298 = scalar_lea.vmem %s2, %s297
      %p299 = pneg %p157
      %p300 = pneg %p154
      %s301 = smul.u32 2, %s24
      %p302 = scmp.lt.s32.totalorder %s22, 3
      %s303 = scalar_select %p302, %s22, 3
      %p304 = scmp.lt.s32.totalorder %s23, 0
      %s305 = scalar_select %p304, %s23, 0
      %p306 = scmp.lt.s32.totalorder %s301, 1
      %s307 = scalar_select %p306, %s301, 1
      %s308 = smul.addr %s305, 2
      %s309 = sadd.s32 %s307, %s308
      %s310 = smul.addr %s303, 2
      %s311 = sadd.s32 %s309, %s310
      %s312 = smul.addr %s311, 8
      %s313 = scalar_lea.vmem %s3, %s312
      %p314 = pneg %p187
      %p315 = pneg %p184
      %s316 = smul.u32 2, %s24
      %p317 = scmp.lt.s32.totalorder %s22, 3
      %s318 = scalar_select %p317, %s22, 3
      %p319 = scmp.lt.s32.totalorder %s23, 0
      %s320 = scalar_select %p319, %s23, 0
      %p321 = scmp.lt.s32.totalorder %s316, 1
      %s322 = scalar_select %p321, %s316, 1
      %s323 = smul.addr %s320, 2
      %s324 = sadd.s32 %s322, %s323
      %s325 = smul.addr %s318, 2
      %s326 = sadd.s32 %s324, %s325
      %s327 = smul.addr %s326, 8
      %s328 = scalar_lea.vmem %s4, %s327
      %s329 = smul.u32 4, %s23
      %s330 = smul.u32 16, %s25
      %p331 = scmp.lt.s32.totalorder %s22, 3
      %s332 = scalar_select %p331, %s22, 3
      %p333 = scmp.lt.s32.totalorder %s329, 3
      %s334 = scalar_select %p333, %s329, 3
      %p335 = scmp.lt.s32.totalorder %s330, 15
      %s336 = scalar_select %p335, %s330, 15
      %s337 = smul.addr %s334, 16
      %s338 = sadd.s32 %s336, %s337
      %s339 = smul.addr %s332, 64
      %s340 = sadd.s32 %s338, %s339
      %s341 = smul.addr %s340, 4
      %s342 = scalar_lea.vmem %s0, %s341
      %s343 = smul.u32 4, %s23
      %s344 = smul.u32 16, %s25
      %s345 = smul.u32 256, %s25
      %s346 = smul.u32 2, %s24
      %p347 = scmp.lt.s32.totalorder %s22, 3
      %s348 = scalar_select %p347, %s22, 3
      %p349 = scmp.lt.s32.totalorder %s345, 255
      %s350 = scalar_select %p349, %s345, 255
      %p351 = scmp.lt.s32.totalorder %s346, 1
      %s352 = scalar_select %p351, %s346, 1
      %s353 = smul.addr %s350, 2
      %s354 = sadd.s32 %s352, %s353
      %s355 = smul.addr %s348, 512
      %s356 = sadd.s32 %s354, %s355
      %s357 = smul.addr %s356, 4
      %s358 = scalar_lea.vmem %s1, %s357
      %s359 = smul.u32 256, %s25
      %s360 = smul.u32 2, %s24
      %s361 = smul.u32 4, %s23
      %s362 = smul.u32 2, %s24
      %p363 = scmp.lt.s32.totalorder %s22, 3
      %s364 = scalar_select %p363, %s22, 3
      %p365 = scmp.lt.s32.totalorder %s361, 3
      %s366 = scalar_select %p365, %s361, 3
      %p367 = scmp.lt.s32.totalorder %s362, 1
      %s368 = scalar_select %p367, %s362, 1
      %s369 = smul.addr %s366, 2
      %s370 = sadd.s32 %s368, %s369
      %s371 = smul.addr %s364, 8
      %s372 = sadd.s32 %s370, %s371
      %s373 = smul.addr %s372, 4
      %s374 = scalar_lea.vmem %s2, %s373
      %s375 = smul.u32 4, %s23
      %s376 = smul.u32 2, %s24
      %s377 = smul.u32 2, %s24
      %p378 = scmp.lt.s32.totalorder %s22, 3
      %s379 = scalar_select %p378, %s22, 3
      %p380 = scmp.lt.s32.totalorder %s23, 0
      %s381 = scalar_select %p380, %s23, 0
      %p382 = scmp.lt.s32.totalorder %s377, 1
      %s383 = scalar_select %p382, %s377, 1
      %s384 = smul.addr %s381, 2
      %s385 = sadd.s32 %s383, %s384
      %s386 = smul.addr %s379, 2
      %s387 = sadd.s32 %s385, %s386
      %s388 = smul.addr %s387, 8
      %s389 = scalar_lea.vmem %s3, %s388
      %s390 = smul.u32 2, %s24
      %s391 = smul.u32 2, %s24
      %p392 = scmp.lt.s32.totalorder %s22, 3
      %s393 = scalar_select %p392, %s22, 3
      %p394 = scmp.lt.s32.totalorder %s23, 0
      %s395 = scalar_select %p394, %s23, 0
      %p396 = scmp.lt.s32.totalorder %s391, 1
      %s397 = scalar_select %p396, %s391, 1
      %s398 = smul.addr %s395, 2
      %s399 = sadd.s32 %s397, %s398
      %s400 = smul.addr %s393, 2
      %s401 = sadd.s32 %s399, %s400
      %s402 = smul.addr %s401, 8
      %s403 = scalar_lea.vmem %s4, %s402
      %s404 = smul.u32 2, %s24
      %p405 = scmp.eq.s32.totalorder %s25, 0
      // Predicated region
      $region29: #{generator_forward.11} parent=27 // pred_check
        %p406 = pneg %p405
      $region30: #{generator_forward.11} parent=27 // pred_check_branch
        %408 = sbr.rel (%p406) target = $region32
      $region31: #{generator_forward.11} parent=27 // pred_region
        %409 = vst [vmem:[#allocation2] sm:$0xff] 0.0
        %410 = vst [vmem:[#allocation2 + $0x8] sm:$0xff] 0.0
        %411 = vst [vmem:[#allocation2 + $0x10] sm:$0xff] 0.0
        %412 = vst [vmem:[#allocation2 + $0x18] sm:$0xff] 0.0
        %413 = vst [vmem:[#allocation2 + $0x20] sm:$0xff] 0.0
        %414 = vst [vmem:[#allocation2 + $0x28] sm:$0xff] 0.0
        %415 = vst [vmem:[#allocation2 + $0x30] sm:$0xff] 0.0
        %416 = vst [vmem:[#allocation2 + $0x38] sm:$0xff] 0.0
      $region32: #{generator_forward.11} parent=27 // pred_fallthru
        _
      %v417 = vld [vmem:[#allocation2] sm:$0xff]
      %v418 = vld [vmem:[#allocation2 + $0x8] sm:$0xff]
      %v419 = vld [vmem:[#allocation2 + $0x10] sm:$0xff]
      %v420 = vld [vmem:[#allocation2 + $0x18] sm:$0xff]
      %v421 = vld [vmem:[#allocation2 + $0x20] sm:$0xff]
      %v422 = vld [vmem:[#allocation2 + $0x28] sm:$0xff]
      %v423 = vld [vmem:[#allocation2 + $0x30] sm:$0xff]
      %v424 = vld [vmem:[#allocation2 + $0x38] sm:$0xff]
      %v425 = vld [vmem:[%s342] sm:$0xff]
      %v426 = vld [vmem:[%s342 + $0x8] sm:$0xff]
      %v427 = vld [vmem:[%s342 + $0x10] sm:$0xff]
      %v428 = vld [vmem:[%s342 + $0x18] sm:$0xff]
      %v429 = vld [vmem:[%s342 + $0x20] sm:$0xff]
      %v430 = vld [vmem:[%s342 + $0x28] sm:$0xff]
      %v431 = vld [vmem:[%s342 + $0x30] sm:$0xff]
      %v432 = vld [vmem:[%s342 + $0x38] sm:$0xff]
      %v433 = vld [vmem:[%s342 + $0x40] sm:$0xff]
      %v434 = vld [vmem:[%s342 + $0x48] sm:$0xff]
      %v435 = vld [vmem:[%s342 + $0x50] sm:$0xff]
      %v436 = vld [vmem:[%s342 + $0x58] sm:$0xff]
      %v437 = vld [vmem:[%s342 + $0x60] sm:$0xff]
      %v438 = vld [vmem:[%s342 + $0x68] sm:$0xff]
      %v439 = vld [vmem:[%s342 + $0x70] sm:$0xff]
      %v440 = vld [vmem:[%s342 + $0x78] sm:$0xff]
      %v441 = vld [vmem:[%s342 + $0x80] sm:$0xff]
      %v442 = vld [vmem:[%s342 + $0x88] sm:$0xff]
      %v443 = vld [vmem:[%s342 + $0x90] sm:$0xff]
      %v444 = vld [vmem:[%s342 + $0x98] sm:$0xff]
      %v445 = vld [vmem:[%s342 + $0xa0] sm:$0xff]
      %v446 = vld [vmem:[%s342 + $0xa8] sm:$0xff]
      %v447 = vld [vmem:[%s342 + $0xb0] sm:$0xff]
      %v448 = vld [vmem:[%s342 + $0xb8] sm:$0xff]
      %v449 = vld [vmem:[%s342 + $0xc0] sm:$0xff]
      %v450 = vld [vmem:[%s342 + $0xc8] sm:$0xff]
      %v451 = vld [vmem:[%s342 + $0xd0] sm:$0xff]
      %v452 = vld [vmem:[%s342 + $0xd8] sm:$0xff]
      %v453 = vld [vmem:[%s342 + $0xe0] sm:$0xff]
      %v454 = vld [vmem:[%s342 + $0xe8] sm:$0xff]
      %v455 = vld [vmem:[%s342 + $0xf0] sm:$0xff]
      %v456 = vld [vmem:[%s342 + $0xf8] sm:$0xff]
      %v457 = vld [vmem:[%s358] sm:$0xff]
      %v458 = vld [vmem:[%s358 + $0x8] sm:$0xff]
      %v459 = vld [vmem:[%s358 + $0x10] sm:$0xff]
      %v460 = vld [vmem:[%s358 + $0x18] sm:$0xff]
      %v461 = vld [vmem:[%s358 + $0x20] sm:$0xff]
      %v462 = vld [vmem:[%s358 + $0x28] sm:$0xff]
      %v463 = vld [vmem:[%s358 + $0x30] sm:$0xff]
      %v464 = vld [vmem:[%s358 + $0x38] sm:$0xff]
      %v465 = vld [vmem:[%s358 + $0x40] sm:$0xff]
      %v466 = vld [vmem:[%s358 + $0x48] sm:$0xff]
      %v467 = vld [vmem:[%s358 + $0x50] sm:$0xff]
      %v468 = vld [vmem:[%s358 + $0x58] sm:$0xff]
      %v469 = vld [vmem:[%s358 + $0x60] sm:$0xff]
      %v470 = vld [vmem:[%s358 + $0x68] sm:$0xff]
      %v471 = vld [vmem:[%s358 + $0x70] sm:$0xff]
      %v472 = vld [vmem:[%s358 + $0x78] sm:$0xff]
      %v473 = vld [vmem:[%s358 + $0x80] sm:$0xff]
      %v474 = vld [vmem:[%s358 + $0x88] sm:$0xff]
      %v475 = vld [vmem:[%s358 + $0x90] sm:$0xff]
      %v476 = vld [vmem:[%s358 + $0x98] sm:$0xff]
      %v477 = vld [vmem:[%s358 + $0xa0] sm:$0xff]
      %v478 = vld [vmem:[%s358 + $0xa8] sm:$0xff]
      %v479 = vld [vmem:[%s358 + $0xb0] sm:$0xff]
      %v480 = vld [vmem:[%s358 + $0xb8] sm:$0xff]
      %v481 = vld [vmem:[%s358 + $0xc0] sm:$0xff]
      %v482 = vld [vmem:[%s358 + $0xc8] sm:$0xff]
      %v483 = vld [vmem:[%s358 + $0xd0] sm:$0xff]
      %v484 = vld [vmem:[%s358 + $0xd8] sm:$0xff]
      %v485 = vld [vmem:[%s358 + $0xe0] sm:$0xff]
      %v486 = vld [vmem:[%s358 + $0xe8] sm:$0xff]
      %v487 = vld [vmem:[%s358 + $0xf0] sm:$0xff]
      %v488 = vld [vmem:[%s358 + $0xf8] sm:$0xff]
      %v489 = vld [vmem:[%s358 + $0x100] sm:$0xff]
      %v490 = vld [vmem:[%s358 + $0x108] sm:$0xff]
      %v491 = vld [vmem:[%s358 + $0x110] sm:$0xff]
      %v492 = vld [vmem:[%s358 + $0x118] sm:$0xff]
      %v493 = vld [vmem:[%s358 + $0x120] sm:$0xff]
      %v494 = vld [vmem:[%s358 + $0x128] sm:$0xff]
      %v495 = vld [vmem:[%s358 + $0x130] sm:$0xff]
      %v496 = vld [vmem:[%s358 + $0x138] sm:$0xff]
      %v497 = vld [vmem:[%s358 + $0x140] sm:$0xff]
      %v498 = vld [vmem:[%s358 + $0x148] sm:$0xff]
      %v499 = vld [vmem:[%s358 + $0x150] sm:$0xff]
      %v500 = vld [vmem:[%s358 + $0x158] sm:$0xff]
      %v501 = vld [vmem:[%s358 + $0x160] sm:$0xff]
      %v502 = vld [vmem:[%s358 + $0x168] sm:$0xff]
      %v503 = vld [vmem:[%s358 + $0x170] sm:$0xff]
      %v504 = vld [vmem:[%s358 + $0x178] sm:$0xff]
      %v505 = vld [vmem:[%s358 + $0x180] sm:$0xff]
      %v506 = vld [vmem:[%s358 + $0x188] sm:$0xff]
      %v507 = vld [vmem:[%s358 + $0x190] sm:$0xff]
      %v508 = vld [vmem:[%s358 + $0x198] sm:$0xff]
      %v509 = vld [vmem:[%s358 + $0x1a0] sm:$0xff]
      %v510 = vld [vmem:[%s358 + $0x1a8] sm:$0xff]
      %v511 = vld [vmem:[%s358 + $0x1b0] sm:$0xff]
      %v512 = vld [vmem:[%s358 + $0x1b8] sm:$0xff]
      %v513 = vld [vmem:[%s358 + $0x1c0] sm:$0xff]
      %v514 = vld [vmem:[%s358 + $0x1c8] sm:$0xff]
      %v515 = vld [vmem:[%s358 + $0x1d0] sm:$0xff]
      %v516 = vld [vmem:[%s358 + $0x1d8] sm:$0xff]
      %v517 = vld [vmem:[%s358 + $0x1e0] sm:$0xff]
      %v518 = vld [vmem:[%s358 + $0x1e8] sm:$0xff]
      %v519 = vld [vmem:[%s358 + $0x1f0] sm:$0xff]
      %v520 = vld [vmem:[%s358 + $0x1f8] sm:$0xff]
      %v521 = vld [vmem:[%s358 + $0x200] sm:$0xff]
      %v522 = vld [vmem:[%s358 + $0x208] sm:$0xff]
      %v523 = vld [vmem:[%s358 + $0x210] sm:$0xff]
      %v524 = vld [vmem:[%s358 + $0x218] sm:$0xff]
      %v525 = vld [vmem:[%s358 + $0x220] sm:$0xff]
      %v526 = vld [vmem:[%s358 + $0x228] sm:$0xff]
      %v527 = vld [vmem:[%s358 + $0x230] sm:$0xff]
      %v528 = vld [vmem:[%s358 + $0x238] sm:$0xff]
      %v529 = vld [vmem:[%s358 + $0x240] sm:$0xff]
      %v530 = vld [vmem:[%s358 + $0x248] sm:$0xff]
      %v531 = vld [vmem:[%s358 + $0x250] sm:$0xff]
      %v532 = vld [vmem:[%s358 + $0x258] sm:$0xff]
      %v533 = vld [vmem:[%s358 + $0x260] sm:$0xff]
      %v534 = vld [vmem:[%s358 + $0x268] sm:$0xff]
      %v535 = vld [vmem:[%s358 + $0x270] sm:$0xff]
      %v536 = vld [vmem:[%s358 + $0x278] sm:$0xff]
      %v537 = vld [vmem:[%s358 + $0x280] sm:$0xff]
      %v538 = vld [vmem:[%s358 + $0x288] sm:$0xff]
      %v539 = vld [vmem:[%s358 + $0x290] sm:$0xff]
      %v540 = vld [vmem:[%s358 + $0x298] sm:$0xff]
      %v541 = vld [vmem:[%s358 + $0x2a0] sm:$0xff]
      %v542 = vld [vmem:[%s358 + $0x2a8] sm:$0xff]
      %v543 = vld [vmem:[%s358 + $0x2b0] sm:$0xff]
      %v544 = vld [vmem:[%s358 + $0x2b8] sm:$0xff]
      %v545 = vld [vmem:[%s358 + $0x2c0] sm:$0xff]
      %v546 = vld [vmem:[%s358 + $0x2c8] sm:$0xff]
      %v547 = vld [vmem:[%s358 + $0x2d0] sm:$0xff]
      %v548 = vld [vmem:[%s358 + $0x2d8] sm:$0xff]
      %v549 = vld [vmem:[%s358 + $0x2e0] sm:$0xff]
      %v550 = vld [vmem:[%s358 + $0x2e8] sm:$0xff]
      %v551 = vld [vmem:[%s358 + $0x2f0] sm:$0xff]
      %v552 = vld [vmem:[%s358 + $0x2f8] sm:$0xff]
      %v553 = vld [vmem:[%s358 + $0x300] sm:$0xff]
      %v554 = vld [vmem:[%s358 + $0x308] sm:$0xff]
      %v555 = vld [vmem:[%s358 + $0x310] sm:$0xff]
      %v556 = vld [vmem:[%s358 + $0x318] sm:$0xff]
      %v557 = vld [vmem:[%s358 + $0x320] sm:$0xff]
      %v558 = vld [vmem:[%s358 + $0x328] sm:$0xff]
      %v559 = vld [vmem:[%s358 + $0x330] sm:$0xff]
      %v560 = vld [vmem:[%s358 + $0x338] sm:$0xff]
      %v561 = vld [vmem:[%s358 + $0x340] sm:$0xff]
      %v562 = vld [vmem:[%s358 + $0x348] sm:$0xff]
      %v563 = vld [vmem:[%s358 + $0x350] sm:$0xff]
      %v564 = vld [vmem:[%s358 + $0x358] sm:$0xff]
      %v565 = vld [vmem:[%s358 + $0x360] sm:$0xff]
      %v566 = vld [vmem:[%s358 + $0x368] sm:$0xff]
      %v567 = vld [vmem:[%s358 + $0x370] sm:$0xff]
      %v568 = vld [vmem:[%s358 + $0x378] sm:$0xff]
      %v569 = vld [vmem:[%s358 + $0x380] sm:$0xff]
      %v570 = vld [vmem:[%s358 + $0x388] sm:$0xff]
      %v571 = vld [vmem:[%s358 + $0x390] sm:$0xff]
      %v572 = vld [vmem:[%s358 + $0x398] sm:$0xff]
      %v573 = vld [vmem:[%s358 + $0x3a0] sm:$0xff]
      %v574 = vld [vmem:[%s358 + $0x3a8] sm:$0xff]
      %v575 = vld [vmem:[%s358 + $0x3b0] sm:$0xff]
      %v576 = vld [vmem:[%s358 + $0x3b8] sm:$0xff]
      %v577 = vld [vmem:[%s358 + $0x3c0] sm:$0xff]
      %v578 = vld [vmem:[%s358 + $0x3c8] sm:$0xff]
      %v579 = vld [vmem:[%s358 + $0x3d0] sm:$0xff]
      %v580 = vld [vmem:[%s358 + $0x3d8] sm:$0xff]
      %v581 = vld [vmem:[%s358 + $0x3e0] sm:$0xff]
      %v582 = vld [vmem:[%s358 + $0x3e8] sm:$0xff]
      %v583 = vld [vmem:[%s358 + $0x3f0] sm:$0xff]
      %v584 = vld [vmem:[%s358 + $0x3f8] sm:$0xff]
      %v585 = vld [vmem:[%s358 + $0x400] sm:$0xff]
      %v586 = vld [vmem:[%s358 + $0x408] sm:$0xff]
      %v587 = vld [vmem:[%s358 + $0x410] sm:$0xff]
      %v588 = vld [vmem:[%s358 + $0x418] sm:$0xff]
      %v589 = vld [vmem:[%s358 + $0x420] sm:$0xff]
      %v590 = vld [vmem:[%s358 + $0x428] sm:$0xff]
      %v591 = vld [vmem:[%s358 + $0x430] sm:$0xff]
      %v592 = vld [vmem:[%s358 + $0x438] sm:$0xff]
      %v593 = vld [vmem:[%s358 + $0x440] sm:$0xff]
      %v594 = vld [vmem:[%s358 + $0x448] sm:$0xff]
      %v595 = vld [vmem:[%s358 + $0x450] sm:$0xff]
      %v596 = vld [vmem:[%s358 + $0x458] sm:$0xff]
      %v597 = vld [vmem:[%s358 + $0x460] sm:$0xff]
      %v598 = vld [vmem:[%s358 + $0x468] sm:$0xff]
      %v599 = vld [vmem:[%s358 + $0x470] sm:$0xff]
      %v600 = vld [vmem:[%s358 + $0x478] sm:$0xff]
      %v601 = vld [vmem:[%s358 + $0x480] sm:$0xff]
      %v602 = vld [vmem:[%s358 + $0x488] sm:$0xff]
      %v603 = vld [vmem:[%s358 + $0x490] sm:$0xff]
      %v604 = vld [vmem:[%s358 + $0x498] sm:$0xff]
      %v605 = vld [vmem:[%s358 + $0x4a0] sm:$0xff]
      %v606 = vld [vmem:[%s358 + $0x4a8] sm:$0xff]
      %v607 = vld [vmem:[%s358 + $0x4b0] sm:$0xff]
      %v608 = vld [vmem:[%s358 + $0x4b8] sm:$0xff]
      %v609 = vld [vmem:[%s358 + $0x4c0] sm:$0xff]
      %v610 = vld [vmem:[%s358 + $0x4c8] sm:$0xff]
      %v611 = vld [vmem:[%s358 + $0x4d0] sm:$0xff]
      %v612 = vld [vmem:[%s358 + $0x4d8] sm:$0xff]
      %v613 = vld [vmem:[%s358 + $0x4e0] sm:$0xff]
      %v614 = vld [vmem:[%s358 + $0x4e8] sm:$0xff]
      %v615 = vld [vmem:[%s358 + $0x4f0] sm:$0xff]
      %v616 = vld [vmem:[%s358 + $0x4f8] sm:$0xff]
      %v617 = vld [vmem:[%s358 + $0x500] sm:$0xff]
      %v618 = vld [vmem:[%s358 + $0x508] sm:$0xff]
      %v619 = vld [vmem:[%s358 + $0x510] sm:$0xff]
      %v620 = vld [vmem:[%s358 + $0x518] sm:$0xff]
      %v621 = vld [vmem:[%s358 + $0x520] sm:$0xff]
      %v622 = vld [vmem:[%s358 + $0x528] sm:$0xff]
      %v623 = vld [vmem:[%s358 + $0x530] sm:$0xff]
      %v624 = vld [vmem:[%s358 + $0x538] sm:$0xff]
      %v625 = vld [vmem:[%s358 + $0x540] sm:$0xff]
      %v626 = vld [vmem:[%s358 + $0x548] sm:$0xff]
      %v627 = vld [vmem:[%s358 + $0x550] sm:$0xff]
      %v628 = vld [vmem:[%s358 + $0x558] sm:$0xff]
      %v629 = vld [vmem:[%s358 + $0x560] sm:$0xff]
      %v630 = vld [vmem:[%s358 + $0x568] sm:$0xff]
      %v631 = vld [vmem:[%s358 + $0x570] sm:$0xff]
      %v632 = vld [vmem:[%s358 + $0x578] sm:$0xff]
      %v633 = vld [vmem:[%s358 + $0x580] sm:$0xff]
      %v634 = vld [vmem:[%s358 + $0x588] sm:$0xff]
      %v635 = vld [vmem:[%s358 + $0x590] sm:$0xff]
      %v636 = vld [vmem:[%s358 + $0x598] sm:$0xff]
      %v637 = vld [vmem:[%s358 + $0x5a0] sm:$0xff]
      %v638 = vld [vmem:[%s358 + $0x5a8] sm:$0xff]
      %v639 = vld [vmem:[%s358 + $0x5b0] sm:$0xff]
      %v640 = vld [vmem:[%s358 + $0x5b8] sm:$0xff]
      %v641 = vld [vmem:[%s358 + $0x5c0] sm:$0xff]
      %v642 = vld [vmem:[%s358 + $0x5c8] sm:$0xff]
      %v643 = vld [vmem:[%s358 + $0x5d0] sm:$0xff]
      %v644 = vld [vmem:[%s358 + $0x5d8] sm:$0xff]
      %v645 = vld [vmem:[%s358 + $0x5e0] sm:$0xff]
      %v646 = vld [vmem:[%s358 + $0x5e8] sm:$0xff]
      %v647 = vld [vmem:[%s358 + $0x5f0] sm:$0xff]
      %v648 = vld [vmem:[%s358 + $0x5f8] sm:$0xff]
      %v649 = vld [vmem:[%s358 + $0x600] sm:$0xff]
      %v650 = vld [vmem:[%s358 + $0x608] sm:$0xff]
      %v651 = vld [vmem:[%s358 + $0x610] sm:$0xff]
      %v652 = vld [vmem:[%s358 + $0x618] sm:$0xff]
      %v653 = vld [vmem:[%s358 + $0x620] sm:$0xff]
      %v654 = vld [vmem:[%s358 + $0x628] sm:$0xff]
      %v655 = vld [vmem:[%s358 + $0x630] sm:$0xff]
      %v656 = vld [vmem:[%s358 + $0x638] sm:$0xff]
      %v657 = vld [vmem:[%s358 + $0x640] sm:$0xff]
      %v658 = vld [vmem:[%s358 + $0x648] sm:$0xff]
      %v659 = vld [vmem:[%s358 + $0x650] sm:$0xff]
      %v660 = vld [vmem:[%s358 + $0x658] sm:$0xff]
      %v661 = vld [vmem:[%s358 + $0x660] sm:$0xff]
      %v662 = vld [vmem:[%s358 + $0x668] sm:$0xff]
      %v663 = vld [vmem:[%s358 + $0x670] sm:$0xff]
      %v664 = vld [vmem:[%s358 + $0x678] sm:$0xff]
      %v665 = vld [vmem:[%s358 + $0x680] sm:$0xff]
      %v666 = vld [vmem:[%s358 + $0x688] sm:$0xff]
      %v667 = vld [vmem:[%s358 + $0x690] sm:$0xff]
      %v668 = vld [vmem:[%s358 + $0x698] sm:$0xff]
      %v669 = vld [vmem:[%s358 + $0x6a0] sm:$0xff]
      %v670 = vld [vmem:[%s358 + $0x6a8] sm:$0xff]
      %v671 = vld [vmem:[%s358 + $0x6b0] sm:$0xff]
      %v672 = vld [vmem:[%s358 + $0x6b8] sm:$0xff]
      %v673 = vld [vmem:[%s358 + $0x6c0] sm:$0xff]
      %v674 = vld [vmem:[%s358 + $0x6c8] sm:$0xff]
      %v675 = vld [vmem:[%s358 + $0x6d0] sm:$0xff]
      %v676 = vld [vmem:[%s358 + $0x6d8] sm:$0xff]
      %v677 = vld [vmem:[%s358 + $0x6e0] sm:$0xff]
      %v678 = vld [vmem:[%s358 + $0x6e8] sm:$0xff]
      %v679 = vld [vmem:[%s358 + $0x6f0] sm:$0xff]
      %v680 = vld [vmem:[%s358 + $0x6f8] sm:$0xff]
      %v681 = vld [vmem:[%s358 + $0x700] sm:$0xff]
      %v682 = vld [vmem:[%s358 + $0x708] sm:$0xff]
      %v683 = vld [vmem:[%s358 + $0x710] sm:$0xff]
      %v684 = vld [vmem:[%s358 + $0x718] sm:$0xff]
      %v685 = vld [vmem:[%s358 + $0x720] sm:$0xff]
      %v686 = vld [vmem:[%s358 + $0x728] sm:$0xff]
      %v687 = vld [vmem:[%s358 + $0x730] sm:$0xff]
      %v688 = vld [vmem:[%s358 + $0x738] sm:$0xff]
      %v689 = vld [vmem:[%s358 + $0x740] sm:$0xff]
      %v690 = vld [vmem:[%s358 + $0x748] sm:$0xff]
      %v691 = vld [vmem:[%s358 + $0x750] sm:$0xff]
      %v692 = vld [vmem:[%s358 + $0x758] sm:$0xff]
      %v693 = vld [vmem:[%s358 + $0x760] sm:$0xff]
      %v694 = vld [vmem:[%s358 + $0x768] sm:$0xff]
      %v695 = vld [vmem:[%s358 + $0x770] sm:$0xff]
      %v696 = vld [vmem:[%s358 + $0x778] sm:$0xff]
      %v697 = vld [vmem:[%s358 + $0x780] sm:$0xff]
      %v698 = vld [vmem:[%s358 + $0x788] sm:$0xff]
      %v699 = vld [vmem:[%s358 + $0x790] sm:$0xff]
      %v700 = vld [vmem:[%s358 + $0x798] sm:$0xff]
      %v701 = vld [vmem:[%s358 + $0x7a0] sm:$0xff]
      %v702 = vld [vmem:[%s358 + $0x7a8] sm:$0xff]
      %v703 = vld [vmem:[%s358 + $0x7b0] sm:$0xff]
      %v704 = vld [vmem:[%s358 + $0x7b8] sm:$0xff]
      %v705 = vld [vmem:[%s358 + $0x7c0] sm:$0xff]
      %v706 = vld [vmem:[%s358 + $0x7c8] sm:$0xff]
      %v707 = vld [vmem:[%s358 + $0x7d0] sm:$0xff]
      %v708 = vld [vmem:[%s358 + $0x7d8] sm:$0xff]
      %v709 = vld [vmem:[%s358 + $0x7e0] sm:$0xff]
      %v710 = vld [vmem:[%s358 + $0x7e8] sm:$0xff]
      %v711 = vld [vmem:[%s358 + $0x7f0] sm:$0xff]
      %v712 = vld [vmem:[%s358 + $0x7f8] sm:$0xff]
      %v745 = vunpack.c.l.b16 %v425
      %v746 = vunpack.c.h.b16 %v425
      %v747 = vunpack.c.l.b16 %v426
      %v748 = vunpack.c.h.b16 %v426
      %v749 = vunpack.c.l.b16 %v427
      %v750 = vunpack.c.h.b16 %v427
      %v751 = vunpack.c.l.b16 %v428
      %v752 = vunpack.c.h.b16 %v428
      %v753 = vunpack.c.l.b16 %v429
      %v754 = vunpack.c.h.b16 %v429
      %v755 = vunpack.c.l.b16 %v430
      %v756 = vunpack.c.h.b16 %v430
      %v757 = vunpack.c.l.b16 %v431
      %v758 = vunpack.c.h.b16 %v431
      %v759 = vunpack.c.l.b16 %v432
      %v760 = vunpack.c.h.b16 %v432
      %v761 = vunpack.c.l.b16 %v433
      %v762 = vunpack.c.h.b16 %v433
      %v763 = vunpack.c.l.b16 %v434
      %v764 = vunpack.c.h.b16 %v434
      %v765 = vunpack.c.l.b16 %v435
      %v766 = vunpack.c.h.b16 %v435
      %v767 = vunpack.c.l.b16 %v436
      %v768 = vunpack.c.h.b16 %v436
      %v769 = vunpack.c.l.b16 %v437
      %v770 = vunpack.c.h.b16 %v437
      %v771 = vunpack.c.l.b16 %v438
      %v772 = vunpack.c.h.b16 %v438
      %v773 = vunpack.c.l.b16 %v439
      %v774 = vunpack.c.h.b16 %v439
      %v775 = vunpack.c.l.b16 %v440
      %v776 = vunpack.c.h.b16 %v440
      %v777 = vunpack.c.l.b16 %v441
      %v778 = vunpack.c.h.b16 %v441
      %v779 = vunpack.c.l.b16 %v442
      %v780 = vunpack.c.h.b16 %v442
      %v781 = vunpack.c.l.b16 %v443
      %v782 = vunpack.c.h.b16 %v443
      %v783 = vunpack.c.l.b16 %v444
      %v784 = vunpack.c.h.b16 %v444
      %v785 = vunpack.c.l.b16 %v445
      %v786 = vunpack.c.h.b16 %v445
      %v787 = vunpack.c.l.b16 %v446
      %v788 = vunpack.c.h.b16 %v446
      %v789 = vunpack.c.l.b16 %v447
      %v790 = vunpack.c.h.b16 %v447
      %v791 = vunpack.c.l.b16 %v448
      %v792 = vunpack.c.h.b16 %v448
      %v793 = vunpack.c.l.b16 %v449
      %v794 = vunpack.c.h.b16 %v449
      %v795 = vunpack.c.l.b16 %v450
      %v796 = vunpack.c.h.b16 %v450
      %v797 = vunpack.c.l.b16 %v451
      %v798 = vunpack.c.h.b16 %v451
      %v799 = vunpack.c.l.b16 %v452
      %v800 = vunpack.c.h.b16 %v452
      %v801 = vunpack.c.l.b16 %v453
      %v802 = vunpack.c.h.b16 %v453
      %v803 = vunpack.c.l.b16 %v454
      %v804 = vunpack.c.h.b16 %v454
      %v805 = vunpack.c.l.b16 %v455
      %v806 = vunpack.c.h.b16 %v455
      %v807 = vunpack.c.l.b16 %v456
      %v808 = vunpack.c.h.b16 %v456
      %v809 = vpack.c.b16 %v761, %v745
      %v810 = vpack.c.b16 %v762, %v746
      %v811 = vpack.c.b16 %v763, %v747
      %v812 = vpack.c.b16 %v764, %v748
      %v813 = vpack.c.b16 %v765, %v749
      %v814 = vpack.c.b16 %v766, %v750
      %v815 = vpack.c.b16 %v767, %v751
      %v816 = vpack.c.b16 %v768, %v752
      %v817 = vpack.c.b16 %v769, %v753
      %v818 = vpack.c.b16 %v770, %v754
      %v819 = vpack.c.b16 %v771, %v755
      %v820 = vpack.c.b16 %v772, %v756
      %v821 = vpack.c.b16 %v773, %v757
      %v822 = vpack.c.b16 %v774, %v758
      %v823 = vpack.c.b16 %v775, %v759
      %v824 = vpack.c.b16 %v776, %v760
      %v825 = vpack.c.b16 %v793, %v777
      %v826 = vpack.c.b16 %v794, %v778
      %v827 = vpack.c.b16 %v795, %v779
      %v828 = vpack.c.b16 %v796, %v780
      %v829 = vpack.c.b16 %v797, %v781
      %v830 = vpack.c.b16 %v798, %v782
      %v831 = vpack.c.b16 %v799, %v783
      %v832 = vpack.c.b16 %v800, %v784
      %v833 = vpack.c.b16 %v801, %v785
      %v834 = vpack.c.b16 %v802, %v786
      %v835 = vpack.c.b16 %v803, %v787
      %v836 = vpack.c.b16 %v804, %v788
      %v837 = vpack.c.b16 %v805, %v789
      %v838 = vpack.c.b16 %v806, %v790
      %v839 = vpack.c.b16 %v807, %v791
      %v840 = vpack.c.b16 %v808, %v792
      %v1129 = vunpack.c.l.b16 %v457
      %v1130 = vunpack.c.h.b16 %v457
      %v1131 = vunpack.c.l.b16 %v458
      %v1132 = vunpack.c.h.b16 %v458
      %v1133 = vunpack.c.l.b16 %v459
      %v1134 = vunpack.c.h.b16 %v459
      %v1135 = vunpack.c.l.b16 %v460
      %v1136 = vunpack.c.h.b16 %v460
      %v1137 = vunpack.c.l.b16 %v461
      %v1138 = vunpack.c.h.b16 %v461
      %v1139 = vunpack.c.l.b16 %v462
      %v1140 = vunpack.c.h.b16 %v462
      %v1141 = vunpack.c.l.b16 %v463
      %v1142 = vunpack.c.h.b16 %v463
      %v1143 = vunpack.c.l.b16 %v464
      %v1144 = vunpack.c.h.b16 %v464
      %v1145 = vunpack.c.l.b16 %v465
      %v1146 = vunpack.c.h.b16 %v465
      %v1147 = vunpack.c.l.b16 %v466
      %v1148 = vunpack.c.h.b16 %v466
      %v1149 = vunpack.c.l.b16 %v467
      %v1150 = vunpack.c.h.b16 %v467
      %v1151 = vunpack.c.l.b16 %v468
      %v1152 = vunpack.c.h.b16 %v468
      %v1153 = vunpack.c.l.b16 %v469
      %v1154 = vunpack.c.h.b16 %v469
      %v1155 = vunpack.c.l.b16 %v470
      %v1156 = vunpack.c.h.b16 %v470
      %v1157 = vunpack.c.l.b16 %v471
      %v1158 = vunpack.c.h.b16 %v471
      %v1159 = vunpack.c.l.b16 %v472
      %v1160 = vunpack.c.h.b16 %v472
      %v1161 = vunpack.c.l.b16 %v473
      %v1162 = vunpack.c.h.b16 %v473
      %v1163 = vunpack.c.l.b16 %v474
      %v1164 = vunpack.c.h.b16 %v474
      %v1165 = vunpack.c.l.b16 %v475
      %v1166 = vunpack.c.h.b16 %v475
      %v1167 = vunpack.c.l.b16 %v476
      %v1168 = vunpack.c.h.b16 %v476
      %v1169 = vunpack.c.l.b16 %v477
      %v1170 = vunpack.c.h.b16 %v477
      %v1171 = vunpack.c.l.b16 %v478
      %v1172 = vunpack.c.h.b16 %v478
      %v1173 = vunpack.c.l.b16 %v479
      %v1174 = vunpack.c.h.b16 %v479
      %v1175 = vunpack.c.l.b16 %v480
      %v1176 = vunpack.c.h.b16 %v480
      %v1177 = vunpack.c.l.b16 %v481
      %v1178 = vunpack.c.h.b16 %v481
      %v1179 = vunpack.c.l.b16 %v482
      %v1180 = vunpack.c.h.b16 %v482
      %v1181 = vunpack.c.l.b16 %v483
      %v1182 = vunpack.c.h.b16 %v483
      %v1183 = vunpack.c.l.b16 %v484
      %v1184 = vunpack.c.h.b16 %v484
      %v1185 = vunpack.c.l.b16 %v485
      %v1186 = vunpack.c.h.b16 %v485
      %v1187 = vunpack.c.l.b16 %v486
      %v1188 = vunpack.c.h.b16 %v486
      %v1189 = vunpack.c.l.b16 %v487
      %v1190 = vunpack.c.h.b16 %v487
      %v1191 = vunpack.c.l.b16 %v488
      %v1192 = vunpack.c.h.b16 %v488
      %v1193 = vunpack.c.l.b16 %v489
      %v1194 = vunpack.c.h.b16 %v489
      %v1195 = vunpack.c.l.b16 %v490
      %v1196 = vunpack.c.h.b16 %v490
      %v1197 = vunpack.c.l.b16 %v491
      %v1198 = vunpack.c.h.b16 %v491
      %v1199 = vunpack.c.l.b16 %v492
      %v1200 = vunpack.c.h.b16 %v492
      %v1201 = vunpack.c.l.b16 %v493
      %v1202 = vunpack.c.h.b16 %v493
      %v1203 = vunpack.c.l.b16 %v494
      %v1204 = vunpack.c.h.b16 %v494
      %v1205 = vunpack.c.l.b16 %v495
      %v1206 = vunpack.c.h.b16 %v495
      %v1207 = vunpack.c.l.b16 %v496
      %v1208 = vunpack.c.h.b16 %v496
      %v1209 = vunpack.c.l.b16 %v497
      %v1210 = vunpack.c.h.b16 %v497
      %v1211 = vunpack.c.l.b16 %v498
      %v1212 = vunpack.c.h.b16 %v498
      %v1213 = vunpack.c.l.b16 %v499
      %v1214 = vunpack.c.h.b16 %v499
      %v1215 = vunpack.c.l.b16 %v500
      %v1216 = vunpack.c.h.b16 %v500
      %v1217 = vunpack.c.l.b16 %v501
      %v1218 = vunpack.c.h.b16 %v501
      %v1219 = vunpack.c.l.b16 %v502
      %v1220 = vunpack.c.h.b16 %v502
      %v1221 = vunpack.c.l.b16 %v503
      %v1222 = vunpack.c.h.b16 %v503
      %v1223 = vunpack.c.l.b16 %v504
      %v1224 = vunpack.c.h.b16 %v504
      %v1225 = vunpack.c.l.b16 %v505
      %v1226 = vunpack.c.h.b16 %v505
      %v1227 = vunpack.c.l.b16 %v506
      %v1228 = vunpack.c.h.b16 %v506
      %v1229 = vunpack.c.l.b16 %v507
      %v1230 = vunpack.c.h.b16 %v507
      %v1231 = vunpack.c.l.b16 %v508
      %v1232 = vunpack.c.h.b16 %v508
      %v1233 = vunpack.c.l.b16 %v509
      %v1234 = vunpack.c.h.b16 %v509
      %v1235 = vunpack.c.l.b16 %v510
      %v1236 = vunpack.c.h.b16 %v510
      %v1237 = vunpack.c.l.b16 %v511
      %v1238 = vunpack.c.h.b16 %v511
      %v1239 = vunpack.c.l.b16 %v512
      %v1240 = vunpack.c.h.b16 %v512
      %v1241 = vunpack.c.l.b16 %v513
      %v1242 = vunpack.c.h.b16 %v513
      %v1243 = vunpack.c.l.b16 %v514
      %v1244 = vunpack.c.h.b16 %v514
      %v1245 = vunpack.c.l.b16 %v515
      %v1246 = vunpack.c.h.b16 %v515
      %v1247 = vunpack.c.l.b16 %v516
      %v1248 = vunpack.c.h.b16 %v516
      %v1249 = vunpack.c.l.b16 %v517
      %v1250 = vunpack.c.h.b16 %v517
      %v1251 = vunpack.c.l.b16 %v518
      %v1252 = vunpack.c.h.b16 %v518
      %v1253 = vunpack.c.l.b16 %v519
      %v1254 = vunpack.c.h.b16 %v519
      %v1255 = vunpack.c.l.b16 %v520
      %v1256 = vunpack.c.h.b16 %v520
      %v1257 = vunpack.c.l.b16 %v521
      %v1258 = vunpack.c.h.b16 %v521
      %v1259 = vunpack.c.l.b16 %v522
      %v1260 = vunpack.c.h.b16 %v522
      %v1261 = vunpack.c.l.b16 %v523
      %v1262 = vunpack.c.h.b16 %v523
      %v1263 = vunpack.c.l.b16 %v524
      %v1264 = vunpack.c.h.b16 %v524
      %v1265 = vunpack.c.l.b16 %v525
      %v1266 = vunpack.c.h.b16 %v525
      %v1267 = vunpack.c.l.b16 %v526
      %v1268 = vunpack.c.h.b16 %v526
      %v1269 = vunpack.c.l.b16 %v527
      %v1270 = vunpack.c.h.b16 %v527
      %v1271 = vunpack.c.l.b16 %v528
      %v1272 = vunpack.c.h.b16 %v528
      %v1273 = vunpack.c.l.b16 %v529
      %v1274 = vunpack.c.h.b16 %v529
      %v1275 = vunpack.c.l.b16 %v530
      %v1276 = vunpack.c.h.b16 %v530
      %v1277 = vunpack.c.l.b16 %v531
      %v1278 = vunpack.c.h.b16 %v531
      %v1279 = vunpack.c.l.b16 %v532
      %v1280 = vunpack.c.h.b16 %v532
      %v1281 = vunpack.c.l.b16 %v533
      %v1282 = vunpack.c.h.b16 %v533
      %v1283 = vunpack.c.l.b16 %v534
      %v1284 = vunpack.c.h.b16 %v534
      %v1285 = vunpack.c.l.b16 %v535
      %v1286 = vunpack.c.h.b16 %v535
      %v1287 = vunpack.c.l.b16 %v536
      %v1288 = vunpack.c.h.b16 %v536
      %v1289 = vunpack.c.l.b16 %v537
      %v1290 = vunpack.c.h.b16 %v537
      %v1291 = vunpack.c.l.b16 %v538
      %v1292 = vunpack.c.h.b16 %v538
      %v1293 = vunpack.c.l.b16 %v539
      %v1294 = vunpack.c.h.b16 %v539
      %v1295 = vunpack.c.l.b16 %v540
      %v1296 = vunpack.c.h.b16 %v540
      %v1297 = vunpack.c.l.b16 %v541
      %v1298 = vunpack.c.h.b16 %v541
      %v1299 = vunpack.c.l.b16 %v542
      %v1300 = vunpack.c.h.b16 %v542
      %v1301 = vunpack.c.l.b16 %v543
      %v1302 = vunpack.c.h.b16 %v543
      %v1303 = vunpack.c.l.b16 %v544
      %v1304 = vunpack.c.h.b16 %v544
      %v1305 = vunpack.c.l.b16 %v545
      %v1306 = vunpack.c.h.b16 %v545
      %v1307 = vunpack.c.l.b16 %v546
      %v1308 = vunpack.c.h.b16 %v546
      %v1309 = vunpack.c.l.b16 %v547
      %v1310 = vunpack.c.h.b16 %v547
      %v1311 = vunpack.c.l.b16 %v548
      %v1312 = vunpack.c.h.b16 %v548
      %v1313 = vunpack.c.l.b16 %v549
      %v1314 = vunpack.c.h.b16 %v549
      %v1315 = vunpack.c.l.b16 %v550
      %v1316 = vunpack.c.h.b16 %v550
      %v1317 = vunpack.c.l.b16 %v551
      %v1318 = vunpack.c.h.b16 %v551
      %v1319 = vunpack.c.l.b16 %v552
      %v1320 = vunpack.c.h.b16 %v552
      %v1321 = vunpack.c.l.b16 %v553
      %v1322 = vunpack.c.h.b16 %v553
      %v1323 = vunpack.c.l.b16 %v554
      %v1324 = vunpack.c.h.b16 %v554
      %v1325 = vunpack.c.l.b16 %v555
      %v1326 = vunpack.c.h.b16 %v555
      %v1327 = vunpack.c.l.b16 %v556
      %v1328 = vunpack.c.h.b16 %v556
      %v1329 = vunpack.c.l.b16 %v557
      %v1330 = vunpack.c.h.b16 %v557
      %v1331 = vunpack.c.l.b16 %v558
      %v1332 = vunpack.c.h.b16 %v558
      %v1333 = vunpack.c.l.b16 %v559
      %v1334 = vunpack.c.h.b16 %v559
      %v1335 = vunpack.c.l.b16 %v560
      %v1336 = vunpack.c.h.b16 %v560
      %v1337 = vunpack.c.l.b16 %v561
      %v1338 = vunpack.c.h.b16 %v561
      %v1339 = vunpack.c.l.b16 %v562
      %v1340 = vunpack.c.h.b16 %v562
      %v1341 = vunpack.c.l.b16 %v563
      %v1342 = vunpack.c.h.b16 %v563
      %v1343 = vunpack.c.l.b16 %v564
      %v1344 = vunpack.c.h.b16 %v564
      %v1345 = vunpack.c.l.b16 %v565
      %v1346 = vunpack.c.h.b16 %v565
      %v1347 = vunpack.c.l.b16 %v566
      %v1348 = vunpack.c.h.b16 %v566
      %v1349 = vunpack.c.l.b16 %v567
      %v1350 = vunpack.c.h.b16 %v567
      %v1351 = vunpack.c.l.b16 %v568
      %v1352 = vunpack.c.h.b16 %v568
      %v1353 = vunpack.c.l.b16 %v569
      %v1354 = vunpack.c.h.b16 %v569
      %v1355 = vunpack.c.l.b16 %v570
      %v1356 = vunpack.c.h.b16 %v570
      %v1357 = vunpack.c.l.b16 %v571
      %v1358 = vunpack.c.h.b16 %v571
      %v1359 = vunpack.c.l.b16 %v572
      %v1360 = vunpack.c.h.b16 %v572
      %v1361 = vunpack.c.l.b16 %v573
      %v1362 = vunpack.c.h.b16 %v573
      %v1363 = vunpack.c.l.b16 %v574
      %v1364 = vunpack.c.h.b16 %v574
      %v1365 = vunpack.c.l.b16 %v575
      %v1366 = vunpack.c.h.b16 %v575
      %v1367 = vunpack.c.l.b16 %v576
      %v1368 = vunpack.c.h.b16 %v576
      %v1369 = vunpack.c.l.b16 %v577
      %v1370 = vunpack.c.h.b16 %v577
      %v1371 = vunpack.c.l.b16 %v578
      %v1372 = vunpack.c.h.b16 %v578
      %v1373 = vunpack.c.l.b16 %v579
      %v1374 = vunpack.c.h.b16 %v579
      %v1375 = vunpack.c.l.b16 %v580
      %v1376 = vunpack.c.h.b16 %v580
      %v1377 = vunpack.c.l.b16 %v581
      %v1378 = vunpack.c.h.b16 %v581
      %v1379 = vunpack.c.l.b16 %v582
      %v1380 = vunpack.c.h.b16 %v582
      %v1381 = vunpack.c.l.b16 %v583
      %v1382 = vunpack.c.h.b16 %v583
      %v1383 = vunpack.c.l.b16 %v584
      %v1384 = vunpack.c.h.b16 %v584
      %v1385 = vunpack.c.l.b16 %v585
      %v1386 = vunpack.c.h.b16 %v585
      %v1387 = vunpack.c.l.b16 %v586
      %v1388 = vunpack.c.h.b16 %v586
      %v1389 = vunpack.c.l.b16 %v587
      %v1390 = vunpack.c.h.b16 %v587
      %v1391 = vunpack.c.l.b16 %v588
      %v1392 = vunpack.c.h.b16 %v588
      %v1393 = vunpack.c.l.b16 %v589
      %v1394 = vunpack.c.h.b16 %v589
      %v1395 = vunpack.c.l.b16 %v590
      %v1396 = vunpack.c.h.b16 %v590
      %v1397 = vunpack.c.l.b16 %v591
      %v1398 = vunpack.c.h.b16 %v591
      %v1399 = vunpack.c.l.b16 %v592
      %v1400 = vunpack.c.h.b16 %v592
      %v1401 = vunpack.c.l.b16 %v593
      %v1402 = vunpack.c.h.b16 %v593
      %v1403 = vunpack.c.l.b16 %v594
      %v1404 = vunpack.c.h.b16 %v594
      %v1405 = vunpack.c.l.b16 %v595
      %v1406 = vunpack.c.h.b16 %v595
      %v1407 = vunpack.c.l.b16 %v596
      %v1408 = vunpack.c.h.b16 %v596
      %v1409 = vunpack.c.l.b16 %v597
      %v1410 = vunpack.c.h.b16 %v597
      %v1411 = vunpack.c.l.b16 %v598
      %v1412 = vunpack.c.h.b16 %v598
      %v1413 = vunpack.c.l.b16 %v599
      %v1414 = vunpack.c.h.b16 %v599
      %v1415 = vunpack.c.l.b16 %v600
      %v1416 = vunpack.c.h.b16 %v600
      %v1417 = vunpack.c.l.b16 %v601
      %v1418 = vunpack.c.h.b16 %v601
      %v1419 = vunpack.c.l.b16 %v602
      %v1420 = vunpack.c.h.b16 %v602
      %v1421 = vunpack.c.l.b16 %v603
      %v1422 = vunpack.c.h.b16 %v603
      %v1423 = vunpack.c.l.b16 %v604
      %v1424 = vunpack.c.h.b16 %v604
      %v1425 = vunpack.c.l.b16 %v605
      %v1426 = vunpack.c.h.b16 %v605
      %v1427 = vunpack.c.l.b16 %v606
      %v1428 = vunpack.c.h.b16 %v606
      %v1429 = vunpack.c.l.b16 %v607
      %v1430 = vunpack.c.h.b16 %v607
      %v1431 = vunpack.c.l.b16 %v608
      %v1432 = vunpack.c.h.b16 %v608
      %v1433 = vunpack.c.l.b16 %v609
      %v1434 = vunpack.c.h.b16 %v609
      %v1435 = vunpack.c.l.b16 %v610
      %v1436 = vunpack.c.h.b16 %v610
      %v1437 = vunpack.c.l.b16 %v611
      %v1438 = vunpack.c.h.b16 %v611
      %v1439 = vunpack.c.l.b16 %v612
      %v1440 = vunpack.c.h.b16 %v612
      %v1441 = vunpack.c.l.b16 %v613
      %v1442 = vunpack.c.h.b16 %v613
      %v1443 = vunpack.c.l.b16 %v614
      %v1444 = vunpack.c.h.b16 %v614
      %v1445 = vunpack.c.l.b16 %v615
      %v1446 = vunpack.c.h.b16 %v615
      %v1447 = vunpack.c.l.b16 %v616
      %v1448 = vunpack.c.h.b16 %v616
      %v1449 = vunpack.c.l.b16 %v617
      %v1450 = vunpack.c.h.b16 %v617
      %v1451 = vunpack.c.l.b16 %v618
      %v1452 = vunpack.c.h.b16 %v618
      %v1453 = vunpack.c.l.b16 %v619
      %v1454 = vunpack.c.h.b16 %v619
      %v1455 = vunpack.c.l.b16 %v620
      %v1456 = vunpack.c.h.b16 %v620
      %v1457 = vunpack.c.l.b16 %v621
      %v1458 = vunpack.c.h.b16 %v621
      %v1459 = vunpack.c.l.b16 %v622
      %v1460 = vunpack.c.h.b16 %v622
      %v1461 = vunpack.c.l.b16 %v623
      %v1462 = vunpack.c.h.b16 %v623
      %v1463 = vunpack.c.l.b16 %v624
      %v1464 = vunpack.c.h.b16 %v624
      %v1465 = vunpack.c.l.b16 %v625
      %v1466 = vunpack.c.h.b16 %v625
      %v1467 = vunpack.c.l.b16 %v626
      %v1468 = vunpack.c.h.b16 %v626
      %v1469 = vunpack.c.l.b16 %v627
      %v1470 = vunpack.c.h.b16 %v627
      %v1471 = vunpack.c.l.b16 %v628
      %v1472 = vunpack.c.h.b16 %v628
      %v1473 = vunpack.c.l.b16 %v629
      %v1474 = vunpack.c.h.b16 %v629
      %v1475 = vunpack.c.l.b16 %v630
      %v1476 = vunpack.c.h.b16 %v630
      %v1477 = vunpack.c.l.b16 %v631
      %v1478 = vunpack.c.h.b16 %v631
      %v1479 = vunpack.c.l.b16 %v632
      %v1480 = vunpack.c.h.b16 %v632
      %v1481 = vunpack.c.l.b16 %v633
      %v1482 = vunpack.c.h.b16 %v633
      %v1483 = vunpack.c.l.b16 %v634
      %v1484 = vunpack.c.h.b16 %v634
      %v1485 = vunpack.c.l.b16 %v635
      %v1486 = vunpack.c.h.b16 %v635
      %v1487 = vunpack.c.l.b16 %v636
      %v1488 = vunpack.c.h.b16 %v636
      %v1489 = vunpack.c.l.b16 %v637
      %v1490 = vunpack.c.h.b16 %v637
      %v1491 = vunpack.c.l.b16 %v638
      %v1492 = vunpack.c.h.b16 %v638
      %v1493 = vunpack.c.l.b16 %v639
      %v1494 = vunpack.c.h.b16 %v639
      %v1495 = vunpack.c.l.b16 %v640
      %v1496 = vunpack.c.h.b16 %v640
      %v1497 = vunpack.c.l.b16 %v641
      %v1498 = vunpack.c.h.b16 %v641
      %v1499 = vunpack.c.l.b16 %v642
      %v1500 = vunpack.c.h.b16 %v642
      %v1501 = vunpack.c.l.b16 %v643
      %v1502 = vunpack.c.h.b16 %v643
      %v1503 = vunpack.c.l.b16 %v644
      %v1504 = vunpack.c.h.b16 %v644
      %v1505 = vunpack.c.l.b16 %v645
      %v1506 = vunpack.c.h.b16 %v645
      %v1507 = vunpack.c.l.b16 %v646
      %v1508 = vunpack.c.h.b16 %v646
      %v1509 = vunpack.c.l.b16 %v647
      %v1510 = vunpack.c.h.b16 %v647
      %v1511 = vunpack.c.l.b16 %v648
      %v1512 = vunpack.c.h.b16 %v648
      %v1513 = vunpack.c.l.b16 %v649
      %v1514 = vunpack.c.h.b16 %v649
      %v1515 = vunpack.c.l.b16 %v650
      %v1516 = vunpack.c.h.b16 %v650
      %v1517 = vunpack.c.l.b16 %v651
      %v1518 = vunpack.c.h.b16 %v651
      %v1519 = vunpack.c.l.b16 %v652
      %v1520 = vunpack.c.h.b16 %v652
      %v1521 = vunpack.c.l.b16 %v653
      %v1522 = vunpack.c.h.b16 %v653
      %v1523 = vunpack.c.l.b16 %v654
      %v1524 = vunpack.c.h.b16 %v654
      %v1525 = vunpack.c.l.b16 %v655
      %v1526 = vunpack.c.h.b16 %v655
      %v1527 = vunpack.c.l.b16 %v656
      %v1528 = vunpack.c.h.b16 %v656
      %v1529 = vunpack.c.l.b16 %v657
      %v1530 = vunpack.c.h.b16 %v657
      %v1531 = vunpack.c.l.b16 %v658
      %v1532 = vunpack.c.h.b16 %v658
      %v1533 = vunpack.c.l.b16 %v659
      %v1534 = vunpack.c.h.b16 %v659
      %v1535 = vunpack.c.l.b16 %v660
      %v1536 = vunpack.c.h.b16 %v660
      %v1537 = vunpack.c.l.b16 %v661
      %v1538 = vunpack.c.h.b16 %v661
      %v1539 = vunpack.c.l.b16 %v662
      %v1540 = vunpack.c.h.b16 %v662
      %v1541 = vunpack.c.l.b16 %v663
      %v1542 = vunpack.c.h.b16 %v663
      %v1543 = vunpack.c.l.b16 %v664
      %v1544 = vunpack.c.h.b16 %v664
      %v1545 = vunpack.c.l.b16 %v665
      %v1546 = vunpack.c.h.b16 %v665
      %v1547 = vunpack.c.l.b16 %v666
      %v1548 = vunpack.c.h.b16 %v666
      %v1549 = vunpack.c.l.b16 %v667
      %v1550 = vunpack.c.h.b16 %v667
      %v1551 = vunpack.c.l.b16 %v668
      %v1552 = vunpack.c.h.b16 %v668
      %v1553 = vunpack.c.l.b16 %v669
      %v1554 = vunpack.c.h.b16 %v669
      %v1555 = vunpack.c.l.b16 %v670
      %v1556 = vunpack.c.h.b16 %v670
      %v1557 = vunpack.c.l.b16 %v671
      %v1558 = vunpack.c.h.b16 %v671
      %v1559 = vunpack.c.l.b16 %v672
      %v1560 = vunpack.c.h.b16 %v672
      %v1561 = vunpack.c.l.b16 %v673
      %v1562 = vunpack.c.h.b16 %v673
      %v1563 = vunpack.c.l.b16 %v674
      %v1564 = vunpack.c.h.b16 %v674
      %v1565 = vunpack.c.l.b16 %v675
      %v1566 = vunpack.c.h.b16 %v675
      %v1567 = vunpack.c.l.b16 %v676
      %v1568 = vunpack.c.h.b16 %v676
      %v1569 = vunpack.c.l.b16 %v677
      %v1570 = vunpack.c.h.b16 %v677
      %v1571 = vunpack.c.l.b16 %v678
      %v1572 = vunpack.c.h.b16 %v678
      %v1573 = vunpack.c.l.b16 %v679
      %v1574 = vunpack.c.h.b16 %v679
      %v1575 = vunpack.c.l.b16 %v680
      %v1576 = vunpack.c.h.b16 %v680
      %v1577 = vunpack.c.l.b16 %v681
      %v1578 = vunpack.c.h.b16 %v681
      %v1579 = vunpack.c.l.b16 %v682
      %v1580 = vunpack.c.h.b16 %v682
      %v1581 = vunpack.c.l.b16 %v683
      %v1582 = vunpack.c.h.b16 %v683
      %v1583 = vunpack.c.l.b16 %v684
      %v1584 = vunpack.c.h.b16 %v684
      %v1585 = vunpack.c.l.b16 %v685
      %v1586 = vunpack.c.h.b16 %v685
      %v1587 = vunpack.c.l.b16 %v686
      %v1588 = vunpack.c.h.b16 %v686
      %v1589 = vunpack.c.l.b16 %v687
      %v1590 = vunpack.c.h.b16 %v687
      %v1591 = vunpack.c.l.b16 %v688
      %v1592 = vunpack.c.h.b16 %v688
      %v1593 = vunpack.c.l.b16 %v689
      %v1594 = vunpack.c.h.b16 %v689
      %v1595 = vunpack.c.l.b16 %v690
      %v1596 = vunpack.c.h.b16 %v690
      %v1597 = vunpack.c.l.b16 %v691
      %v1598 = vunpack.c.h.b16 %v691
      %v1599 = vunpack.c.l.b16 %v692
      %v1600 = vunpack.c.h.b16 %v692
      %v1601 = vunpack.c.l.b16 %v693
      %v1602 = vunpack.c.h.b16 %v693
      %v1603 = vunpack.c.l.b16 %v694
      %v1604 = vunpack.c.h.b16 %v694
      %v1605 = vunpack.c.l.b16 %v695
      %v1606 = vunpack.c.h.b16 %v695
      %v1607 = vunpack.c.l.b16 %v696
      %v1608 = vunpack.c.h.b16 %v696
      %v1609 = vunpack.c.l.b16 %v697
      %v1610 = vunpack.c.h.b16 %v697
      %v1611 = vunpack.c.l.b16 %v698
      %v1612 = vunpack.c.h.b16 %v698
      %v1613 = vunpack.c.l.b16 %v699
      %v1614 = vunpack.c.h.b16 %v699
      %v1615 = vunpack.c.l.b16 %v700
      %v1616 = vunpack.c.h.b16 %v700
      %v1617 = vunpack.c.l.b16 %v701
      %v1618 = vunpack.c.h.b16 %v701
      %v1619 = vunpack.c.l.b16 %v702
      %v1620 = vunpack.c.h.b16 %v702
      %v1621 = vunpack.c.l.b16 %v703
      %v1622 = vunpack.c.h.b16 %v703
      %v1623 = vunpack.c.l.b16 %v704
      %v1624 = vunpack.c.h.b16 %v704
      %v1625 = vunpack.c.l.b16 %v705
      %v1626 = vunpack.c.h.b16 %v705
      %v1627 = vunpack.c.l.b16 %v706
      %v1628 = vunpack.c.h.b16 %v706
      %v1629 = vunpack.c.l.b16 %v707
      %v1630 = vunpack.c.h.b16 %v707
      %v1631 = vunpack.c.l.b16 %v708
      %v1632 = vunpack.c.h.b16 %v708
      %v1633 = vunpack.c.l.b16 %v709
      %v1634 = vunpack.c.h.b16 %v709
      %v1635 = vunpack.c.l.b16 %v710
      %v1636 = vunpack.c.h.b16 %v710
      %v1637 = vunpack.c.l.b16 %v711
      %v1638 = vunpack.c.h.b16 %v711
      %v1639 = vunpack.c.l.b16 %v712
      %v1640 = vunpack.c.h.b16 %v712
      %v1641 = vpack.c.b16 %v1131, %v1129
      %v1642 = vpack.c.b16 %v1132, %v1130
      %v1643 = vpack.c.b16 %v1135, %v1133
      %v1644 = vpack.c.b16 %v1136, %v1134
      %v1645 = vpack.c.b16 %v1139, %v1137
      %v1646 = vpack.c.b16 %v1140, %v1138
      %v1647 = vpack.c.b16 %v1143, %v1141
      %v1648 = vpack.c.b16 %v1144, %v1142
      %v1649 = vpack.c.b16 %v1147, %v1145
      %v1650 = vpack.c.b16 %v1148, %v1146
      %v1651 = vpack.c.b16 %v1151, %v1149
      %v1652 = vpack.c.b16 %v1152, %v1150
      %v1653 = vpack.c.b16 %v1155, %v1153
      %v1654 = vpack.c.b16 %v1156, %v1154
      %v1655 = vpack.c.b16 %v1159, %v1157
      %v1656 = vpack.c.b16 %v1160, %v1158
      %v1657 = vpack.c.b16 %v1163, %v1161
      %v1658 = vpack.c.b16 %v1164, %v1162
      %v1659 = vpack.c.b16 %v1167, %v1165
      %v1660 = vpack.c.b16 %v1168, %v1166
      %v1661 = vpack.c.b16 %v1171, %v1169
      %v1662 = vpack.c.b16 %v1172, %v1170
      %v1663 = vpack.c.b16 %v1175, %v1173
      %v1664 = vpack.c.b16 %v1176, %v1174
      %v1665 = vpack.c.b16 %v1179, %v1177
      %v1666 = vpack.c.b16 %v1180, %v1178
      %v1667 = vpack.c.b16 %v1183, %v1181
      %v1668 = vpack.c.b16 %v1184, %v1182
      %v1669 = vpack.c.b16 %v1187, %v1185
      %v1670 = vpack.c.b16 %v1188, %v1186
      %v1671 = vpack.c.b16 %v1191, %v1189
      %v1672 = vpack.c.b16 %v1192, %v1190
      %v1673 = vpack.c.b16 %v1195, %v1193
      %v1674 = vpack.c.b16 %v1196, %v1194
      %v1675 = vpack.c.b16 %v1199, %v1197
      %v1676 = vpack.c.b16 %v1200, %v1198
      %v1677 = vpack.c.b16 %v1203, %v1201
      %v1678 = vpack.c.b16 %v1204, %v1202
      %v1679 = vpack.c.b16 %v1207, %v1205
      %v1680 = vpack.c.b16 %v1208, %v1206
      %v1681 = vpack.c.b16 %v1211, %v1209
      %v1682 = vpack.c.b16 %v1212, %v1210
      %v1683 = vpack.c.b16 %v1215, %v1213
      %v1684 = vpack.c.b16 %v1216, %v1214
      %v1685 = vpack.c.b16 %v1219, %v1217
      %v1686 = vpack.c.b16 %v1220, %v1218
      %v1687 = vpack.c.b16 %v1223, %v1221
      %v1688 = vpack.c.b16 %v1224, %v1222
      %v1689 = vpack.c.b16 %v1227, %v1225
      %v1690 = vpack.c.b16 %v1228, %v1226
      %v1691 = vpack.c.b16 %v1231, %v1229
      %v1692 = vpack.c.b16 %v1232, %v1230
      %v1693 = vpack.c.b16 %v1235, %v1233
      %v1694 = vpack.c.b16 %v1236, %v1234
      %v1695 = vpack.c.b16 %v1239, %v1237
      %v1696 = vpack.c.b16 %v1240, %v1238
      %v1697 = vpack.c.b16 %v1243, %v1241
      %v1698 = vpack.c.b16 %v1244, %v1242
      %v1699 = vpack.c.b16 %v1247, %v1245
      %v1700 = vpack.c.b16 %v1248, %v1246
      %v1701 = vpack.c.b16 %v1251, %v1249
      %v1702 = vpack.c.b16 %v1252, %v1250
      %v1703 = vpack.c.b16 %v1255, %v1253
      %v1704 = vpack.c.b16 %v1256, %v1254
      %v1705 = vpack.c.b16 %v1259, %v1257
      %v1706 = vpack.c.b16 %v1260, %v1258
      %v1707 = vpack.c.b16 %v1263, %v1261
      %v1708 = vpack.c.b16 %v1264, %v1262
      %v1709 = vpack.c.b16 %v1267, %v1265
      %v1710 = vpack.c.b16 %v1268, %v1266
      %v1711 = vpack.c.b16 %v1271, %v1269
      %v1712 = vpack.c.b16 %v1272, %v1270
      %v1713 = vpack.c.b16 %v1275, %v1273
      %v1714 = vpack.c.b16 %v1276, %v1274
      %v1715 = vpack.c.b16 %v1279, %v1277
      %v1716 = vpack.c.b16 %v1280, %v1278
      %v1717 = vpack.c.b16 %v1283, %v1281
      %v1718 = vpack.c.b16 %v1284, %v1282
      %v1719 = vpack.c.b16 %v1287, %v1285
      %v1720 = vpack.c.b16 %v1288, %v1286
      %v1721 = vpack.c.b16 %v1291, %v1289
      %v1722 = vpack.c.b16 %v1292, %v1290
      %v1723 = vpack.c.b16 %v1295, %v1293
      %v1724 = vpack.c.b16 %v1296, %v1294
      %v1725 = vpack.c.b16 %v1299, %v1297
      %v1726 = vpack.c.b16 %v1300, %v1298
      %v1727 = vpack.c.b16 %v1303, %v1301
      %v1728 = vpack.c.b16 %v1304, %v1302
      %v1729 = vpack.c.b16 %v1307, %v1305
      %v1730 = vpack.c.b16 %v1308, %v1306
      %v1731 = vpack.c.b16 %v1311, %v1309
      %v1732 = vpack.c.b16 %v1312, %v1310
      %v1733 = vpack.c.b16 %v1315, %v1313
      %v1734 = vpack.c.b16 %v1316, %v1314
      %v1735 = vpack.c.b16 %v1319, %v1317
      %v1736 = vpack.c.b16 %v1320, %v1318
      %v1737 = vpack.c.b16 %v1323, %v1321
      %v1738 = vpack.c.b16 %v1324, %v1322
      %v1739 = vpack.c.b16 %v1327, %v1325
      %v1740 = vpack.c.b16 %v1328, %v1326
      %v1741 = vpack.c.b16 %v1331, %v1329
      %v1742 = vpack.c.b16 %v1332, %v1330
      %v1743 = vpack.c.b16 %v1335, %v1333
      %v1744 = vpack.c.b16 %v1336, %v1334
      %v1745 = vpack.c.b16 %v1339, %v1337
      %v1746 = vpack.c.b16 %v1340, %v1338
      %v1747 = vpack.c.b16 %v1343, %v1341
      %v1748 = vpack.c.b16 %v1344, %v1342
      %v1749 = vpack.c.b16 %v1347, %v1345
      %v1750 = vpack.c.b16 %v1348, %v1346
      %v1751 = vpack.c.b16 %v1351, %v1349
      %v1752 = vpack.c.b16 %v1352, %v1350
      %v1753 = vpack.c.b16 %v1355, %v1353
      %v1754 = vpack.c.b16 %v1356, %v1354
      %v1755 = vpack.c.b16 %v1359, %v1357
      %v1756 = vpack.c.b16 %v1360, %v1358
      %v1757 = vpack.c.b16 %v1363, %v1361
      %v1758 = vpack.c.b16 %v1364, %v1362
      %v1759 = vpack.c.b16 %v1367, %v1365
      %v1760 = vpack.c.b16 %v1368, %v1366
      %v1761 = vpack.c.b16 %v1371, %v1369
      %v1762 = vpack.c.b16 %v1372, %v1370
      %v1763 = vpack.c.b16 %v1375, %v1373
      %v1764 = vpack.c.b16 %v1376, %v1374
      %v1765 = vpack.c.b16 %v1379, %v1377
      %v1766 = vpack.c.b16 %v1380, %v1378
      %v1767 = vpack.c.b16 %v1383, %v1381
      %v1768 = vpack.c.b16 %v1384, %v1382
      %v1769 = vpack.c.b16 %v1387, %v1385
      %v1770 = vpack.c.b16 %v1388, %v1386
      %v1771 = vpack.c.b16 %v1391, %v1389
      %v1772 = vpack.c.b16 %v1392, %v1390
      %v1773 = vpack.c.b16 %v1395, %v1393
      %v1774 = vpack.c.b16 %v1396, %v1394
      %v1775 = vpack.c.b16 %v1399, %v1397
      %v1776 = vpack.c.b16 %v1400, %v1398
      %v1777 = vpack.c.b16 %v1403, %v1401
      %v1778 = vpack.c.b16 %v1404, %v1402
      %v1779 = vpack.c.b16 %v1407, %v1405
      %v1780 = vpack.c.b16 %v1408, %v1406
      %v1781 = vpack.c.b16 %v1411, %v1409
      %v1782 = vpack.c.b16 %v1412, %v1410
      %v1783 = vpack.c.b16 %v1415, %v1413
      %v1784 = vpack.c.b16 %v1416, %v1414
      %v1785 = vpack.c.b16 %v1419, %v1417
      %v1786 = vpack.c.b16 %v1420, %v1418
      %v1787 = vpack.c.b16 %v1423, %v1421
      %v1788 = vpack.c.b16 %v1424, %v1422
      %v1789 = vpack.c.b16 %v1427, %v1425
      %v1790 = vpack.c.b16 %v1428, %v1426
      %v1791 = vpack.c.b16 %v1431, %v1429
      %v1792 = vpack.c.b16 %v1432, %v1430
      %v1793 = vpack.c.b16 %v1435, %v1433
      %v1794 = vpack.c.b16 %v1436, %v1434
      %v1795 = vpack.c.b16 %v1439, %v1437
      %v1796 = vpack.c.b16 %v1440, %v1438
      %v1797 = vpack.c.b16 %v1443, %v1441
      %v1798 = vpack.c.b16 %v1444, %v1442
      %v1799 = vpack.c.b16 %v1447, %v1445
      %v1800 = vpack.c.b16 %v1448, %v1446
      %v1801 = vpack.c.b16 %v1451, %v1449
      %v1802 = vpack.c.b16 %v1452, %v1450
      %v1803 = vpack.c.b16 %v1455, %v1453
      %v1804 = vpack.c.b16 %v1456, %v1454
      %v1805 = vpack.c.b16 %v1459, %v1457
      %v1806 = vpack.c.b16 %v1460, %v1458
      %v1807 = vpack.c.b16 %v1463, %v1461
      %v1808 = vpack.c.b16 %v1464, %v1462
      %v1809 = vpack.c.b16 %v1467, %v1465
      %v1810 = vpack.c.b16 %v1468, %v1466
      %v1811 = vpack.c.b16 %v1471, %v1469
      %v1812 = vpack.c.b16 %v1472, %v1470
      %v1813 = vpack.c.b16 %v1475, %v1473
      %v1814 = vpack.c.b16 %v1476, %v1474
      %v1815 = vpack.c.b16 %v1479, %v1477
      %v1816 = vpack.c.b16 %v1480, %v1478
      %v1817 = vpack.c.b16 %v1483, %v1481
      %v1818 = vpack.c.b16 %v1484, %v1482
      %v1819 = vpack.c.b16 %v1487, %v1485
      %v1820 = vpack.c.b16 %v1488, %v1486
      %v1821 = vpack.c.b16 %v1491, %v1489
      %v1822 = vpack.c.b16 %v1492, %v1490
      %v1823 = vpack.c.b16 %v1495, %v1493
      %v1824 = vpack.c.b16 %v1496, %v1494
      %v1825 = vpack.c.b16 %v1499, %v1497
      %v1826 = vpack.c.b16 %v1500, %v1498
      %v1827 = vpack.c.b16 %v1503, %v1501
      %v1828 = vpack.c.b16 %v1504, %v1502
      %v1829 = vpack.c.b16 %v1507, %v1505
      %v1830 = vpack.c.b16 %v1508, %v1506
      %v1831 = vpack.c.b16 %v1511, %v1509
      %v1832 = vpack.c.b16 %v1512, %v1510
      %v1833 = vpack.c.b16 %v1515, %v1513
      %v1834 = vpack.c.b16 %v1516, %v1514
      %v1835 = vpack.c.b16 %v1519, %v1517
      %v1836 = vpack.c.b16 %v1520, %v1518
      %v1837 = vpack.c.b16 %v1523, %v1521
      %v1838 = vpack.c.b16 %v1524, %v1522
      %v1839 = vpack.c.b16 %v1527, %v1525
      %v1840 = vpack.c.b16 %v1528, %v1526
      %v1841 = vpack.c.b16 %v1531, %v1529
      %v1842 = vpack.c.b16 %v1532, %v1530
      %v1843 = vpack.c.b16 %v1535, %v1533
      %v1844 = vpack.c.b16 %v1536, %v1534
      %v1845 = vpack.c.b16 %v1539, %v1537
      %v1846 = vpack.c.b16 %v1540, %v1538
      %v1847 = vpack.c.b16 %v1543, %v1541
      %v1848 = vpack.c.b16 %v1544, %v1542
      %v1849 = vpack.c.b16 %v1547, %v1545
      %v1850 = vpack.c.b16 %v1548, %v1546
      %v1851 = vpack.c.b16 %v1551, %v1549
      %v1852 = vpack.c.b16 %v1552, %v1550
      %v1853 = vpack.c.b16 %v1555, %v1553
      %v1854 = vpack.c.b16 %v1556, %v1554
      %v1855 = vpack.c.b16 %v1559, %v1557
      %v1856 = vpack.c.b16 %v1560, %v1558
      %v1857 = vpack.c.b16 %v1563, %v1561
      %v1858 = vpack.c.b16 %v1564, %v1562
      %v1859 = vpack.c.b16 %v1567, %v1565
      %v1860 = vpack.c.b16 %v1568, %v1566
      %v1861 = vpack.c.b16 %v1571, %v1569
      %v1862 = vpack.c.b16 %v1572, %v1570
      %v1863 = vpack.c.b16 %v1575, %v1573
      %v1864 = vpack.c.b16 %v1576, %v1574
      %v1865 = vpack.c.b16 %v1579, %v1577
      %v1866 = vpack.c.b16 %v1580, %v1578
      %v1867 = vpack.c.b16 %v1583, %v1581
      %v1868 = vpack.c.b16 %v1584, %v1582
      %v1869 = vpack.c.b16 %v1587, %v1585
      %v1870 = vpack.c.b16 %v1588, %v1586
      %v1871 = vpack.c.b16 %v1591, %v1589
      %v1872 = vpack.c.b16 %v1592, %v1590
      %v1873 = vpack.c.b16 %v1595, %v1593
      %v1874 = vpack.c.b16 %v1596, %v1594
      %v1875 = vpack.c.b16 %v1599, %v1597
      %v1876 = vpack.c.b16 %v1600, %v1598
      %v1877 = vpack.c.b16 %v1603, %v1601
      %v1878 = vpack.c.b16 %v1604, %v1602
      %v1879 = vpack.c.b16 %v1607, %v1605
      %v1880 = vpack.c.b16 %v1608, %v1606
      %v1881 = vpack.c.b16 %v1611, %v1609
      %v1882 = vpack.c.b16 %v1612, %v1610
      %v1883 = vpack.c.b16 %v1615, %v1613
      %v1884 = vpack.c.b16 %v1616, %v1614
      %v1885 = vpack.c.b16 %v1619, %v1617
      %v1886 = vpack.c.b16 %v1620, %v1618
      %v1887 = vpack.c.b16 %v1623, %v1621
      %v1888 = vpack.c.b16 %v1624, %v1622
      %v1889 = vpack.c.b16 %v1627, %v1625
      %v1890 = vpack.c.b16 %v1628, %v1626
      %v1891 = vpack.c.b16 %v1631, %v1629
      %v1892 = vpack.c.b16 %v1632, %v1630
      %v1893 = vpack.c.b16 %v1635, %v1633
      %v1894 = vpack.c.b16 %v1636, %v1634
      %v1895 = vpack.c.b16 %v1639, %v1637
      %v1896 = vpack.c.b16 %v1640, %v1638
      %2153 = vmatprep.subr.bf16.mxu0 %v1656
      %2154 = vmatpush1.bf16.msra.mxu0 %v1655
      %2155 = vmatprep.subr.bf16.mxu0 %v1654
      %2156 = vmatpush1.bf16.msra.mxu0 %v1653
      %2157 = vmatprep.subr.bf16.mxu0 %v1652
      %2158 = vmatpush1.bf16.msra.mxu0 %v1651
      %2159 = vmatprep.subr.bf16.mxu0 %v1650
      %2160 = vmatpush1.bf16.msra.mxu0 %v1649
      %2161 = vmatprep.subr.bf16.mxu0 %v1648
      %2162 = vmatpush1.bf16.msra.mxu0 %v1647
      %2163 = vmatprep.subr.bf16.mxu0 %v1646
      %2164 = vmatpush1.bf16.msra.mxu0 %v1645
      %2165 = vmatprep.subr.bf16.mxu0 %v1644
      %2166 = vmatpush1.bf16.msra.mxu0 %v1643
      %2167 = vmatprep.subr.bf16.mxu0 %v1642
      %2168 = vmatpush1.bf16.msra.mxu0 %v1641
      %2169 = vmatprep.subr.bf16.mxu0 %v1672
      %2170 = vmatpush2.bf16.msra.mxu0 %v1671
      %2171 = vmatprep.subr.bf16.mxu0 %v1670
      %2172 = vmatpush2.bf16.msra.mxu0 %v1669
      %2173 = vmatprep.subr.bf16.mxu0 %v1668
      %2174 = vmatpush2.bf16.msra.mxu0 %v1667
      %2175 = vmatprep.subr.bf16.mxu0 %v1666
      %2176 = vmatpush2.bf16.msra.mxu0 %v1665
      %2177 = vmatprep.subr.bf16.mxu0 %v1664
      %2178 = vmatpush2.bf16.msra.mxu0 %v1663
      %2179 = vmatprep.subr.bf16.mxu0 %v1662
      %2180 = vmatpush2.bf16.msra.mxu0 %v1661
      %2181 = vmatprep.subr.bf16.mxu0 %v1660
      %2182 = vmatpush2.bf16.msra.mxu0 %v1659
      %2183 = vmatprep.subr.bf16.mxu0 %v1658
      %2184 = vmatpush2.bf16.msra.mxu0 %v1657
      %2185 = vmatprep.mubr.bf16.mxu0 %v810
      %2186 = vmatmul.mubr.bf16.gmra.mxu0 %v809
      %v2187 = vpop.f32.mrf.mxu0
      %v2188 = vadd.f32 0.0, %v2187
      %v2189 = vpop.f32.mrf.mxu0
      %v2190 = vadd.f32 0.0, %v2189
      %v2191 = vpop.f32.mrf.mxu0
      %v2192 = vadd.f32 0.0, %v2191
      %v2193 = vpop.f32.mrf.mxu0
      %v2194 = vadd.f32 0.0, %v2193
      %2195 = vmatprep.mubr.bf16.mxu0 %v826
      %2196 = vmatmul.mubr.bf16.gmra.mxu0 %v825
      %v2197 = vpop.f32.mrf.mxu0
      %v2198 = vadd.f32 0.0, %v2197
      %v2199 = vpop.f32.mrf.mxu0
      %v2200 = vadd.f32 0.0, %v2199
      %v2201 = vpop.f32.mrf.mxu0
      %v2202 = vadd.f32 0.0, %v2201
      %v2203 = vpop.f32.mrf.mxu0
      %v2204 = vadd.f32 0.0, %v2203
      %2205 = vdwg.mxu0
      %2206 = vmatprep.subr.bf16.mxu0 %v1688
      %2207 = vmatpush1.bf16.msra.mxu0 %v1687
      %2208 = vmatprep.subr.bf16.mxu0 %v1686
      %2209 = vmatpush1.bf16.msra.mxu0 %v1685
      %2210 = vmatprep.subr.bf16.mxu0 %v1684
      %2211 = vmatpush1.bf16.msra.mxu0 %v1683
      %2212 = vmatprep.subr.bf16.mxu0 %v1682
      %2213 = vmatpush1.bf16.msra.mxu0 %v1681
      %2214 = vmatprep.subr.bf16.mxu0 %v1680
      %2215 = vmatpush1.bf16.msra.mxu0 %v1679
      %2216 = vmatprep.subr.bf16.mxu0 %v1678
      %2217 = vmatpush1.bf16.msra.mxu0 %v1677
      %2218 = vmatprep.subr.bf16.mxu0 %v1676
      %2219 = vmatpush1.bf16.msra.mxu0 %v1675
      %2220 = vmatprep.subr.bf16.mxu0 %v1674
      %2221 = vmatpush1.bf16.msra.mxu0 %v1673
      %2222 = vmatprep.subr.bf16.mxu0 %v1704
      %2223 = vmatpush2.bf16.msra.mxu0 %v1703
      %2224 = vmatprep.subr.bf16.mxu0 %v1702
      %2225 = vmatpush2.bf16.msra.mxu0 %v1701
      %2226 = vmatprep.subr.bf16.mxu0 %v1700
      %2227 = vmatpush2.bf16.msra.mxu0 %v1699
      %2228 = vmatprep.subr.bf16.mxu0 %v1698
      %2229 = vmatpush2.bf16.msra.mxu0 %v1697
      %2230 = vmatprep.subr.bf16.mxu0 %v1696
      %2231 = vmatpush2.bf16.msra.mxu0 %v1695
      %2232 = vmatprep.subr.bf16.mxu0 %v1694
      %2233 = vmatpush2.bf16.msra.mxu0 %v1693
      %2234 = vmatprep.subr.bf16.mxu0 %v1692
      %2235 = vmatpush2.bf16.msra.mxu0 %v1691
      %2236 = vmatprep.subr.bf16.mxu0 %v1690
      %2237 = vmatpush2.bf16.msra.mxu0 %v1689
      %2238 = vmatprep.mubr.bf16.mxu0 %v812
      %2239 = vmatmul.mubr.bf16.gmra.mxu0 %v811
      %v2240 = vpop.f32.mrf.mxu0
      %v2241 = vadd.f32 %v2188, %v2240
      %v2242 = vpop.f32.mrf.mxu0
      %v2243 = vadd.f32 %v2190, %v2242
      %v2244 = vpop.f32.mrf.mxu0
      %v2245 = vadd.f32 %v2192, %v2244
      %v2246 = vpop.f32.mrf.mxu0
      %v2247 = vadd.f32 %v2194, %v2246
      %2248 = vmatprep.mubr.bf16.mxu0 %v828
      %2249 = vmatmul.mubr.bf16.gmra.mxu0 %v827
      %v2250 = vpop.f32.mrf.mxu0
      %v2251 = vadd.f32 %v2198, %v2250
      %v2252 = vpop.f32.mrf.mxu0
      %v2253 = vadd.f32 %v2200, %v2252
      %v2254 = vpop.f32.mrf.mxu0
      %v2255 = vadd.f32 %v2202, %v2254
      %v2256 = vpop.f32.mrf.mxu0
      %v2257 = vadd.f32 %v2204, %v2256
      %2258 = vdwg.mxu0
      %2259 = vmatprep.subr.bf16.mxu0 %v1720
      %2260 = vmatpush1.bf16.msra.mxu0 %v1719
      %2261 = vmatprep.subr.bf16.mxu0 %v1718
      %2262 = vmatpush1.bf16.msra.mxu0 %v1717
      %2263 = vmatprep.subr.bf16.mxu0 %v1716
      %2264 = vmatpush1.bf16.msra.mxu0 %v1715
      %2265 = vmatprep.subr.bf16.mxu0 %v1714
      %2266 = vmatpush1.bf16.msra.mxu0 %v1713
      %2267 = vmatprep.subr.bf16.mxu0 %v1712
      %2268 = vmatpush1.bf16.msra.mxu0 %v1711
      %2269 = vmatprep.subr.bf16.mxu0 %v1710
      %2270 = vmatpush1.bf16.msra.mxu0 %v1709
      %2271 = vmatprep.subr.bf16.mxu0 %v1708
      %2272 = vmatpush1.bf16.msra.mxu0 %v1707
      %2273 = vmatprep.subr.bf16.mxu0 %v1706
      %2274 = vmatpush1.bf16.msra.mxu0 %v1705
      %2275 = vmatprep.subr.bf16.mxu0 %v1736
      %2276 = vmatpush2.bf16.msra.mxu0 %v1735
      %2277 = vmatprep.subr.bf16.mxu0 %v1734
      %2278 = vmatpush2.bf16.msra.mxu0 %v1733
      %2279 = vmatprep.subr.bf16.mxu0 %v1732
      %2280 = vmatpush2.bf16.msra.mxu0 %v1731
      %2281 = vmatprep.subr.bf16.mxu0 %v1730
      %2282 = vmatpush2.bf16.msra.mxu0 %v1729
      %2283 = vmatprep.subr.bf16.mxu0 %v1728
      %2284 = vmatpush2.bf16.msra.mxu0 %v1727
      %2285 = vmatprep.subr.bf16.mxu0 %v1726
      %2286 = vmatpush2.bf16.msra.mxu0 %v1725
      %2287 = vmatprep.subr.bf16.mxu0 %v1724
      %2288 = vmatpush2.bf16.msra.mxu0 %v1723
      %2289 = vmatprep.subr.bf16.mxu0 %v1722
      %2290 = vmatpush2.bf16.msra.mxu0 %v1721
      %2291 = vmatprep.mubr.bf16.mxu0 %v814
      %2292 = vmatmul.mubr.bf16.gmra.mxu0 %v813
      %v2293 = vpop.f32.mrf.mxu0
      %v2294 = vadd.f32 %v2241, %v2293
      %v2295 = vpop.f32.mrf.mxu0
      %v2296 = vadd.f32 %v2243, %v2295
      %v2297 = vpop.f32.mrf.mxu0
      %v2298 = vadd.f32 %v2245, %v2297
      %v2299 = vpop.f32.mrf.mxu0
      %v2300 = vadd.f32 %v2247, %v2299
      %2301 = vmatprep.mubr.bf16.mxu0 %v830
      %2302 = vmatmul.mubr.bf16.gmra.mxu0 %v829
      %v2303 = vpop.f32.mrf.mxu0
      %v2304 = vadd.f32 %v2251, %v2303
      %v2305 = vpop.f32.mrf.mxu0
      %v2306 = vadd.f32 %v2253, %v2305
      %v2307 = vpop.f32.mrf.mxu0
      %v2308 = vadd.f32 %v2255, %v2307
      %v2309 = vpop.f32.mrf.mxu0
      %v2310 = vadd.f32 %v2257, %v2309
      %2311 = vdwg.mxu0
      %2312 = vmatprep.subr.bf16.mxu0 %v1752
      %2313 = vmatpush1.bf16.msra.mxu0 %v1751
      %2314 = vmatprep.subr.bf16.mxu0 %v1750
      %2315 = vmatpush1.bf16.msra.mxu0 %v1749
      %2316 = vmatprep.subr.bf16.mxu0 %v1748
      %2317 = vmatpush1.bf16.msra.mxu0 %v1747
      %2318 = vmatprep.subr.bf16.mxu0 %v1746
      %2319 = vmatpush1.bf16.msra.mxu0 %v1745
      %2320 = vmatprep.subr.bf16.mxu0 %v1744
      %2321 = vmatpush1.bf16.msra.mxu0 %v1743
      %2322 = vmatprep.subr.bf16.mxu0 %v1742
      %2323 = vmatpush1.bf16.msra.mxu0 %v1741
      %2324 = vmatprep.subr.bf16.mxu0 %v1740
      %2325 = vmatpush1.bf16.msra.mxu0 %v1739
      %2326 = vmatprep.subr.bf16.mxu0 %v1738
      %2327 = vmatpush1.bf16.msra.mxu0 %v1737
      %2328 = vmatprep.subr.bf16.mxu0 %v1768
      %2329 = vmatpush2.bf16.msra.mxu0 %v1767
      %2330 = vmatprep.subr.bf16.mxu0 %v1766
      %2331 = vmatpush2.bf16.msra.mxu0 %v1765
      %2332 = vmatprep.subr.bf16.mxu0 %v1764
      %2333 = vmatpush2.bf16.msra.mxu0 %v1763
      %2334 = vmatprep.subr.bf16.mxu0 %v1762
      %2335 = vmatpush2.bf16.msra.mxu0 %v1761
      %2336 = vmatprep.subr.bf16.mxu0 %v1760
      %2337 = vmatpush2.bf16.msra.mxu0 %v1759
      %2338 = vmatprep.subr.bf16.mxu0 %v1758
      %2339 = vmatpush2.bf16.msra.mxu0 %v1757
      %2340 = vmatprep.subr.bf16.mxu0 %v1756
      %2341 = vmatpush2.bf16.msra.mxu0 %v1755
      %2342 = vmatprep.subr.bf16.mxu0 %v1754
      %2343 = vmatpush2.bf16.msra.mxu0 %v1753
      %2344 = vmatprep.mubr.bf16.mxu0 %v816
      %2345 = vmatmul.mubr.bf16.gmra.mxu0 %v815
      %v2346 = vpop.f32.mrf.mxu0
      %v2347 = vadd.f32 %v2294, %v2346
      %v2348 = vpop.f32.mrf.mxu0
      %v2349 = vadd.f32 %v2296, %v2348
      %v2350 = vpop.f32.mrf.mxu0
      %v2351 = vadd.f32 %v2298, %v2350
      %v2352 = vpop.f32.mrf.mxu0
      %v2353 = vadd.f32 %v2300, %v2352
      %2354 = vmatprep.mubr.bf16.mxu0 %v832
      %2355 = vmatmul.mubr.bf16.gmra.mxu0 %v831
      %v2356 = vpop.f32.mrf.mxu0
      %v2357 = vadd.f32 %v2304, %v2356
      %v2358 = vpop.f32.mrf.mxu0
      %v2359 = vadd.f32 %v2306, %v2358
      %v2360 = vpop.f32.mrf.mxu0
      %v2361 = vadd.f32 %v2308, %v2360
      %v2362 = vpop.f32.mrf.mxu0
      %v2363 = vadd.f32 %v2310, %v2362
      %2364 = vdwg.mxu0
      %2365 = vmatprep.subr.bf16.mxu0 %v1784
      %2366 = vmatpush1.bf16.msra.mxu0 %v1783
      %2367 = vmatprep.subr.bf16.mxu0 %v1782
      %2368 = vmatpush1.bf16.msra.mxu0 %v1781
      %2369 = vmatprep.subr.bf16.mxu0 %v1780
      %2370 = vmatpush1.bf16.msra.mxu0 %v1779
      %2371 = vmatprep.subr.bf16.mxu0 %v1778
      %2372 = vmatpush1.bf16.msra.mxu0 %v1777
      %2373 = vmatprep.subr.bf16.mxu0 %v1776
      %2374 = vmatpush1.bf16.msra.mxu0 %v1775
      %2375 = vmatprep.subr.bf16.mxu0 %v1774
      %2376 = vmatpush1.bf16.msra.mxu0 %v1773
      %2377 = vmatprep.subr.bf16.mxu0 %v1772
      %2378 = vmatpush1.bf16.msra.mxu0 %v1771
      %2379 = vmatprep.subr.bf16.mxu0 %v1770
      %2380 = vmatpush1.bf16.msra.mxu0 %v1769
      %2381 = vmatprep.subr.bf16.mxu0 %v1800
      %2382 = vmatpush2.bf16.msra.mxu0 %v1799
      %2383 = vmatprep.subr.bf16.mxu0 %v1798
      %2384 = vmatpush2.bf16.msra.mxu0 %v1797
      %2385 = vmatprep.subr.bf16.mxu0 %v1796
      %2386 = vmatpush2.bf16.msra.mxu0 %v1795
      %2387 = vmatprep.subr.bf16.mxu0 %v1794
      %2388 = vmatpush2.bf16.msra.mxu0 %v1793
      %2389 = vmatprep.subr.bf16.mxu0 %v1792
      %2390 = vmatpush2.bf16.msra.mxu0 %v1791
      %2391 = vmatprep.subr.bf16.mxu0 %v1790
      %2392 = vmatpush2.bf16.msra.mxu0 %v1789
      %2393 = vmatprep.subr.bf16.mxu0 %v1788
      %2394 = vmatpush2.bf16.msra.mxu0 %v1787
      %2395 = vmatprep.subr.bf16.mxu0 %v1786
      %2396 = vmatpush2.bf16.msra.mxu0 %v1785
      %2397 = vmatprep.mubr.bf16.mxu0 %v818
      %2398 = vmatmul.mubr.bf16.gmra.mxu0 %v817
      %v2399 = vpop.f32.mrf.mxu0
      %v2400 = vadd.f32 %v2347, %v2399
      %v2401 = vpop.f32.mrf.mxu0
      %v2402 = vadd.f32 %v2349, %v2401
      %v2403 = vpop.f32.mrf.mxu0
      %v2404 = vadd.f32 %v2351, %v2403
      %v2405 = vpop.f32.mrf.mxu0
      %v2406 = vadd.f32 %v2353, %v2405
      %2407 = vmatprep.mubr.bf16.mxu0 %v834
      %2408 = vmatmul.mubr.bf16.gmra.mxu0 %v833
      %v2409 = vpop.f32.mrf.mxu0
      %v2410 = vadd.f32 %v2357, %v2409
      %v2411 = vpop.f32.mrf.mxu0
      %v2412 = vadd.f32 %v2359, %v2411
      %v2413 = vpop.f32.mrf.mxu0
      %v2414 = vadd.f32 %v2361, %v2413
      %v2415 = vpop.f32.mrf.mxu0
      %v2416 = vadd.f32 %v2363, %v2415
      %2417 = vdwg.mxu0
      %2418 = vmatprep.subr.bf16.mxu0 %v1816
      %2419 = vmatpush1.bf16.msra.mxu0 %v1815
      %2420 = vmatprep.subr.bf16.mxu0 %v1814
      %2421 = vmatpush1.bf16.msra.mxu0 %v1813
      %2422 = vmatprep.subr.bf16.mxu0 %v1812
      %2423 = vmatpush1.bf16.msra.mxu0 %v1811
      %2424 = vmatprep.subr.bf16.mxu0 %v1810
      %2425 = vmatpush1.bf16.msra.mxu0 %v1809
      %2426 = vmatprep.subr.bf16.mxu0 %v1808
      %2427 = vmatpush1.bf16.msra.mxu0 %v1807
      %2428 = vmatprep.subr.bf16.mxu0 %v1806
      %2429 = vmatpush1.bf16.msra.mxu0 %v1805
      %2430 = vmatprep.subr.bf16.mxu0 %v1804
      %2431 = vmatpush1.bf16.msra.mxu0 %v1803
      %2432 = vmatprep.subr.bf16.mxu0 %v1802
      %2433 = vmatpush1.bf16.msra.mxu0 %v1801
      %2434 = vmatprep.subr.bf16.mxu0 %v1832
      %2435 = vmatpush2.bf16.msra.mxu0 %v1831
      %2436 = vmatprep.subr.bf16.mxu0 %v1830
      %2437 = vmatpush2.bf16.msra.mxu0 %v1829
      %2438 = vmatprep.subr.bf16.mxu0 %v1828
      %2439 = vmatpush2.bf16.msra.mxu0 %v1827
      %2440 = vmatprep.subr.bf16.mxu0 %v1826
      %2441 = vmatpush2.bf16.msra.mxu0 %v1825
      %2442 = vmatprep.subr.bf16.mxu0 %v1824
      %2443 = vmatpush2.bf16.msra.mxu0 %v1823
      %2444 = vmatprep.subr.bf16.mxu0 %v1822
      %2445 = vmatpush2.bf16.msra.mxu0 %v1821
      %2446 = vmatprep.subr.bf16.mxu0 %v1820
      %2447 = vmatpush2.bf16.msra.mxu0 %v1819
      %2448 = vmatprep.subr.bf16.mxu0 %v1818
      %2449 = vmatpush2.bf16.msra.mxu0 %v1817
      %2450 = vmatprep.mubr.bf16.mxu0 %v820
      %2451 = vmatmul.mubr.bf16.gmra.mxu0 %v819
      %v2452 = vpop.f32.mrf.mxu0
      %v2453 = vadd.f32 %v2400, %v2452
      %v2454 = vpop.f32.mrf.mxu0
      %v2455 = vadd.f32 %v2402, %v2454
      %v2456 = vpop.f32.mrf.mxu0
      %v2457 = vadd.f32 %v2404, %v2456
      %v2458 = vpop.f32.mrf.mxu0
      %v2459 = vadd.f32 %v2406, %v2458
      %2460 = vmatprep.mubr.bf16.mxu0 %v836
      %2461 = vmatmul.mubr.bf16.gmra.mxu0 %v835
      %v2462 = vpop.f32.mrf.mxu0
      %v2463 = vadd.f32 %v2410, %v2462
      %v2464 = vpop.f32.mrf.mxu0
      %v2465 = vadd.f32 %v2412, %v2464
      %v2466 = vpop.f32.mrf.mxu0
      %v2467 = vadd.f32 %v2414, %v2466
      %v2468 = vpop.f32.mrf.mxu0
      %v2469 = vadd.f32 %v2416, %v2468
      %2470 = vdwg.mxu0
      %2471 = vmatprep.subr.bf16.mxu0 %v1848
      %2472 = vmatpush1.bf16.msra.mxu0 %v1847
      %2473 = vmatprep.subr.bf16.mxu0 %v1846
      %2474 = vmatpush1.bf16.msra.mxu0 %v1845
      %2475 = vmatprep.subr.bf16.mxu0 %v1844
      %2476 = vmatpush1.bf16.msra.mxu0 %v1843
      %2477 = vmatprep.subr.bf16.mxu0 %v1842
      %2478 = vmatpush1.bf16.msra.mxu0 %v1841
      %2479 = vmatprep.subr.bf16.mxu0 %v1840
      %2480 = vmatpush1.bf16.msra.mxu0 %v1839
      %2481 = vmatprep.subr.bf16.mxu0 %v1838
      %2482 = vmatpush1.bf16.msra.mxu0 %v1837
      %2483 = vmatprep.subr.bf16.mxu0 %v1836
      %2484 = vmatpush1.bf16.msra.mxu0 %v1835
      %2485 = vmatprep.subr.bf16.mxu0 %v1834
      %2486 = vmatpush1.bf16.msra.mxu0 %v1833
      %2487 = vmatprep.subr.bf16.mxu0 %v1864
      %2488 = vmatpush2.bf16.msra.mxu0 %v1863
      %2489 = vmatprep.subr.bf16.mxu0 %v1862
      %2490 = vmatpush2.bf16.msra.mxu0 %v1861
      %2491 = vmatprep.subr.bf16.mxu0 %v1860
      %2492 = vmatpush2.bf16.msra.mxu0 %v1859
      %2493 = vmatprep.subr.bf16.mxu0 %v1858
      %2494 = vmatpush2.bf16.msra.mxu0 %v1857
      %2495 = vmatprep.subr.bf16.mxu0 %v1856
      %2496 = vmatpush2.bf16.msra.mxu0 %v1855
      %2497 = vmatprep.subr.bf16.mxu0 %v1854
      %2498 = vmatpush2.bf16.msra.mxu0 %v1853
      %2499 = vmatprep.subr.bf16.mxu0 %v1852
      %2500 = vmatpush2.bf16.msra.mxu0 %v1851
      %2501 = vmatprep.subr.bf16.mxu0 %v1850
      %2502 = vmatpush2.bf16.msra.mxu0 %v1849
      %2503 = vmatprep.mubr.bf16.mxu0 %v822
      %2504 = vmatmul.mubr.bf16.gmra.mxu0 %v821
      %v2505 = vpop.f32.mrf.mxu0
      %v2506 = vadd.f32 %v2453, %v2505
      %v2507 = vpop.f32.mrf.mxu0
      %v2508 = vadd.f32 %v2455, %v2507
      %v2509 = vpop.f32.mrf.mxu0
      %v2510 = vadd.f32 %v2457, %v2509
      %v2511 = vpop.f32.mrf.mxu0
      %v2512 = vadd.f32 %v2459, %v2511
      %2513 = vmatprep.mubr.bf16.mxu0 %v838
      %2514 = vmatmul.mubr.bf16.gmra.mxu0 %v837
      %v2515 = vpop.f32.mrf.mxu0
      %v2516 = vadd.f32 %v2463, %v2515
      %v2517 = vpop.f32.mrf.mxu0
      %v2518 = vadd.f32 %v2465, %v2517
      %v2519 = vpop.f32.mrf.mxu0
      %v2520 = vadd.f32 %v2467, %v2519
      %v2521 = vpop.f32.mrf.mxu0
      %v2522 = vadd.f32 %v2469, %v2521
      %2523 = vdwg.mxu0
      %2524 = vmatprep.subr.bf16.mxu0 %v1880
      %2525 = vmatpush1.bf16.msra.mxu0 %v1879
      %2526 = vmatprep.subr.bf16.mxu0 %v1878
      %2527 = vmatpush1.bf16.msra.mxu0 %v1877
      %2528 = vmatprep.subr.bf16.mxu0 %v1876
      %2529 = vmatpush1.bf16.msra.mxu0 %v1875
      %2530 = vmatprep.subr.bf16.mxu0 %v1874
      %2531 = vmatpush1.bf16.msra.mxu0 %v1873
      %2532 = vmatprep.subr.bf16.mxu0 %v1872
      %2533 = vmatpush1.bf16.msra.mxu0 %v1871
      %2534 = vmatprep.subr.bf16.mxu0 %v1870
      %2535 = vmatpush1.bf16.msra.mxu0 %v1869
      %2536 = vmatprep.subr.bf16.mxu0 %v1868
      %2537 = vmatpush1.bf16.msra.mxu0 %v1867
      %2538 = vmatprep.subr.bf16.mxu0 %v1866
      %2539 = vmatpush1.bf16.msra.mxu0 %v1865
      %2540 = vmatprep.subr.bf16.mxu0 %v1896
      %2541 = vmatpush2.bf16.msra.mxu0 %v1895
      %2542 = vmatprep.subr.bf16.mxu0 %v1894
      %2543 = vmatpush2.bf16.msra.mxu0 %v1893
      %2544 = vmatprep.subr.bf16.mxu0 %v1892
      %2545 = vmatpush2.bf16.msra.mxu0 %v1891
      %2546 = vmatprep.subr.bf16.mxu0 %v1890
      %2547 = vmatpush2.bf16.msra.mxu0 %v1889
      %2548 = vmatprep.subr.bf16.mxu0 %v1888
      %2549 = vmatpush2.bf16.msra.mxu0 %v1887
      %2550 = vmatprep.subr.bf16.mxu0 %v1886
      %2551 = vmatpush2.bf16.msra.mxu0 %v1885
      %2552 = vmatprep.subr.bf16.mxu0 %v1884
      %2553 = vmatpush2.bf16.msra.mxu0 %v1883
      %2554 = vmatprep.subr.bf16.mxu0 %v1882
      %2555 = vmatpush2.bf16.msra.mxu0 %v1881
      %2556 = vmatprep.mubr.bf16.mxu0 %v824
      %2557 = vmatmul.mubr.bf16.gmra.mxu0 %v823
      %v2558 = vpop.f32.mrf.mxu0
      %v2559 = vadd.f32 %v2506, %v2558
      %v2560 = vpop.f32.mrf.mxu0
      %v2561 = vadd.f32 %v2508, %v2560
      %v2562 = vpop.f32.mrf.mxu0
      %v2563 = vadd.f32 %v2510, %v2562
      %v2564 = vpop.f32.mrf.mxu0
      %v2565 = vadd.f32 %v2512, %v2564
      %2566 = vmatprep.mubr.bf16.mxu0 %v840
      %2567 = vmatmul.mubr.bf16.gmra.mxu0 %v839
      %v2568 = vpop.f32.mrf.mxu0
      %v2569 = vadd.f32 %v2516, %v2568
      %v2570 = vpop.f32.mrf.mxu0
      %v2571 = vadd.f32 %v2518, %v2570
      %v2572 = vpop.f32.mrf.mxu0
      %v2573 = vadd.f32 %v2520, %v2572
      %v2574 = vpop.f32.mrf.mxu0
      %v2575 = vadd.f32 %v2522, %v2574
      %2576 = vdwg.mxu0
      %v2577 = vadd.f32 %v417, %v2559
      %v2578 = vadd.f32 %v418, %v2561
      %v2579 = vadd.f32 %v419, %v2563
      %v2580 = vadd.f32 %v420, %v2565
      %v2581 = vadd.f32 %v421, %v2569
      %v2582 = vadd.f32 %v422, %v2571
      %v2583 = vadd.f32 %v423, %v2573
      %v2584 = vadd.f32 %v424, %v2575
      %2585 = vst [vmem:[#allocation2] sm:$0xff] %v2577
      %2586 = vst [vmem:[#allocation2 + $0x8] sm:$0xff] %v2578
      %2587 = vst [vmem:[#allocation2 + $0x10] sm:$0xff] %v2579
      %2588 = vst [vmem:[#allocation2 + $0x18] sm:$0xff] %v2580
      %2589 = vst [vmem:[#allocation2 + $0x20] sm:$0xff] %v2581
      %2590 = vst [vmem:[#allocation2 + $0x28] sm:$0xff] %v2582
      %2591 = vst [vmem:[#allocation2 + $0x30] sm:$0xff] %v2583
      %2592 = vst [vmem:[#allocation2 + $0x38] sm:$0xff] %v2584
      // Predicated region
      $region33: #{generator_forward.11} parent=27 // pred_check
        %p2593 = pneg %p405
      $region34: #{generator_forward.11} parent=27 // pred_check_branch
        %2595 = sbr.rel (%p2593) target = $region36
      $region35: #{generator_forward.11} parent=27 // pred_region
        %v2596 = vld [vmem:[#allocation2] sm:$0xff]
        %v2597 = vld [vmem:[#allocation2 + $0x8] sm:$0xff]
        %v2598 = vld [vmem:[#allocation2 + $0x10] sm:$0xff]
        %v2599 = vld [vmem:[#allocation2 + $0x18] sm:$0xff]
        %v2600 = vld [vmem:[#allocation2 + $0x20] sm:$0xff]
        %v2601 = vld [vmem:[#allocation2 + $0x28] sm:$0xff]
        %v2602 = vld [vmem:[#allocation2 + $0x30] sm:$0xff]
        %v2603 = vld [vmem:[#allocation2 + $0x38] sm:$0xff]
        %v2604 = vpack.c.bf16 %v2598, %v2596
        %v2605 = vpack.c.bf16 %v2599, %v2597
        %v2606 = vpack.c.bf16 %v2602, %v2600
        %v2607 = vpack.c.bf16 %v2603, %v2601
        %v2612 = vunpack.c.l.b16 %v2604
        %v2613 = vunpack.c.l.b16 %v2605
        %v2614 = vunpack.c.h.b16 %v2604
        %v2615 = vunpack.c.h.b16 %v2605
        %v2616 = vunpack.c.l.b16 %v2606
        %v2617 = vunpack.c.l.b16 %v2607
        %v2618 = vunpack.c.h.b16 %v2606
        %v2619 = vunpack.c.h.b16 %v2607
        %v2620 = vpack.c.b16 %v2613, %v2612
        %v2621 = vpack.c.b16 %v2615, %v2614
        %v2622 = vpack.c.b16 %v2617, %v2616
        %v2623 = vpack.c.b16 %v2619, %v2618
        %2628 = vst [vmem:[%s374] sm:$0xff] %v2620
        %2629 = vst [vmem:[%s374 + $0x8] sm:$0xff] %v2621
        %2630 = vst [vmem:[%s374 + $0x10] sm:$0xff] %v2622
        %2631 = vst [vmem:[%s374 + $0x18] sm:$0xff] %v2623
        %v2632 = vadd.f32 %v2596, %v2598
        %v2633 = vadd.f32 %v2632, %v2600
        %v2634 = vadd.f32 %v2633, %v2602
        %v2635 = vrot.slane %v2634, 4
        %v2636 = vadd.f32 %v2634, %v2635
        %v2637 = vrot.slane %v2636, 2
        %v2638 = vadd.f32 %v2636, %v2637
        %v2639 = vrot.slane %v2638, 1
        %v2640 = vadd.f32 %v2638, %v2639
        %v2641 = vadd.f32 %v2597, %v2599
        %v2642 = vadd.f32 %v2641, %v2601
        %v2643 = vadd.f32 %v2642, %v2603
        %v2644 = vrot.slane %v2643, 4
        %v2645 = vadd.f32 %v2643, %v2644
        %v2646 = vrot.slane %v2645, 2
        %v2647 = vadd.f32 %v2645, %v2646
        %v2648 = vrot.slane %v2647, 1
        %v2649 = vadd.f32 %v2647, %v2648
        %v2650 = vmul.f32 %v2596, %v2596
        %v2651 = vmul.f32 %v2597, %v2597
        %v2652 = vmul.f32 %v2598, %v2598
        %v2653 = vmul.f32 %v2599, %v2599
        %v2654 = vmul.f32 %v2600, %v2600
        %v2655 = vmul.f32 %v2601, %v2601
        %v2656 = vmul.f32 %v2602, %v2602
        %v2657 = vmul.f32 %v2603, %v2603
        %v2658 = vadd.f32 %v2650, %v2652
        %v2659 = vadd.f32 %v2658, %v2654
        %v2660 = vadd.f32 %v2659, %v2656
        %v2661 = vrot.slane %v2660, 4
        %v2662 = vadd.f32 %v2660, %v2661
        %v2663 = vrot.slane %v2662, 2
        %v2664 = vadd.f32 %v2662, %v2663
        %v2665 = vrot.slane %v2664, 1
        %v2666 = vadd.f32 %v2664, %v2665
        %v2667 = vadd.f32 %v2651, %v2653
        %v2668 = vadd.f32 %v2667, %v2655
        %v2669 = vadd.f32 %v2668, %v2657
        %v2670 = vrot.slane %v2669, 4
        %v2671 = vadd.f32 %v2669, %v2670
        %v2672 = vrot.slane %v2671, 2
        %v2673 = vadd.f32 %v2671, %v2672
        %v2674 = vrot.slane %v2673, 1
        %v2675 = vadd.f32 %v2673, %v2674
        %2676 = vst [vmem:[%s389] sm:$0xff] %v2640
        %2677 = vst [vmem:[%s389 + $0x8] sm:$0xff] %v2649
        %2678 = vst [vmem:[%s403] sm:$0xff] %v2666
        %2679 = vst [vmem:[%s403 + $0x8] sm:$0xff] %v2675
      $region36: #{generator_forward.11} parent=27 // pred_fallthru
        _
      %s2680 = smul.u32 4, %s23
      %s2681 = smul.u32 2, %s24
      %p2682 = scmp.lt.s32.totalorder %s22, 3
      %s2683 = scalar_select %p2682, %s22, 3
      %p2684 = scmp.lt.s32.totalorder %s2680, 3
      %s2685 = scalar_select %p2684, %s2680, 3
      %p2686 = scmp.lt.s32.totalorder %s2681, 1
      %s2687 = scalar_select %p2686, %s2681, 1
      %s2688 = smul.addr %s2685, 2
      %s2689 = sadd.s32 %s2687, %s2688
      %s2690 = smul.addr %s2683, 8
      %s2691 = sadd.s32 %s2689, %s2690
      %s2692 = smul.addr %s2691, 4
      %s2693 = scalar_lea.vmem %s2, %s2692
      %s2694 = smul.u32 2, %s24
      %p2695 = scmp.lt.s32.totalorder %s22, 3
      %s2696 = scalar_select %p2695, %s22, 3
      %p2697 = scmp.lt.s32.totalorder %s23, 0
      %s2698 = scalar_select %p2697, %s23, 0
      %p2699 = scmp.lt.s32.totalorder %s2694, 1
      %s2700 = scalar_select %p2699, %s2694, 1
      %s2701 = smul.addr %s2698, 2
      %s2702 = sadd.s32 %s2700, %s2701
      %s2703 = smul.addr %s2696, 2
      %s2704 = sadd.s32 %s2702, %s2703
      %s2705 = smul.addr %s2704, 8
      %s2706 = scalar_lea.vmem %s3, %s2705
      %s2707 = smul.u32 2, %s24
      %p2708 = scmp.lt.s32.totalorder %s22, 3
      %s2709 = scalar_select %p2708, %s22, 3
      %p2710 = scmp.lt.s32.totalorder %s23, 0
      %s2711 = scalar_select %p2710, %s23, 0
      %p2712 = scmp.lt.s32.totalorder %s2707, 1
      %s2713 = scalar_select %p2712, %s2707, 1
      %s2714 = smul.addr %s2711, 2
      %s2715 = sadd.s32 %s2713, %s2714
      %s2716 = smul.addr %s2709, 2
      %s2717 = sadd.s32 %s2715, %s2716
      %s2718 = smul.addr %s2717, 8
      %s2719 = scalar_lea.vmem %s4, %s2718
      // Predicated region
      $region37: #{generator_forward.11} parent=27 // pred_check
        %p2720 = pneg %p124
      $region38: #{generator_forward.11} parent=27 // pred_check_branch
        %2722 = sbr.rel (%p2720) target = $region40
      $region39: #{generator_forward.11} parent=27 // pred_region
        %s2723 = smul.u32 4, %s23
        %s2724 = smul.u32 2, %s24
      $region40: #{generator_forward.11} parent=27 // pred_fallthru
        _
      // Predicated region
      $region41: #{generator_forward.11} parent=27 // pred_check
        %p2725 = pneg %p154
      $region42: #{generator_forward.11} parent=27 // pred_check_branch
        %2727 = sbr.rel (%p2725) target = $region44
      $region43: #{generator_forward.11} parent=27 // pred_region
        %s2728 = smul.u32 2, %s24
      $region44: #{generator_forward.11} parent=27 // pred_fallthru
        _
      // Predicated region
      $region45: #{generator_forward.11} parent=27 // pred_check
        %p2729 = pneg %p184
      $region46: #{generator_forward.11} parent=27 // pred_check_branch
        %2731 = sbr.rel (%p2729) target = $region48
      $region47: #{generator_forward.11} parent=27 // pred_region
        %s2732 = smul.u32 2, %s24
      $region48: #{generator_forward.11} parent=27 // pred_fallthru
        _
    $region28: #{generator_forward.11} parent=5 // pred_fallthru
      _
    %p2733 = scmp.le.s32.totalorder 2, %s11
    // Predicated region
    $region49: #{generator_forward.11} parent=5 // pred_check
      %p2734 = pneg %p2733
    $region50: #{generator_forward.11} parent=5 // pred_check_branch
      %2736 = sbr.rel (%p2734) target = $region52
    $region51: #{generator_forward.11} parent=5 // pred_region
      %s2737 = ssub.s32 %s11, 2
      // Predicated region
      $region53: #{generator_forward.11} parent=51 // pred_check
        %p2738 = pneg %p130
      $region54: #{generator_forward.11} parent=51 // pred_check_branch
        %2740 = sbr.rel (%p2738) target = $region56
      $region55: #{generator_forward.11} parent=51 // pred_region
        %s2741 = smul.u32 4, %s27
        %s2742 = smul.u32 2, %s28
        %p2743 = scmp.lt.s32.totalorder %s26, 3
        %s2744 = scalar_select %p2743, %s26, 3
        %p2745 = scmp.lt.s32.totalorder %s2741, 3
        %s2746 = scalar_select %p2745, %s2741, 3
        %p2747 = scmp.lt.s32.totalorder %s2742, 1
        %s2748 = scalar_select %p2747, %s2742, 1
        %s2749 = smul.addr %s2746, 2
        %s2750 = sadd.s32 %s2748, %s2749
        %s2751 = smul.addr %s2744, 8
        %s2752 = sadd.s32 %s2750, %s2751
        %s2753 = smul.addr %s2752, 4
        %s2754 = scalar_lea.vmem %s2, %s2753
      $region56: #{generator_forward.11} parent=51 // pred_fallthru
        _
      // Predicated region
      $region57: #{generator_forward.11} parent=51 // pred_check
        %p2755 = pneg %p160
      $region58: #{generator_forward.11} parent=51 // pred_check_branch
        %2757 = sbr.rel (%p2755) target = $region60
      $region59: #{generator_forward.11} parent=51 // pred_region
        %s2758 = smul.u32 2, %s28
        %p2759 = scmp.lt.s32.totalorder %s26, 3
        %s2760 = scalar_select %p2759, %s26, 3
        %p2761 = scmp.lt.s32.totalorder %s27, 0
        %s2762 = scalar_select %p2761, %s27, 0
        %p2763 = scmp.lt.s32.totalorder %s2758, 1
        %s2764 = scalar_select %p2763, %s2758, 1
        %s2765 = smul.addr %s2762, 2
        %s2766 = sadd.s32 %s2764, %s2765
        %s2767 = smul.addr %s2760, 2
        %s2768 = sadd.s32 %s2766, %s2767
        %s2769 = smul.addr %s2768, 8
        %s2770 = scalar_lea.vmem %s3, %s2769
      $region60: #{generator_forward.11} parent=51 // pred_fallthru
        _
      // Predicated region
      $region61: #{generator_forward.11} parent=51 // pred_check
        %p2771 = pneg %p190
      $region62: #{generator_forward.11} parent=51 // pred_check_branch
        %2773 = sbr.rel (%p2771) target = $region64
      $region63: #{generator_forward.11} parent=51 // pred_region
        %s2774 = smul.u32 2, %s28
        %p2775 = scmp.lt.s32.totalorder %s26, 3
        %s2776 = scalar_select %p2775, %s26, 3
        %p2777 = scmp.lt.s32.totalorder %s27, 0
        %s2778 = scalar_select %p2777, %s27, 0
        %p2779 = scmp.lt.s32.totalorder %s2774, 1
        %s2780 = scalar_select %p2779, %s2774, 1
        %s2781 = smul.addr %s2778, 2
        %s2782 = sadd.s32 %s2780, %s2781
        %s2783 = smul.addr %s2776, 2
        %s2784 = sadd.s32 %s2782, %s2783
        %s2785 = smul.addr %s2784, 8
        %s2786 = scalar_lea.vmem %s4, %s2785
      $region64: #{generator_forward.11} parent=51 // pred_fallthru
        _
    $region52: #{generator_forward.11} parent=5 // pred_fallthru
      _
  $region6: #{generator_forward.11} parent=0 // loop_footer
    %s15 = sadd.s32 1, %s11
  $region7: #{generator_forward.11} parent=0 // loop_footer_branch
    %10 = sbr.rel target = $region3
  $region8: #{generator_forward.11} parent=0 // loop_exit
    _

// kernel: generator_forward.14
$region0: #{generator_forward.14}
  #allocation0 [shape = 'u32[]', space=smem, size = 0x4, offset = 0x4, fixed_abs, tag = 'smem constant byte address 0x4 - core index']
  #allocation1 [shape = 'u32[144,128]{1,0:T(1,128)}', space=vmem, size = 0x12000, scoped, tag = 'internal scratch']
  %s0 = inlined_call_operand.vmem [shape: bf16[512,128], index: 0, kind: input, shape index: {}]
  %s1 = inlined_call_operand.vmem [shape: f32[1,128], index: 1, kind: input, shape index: {}]
  %s2 = inlined_call_operand.vmem [shape: f32[1,128], index: 2, kind: input, shape index: {}]
  %s3 = inlined_call_operand.vmem [shape: bf16[512,128], index: 3, kind: output, shape index: {}]
  %s4 = sld [smem:[#allocation0]]
  $region22: #{generator_forward.14} parent=0
    _
  %s6 = ssub.s32 1, %s4
  %s7 = scalar_select 0, %s6, %s4
  // Predicated region
  $region2: #{generator_forward.14} parent=0 // pred_check
    _
  $region3: #{generator_forward.14} parent=0 // pred_check_branch
    %9 = sbr.rel (0) target = $region5
  $region4: #{generator_forward.14} parent=0 // pred_region
    _
  $region5: #{generator_forward.14} parent=0 // pred_fallthru
    _
  // Predicated region
  $region6: #{generator_forward.14} parent=0 // pred_check
    _
  $region7: #{generator_forward.14} parent=0 // pred_check_branch
    %11 = sbr.rel (0) target = $region9
  $region8: #{generator_forward.14} parent=0 // pred_region
    _
  $region9: #{generator_forward.14} parent=0 // pred_fallthru
    _
  // Predicated region
  $region10: #{generator_forward.14} parent=0 // pred_check
    _
  $region11: #{generator_forward.14} parent=0 // pred_check_branch
    %13 = sbr.rel (0) target = $region13
  $region12: #{generator_forward.14} parent=0 // pred_region
    _
  $region13: #{generator_forward.14} parent=0 // pred_fallthru
    _
  %v14 = vld [vmem:[%s0] sm:$0xf]
  %v15 = vld [vmem:[%s0 + $0x4] sm:$0xf]
  %v16 = vld [vmem:[%s0 + $0x8] sm:$0xf]
  %v17 = vld [vmem:[%s0 + $0xc] sm:$0xf]
  %v18 = vld [vmem:[%s0 + $0x10] sm:$0xf]
  %v19 = vld [vmem:[%s0 + $0x14] sm:$0xf]
  %v20 = vld [vmem:[%s0 + $0x18] sm:$0xf]
  %v21 = vld [vmem:[%s0 + $0x1c] sm:$0xf]
  %v22 = vld [vmem:[%s0 + $0x20] sm:$0xf]
  %v23 = vld [vmem:[%s0 + $0x24] sm:$0xf]
  %v24 = vld [vmem:[%s0 + $0x28] sm:$0xf]
  %v25 = vld [vmem:[%s0 + $0x2c] sm:$0xf]
  %v26 = vld [vmem:[%s0 + $0x30] sm:$0xf]
  %v27 = vld [vmem:[%s0 + $0x34] sm:$0xf]
  %v28 = vld [vmem:[%s0 + $0x38] sm:$0xf]
  %v29 = vld [vmem:[%s0 + $0x3c] sm:$0xf]
  %v30 = vld [vmem:[%s0 + $0x40] sm:$0xf]
  %v31 = vld [vmem:[%s0 + $0x44] sm:$0xf]
  %v32 = vld [vmem:[%s0 + $0x48] sm:$0xf]
  %v33 = vld [vmem:[%s0 + $0x4c] sm:$0xf]
  %v34 = vld [vmem:[%s0 + $0x50] sm:$0xf]
  %v35 = vld [vmem:[%s0 + $0x54] sm:$0xf]
  %v36 = vld [vmem:[%s0 + $0x58] sm:$0xf]
  %v37 = vld [vmem:[%s0 + $0x5c] sm:$0xf]
  %v38 = vld [vmem:[%s0 + $0x60] sm:$0xf]
  %v39 = vld [vmem:[%s0 + $0x64] sm:$0xf]
  %v40 = vld [vmem:[%s0 + $0x68] sm:$0xf]
  %v41 = vld [vmem:[%s0 + $0x6c] sm:$0xf]
  %v42 = vld [vmem:[%s0 + $0x70] sm:$0xf]
  %v43 = vld [vmem:[%s0 + $0x74] sm:$0xf]
  %v44 = vld [vmem:[%s0 + $0x78] sm:$0xf]
  %v45 = vld [vmem:[%s0 + $0x7c] sm:$0xf]
  %v46 = vld [vmem:[%s0 + $0x80] sm:$0xf]
  %v47 = vld [vmem:[%s0 + $0x84] sm:$0xf]
  %v48 = vld [vmem:[%s0 + $0x88] sm:$0xf]
  %v49 = vld [vmem:[%s0 + $0x8c] sm:$0xf]
  %v50 = vld [vmem:[%s0 + $0x90] sm:$0xf]
  %v51 = vld [vmem:[%s0 + $0x94] sm:$0xf]
  %v52 = vld [vmem:[%s0 + $0x98] sm:$0xf]
  %v53 = vld [vmem:[%s0 + $0x9c] sm:$0xf]
  %v54 = vld [vmem:[%s0 + $0xa0] sm:$0xf]
  %v55 = vld [vmem:[%s0 + $0xa4] sm:$0xf]
  %v56 = vld [vmem:[%s0 + $0xa8] sm:$0xf]
  %v57 = vld [vmem:[%s0 + $0xac] sm:$0xf]
  %v58 = vld [vmem:[%s0 + $0xb0] sm:$0xf]
  %v59 = vld [vmem:[%s0 + $0xb4] sm:$0xf]
  %v60 = vld [vmem:[%s0 + $0xb8] sm:$0xf]
  %v61 = vld [vmem:[%s0 + $0xbc] sm:$0xf]
  %v62 = vld [vmem:[%s0 + $0xc0] sm:$0xf]
  %v63 = vld [vmem:[%s0 + $0xc4] sm:$0xf]
  %v64 = vld [vmem:[%s0 + $0xc8] sm:$0xf]
  %v65 = vld [vmem:[%s0 + $0xcc] sm:$0xf]
  %v66 = vld [vmem:[%s0 + $0xd0] sm:$0xf]
  %v67 = vld [vmem:[%s0 + $0xd4] sm:$0xf]
  %v68 = vld [vmem:[%s0 + $0xd8] sm:$0xf]
  %v69 = vld [vmem:[%s0 + $0xdc] sm:$0xf]
  %v70 = vld [vmem:[%s0 + $0xe0] sm:$0xf]
  %v71 = vld [vmem:[%s0 + $0xe4] sm:$0xf]
  %v72 = vld [vmem:[%s0 + $0xe8] sm:$0xf]
  %v73 = vld [vmem:[%s0 + $0xec] sm:$0xf]
  %v74 = vld [vmem:[%s0 + $0xf0] sm:$0xf]
  %v75 = vld [vmem:[%s0 + $0xf4] sm:$0xf]
  %v76 = vld [vmem:[%s0 + $0xf8] sm:$0xf]
  %v77 = vld [vmem:[%s0 + $0xfc] sm:$0xf]
  %v78 = vunpack.c.l.bf16 %v14
  %v79 = vunpack.c.l.bf16 %v15
  %v80 = vunpack.c.l.bf16 %v16
  %v81 = vunpack.c.l.bf16 %v17
  %v82 = vunpack.c.l.bf16 %v18
  %v83 = vunpack.c.l.bf16 %v19
  %v84 = vunpack.c.l.bf16 %v20
  %v85 = vunpack.c.l.bf16 %v21
  %v86 = vunpack.c.l.bf16 %v22
  %v87 = vunpack.c.l.bf16 %v23
  %v88 = vunpack.c.l.bf16 %v24
  %v89 = vunpack.c.l.bf16 %v25
  %v90 = vunpack.c.l.bf16 %v26
  %v91 = vunpack.c.l.bf16 %v27
  %v92 = vunpack.c.l.bf16 %v28
  %v93 = vunpack.c.l.bf16 %v29
  %v94 = vunpack.c.l.bf16 %v30
  %v95 = vunpack.c.l.bf16 %v31
  %v96 = vunpack.c.l.bf16 %v32
  %v97 = vunpack.c.l.bf16 %v33
  %v98 = vunpack.c.l.bf16 %v34
  %v99 = vunpack.c.l.bf16 %v35
  %v100 = vunpack.c.l.bf16 %v36
  %v101 = vunpack.c.l.bf16 %v37
  %v102 = vunpack.c.l.bf16 %v38
  %v103 = vunpack.c.l.bf16 %v39
  %v104 = vunpack.c.l.bf16 %v40
  %v105 = vunpack.c.l.bf16 %v41
  %v106 = vunpack.c.l.bf16 %v42
  %v107 = vunpack.c.l.bf16 %v43
  %v108 = vunpack.c.l.bf16 %v44
  %v109 = vunpack.c.l.bf16 %v45
  %v110 = vunpack.c.l.bf16 %v46
  %v111 = vunpack.c.l.bf16 %v47
  %v112 = vunpack.c.l.bf16 %v48
  %v113 = vunpack.c.l.bf16 %v49
  %v114 = vunpack.c.l.bf16 %v50
  %v115 = vunpack.c.l.bf16 %v51
  %v116 = vunpack.c.l.bf16 %v52
  %v117 = vunpack.c.l.bf16 %v53
  %v118 = vunpack.c.l.bf16 %v54
  %v119 = vunpack.c.l.bf16 %v55
  %v120 = vunpack.c.l.bf16 %v56
  %v121 = vunpack.c.l.bf16 %v57
  %v122 = vunpack.c.l.bf16 %v58
  %v123 = vunpack.c.l.bf16 %v59
  %v124 = vunpack.c.l.bf16 %v60
  %v125 = vunpack.c.l.bf16 %v61
  %v126 = vunpack.c.l.bf16 %v62
  %v127 = vunpack.c.l.bf16 %v63
  %v128 = vunpack.c.l.bf16 %v64
  %v129 = vunpack.c.l.bf16 %v65
  %v130 = vunpack.c.l.bf16 %v66
  %v131 = vunpack.c.l.bf16 %v67
  %v132 = vunpack.c.l.bf16 %v68
  %v133 = vunpack.c.l.bf16 %v69
  %v134 = vunpack.c.l.bf16 %v70
  %v135 = vunpack.c.l.bf16 %v71
  %v136 = vunpack.c.l.bf16 %v72
  %v137 = vunpack.c.l.bf16 %v73
  %v138 = vunpack.c.l.bf16 %v74
  %v139 = vunpack.c.l.bf16 %v75
  %v140 = vunpack.c.l.bf16 %v76
  %v141 = vunpack.c.l.bf16 %v77
  %v142 = vld [vmem:[%s1] sm:$0x1]
  %v144 = vlaneseq
  %v145 = vshrl.u32 %v144, 7
  %v146 = vsub.s32 0, %v145
  %v147 = vrot.slane %v142, %v146
  %v149 = vmul.f32 %v78, %v147
  %v150 = vmul.f32 %v79, %v147
  %v151 = vmul.f32 %v80, %v147
  %v152 = vmul.f32 %v81, %v147
  %v153 = vmul.f32 %v82, %v147
  %v154 = vmul.f32 %v83, %v147
  %v155 = vmul.f32 %v84, %v147
  %v156 = vmul.f32 %v85, %v147
  %v157 = vmul.f32 %v86, %v147
  %v158 = vmul.f32 %v87, %v147
  %v159 = vmul.f32 %v88, %v147
  %v160 = vmul.f32 %v89, %v147
  %v161 = vmul.f32 %v90, %v147
  %v162 = vmul.f32 %v91, %v147
  %v163 = vmul.f32 %v92, %v147
  %v164 = vmul.f32 %v93, %v147
  %v165 = vmul.f32 %v94, %v147
  %v166 = vmul.f32 %v95, %v147
  %v167 = vmul.f32 %v96, %v147
  %v168 = vmul.f32 %v97, %v147
  %v169 = vmul.f32 %v98, %v147
  %v170 = vmul.f32 %v99, %v147
  %v171 = vmul.f32 %v100, %v147
  %v172 = vmul.f32 %v101, %v147
  %v173 = vmul.f32 %v102, %v147
  %v174 = vmul.f32 %v103, %v147
  %v175 = vmul.f32 %v104, %v147
  %v176 = vmul.f32 %v105, %v147
  %v177 = vmul.f32 %v106, %v147
  %v178 = vmul.f32 %v107, %v147
  %v179 = vmul.f32 %v108, %v147
  %v180 = vmul.f32 %v109, %v147
  %v181 = vmul.f32 %v110, %v147
  %v182 = vmul.f32 %v111, %v147
  %v183 = vmul.f32 %v112, %v147
  %v184 = vmul.f32 %v113, %v147
  %v185 = vmul.f32 %v114, %v147
  %v186 = vmul.f32 %v115, %v147
  %v187 = vmul.f32 %v116, %v147
  %v188 = vmul.f32 %v117, %v147
  %v189 = vmul.f32 %v118, %v147
  %v190 = vmul.f32 %v119, %v147
  %v191 = vmul.f32 %v120, %v147
  %v192 = vmul.f32 %v121, %v147
  %v193 = vmul.f32 %v122, %v147
  %v194 = vmul.f32 %v123, %v147
  %v195 = vmul.f32 %v124, %v147
  %v196 = vmul.f32 %v125, %v147
  %v197 = vmul.f32 %v126, %v147
  %v198 = vmul.f32 %v127, %v147
  %v199 = vmul.f32 %v128, %v147
  %v200 = vmul.f32 %v129, %v147
  %v201 = vmul.f32 %v130, %v147
  %v202 = vmul.f32 %v131, %v147
  %v203 = vmul.f32 %v132, %v147
  %v204 = vmul.f32 %v133, %v147
  %v205 = vmul.f32 %v134, %v147
  %v206 = vmul.f32 %v135, %v147
  %v207 = vmul.f32 %v136, %v147
  %v208 = vmul.f32 %v137, %v147
  %v209 = vmul.f32 %v138, %v147
  %v210 = vmul.f32 %v139, %v147
  %v211 = vmul.f32 %v140, %v147
  %v212 = vmul.f32 %v141, %v147
  %v213 = vld [vmem:[%s2] sm:$0x1]
  %v215 = vlaneseq
  %v216 = vshrl.u32 %v215, 7
  %v217 = vsub.s32 0, %v216
  %v218 = vrot.slane %v213, %v217
  %v220 = vadd.f32 %v149, %v218
  %v221 = vadd.f32 %v150, %v218
  %v222 = vadd.f32 %v151, %v218
  %v223 = vadd.f32 %v152, %v218
  %v224 = vadd.f32 %v153, %v218
  %v225 = vadd.f32 %v154, %v218
  %v226 = vadd.f32 %v155, %v218
  %v227 = vadd.f32 %v156, %v218
  %v228 = vadd.f32 %v157, %v218
  %v229 = vadd.f32 %v158, %v218
  %v230 = vadd.f32 %v159, %v218
  %v231 = vadd.f32 %v160, %v218
  %v232 = vadd.f32 %v161, %v218
  %v233 = vadd.f32 %v162, %v218
  %v234 = vadd.f32 %v163, %v218
  %v235 = vadd.f32 %v164, %v218
  %v236 = vadd.f32 %v165, %v218
  %v237 = vadd.f32 %v166, %v218
  %v238 = vadd.f32 %v167, %v218
  %v239 = vadd.f32 %v168, %v218
  %v240 = vadd.f32 %v169, %v218
  %v241 = vadd.f32 %v170, %v218
  %v242 = vadd.f32 %v171, %v218
  %v243 = vadd.f32 %v172, %v218
  %v244 = vadd.f32 %v173, %v218
  %v245 = vadd.f32 %v174, %v218
  %v246 = vadd.f32 %v175, %v218
  %v247 = vadd.f32 %v176, %v218
  %v248 = vadd.f32 %v177, %v218
  %v249 = vadd.f32 %v178, %v218
  %v250 = vadd.f32 %v179, %v218
  %v251 = vadd.f32 %v180, %v218
  %v252 = vadd.f32 %v181, %v218
  %v253 = vadd.f32 %v182, %v218
  %v254 = vadd.f32 %v183, %v218
  %v255 = vadd.f32 %v184, %v218
  %v256 = vadd.f32 %v185, %v218
  %v257 = vadd.f32 %v186, %v218
  %v258 = vadd.f32 %v187, %v218
  %v259 = vadd.f32 %v188, %v218
  %v260 = vadd.f32 %v189, %v218
  %v261 = vadd.f32 %v190, %v218
  %v262 = vadd.f32 %v191, %v218
  %v263 = vadd.f32 %v192, %v218
  %v264 = vadd.f32 %v193, %v218
  %v265 = vadd.f32 %v194, %v218
  %v266 = vadd.f32 %v195, %v218
  %v267 = vadd.f32 %v196, %v218
  %v268 = vadd.f32 %v197, %v218
  %v269 = vadd.f32 %v198, %v218
  %v270 = vadd.f32 %v199, %v218
  %v271 = vadd.f32 %v200, %v218
  %v272 = vadd.f32 %v201, %v218
  %v273 = vadd.f32 %v202, %v218
  %v274 = vadd.f32 %v203, %v218
  %v275 = vadd.f32 %v204, %v218
  %v276 = vadd.f32 %v205, %v218
  %v277 = vadd.f32 %v206, %v218
  %v278 = vadd.f32 %v207, %v218
  %v279 = vadd.f32 %v208, %v218
  %v280 = vadd.f32 %v209, %v218
  %v281 = vadd.f32 %v210, %v218
  %v282 = vadd.f32 %v211, %v218
  %v283 = vadd.f32 %v212, %v218
  %v284 = vmax.f32 %v220, 0.0
  %v285 = vmax.f32 %v221, 0.0
  %v286 = vmax.f32 %v222, 0.0
  %v287 = vmax.f32 %v223, 0.0
  %v288 = vmax.f32 %v224, 0.0
  %v289 = vmax.f32 %v225, 0.0
  %v290 = vmax.f32 %v226, 0.0
  %v291 = vmax.f32 %v227, 0.0
  %v292 = vmax.f32 %v228, 0.0
  %v293 = vmax.f32 %v229, 0.0
  %v294 = vmax.f32 %v230, 0.0
  %v295 = vmax.f32 %v231, 0.0
  %v296 = vmax.f32 %v232, 0.0
  %v297 = vmax.f32 %v233, 0.0
  %v298 = vmax.f32 %v234, 0.0
  %v299 = vmax.f32 %v235, 0.0
  %v300 = vmax.f32 %v236, 0.0
  %v301 = vmax.f32 %v237, 0.0
  %v302 = vmax.f32 %v238, 0.0
  %v303 = vmax.f32 %v239, 0.0
  %v304 = vmax.f32 %v240, 0.0
  %v305 = vmax.f32 %v241, 0.0
  %v306 = vmax.f32 %v242, 0.0
  %v307 = vmax.f32 %v243, 0.0
  %v308 = vmax.f32 %v244, 0.0
  %v309 = vmax.f32 %v245, 0.0
  %v310 = vmax.f32 %v246, 0.0
  %v311 = vmax.f32 %v247, 0.0
  %v312 = vmax.f32 %v248, 0.0
  %v313 = vmax.f32 %v249, 0.0
  %v314 = vmax.f32 %v250, 0.0
  %v315 = vmax.f32 %v251, 0.0
  %v316 = vmax.f32 %v252, 0.0
  %v317 = vmax.f32 %v253, 0.0
  %v318 = vmax.f32 %v254, 0.0
  %v319 = vmax.f32 %v255, 0.0
  %v320 = vmax.f32 %v256, 0.0
  %v321 = vmax.f32 %v257, 0.0
  %v322 = vmax.f32 %v258, 0.0
  %v323 = vmax.f32 %v259, 0.0
  %v324 = vmax.f32 %v260, 0.0
  %v325 = vmax.f32 %v261, 0.0
  %v326 = vmax.f32 %v262, 0.0
  %v327 = vmax.f32 %v263, 0.0
  %v328 = vmax.f32 %v264, 0.0
  %v329 = vmax.f32 %v265, 0.0
  %v330 = vmax.f32 %v266, 0.0
  %v331 = vmax.f32 %v267, 0.0
  %v332 = vmax.f32 %v268, 0.0
  %v333 = vmax.f32 %v269, 0.0
  %v334 = vmax.f32 %v270, 0.0
  %v335 = vmax.f32 %v271, 0.0
  %v336 = vmax.f32 %v272, 0.0
  %v337 = vmax.f32 %v273, 0.0
  %v338 = vmax.f32 %v274, 0.0
  %v339 = vmax.f32 %v275, 0.0
  %v340 = vmax.f32 %v276, 0.0
  %v341 = vmax.f32 %v277, 0.0
  %v342 = vmax.f32 %v278, 0.0
  %v343 = vmax.f32 %v279, 0.0
  %v344 = vmax.f32 %v280, 0.0
  %v345 = vmax.f32 %v281, 0.0
  %v346 = vmax.f32 %v282, 0.0
  %v347 = vmax.f32 %v283, 0.0
  %v348 = vpack.c.bf16 %v285, %v284
  %v349 = vpack.c.bf16 %v287, %v286
  %v350 = vpack.c.bf16 %v289, %v288
  %v351 = vpack.c.bf16 %v291, %v290
  %v352 = vpack.c.bf16 %v293, %v292
  %v353 = vpack.c.bf16 %v295, %v294
  %v354 = vpack.c.bf16 %v297, %v296
  %v355 = vpack.c.bf16 %v299, %v298
  %v356 = vpack.c.bf16 %v301, %v300
  %v357 = vpack.c.bf16 %v303, %v302
  %v358 = vpack.c.bf16 %v305, %v304
  %v359 = vpack.c.bf16 %v307, %v306
  %v360 = vpack.c.bf16 %v309, %v308
  %v361 = vpack.c.bf16 %v311, %v310
  %v362 = vpack.c.bf16 %v313, %v312
  %v363 = vpack.c.bf16 %v315, %v314
  %v364 = vpack.c.bf16 %v317, %v316
  %v365 = vpack.c.bf16 %v319, %v318
  %v366 = vpack.c.bf16 %v321, %v320
  %v367 = vpack.c.bf16 %v323, %v322
  %v368 = vpack.c.bf16 %v325, %v324
  %v369 = vpack.c.bf16 %v327, %v326
  %v370 = vpack.c.bf16 %v329, %v328
  %v371 = vpack.c.bf16 %v331, %v330
  %v372 = vpack.c.bf16 %v333, %v332
  %v373 = vpack.c.bf16 %v335, %v334
  %v374 = vpack.c.bf16 %v337, %v336
  %v375 = vpack.c.bf16 %v339, %v338
  %v376 = vpack.c.bf16 %v341, %v340
  %v377 = vpack.c.bf16 %v343, %v342
  %v378 = vpack.c.bf16 %v345, %v344
  %v379 = vpack.c.bf16 %v347, %v346
  %v412 = vunpack.c.l.b16 %v348
  %v413 = vunpack.c.h.b16 %v348
  %v414 = vunpack.c.l.b16 %v349
  %v415 = vunpack.c.h.b16 %v349
  %v416 = vunpack.c.l.b16 %v350
  %v417 = vunpack.c.h.b16 %v350
  %v418 = vunpack.c.l.b16 %v351
  %v419 = vunpack.c.h.b16 %v351
  %v420 = vunpack.c.l.b16 %v352
  %v421 = vunpack.c.h.b16 %v352
  %v422 = vunpack.c.l.b16 %v353
  %v423 = vunpack.c.h.b16 %v353
  %v424 = vunpack.c.l.b16 %v354
  %v425 = vunpack.c.h.b16 %v354
  %v426 = vunpack.c.l.b16 %v355
  %v427 = vunpack.c.h.b16 %v355
  %v428 = vunpack.c.l.b16 %v356
  %v429 = vunpack.c.h.b16 %v356
  %v430 = vunpack.c.l.b16 %v357
  %v431 = vunpack.c.h.b16 %v357
  %v432 = vunpack.c.l.b16 %v358
  %v433 = vunpack.c.h.b16 %v358
  %v434 = vunpack.c.l.b16 %v359
  %v435 = vunpack.c.h.b16 %v359
  %v436 = vunpack.c.l.b16 %v360
  %v437 = vunpack.c.h.b16 %v360
  %v438 = vunpack.c.l.b16 %v361
  %v439 = vunpack.c.h.b16 %v361
  %v440 = vunpack.c.l.b16 %v362
  %v441 = vunpack.c.h.b16 %v362
  %v442 = vunpack.c.l.b16 %v363
  %v443 = vunpack.c.h.b16 %v363
  %v444 = vunpack.c.l.b16 %v364
  %v445 = vunpack.c.h.b16 %v364
  %v446 = vunpack.c.l.b16 %v365
  %v447 = vunpack.c.h.b16 %v365
  %v448 = vunpack.c.l.b16 %v366
  %v449 = vunpack.c.h.b16 %v366
  %v450 = vunpack.c.l.b16 %v367
  %v451 = vunpack.c.h.b16 %v367
  %v452 = vunpack.c.l.b16 %v368
  %v453 = vunpack.c.h.b16 %v368
  %v454 = vunpack.c.l.b16 %v369
  %v455 = vunpack.c.h.b16 %v369
  %v456 = vunpack.c.l.b16 %v370
  %v457 = vunpack.c.h.b16 %v370
  %v458 = vunpack.c.l.b16 %v371
  %v459 = vunpack.c.h.b16 %v371
  %v460 = vunpack.c.l.b16 %v372
  %v461 = vunpack.c.h.b16 %v372
  %v462 = vunpack.c.l.b16 %v373
  %v463 = vunpack.c.h.b16 %v373
  %v464 = vunpack.c.l.b16 %v374
  %v465 = vunpack.c.h.b16 %v374
  %v466 = vunpack.c.l.b16 %v375
  %v467 = vunpack.c.h.b16 %v375
  %v468 = vunpack.c.l.b16 %v376
  %v469 = vunpack.c.h.b16 %v376
  %v470 = vunpack.c.l.b16 %v377
  %v471 = vunpack.c.h.b16 %v377
  %v472 = vunpack.c.l.b16 %v378
  %v473 = vunpack.c.h.b16 %v378
  %v474 = vunpack.c.l.b16 %v379
  %v475 = vunpack.c.h.b16 %v379
  %v476 = vpack.c.b16 %v412, %v412
  %v477 = vpack.c.b16 %v413, %v413
  %v478 = vpack.c.b16 %v414, %v414
  %v479 = vpack.c.b16 %v415, %v415
  %v480 = vpack.c.b16 %v416, %v416
  %v481 = vpack.c.b16 %v417, %v417
  %v482 = vpack.c.b16 %v418, %v418
  %v483 = vpack.c.b16 %v419, %v419
  %v484 = vpack.c.b16 %v420, %v420
  %v485 = vpack.c.b16 %v421, %v421
  %v486 = vpack.c.b16 %v422, %v422
  %v487 = vpack.c.b16 %v423, %v423
  %v488 = vpack.c.b16 %v424, %v424
  %v489 = vpack.c.b16 %v425, %v425
  %v490 = vpack.c.b16 %v426, %v426
  %v491 = vpack.c.b16 %v427, %v427
  %v492 = vpack.c.b16 %v428, %v428
  %v493 = vpack.c.b16 %v429, %v429
  %v494 = vpack.c.b16 %v430, %v430
  %v495 = vpack.c.b16 %v431, %v431
  %v496 = vpack.c.b16 %v432, %v432
  %v497 = vpack.c.b16 %v433, %v433
  %v498 = vpack.c.b16 %v434, %v434
  %v499 = vpack.c.b16 %v435, %v435
  %v500 = vpack.c.b16 %v436, %v436
  %v501 = vpack.c.b16 %v437, %v437
  %v502 = vpack.c.b16 %v438, %v438
  %v503 = vpack.c.b16 %v439, %v439
  %v504 = vpack.c.b16 %v440, %v440
  %v505 = vpack.c.b16 %v441, %v441
  %v506 = vpack.c.b16 %v442, %v442
  %v507 = vpack.c.b16 %v443, %v443
  %v508 = vpack.c.b16 %v444, %v444
  %v509 = vpack.c.b16 %v445, %v445
  %v510 = vpack.c.b16 %v446, %v446
  %v511 = vpack.c.b16 %v447, %v447
  %v512 = vpack.c.b16 %v448, %v448
  %v513 = vpack.c.b16 %v449, %v449
  %v514 = vpack.c.b16 %v450, %v450
  %v515 = vpack.c.b16 %v451, %v451
  %v516 = vpack.c.b16 %v452, %v452
  %v517 = vpack.c.b16 %v453, %v453
  %v518 = vpack.c.b16 %v454, %v454
  %v519 = vpack.c.b16 %v455, %v455
  %v520 = vpack.c.b16 %v456, %v456
  %v521 = vpack.c.b16 %v457, %v457
  %v522 = vpack.c.b16 %v458, %v458
  %v523 = vpack.c.b16 %v459, %v459
  %v524 = vpack.c.b16 %v460, %v460
  %v525 = vpack.c.b16 %v461, %v461
  %v526 = vpack.c.b16 %v462, %v462
  %v527 = vpack.c.b16 %v463, %v463
  %v528 = vpack.c.b16 %v464, %v464
  %v529 = vpack.c.b16 %v465, %v465
  %v530 = vpack.c.b16 %v466, %v466
  %v531 = vpack.c.b16 %v467, %v467
  %v532 = vpack.c.b16 %v468, %v468
  %v533 = vpack.c.b16 %v469, %v469
  %v534 = vpack.c.b16 %v470, %v470
  %v535 = vpack.c.b16 %v471, %v471
  %v536 = vpack.c.b16 %v472, %v472
  %v537 = vpack.c.b16 %v473, %v473
  %v538 = vpack.c.b16 %v474, %v474
  %v539 = vpack.c.b16 %v475, %v475
  %604 = vst [vmem:[%s3] sm:$0xf] %v476
  %605 = vst [vmem:[%s3 + $0x4] sm:$0xf] %v477
  %606 = vst [vmem:[%s3 + $0x8] sm:$0xf] %v478
  %607 = vst [vmem:[%s3 + $0xc] sm:$0xf] %v479
  %608 = vst [vmem:[%s3 + $0x10] sm:$0xf] %v480
  %609 = vst [vmem:[%s3 + $0x14] sm:$0xf] %v481
  %610 = vst [vmem:[%s3 + $0x18] sm:$0xf] %v482
  %611 = vst [vmem:[%s3 + $0x1c] sm:$0xf] %v483
  %612 = vst [vmem:[%s3 + $0x20] sm:$0xf] %v484
  %613 = vst [vmem:[%s3 + $0x24] sm:$0xf] %v485
  %614 = vst [vmem:[%s3 + $0x28] sm:$0xf] %v486
  %615 = vst [vmem:[%s3 + $0x2c] sm:$0xf] %v487
  %616 = vst [vmem:[%s3 + $0x30] sm:$0xf] %v488
  %617 = vst [vmem:[%s3 + $0x34] sm:$0xf] %v489
  %618 = vst [vmem:[%s3 + $0x38] sm:$0xf] %v490
  %619 = vst [vmem:[%s3 + $0x3c] sm:$0xf] %v491
  %620 = vst [vmem:[%s3 + $0x40] sm:$0xf] %v492
  %621 = vst [vmem:[%s3 + $0x44] sm:$0xf] %v493
  %622 = vst [vmem:[%s3 + $0x48] sm:$0xf] %v494
  %623 = vst [vmem:[%s3 + $0x4c] sm:$0xf] %v495
  %624 = vst [vmem:[%s3 + $0x50] sm:$0xf] %v496
  %625 = vst [vmem:[%s3 + $0x54] sm:$0xf] %v497
  %626 = vst [vmem:[%s3 + $0x58] sm:$0xf] %v498
  %627 = vst [vmem:[%s3 + $0x5c] sm:$0xf] %v499
  %628 = vst [vmem:[%s3 + $0x60] sm:$0xf] %v500
  %629 = vst [vmem:[%s3 + $0x64] sm:$0xf] %v501
  %630 = vst [vmem:[%s3 + $0x68] sm:$0xf] %v502
  %631 = vst [vmem:[%s3 + $0x6c] sm:$0xf] %v503
  %632 = vst [vmem:[%s3 + $0x70] sm:$0xf] %v504
  %633 = vst [vmem:[%s3 + $0x74] sm:$0xf] %v505
  %634 = vst [vmem:[%s3 + $0x78] sm:$0xf] %v506
  %635 = vst [vmem:[%s3 + $0x7c] sm:$0xf] %v507
  %636 = vst [vmem:[%s3 + $0x80] sm:$0xf] %v508
  %637 = vst [vmem:[%s3 + $0x84] sm:$0xf] %v509
  %638 = vst [vmem:[%s3 + $0x88] sm:$0xf] %v510
  %639 = vst [vmem:[%s3 + $0x8c] sm:$0xf] %v511
  %640 = vst [vmem:[%s3 + $0x90] sm:$0xf] %v512
  %641 = vst [vmem:[%s3 + $0x94] sm:$0xf] %v513
  %642 = vst [vmem:[%s3 + $0x98] sm:$0xf] %v514
  %643 = vst [vmem:[%s3 + $0x9c] sm:$0xf] %v515
  %644 = vst [vmem:[%s3 + $0xa0] sm:$0xf] %v516
  %645 = vst [vmem:[%s3 + $0xa4] sm:$0xf] %v517
  %646 = vst [vmem:[%s3 + $0xa8] sm:$0xf] %v518
  %647 = vst [vmem:[%s3 + $0xac] sm:$0xf] %v519
  %648 = vst [vmem:[%s3 + $0xb0] sm:$0xf] %v520
  %649 = vst [vmem:[%s3 + $0xb4] sm:$0xf] %v521
  %650 = vst [vmem:[%s3 + $0xb8] sm:$0xf] %v522
  %651 = vst [vmem:[%s3 + $0xbc] sm:$0xf] %v523
  %652 = vst [vmem:[%s3 + $0xc0] sm:$0xf] %v524
  %653 = vst [vmem:[%s3 + $0xc4] sm:$0xf] %v525
  %654 = vst [vmem:[%s3 + $0xc8] sm:$0xf] %v526
  %655 = vst [vmem:[%s3 + $0xcc] sm:$0xf] %v527
  %656 = vst [vmem:[%s3 + $0xd0] sm:$0xf] %v528
  %657 = vst [vmem:[%s3 + $0xd4] sm:$0xf] %v529
  %658 = vst [vmem:[%s3 + $0xd8] sm:$0xf] %v530
  %659 = vst [vmem:[%s3 + $0xdc] sm:$0xf] %v531
  %660 = vst [vmem:[%s3 + $0xe0] sm:$0xf] %v532
  %661 = vst [vmem:[%s3 + $0xe4] sm:$0xf] %v533
  %662 = vst [vmem:[%s3 + $0xe8] sm:$0xf] %v534
  %663 = vst [vmem:[%s3 + $0xec] sm:$0xf] %v535
  %664 = vst [vmem:[%s3 + $0xf0] sm:$0xf] %v536
  %665 = vst [vmem:[%s3 + $0xf4] sm:$0xf] %v537
  %666 = vst [vmem:[%s3 + $0xf8] sm:$0xf] %v538
  %667 = vst [vmem:[%s3 + $0xfc] sm:$0xf] %v539
  // Predicated region
  $region14: #{generator_forward.14} parent=0 // pred_check
    _
  $region15: #{generator_forward.14} parent=0 // pred_check_branch
    %669 = sbr.rel (0) target = $region17
  $region16: #{generator_forward.14} parent=0 // pred_region
    _
  $region17: #{generator_forward.14} parent=0 // pred_fallthru
    _
  // Predicated region
  $region18: #{generator_forward.14} parent=0 // pred_check
    _
  $region19: #{generator_forward.14} parent=0 // pred_check_branch
    %671 = sbr.rel (0) target = $region21
  $region20: #{generator_forward.14} parent=0 // pred_region
    _
  $region21: #{generator_forward.14} parent=0 // pred_fallthru
    _

// kernel: generator_forward.13
$region0: #{generator_forward.13}
  #allocation0 [shape = 'u32[]', space=smem, size = 0x4, offset = 0x4, fixed_abs, tag = 'smem constant byte address 0x4 - core index']
  #allocation1 [shape = 'u32[144,128]{1,0:T(1,128)}', space=vmem, size = 0x12000, scoped, tag = 'internal scratch']
  #allocation2 [shape = 'f32[128,128]{1,0:T(8,128)}', space=vmem, size = 0x10000, scoped, tag = 'scratch operand']
  %s0 = inlined_call_operand.vmem [shape: bf16[4,128,1024], index: 0, kind: input, shape index: {}]
  %s1 = inlined_call_operand.vmem [shape: bf16[4,1024,128], index: 1, kind: input, shape index: {}]
  %s2 = inlined_call_operand.vmem [shape: bf16[4,128,128], index: 2, kind: output, shape index: {0}]
  %s3 = inlined_call_operand.vmem [shape: f32[4,8,128], index: 3, kind: output, shape index: {1}]
  %s4 = inlined_call_operand.vmem [shape: f32[4,8,128], index: 4, kind: output, shape index: {2}]
  %5 = xla_tuple %s2, %s3, %s4
  %s6 = sld [smem:[#allocation0]]
  $region65: #{generator_forward.13} parent=0
    _
  %s8 = ssub.s32 1, %s6
  %s9 = scalar_select 0, %s8, %s6
  loop: start=0, step=1, limit=6
  $region2: #{generator_forward.13} parent=0 // loop_pre_header
    _
  $region3: #{generator_forward.13} parent=0 // loop_header
    %s11 = sphi 0, %s15
    %p12 = scmp.ge.s32.totalorder %s11, 6
    %s18 = sphi 0, %s44
    %s19 = sphi 0, %s40
    %s20 = sphi 0, %s36
    %s21 = sphi 0, %s32
    %s22 = sphi 0, %s18
    %s23 = sphi 0, %s19
    %s24 = sphi 0, %s20
    %s25 = sphi 0, %s21
    %s26 = sphi 0, %s22
    %s27 = sphi 0, %s23
    %s28 = sphi 0, %s24
    %s29 = sphi 0, %s25
    %s51 = sphi 0, %s53
    %s54 = sphi 0, %s51
    %s55 = sphi 0, %s54
    %s71 = sphi 0, %s55
    %s81 = sphi 0, %s83
    %s84 = sphi 0, %s81
    %s85 = sphi 0, %s84
    %s101 = sphi 0, %s85
    %s111 = sphi 0, %s113
    %s114 = sphi 0, %s111
    %s115 = sphi 0, %s114
    %s131 = sphi 0, %s115
    %s141 = sphi 0, %s143
    %s144 = sphi 0, %s141
    %s145 = sphi 0, %s144
    %s161 = sphi 0, %s145
    %s171 = sphi 0, %s173
    %s174 = sphi 0, %s171
    %s175 = sphi 0, %s174
    %s191 = sphi 0, %s175
  $region4: #{generator_forward.13} parent=0 // loop_header_branch
    %14 = sbr.rel (%p12) target = $region8
  $region5: #{generator_forward.13} parent=0 // loop_body
    %s16 = ssub.s32 %s11, 1
    %s17 = ssub.s32 %s11, 2
    %s30 = sadd.s32 1, %s21
    %p31 = scmp.ge.s32.totalorder %s30, 1
    %s32 = scalar_select %p31, 0, %s30
    %s33 = sadd.s32 1, %s20
    %s34 = scalar_select %p31, %s33, %s20
    %p35 = scmp.ge.s32.totalorder %s34, 1
    %s36 = scalar_select %p35, 0, %s34
    %s37 = sadd.s32 1, %s19
    %s38 = scalar_select %p35, %s37, %s19
    %p39 = scmp.ge.s32.totalorder %s38, 1
    %s40 = scalar_select %p39, 0, %s38
    %s41 = sadd.s32 1, %s18
    %s42 = scalar_select %p39, %s41, %s18
    %p43 = scmp.ge.s32.totalorder %s42, 4
    %s44 = scalar_select %p43, 0, %s42
    %s45 = ssub.s32 %s18, %s44
    %s46 = ssub.s32 %s19, %s40
    %s47 = sor.u32 %s45, %s46
    %s48 = ssub.s32 %s21, %s32
    %s49 = sor.u32 %s47, %s48
    %p50 = scmp.eq.s32.totalorder %s49, 0
    %s52 = sadd.s32 %s51, 1
    %s53 = scalar_select %p50, %s51, %s52
    %p56 = pneg %p50
    %p57 = scmp.eq.s32.totalorder %s11, 3
    %p58 = por %p56, %p57
    %p59 = scmp.ne.s32.totalorder %s51, %s54
    %p60 = scmp.eq.s32.totalorder %s11, 0
    %p61 = por %p59, %p60
    %p62 = scmp.ne.s32.totalorder %s51, %s54
    %p63 = scmp.eq.s32.totalorder %s16, 3
    %p64 = por %p62, %p63
    %p65 = scmp.ne.s32.totalorder %s54, %s55
    %p66 = scmp.eq.s32.totalorder %s16, 0
    %p67 = por %p65, %p66
    %p68 = scmp.ne.s32.totalorder %s54, %s55
    %p69 = scmp.eq.s32.totalorder %s17, 3
    %p70 = por %p68, %p69
    %p72 = scmp.ne.s32.totalorder %s55, %s71
    %p73 = scmp.eq.s32.totalorder %s17, 0
    %p74 = por %p72, %p73
    %s75 = ssub.s32 %s18, %s44
    %s76 = ssub.s32 %s21, %s32
    %s77 = sor.u32 %s75, %s76
    %s78 = ssub.s32 %s20, %s36
    %s79 = sor.u32 %s77, %s78
    %p80 = scmp.eq.s32.totalorder %s79, 0
    %s82 = sadd.s32 %s81, 1
    %s83 = scalar_select %p80, %s81, %s82
    %p86 = pneg %p80
    %p87 = scmp.eq.s32.totalorder %s11, 3
    %p88 = por %p86, %p87
    %p89 = scmp.ne.s32.totalorder %s81, %s84
    %p90 = scmp.eq.s32.totalorder %s11, 0
    %p91 = por %p89, %p90
    %p92 = scmp.ne.s32.totalorder %s81, %s84
    %p93 = scmp.eq.s32.totalorder %s16, 3
    %p94 = por %p92, %p93
    %p95 = scmp.ne.s32.totalorder %s84, %s85
    %p96 = scmp.eq.s32.totalorder %s16, 0
    %p97 = por %p95, %p96
    %p98 = scmp.ne.s32.totalorder %s84, %s85
    %p99 = scmp.eq.s32.totalorder %s17, 3
    %p100 = por %p98, %p99
    %p102 = scmp.ne.s32.totalorder %s85, %s101
    %p103 = scmp.eq.s32.totalorder %s17, 0
    %p104 = por %p102, %p103
    %s105 = ssub.s32 %s18, %s44
    %s106 = ssub.s32 %s19, %s40
    %s107 = sor.u32 %s105, %s106
    %s108 = ssub.s32 %s20, %s36
    %s109 = sor.u32 %s107, %s108
    %p110 = scmp.eq.s32.totalorder %s109, 0
    %s112 = sadd.s32 %s111, 1
    %s113 = scalar_select %p110, %s111, %s112
    %p116 = pneg %p110
    %p117 = scmp.eq.s32.totalorder %s11, 3
    %p118 = por %p116, %p117
    %p119 = scmp.ne.s32.totalorder %s111, %s114
    %p120 = scmp.eq.s32.totalorder %s11, 0
    %p121 = por %p119, %p120
    %p122 = scmp.ne.s32.totalorder %s111, %s114
    %p123 = scmp.eq.s32.totalorder %s16, 3
    %p124 = por %p122, %p123
    %p125 = scmp.ne.s32.totalorder %s114, %s115
    %p126 = scmp.eq.s32.totalorder %s16, 0
    %p127 = por %p125, %p126
    %p128 = scmp.ne.s32.totalorder %s114, %s115
    %p129 = scmp.eq.s32.totalorder %s17, 3
    %p130 = por %p128, %p129
    %p132 = scmp.ne.s32.totalorder %s115, %s131
    %p133 = scmp.eq.s32.totalorder %s17, 0
    %p134 = por %p132, %p133
    %s135 = ssub.s32 %s18, %s44
    %s136 = ssub.s32 %s19, %s40
    %s137 = sor.u32 %s135, %s136
    %s138 = ssub.s32 %s20, %s36
    %s139 = sor.u32 %s137, %s138
    %p140 = scmp.eq.s32.totalorder %s139, 0
    %s142 = sadd.s32 %s141, 1
    %s143 = scalar_select %p140, %s141, %s142
    %p146 = pneg %p140
    %p147 = scmp.eq.s32.totalorder %s11, 3
    %p148 = por %p146, %p147
    %p149 = scmp.ne.s32.totalorder %s141, %s144
    %p150 = scmp.eq.s32.totalorder %s11, 0
    %p151 = por %p149, %p150
    %p152 = scmp.ne.s32.totalorder %s141, %s144
    %p153 = scmp.eq.s32.totalorder %s16, 3
    %p154 = por %p152, %p153
    %p155 = scmp.ne.s32.totalorder %s144, %s145
    %p156 = scmp.eq.s32.totalorder %s16, 0
    %p157 = por %p155, %p156
    %p158 = scmp.ne.s32.totalorder %s144, %s145
    %p159 = scmp.eq.s32.totalorder %s17, 3
    %p160 = por %p158, %p159
    %p162 = scmp.ne.s32.totalorder %s145, %s161
    %p163 = scmp.eq.s32.totalorder %s17, 0
    %p164 = por %p162, %p163
    %s165 = ssub.s32 %s18, %s44
    %s166 = ssub.s32 %s19, %s40
    %s167 = sor.u32 %s165, %s166
    %s168 = ssub.s32 %s20, %s36
    %s169 = sor.u32 %s167, %s168
    %p170 = scmp.eq.s32.totalorder %s169, 0
    %s172 = sadd.s32 %s171, 1
    %s173 = scalar_select %p170, %s171, %s172
    %p176 = pneg %p170
    %p177 = scmp.eq.s32.totalorder %s11, 3
    %p178 = por %p176, %p177
    %p179 = scmp.ne.s32.totalorder %s171, %s174
    %p180 = scmp.eq.s32.totalorder %s11, 0
    %p181 = por %p179, %p180
    %p182 = scmp.ne.s32.totalorder %s171, %s174
    %p183 = scmp.eq.s32.totalorder %s16, 3
    %p184 = por %p182, %p183
    %p185 = scmp.ne.s32.totalorder %s174, %s175
    %p186 = scmp.eq.s32.totalorder %s16, 0
    %p187 = por %p185, %p186
    %p188 = scmp.ne.s32.totalorder %s174, %s175
    %p189 = scmp.eq.s32.totalorder %s17, 3
    %p190 = por %p188, %p189
    %p192 = scmp.ne.s32.totalorder %s175, %s191
    %p193 = scmp.eq.s32.totalorder %s17, 0
    %p194 = por %p192, %p193
    %p195 = scmp.le.s32.totalorder 1, %s11
    %p196 = scmp.lt.s32.totalorder %s11, 5
    %p197 = pnand %p195, %p196
    %p198 = pneg %p197
    // Predicated region
    $region9: #{generator_forward.13} parent=5 // pred_check
      _
    $region10: #{generator_forward.13} parent=5 // pred_check_branch
      %200 = sbr.rel (%p197) target = $region12
    $region11: #{generator_forward.13} parent=5 // pred_region
      %s201 = ssub.s32 %s11, 1
    $region12: #{generator_forward.13} parent=5 // pred_fallthru
      _
    %p202 = scmp.lt.s32.totalorder %s11, 4
    // Predicated region
    $region13: #{generator_forward.13} parent=5 // pred_check
      %p203 = pneg %p202
    $region14: #{generator_forward.13} parent=5 // pred_check_branch
      %205 = sbr.rel (%p203) target = $region16
    $region15: #{generator_forward.13} parent=5 // pred_region
      // Predicated region
      $region17: #{generator_forward.13} parent=15 // pred_check
        %p206 = pneg %p61
      $region18: #{generator_forward.13} parent=15 // pred_check_branch
        %208 = sbr.rel (%p206) target = $region20
      $region19: #{generator_forward.13} parent=15 // pred_region
        %s209 = smul.u32 16, %s19
        %s210 = smul.u32 8, %s21
        %p211 = scmp.lt.s32.totalorder %s18, 3
        %s212 = scalar_select %p211, %s18, 3
        %p213 = scmp.lt.s32.totalorder %s209, 15
        %s214 = scalar_select %p213, %s209, 15
        %p215 = scmp.lt.s32.totalorder %s210, 7
        %s216 = scalar_select %p215, %s210, 7
        %s217 = smul.addr %s214, 8
        %s218 = sadd.s32 %s216, %s217
        %s219 = smul.addr %s212, 128
        %s220 = sadd.s32 %s218, %s219
        %s221 = smul.addr %s220, 4
        %s222 = scalar_lea.vmem %s0, %s221
        %s223 = smul.u32 16, %s19
        %s224 = smul.u32 8, %s21
      $region20: #{generator_forward.13} parent=15 // pred_fallthru
        _
      // Predicated region
      $region21: #{generator_forward.13} parent=15 // pred_check
        %p225 = pneg %p91
      $region22: #{generator_forward.13} parent=15 // pred_check_branch
        %227 = sbr.rel (%p225) target = $region24
      $region23: #{generator_forward.13} parent=15 // pred_region
        %s228 = smul.u32 128, %s21
        %p229 = scmp.lt.s32.totalorder %s18, 3
        %s230 = scalar_select %p229, %s18, 3
        %p231 = scmp.lt.s32.totalorder %s228, 127
        %s232 = scalar_select %p231, %s228, 127
        %p233 = scmp.lt.s32.totalorder %s20, 0
        %s234 = scalar_select %p233, %s20, 0
        %s235 = sadd.s32 %s234, %s232
        %s236 = smul.addr %s230, 128
        %s237 = sadd.s32 %s235, %s236
        %s238 = smul.addr %s237, 4
        %s239 = scalar_lea.vmem %s1, %s238
        %s240 = smul.u32 128, %s21
      $region24: #{generator_forward.13} parent=15 // pred_fallthru
        _
    $region16: #{generator_forward.13} parent=5 // pred_fallthru
      _
    %p241 = scmp.le.s32.totalorder 1, %s11
    %p242 = scmp.lt.s32.totalorder %s11, 5
    %p243 = pnand %p241, %p242
    %p244 = pneg %p243
    // Predicated region
    $region25: #{generator_forward.13} parent=5 // pred_check
      _
    $region26: #{generator_forward.13} parent=5 // pred_check_branch
      %246 = sbr.rel (%p243) target = $region28
    $region27: #{generator_forward.13} parent=5 // pred_region
      %s247 = ssub.s32 %s11, 1
      %s248 = smul.u32 16, %s23
      %s249 = smul.u32 8, %s25
      %p250 = scmp.lt.s32.totalorder %s22, 3
      %s251 = scalar_select %p250, %s22, 3
      %p252 = scmp.lt.s32.totalorder %s248, 15
      %s253 = scalar_select %p252, %s248, 15
      %p254 = scmp.lt.s32.totalorder %s249, 7
      %s255 = scalar_select %p254, %s249, 7
      %s256 = smul.addr %s253, 8
      %s257 = sadd.s32 %s255, %s256
      %s258 = smul.addr %s251, 128
      %s259 = sadd.s32 %s257, %s258
      %s260 = smul.addr %s259, 4
      %s261 = scalar_lea.vmem %s0, %s260
      %p262 = pneg %p67
      %p263 = pneg %p64
      %s264 = smul.u32 128, %s25
      %p265 = scmp.lt.s32.totalorder %s22, 3
      %s266 = scalar_select %p265, %s22, 3
      %p267 = scmp.lt.s32.totalorder %s264, 127
      %s268 = scalar_select %p267, %s264, 127
      %p269 = scmp.lt.s32.totalorder %s24, 0
      %s270 = scalar_select %p269, %s24, 0
      %s271 = sadd.s32 %s270, %s268
      %s272 = smul.addr %s266, 128
      %s273 = sadd.s32 %s271, %s272
      %s274 = smul.addr %s273, 4
      %s275 = scalar_lea.vmem %s1, %s274
      %p276 = pneg %p97
      %p277 = pneg %p94
      %p278 = pneg %p127
      %p279 = pneg %p124
      %s280 = smul.u32 16, %s23
      %p281 = scmp.lt.s32.totalorder %s22, 3
      %s282 = scalar_select %p281, %s22, 3
      %p283 = scmp.lt.s32.totalorder %s280, 15
      %s284 = scalar_select %p283, %s280, 15
      %p285 = scmp.lt.s32.totalorder %s24, 0
      %s286 = scalar_select %p285, %s24, 0
      %s287 = sadd.s32 %s286, %s284
      %s288 = smul.addr %s282, 16
      %s289 = sadd.s32 %s287, %s288
      %s290 = smul.addr %s289, 4
      %s291 = scalar_lea.vmem %s2, %s290
      %p292 = pneg %p157
      %p293 = pneg %p154
      %p294 = scmp.lt.s32.totalorder %s22, 3
      %s295 = scalar_select %p294, %s22, 3
      %p296 = scmp.lt.s32.totalorder %s23, 0
      %s297 = scalar_select %p296, %s23, 0
      %p298 = scmp.lt.s32.totalorder %s24, 0
      %s299 = scalar_select %p298, %s24, 0
      %s300 = sadd.s32 %s299, %s297
      %s301 = sadd.s32 %s300, %s295
      %s302 = smul.addr %s301, 8
      %s303 = scalar_lea.vmem %s3, %s302
      %p304 = pneg %p187
      %p305 = pneg %p184
      %p306 = scmp.lt.s32.totalorder %s22, 3
      %s307 = scalar_select %p306, %s22, 3
      %p308 = scmp.lt.s32.totalorder %s23, 0
      %s309 = scalar_select %p308, %s23, 0
      %p310 = scmp.lt.s32.totalorder %s24, 0
      %s311 = scalar_select %p310, %s24, 0
      %s312 = sadd.s32 %s311, %s309
      %s313 = sadd.s32 %s312, %s307
      %s314 = smul.addr %s313, 8
      %s315 = scalar_lea.vmem %s4, %s314
      %s316 = smul.u32 16, %s23
      %s317 = smul.u32 8, %s25
      %p318 = scmp.lt.s32.totalorder %s22, 3
      %s319 = scalar_select %p318, %s22, 3
      %p320 = scmp.lt.s32.totalorder %s316, 15
      %s321 = scalar_select %p320, %s316, 15
      %p322 = scmp.lt.s32.totalorder %s317, 7
      %s323 = scalar_select %p322, %s317, 7
      %s324 = smul.addr %s321, 8
      %s325 = sadd.s32 %s323, %s324
      %s326 = smul.addr %s319, 128
      %s327 = sadd.s32 %s325, %s326
      %s328 = smul.addr %s327, 4
      %s329 = scalar_lea.vmem %s0, %s328
      %s330 = smul.u32 16, %s23
      %s331 = smul.u32 8, %s25
      %s332 = smul.u32 128, %s25
      %p333 = scmp.lt.s32.totalorder %s22, 3
      %s334 = scalar_select %p333, %s22, 3
      %p335 = scmp.lt.s32.totalorder %s332, 127
      %s336 = scalar_select %p335, %s332, 127
      %p337 = scmp.lt.s32.totalorder %s24, 0
      %s338 = scalar_select %p337, %s24, 0
      %s339 = sadd.s32 %s338, %s336
      %s340 = smul.addr %s334, 128
      %s341 = sadd.s32 %s339, %s340
      %s342 = smul.addr %s341, 4
      %s343 = scalar_lea.vmem %s1, %s342
      %s344 = smul.u32 128, %s25
      %s345 = smul.u32 16, %s23
      %p346 = scmp.lt.s32.totalorder %s22, 3
      %s347 = scalar_select %p346, %s22, 3
      %p348 = scmp.lt.s32.totalorder %s345, 15
      %s349 = scalar_select %p348, %s345, 15
      %p350 = scmp.lt.s32.totalorder %s24, 0
      %s351 = scalar_select %p350, %s24, 0
      %s352 = sadd.s32 %s351, %s349
      %s353 = smul.addr %s347, 16
      %s354 = sadd.s32 %s352, %s353
      %s355 = smul.addr %s354, 4
      %s356 = scalar_lea.vmem %s2, %s355
      %s357 = smul.u32 16, %s23
      %p358 = scmp.lt.s32.totalorder %s22, 3
      %s359 = scalar_select %p358, %s22, 3
      %p360 = scmp.lt.s32.totalorder %s23, 0
      %s361 = scalar_select %p360, %s23, 0
      %p362 = scmp.lt.s32.totalorder %s24, 0
      %s363 = scalar_select %p362, %s24, 0
      %s364 = sadd.s32 %s363, %s361
      %s365 = sadd.s32 %s364, %s359
      %s366 = smul.addr %s365, 8
      %s367 = scalar_lea.vmem %s3, %s366
      %p368 = scmp.lt.s32.totalorder %s22, 3
      %s369 = scalar_select %p368, %s22, 3
      %p370 = scmp.lt.s32.totalorder %s23, 0
      %s371 = scalar_select %p370, %s23, 0
      %p372 = scmp.lt.s32.totalorder %s24, 0
      %s373 = scalar_select %p372, %s24, 0
      %s374 = sadd.s32 %s373, %s371
      %s375 = sadd.s32 %s374, %s369
      %s376 = smul.addr %s375, 8
      %s377 = scalar_lea.vmem %s4, %s376
      %p379 = scmp.eq.s32.totalorder %s25, 0
      // Predicated region
      $region29: #{generator_forward.13} parent=27 // pred_check
        %p380 = pneg %p379
      $region30: #{generator_forward.13} parent=27 // pred_check_branch
        %382 = sbr.rel (%p380) target = $region32
      $region31: #{generator_forward.13} parent=27 // pred_region
        %383 = vst [vmem:[#allocation2] sm:$0xff] 0.0
        %384 = vst [vmem:[#allocation2 + $0x8] sm:$0xff] 0.0
        %385 = vst [vmem:[#allocation2 + $0x10] sm:$0xff] 0.0
        %386 = vst [vmem:[#allocation2 + $0x18] sm:$0xff] 0.0
        %387 = vst [vmem:[#allocation2 + $0x20] sm:$0xff] 0.0
        %388 = vst [vmem:[#allocation2 + $0x28] sm:$0xff] 0.0
        %389 = vst [vmem:[#allocation2 + $0x30] sm:$0xff] 0.0
        %390 = vst [vmem:[#allocation2 + $0x38] sm:$0xff] 0.0
        %391 = vst [vmem:[#allocation2 + $0x40] sm:$0xff] 0.0
        %392 = vst [vmem:[#allocation2 + $0x48] sm:$0xff] 0.0
        %393 = vst [vmem:[#allocation2 + $0x50] sm:$0xff] 0.0
        %394 = vst [vmem:[#allocation2 + $0x58] sm:$0xff] 0.0
        %395 = vst [vmem:[#allocation2 + $0x60] sm:$0xff] 0.0
        %396 = vst [vmem:[#allocation2 + $0x68] sm:$0xff] 0.0
        %397 = vst [vmem:[#allocation2 + $0x70] sm:$0xff] 0.0
        %398 = vst [vmem:[#allocation2 + $0x78] sm:$0xff] 0.0
      $region32: #{generator_forward.13} parent=27 // pred_fallthru
        _
      %v399 = vld [vmem:[#allocation2] sm:$0xff]
      %v400 = vld [vmem:[#allocation2 + $0x8] sm:$0xff]
      %v401 = vld [vmem:[#allocation2 + $0x10] sm:$0xff]
      %v402 = vld [vmem:[#allocation2 + $0x18] sm:$0xff]
      %v403 = vld [vmem:[#allocation2 + $0x20] sm:$0xff]
      %v404 = vld [vmem:[#allocation2 + $0x28] sm:$0xff]
      %v405 = vld [vmem:[#allocation2 + $0x30] sm:$0xff]
      %v406 = vld [vmem:[#allocation2 + $0x38] sm:$0xff]
      %v407 = vld [vmem:[#allocation2 + $0x40] sm:$0xff]
      %v408 = vld [vmem:[#allocation2 + $0x48] sm:$0xff]
      %v409 = vld [vmem:[#allocation2 + $0x50] sm:$0xff]
      %v410 = vld [vmem:[#allocation2 + $0x58] sm:$0xff]
      %v411 = vld [vmem:[#allocation2 + $0x60] sm:$0xff]
      %v412 = vld [vmem:[#allocation2 + $0x68] sm:$0xff]
      %v413 = vld [vmem:[#allocation2 + $0x70] sm:$0xff]
      %v414 = vld [vmem:[#allocation2 + $0x78] sm:$0xff]
      %v415 = vld [vmem:[%s329] sm:$0xff]
      %v416 = vld [vmem:[%s329 + $0x8] sm:$0xff]
      %v417 = vld [vmem:[%s329 + $0x10] sm:$0xff]
      %v418 = vld [vmem:[%s329 + $0x18] sm:$0xff]
      %v419 = vld [vmem:[%s329 + $0x20] sm:$0xff]
      %v420 = vld [vmem:[%s329 + $0x28] sm:$0xff]
      %v421 = vld [vmem:[%s329 + $0x30] sm:$0xff]
      %v422 = vld [vmem:[%s329 + $0x38] sm:$0xff]
      %v423 = vld [vmem:[%s329 + $0x40] sm:$0xff]
      %v424 = vld [vmem:[%s329 + $0x48] sm:$0xff]
      %v425 = vld [vmem:[%s329 + $0x50] sm:$0xff]
      %v426 = vld [vmem:[%s329 + $0x58] sm:$0xff]
      %v427 = vld [vmem:[%s329 + $0x60] sm:$0xff]
      %v428 = vld [vmem:[%s329 + $0x68] sm:$0xff]
      %v429 = vld [vmem:[%s329 + $0x70] sm:$0xff]
      %v430 = vld [vmem:[%s329 + $0x78] sm:$0xff]
      %v431 = vld [vmem:[%s329 + $0x80] sm:$0xff]
      %v432 = vld [vmem:[%s329 + $0x88] sm:$0xff]
      %v433 = vld [vmem:[%s329 + $0x90] sm:$0xff]
      %v434 = vld [vmem:[%s329 + $0x98] sm:$0xff]
      %v435 = vld [vmem:[%s329 + $0xa0] sm:$0xff]
      %v436 = vld [vmem:[%s329 + $0xa8] sm:$0xff]
      %v437 = vld [vmem:[%s329 + $0xb0] sm:$0xff]
      %v438 = vld [vmem:[%s329 + $0xb8] sm:$0xff]
      %v439 = vld [vmem:[%s329 + $0xc0] sm:$0xff]
      %v440 = vld [vmem:[%s329 + $0xc8] sm:$0xff]
      %v441 = vld [vmem:[%s329 + $0xd0] sm:$0xff]
      %v442 = vld [vmem:[%s329 + $0xd8] sm:$0xff]
      %v443 = vld [vmem:[%s329 + $0xe0] sm:$0xff]
      %v444 = vld [vmem:[%s329 + $0xe8] sm:$0xff]
      %v445 = vld [vmem:[%s329 + $0xf0] sm:$0xff]
      %v446 = vld [vmem:[%s329 + $0xf8] sm:$0xff]
      %v447 = vld [vmem:[%s329 + $0x100] sm:$0xff]
      %v448 = vld [vmem:[%s329 + $0x108] sm:$0xff]
      %v449 = vld [vmem:[%s329 + $0x110] sm:$0xff]
      %v450 = vld [vmem:[%s329 + $0x118] sm:$0xff]
      %v451 = vld [vmem:[%s329 + $0x120] sm:$0xff]
      %v452 = vld [vmem:[%s329 + $0x128] sm:$0xff]
      %v453 = vld [vmem:[%s329 + $0x130] sm:$0xff]
      %v454 = vld [vmem:[%s329 + $0x138] sm:$0xff]
      %v455 = vld [vmem:[%s329 + $0x140] sm:$0xff]
      %v456 = vld [vmem:[%s329 + $0x148] sm:$0xff]
      %v457 = vld [vmem:[%s329 + $0x150] sm:$0xff]
      %v458 = vld [vmem:[%s329 + $0x158] sm:$0xff]
      %v459 = vld [vmem:[%s329 + $0x160] sm:$0xff]
      %v460 = vld [vmem:[%s329 + $0x168] sm:$0xff]
      %v461 = vld [vmem:[%s329 + $0x170] sm:$0xff]
      %v462 = vld [vmem:[%s329 + $0x178] sm:$0xff]
      %v463 = vld [vmem:[%s329 + $0x180] sm:$0xff]
      %v464 = vld [vmem:[%s329 + $0x188] sm:$0xff]
      %v465 = vld [vmem:[%s329 + $0x190] sm:$0xff]
      %v466 = vld [vmem:[%s329 + $0x198] sm:$0xff]
      %v467 = vld [vmem:[%s329 + $0x1a0] sm:$0xff]
      %v468 = vld [vmem:[%s329 + $0x1a8] sm:$0xff]
      %v469 = vld [vmem:[%s329 + $0x1b0] sm:$0xff]
      %v470 = vld [vmem:[%s329 + $0x1b8] sm:$0xff]
      %v471 = vld [vmem:[%s329 + $0x1c0] sm:$0xff]
      %v472 = vld [vmem:[%s329 + $0x1c8] sm:$0xff]
      %v473 = vld [vmem:[%s329 + $0x1d0] sm:$0xff]
      %v474 = vld [vmem:[%s329 + $0x1d8] sm:$0xff]
      %v475 = vld [vmem:[%s329 + $0x1e0] sm:$0xff]
      %v476 = vld [vmem:[%s329 + $0x1e8] sm:$0xff]
      %v477 = vld [vmem:[%s329 + $0x1f0] sm:$0xff]
      %v478 = vld [vmem:[%s329 + $0x1f8] sm:$0xff]
      %v479 = vld [vmem:[%s343] sm:$0xf]
      %v480 = vld [vmem:[%s343 + $0x4] sm:$0xf]
      %v481 = vld [vmem:[%s343 + $0x8] sm:$0xf]
      %v482 = vld [vmem:[%s343 + $0xc] sm:$0xf]
      %v483 = vld [vmem:[%s343 + $0x10] sm:$0xf]
      %v484 = vld [vmem:[%s343 + $0x14] sm:$0xf]
      %v485 = vld [vmem:[%s343 + $0x18] sm:$0xf]
      %v486 = vld [vmem:[%s343 + $0x1c] sm:$0xf]
      %v487 = vld [vmem:[%s343 + $0x20] sm:$0xf]
      %v488 = vld [vmem:[%s343 + $0x24] sm:$0xf]
      %v489 = vld [vmem:[%s343 + $0x28] sm:$0xf]
      %v490 = vld [vmem:[%s343 + $0x2c] sm:$0xf]
      %v491 = vld [vmem:[%s343 + $0x30] sm:$0xf]
      %v492 = vld [vmem:[%s343 + $0x34] sm:$0xf]
      %v493 = vld [vmem:[%s343 + $0x38] sm:$0xf]
      %v494 = vld [vmem:[%s343 + $0x3c] sm:$0xf]
      %v495 = vld [vmem:[%s343 + $0x40] sm:$0xf]
      %v496 = vld [vmem:[%s343 + $0x44] sm:$0xf]
      %v497 = vld [vmem:[%s343 + $0x48] sm:$0xf]
      %v498 = vld [vmem:[%s343 + $0x4c] sm:$0xf]
      %v499 = vld [vmem:[%s343 + $0x50] sm:$0xf]
      %v500 = vld [vmem:[%s343 + $0x54] sm:$0xf]
      %v501 = vld [vmem:[%s343 + $0x58] sm:$0xf]
      %v502 = vld [vmem:[%s343 + $0x5c] sm:$0xf]
      %v503 = vld [vmem:[%s343 + $0x60] sm:$0xf]
      %v504 = vld [vmem:[%s343 + $0x64] sm:$0xf]
      %v505 = vld [vmem:[%s343 + $0x68] sm:$0xf]
      %v506 = vld [vmem:[%s343 + $0x6c] sm:$0xf]
      %v507 = vld [vmem:[%s343 + $0x70] sm:$0xf]
      %v508 = vld [vmem:[%s343 + $0x74] sm:$0xf]
      %v509 = vld [vmem:[%s343 + $0x78] sm:$0xf]
      %v510 = vld [vmem:[%s343 + $0x7c] sm:$0xf]
      %v511 = vld [vmem:[%s343 + $0x80] sm:$0xf]
      %v512 = vld [vmem:[%s343 + $0x84] sm:$0xf]
      %v513 = vld [vmem:[%s343 + $0x88] sm:$0xf]
      %v514 = vld [vmem:[%s343 + $0x8c] sm:$0xf]
      %v515 = vld [vmem:[%s343 + $0x90] sm:$0xf]
      %v516 = vld [vmem:[%s343 + $0x94] sm:$0xf]
      %v517 = vld [vmem:[%s343 + $0x98] sm:$0xf]
      %v518 = vld [vmem:[%s343 + $0x9c] sm:$0xf]
      %v519 = vld [vmem:[%s343 + $0xa0] sm:$0xf]
      %v520 = vld [vmem:[%s343 + $0xa4] sm:$0xf]
      %v521 = vld [vmem:[%s343 + $0xa8] sm:$0xf]
      %v522 = vld [vmem:[%s343 + $0xac] sm:$0xf]
      %v523 = vld [vmem:[%s343 + $0xb0] sm:$0xf]
      %v524 = vld [vmem:[%s343 + $0xb4] sm:$0xf]
      %v525 = vld [vmem:[%s343 + $0xb8] sm:$0xf]
      %v526 = vld [vmem:[%s343 + $0xbc] sm:$0xf]
      %v527 = vld [vmem:[%s343 + $0xc0] sm:$0xf]
      %v528 = vld [vmem:[%s343 + $0xc4] sm:$0xf]
      %v529 = vld [vmem:[%s343 + $0xc8] sm:$0xf]
      %v530 = vld [vmem:[%s343 + $0xcc] sm:$0xf]
      %v531 = vld [vmem:[%s343 + $0xd0] sm:$0xf]
      %v532 = vld [vmem:[%s343 + $0xd4] sm:$0xf]
      %v533 = vld [vmem:[%s343 + $0xd8] sm:$0xf]
      %v534 = vld [vmem:[%s343 + $0xdc] sm:$0xf]
      %v535 = vld [vmem:[%s343 + $0xe0] sm:$0xf]
      %v536 = vld [vmem:[%s343 + $0xe4] sm:$0xf]
      %v537 = vld [vmem:[%s343 + $0xe8] sm:$0xf]
      %v538 = vld [vmem:[%s343 + $0xec] sm:$0xf]
      %v539 = vld [vmem:[%s343 + $0xf0] sm:$0xf]
      %v540 = vld [vmem:[%s343 + $0xf4] sm:$0xf]
      %v541 = vld [vmem:[%s343 + $0xf8] sm:$0xf]
      %v542 = vld [vmem:[%s343 + $0xfc] sm:$0xf]
      %v543 = vld [vmem:[%s343 + $0x100] sm:$0xf]
      %v544 = vld [vmem:[%s343 + $0x104] sm:$0xf]
      %v545 = vld [vmem:[%s343 + $0x108] sm:$0xf]
      %v546 = vld [vmem:[%s343 + $0x10c] sm:$0xf]
      %v547 = vld [vmem:[%s343 + $0x110] sm:$0xf]
      %v548 = vld [vmem:[%s343 + $0x114] sm:$0xf]
      %v549 = vld [vmem:[%s343 + $0x118] sm:$0xf]
      %v550 = vld [vmem:[%s343 + $0x11c] sm:$0xf]
      %v551 = vld [vmem:[%s343 + $0x120] sm:$0xf]
      %v552 = vld [vmem:[%s343 + $0x124] sm:$0xf]
      %v553 = vld [vmem:[%s343 + $0x128] sm:$0xf]
      %v554 = vld [vmem:[%s343 + $0x12c] sm:$0xf]
      %v555 = vld [vmem:[%s343 + $0x130] sm:$0xf]
      %v556 = vld [vmem:[%s343 + $0x134] sm:$0xf]
      %v557 = vld [vmem:[%s343 + $0x138] sm:$0xf]
      %v558 = vld [vmem:[%s343 + $0x13c] sm:$0xf]
      %v559 = vld [vmem:[%s343 + $0x140] sm:$0xf]
      %v560 = vld [vmem:[%s343 + $0x144] sm:$0xf]
      %v561 = vld [vmem:[%s343 + $0x148] sm:$0xf]
      %v562 = vld [vmem:[%s343 + $0x14c] sm:$0xf]
      %v563 = vld [vmem:[%s343 + $0x150] sm:$0xf]
      %v564 = vld [vmem:[%s343 + $0x154] sm:$0xf]
      %v565 = vld [vmem:[%s343 + $0x158] sm:$0xf]
      %v566 = vld [vmem:[%s343 + $0x15c] sm:$0xf]
      %v567 = vld [vmem:[%s343 + $0x160] sm:$0xf]
      %v568 = vld [vmem:[%s343 + $0x164] sm:$0xf]
      %v569 = vld [vmem:[%s343 + $0x168] sm:$0xf]
      %v570 = vld [vmem:[%s343 + $0x16c] sm:$0xf]
      %v571 = vld [vmem:[%s343 + $0x170] sm:$0xf]
      %v572 = vld [vmem:[%s343 + $0x174] sm:$0xf]
      %v573 = vld [vmem:[%s343 + $0x178] sm:$0xf]
      %v574 = vld [vmem:[%s343 + $0x17c] sm:$0xf]
      %v575 = vld [vmem:[%s343 + $0x180] sm:$0xf]
      %v576 = vld [vmem:[%s343 + $0x184] sm:$0xf]
      %v577 = vld [vmem:[%s343 + $0x188] sm:$0xf]
      %v578 = vld [vmem:[%s343 + $0x18c] sm:$0xf]
      %v579 = vld [vmem:[%s343 + $0x190] sm:$0xf]
      %v580 = vld [vmem:[%s343 + $0x194] sm:$0xf]
      %v581 = vld [vmem:[%s343 + $0x198] sm:$0xf]
      %v582 = vld [vmem:[%s343 + $0x19c] sm:$0xf]
      %v583 = vld [vmem:[%s343 + $0x1a0] sm:$0xf]
      %v584 = vld [vmem:[%s343 + $0x1a4] sm:$0xf]
      %v585 = vld [vmem:[%s343 + $0x1a8] sm:$0xf]
      %v586 = vld [vmem:[%s343 + $0x1ac] sm:$0xf]
      %v587 = vld [vmem:[%s343 + $0x1b0] sm:$0xf]
      %v588 = vld [vmem:[%s343 + $0x1b4] sm:$0xf]
      %v589 = vld [vmem:[%s343 + $0x1b8] sm:$0xf]
      %v590 = vld [vmem:[%s343 + $0x1bc] sm:$0xf]
      %v591 = vld [vmem:[%s343 + $0x1c0] sm:$0xf]
      %v592 = vld [vmem:[%s343 + $0x1c4] sm:$0xf]
      %v593 = vld [vmem:[%s343 + $0x1c8] sm:$0xf]
      %v594 = vld [vmem:[%s343 + $0x1cc] sm:$0xf]
      %v595 = vld [vmem:[%s343 + $0x1d0] sm:$0xf]
      %v596 = vld [vmem:[%s343 + $0x1d4] sm:$0xf]
      %v597 = vld [vmem:[%s343 + $0x1d8] sm:$0xf]
      %v598 = vld [vmem:[%s343 + $0x1dc] sm:$0xf]
      %v599 = vld [vmem:[%s343 + $0x1e0] sm:$0xf]
      %v600 = vld [vmem:[%s343 + $0x1e4] sm:$0xf]
      %v601 = vld [vmem:[%s343 + $0x1e8] sm:$0xf]
      %v602 = vld [vmem:[%s343 + $0x1ec] sm:$0xf]
      %v603 = vld [vmem:[%s343 + $0x1f0] sm:$0xf]
      %v604 = vld [vmem:[%s343 + $0x1f4] sm:$0xf]
      %v605 = vld [vmem:[%s343 + $0x1f8] sm:$0xf]
      %v606 = vld [vmem:[%s343 + $0x1fc] sm:$0xf]
      %v671 = vunpack.c.l.b16 %v415
      %v672 = vunpack.c.h.b16 %v415
      %v673 = vunpack.c.l.b16 %v416
      %v674 = vunpack.c.h.b16 %v416
      %v675 = vunpack.c.l.b16 %v417
      %v676 = vunpack.c.h.b16 %v417
      %v677 = vunpack.c.l.b16 %v418
      %v678 = vunpack.c.h.b16 %v418
      %v679 = vunpack.c.l.b16 %v419
      %v680 = vunpack.c.h.b16 %v419
      %v681 = vunpack.c.l.b16 %v420
      %v682 = vunpack.c.h.b16 %v420
      %v683 = vunpack.c.l.b16 %v421
      %v684 = vunpack.c.h.b16 %v421
      %v685 = vunpack.c.l.b16 %v422
      %v686 = vunpack.c.h.b16 %v422
      %v687 = vunpack.c.l.b16 %v423
      %v688 = vunpack.c.h.b16 %v423
      %v689 = vunpack.c.l.b16 %v424
      %v690 = vunpack.c.h.b16 %v424
      %v691 = vunpack.c.l.b16 %v425
      %v692 = vunpack.c.h.b16 %v425
      %v693 = vunpack.c.l.b16 %v426
      %v694 = vunpack.c.h.b16 %v426
      %v695 = vunpack.c.l.b16 %v427
      %v696 = vunpack.c.h.b16 %v427
      %v697 = vunpack.c.l.b16 %v428
      %v698 = vunpack.c.h.b16 %v428
      %v699 = vunpack.c.l.b16 %v429
      %v700 = vunpack.c.h.b16 %v429
      %v701 = vunpack.c.l.b16 %v430
      %v702 = vunpack.c.h.b16 %v430
      %v703 = vunpack.c.l.b16 %v431
      %v704 = vunpack.c.h.b16 %v431
      %v705 = vunpack.c.l.b16 %v432
      %v706 = vunpack.c.h.b16 %v432
      %v707 = vunpack.c.l.b16 %v433
      %v708 = vunpack.c.h.b16 %v433
      %v709 = vunpack.c.l.b16 %v434
      %v710 = vunpack.c.h.b16 %v434
      %v711 = vunpack.c.l.b16 %v435
      %v712 = vunpack.c.h.b16 %v435
      %v713 = vunpack.c.l.b16 %v436
      %v714 = vunpack.c.h.b16 %v436
      %v715 = vunpack.c.l.b16 %v437
      %v716 = vunpack.c.h.b16 %v437
      %v717 = vunpack.c.l.b16 %v438
      %v718 = vunpack.c.h.b16 %v438
      %v719 = vunpack.c.l.b16 %v439
      %v720 = vunpack.c.h.b16 %v439
      %v721 = vunpack.c.l.b16 %v440
      %v722 = vunpack.c.h.b16 %v440
      %v723 = vunpack.c.l.b16 %v441
      %v724 = vunpack.c.h.b16 %v441
      %v725 = vunpack.c.l.b16 %v442
      %v726 = vunpack.c.h.b16 %v442
      %v727 = vunpack.c.l.b16 %v443
      %v728 = vunpack.c.h.b16 %v443
      %v729 = vunpack.c.l.b16 %v444
      %v730 = vunpack.c.h.b16 %v444
      %v731 = vunpack.c.l.b16 %v445
      %v732 = vunpack.c.h.b16 %v445
      %v733 = vunpack.c.l.b16 %v446
      %v734 = vunpack.c.h.b16 %v446
      %v735 = vunpack.c.l.b16 %v447
      %v736 = vunpack.c.h.b16 %v447
      %v737 = vunpack.c.l.b16 %v448
      %v738 = vunpack.c.h.b16 %v448
      %v739 = vunpack.c.l.b16 %v449
      %v740 = vunpack.c.h.b16 %v449
      %v741 = vunpack.c.l.b16 %v450
      %v742 = vunpack.c.h.b16 %v450
      %v743 = vunpack.c.l.b16 %v451
      %v744 = vunpack.c.h.b16 %v451
      %v745 = vunpack.c.l.b16 %v452
      %v746 = vunpack.c.h.b16 %v452
      %v747 = vunpack.c.l.b16 %v453
      %v748 = vunpack.c.h.b16 %v453
      %v749 = vunpack.c.l.b16 %v454
      %v750 = vunpack.c.h.b16 %v454
      %v751 = vunpack.c.l.b16 %v455
      %v752 = vunpack.c.h.b16 %v455
      %v753 = vunpack.c.l.b16 %v456
      %v754 = vunpack.c.h.b16 %v456
      %v755 = vunpack.c.l.b16 %v457
      %v756 = vunpack.c.h.b16 %v457
      %v757 = vunpack.c.l.b16 %v458
      %v758 = vunpack.c.h.b16 %v458
      %v759 = vunpack.c.l.b16 %v459
      %v760 = vunpack.c.h.b16 %v459
      %v761 = vunpack.c.l.b16 %v460
      %v762 = vunpack.c.h.b16 %v460
      %v763 = vunpack.c.l.b16 %v461
      %v764 = vunpack.c.h.b16 %v461
      %v765 = vunpack.c.l.b16 %v462
      %v766 = vunpack.c.h.b16 %v462
      %v767 = vunpack.c.l.b16 %v463
      %v768 = vunpack.c.h.b16 %v463
      %v769 = vunpack.c.l.b16 %v464
      %v770 = vunpack.c.h.b16 %v464
      %v771 = vunpack.c.l.b16 %v465
      %v772 = vunpack.c.h.b16 %v465
      %v773 = vunpack.c.l.b16 %v466
      %v774 = vunpack.c.h.b16 %v466
      %v775 = vunpack.c.l.b16 %v467
      %v776 = vunpack.c.h.b16 %v467
      %v777 = vunpack.c.l.b16 %v468
      %v778 = vunpack.c.h.b16 %v468
      %v779 = vunpack.c.l.b16 %v469
      %v780 = vunpack.c.h.b16 %v469
      %v781 = vunpack.c.l.b16 %v470
      %v782 = vunpack.c.h.b16 %v470
      %v783 = vunpack.c.l.b16 %v471
      %v784 = vunpack.c.h.b16 %v471
      %v785 = vunpack.c.l.b16 %v472
      %v786 = vunpack.c.h.b16 %v472
      %v787 = vunpack.c.l.b16 %v473
      %v788 = vunpack.c.h.b16 %v473
      %v789 = vunpack.c.l.b16 %v474
      %v790 = vunpack.c.h.b16 %v474
      %v791 = vunpack.c.l.b16 %v475
      %v792 = vunpack.c.h.b16 %v475
      %v793 = vunpack.c.l.b16 %v476
      %v794 = vunpack.c.h.b16 %v476
      %v795 = vunpack.c.l.b16 %v477
      %v796 = vunpack.c.h.b16 %v477
      %v797 = vunpack.c.l.b16 %v478
      %v798 = vunpack.c.h.b16 %v478
      %v799 = vpack.c.b16 %v679, %v671
      %v800 = vpack.c.b16 %v680, %v672
      %v801 = vpack.c.b16 %v681, %v673
      %v802 = vpack.c.b16 %v682, %v674
      %v803 = vpack.c.b16 %v683, %v675
      %v804 = vpack.c.b16 %v684, %v676
      %v805 = vpack.c.b16 %v685, %v677
      %v806 = vpack.c.b16 %v686, %v678
      %v807 = vpack.c.b16 %v695, %v687
      %v808 = vpack.c.b16 %v696, %v688
      %v809 = vpack.c.b16 %v697, %v689
      %v810 = vpack.c.b16 %v698, %v690
      %v811 = vpack.c.b16 %v699, %v691
      %v812 = vpack.c.b16 %v700, %v692
      %v813 = vpack.c.b16 %v701, %v693
      %v814 = vpack.c.b16 %v702, %v694
      %v815 = vpack.c.b16 %v711, %v703
      %v816 = vpack.c.b16 %v712, %v704
      %v817 = vpack.c.b16 %v713, %v705
      %v818 = vpack.c.b16 %v714, %v706
      %v819 = vpack.c.b16 %v715, %v707
      %v820 = vpack.c.b16 %v716, %v708
      %v821 = vpack.c.b16 %v717, %v709
      %v822 = vpack.c.b16 %v718, %v710
      %v823 = vpack.c.b16 %v727, %v719
      %v824 = vpack.c.b16 %v728, %v720
      %v825 = vpack.c.b16 %v729, %v721
      %v826 = vpack.c.b16 %v730, %v722
      %v827 = vpack.c.b16 %v731, %v723
      %v828 = vpack.c.b16 %v732, %v724
      %v829 = vpack.c.b16 %v733, %v725
      %v830 = vpack.c.b16 %v734, %v726
      %v831 = vpack.c.b16 %v743, %v735
      %v832 = vpack.c.b16 %v744, %v736
      %v833 = vpack.c.b16 %v745, %v737
      %v834 = vpack.c.b16 %v746, %v738
      %v835 = vpack.c.b16 %v747, %v739
      %v836 = vpack.c.b16 %v748, %v740
      %v837 = vpack.c.b16 %v749, %v741
      %v838 = vpack.c.b16 %v750, %v742
      %v839 = vpack.c.b16 %v759, %v751
      %v840 = vpack.c.b16 %v760, %v752
      %v841 = vpack.c.b16 %v761, %v753
      %v842 = vpack.c.b16 %v762, %v754
      %v843 = vpack.c.b16 %v763, %v755
      %v844 = vpack.c.b16 %v764, %v756
      %v845 = vpack.c.b16 %v765, %v757
      %v846 = vpack.c.b16 %v766, %v758
      %v847 = vpack.c.b16 %v775, %v767
      %v848 = vpack.c.b16 %v776, %v768
      %v849 = vpack.c.b16 %v777, %v769
      %v850 = vpack.c.b16 %v778, %v770
      %v851 = vpack.c.b16 %v779, %v771
      %v852 = vpack.c.b16 %v780, %v772
      %v853 = vpack.c.b16 %v781, %v773
      %v854 = vpack.c.b16 %v782, %v774
      %v855 = vpack.c.b16 %v791, %v783
      %v856 = vpack.c.b16 %v792, %v784
      %v857 = vpack.c.b16 %v793, %v785
      %v858 = vpack.c.b16 %v794, %v786
      %v859 = vpack.c.b16 %v795, %v787
      %v860 = vpack.c.b16 %v796, %v788
      %v861 = vpack.c.b16 %v797, %v789
      %v862 = vpack.c.b16 %v798, %v790
      %v1055 = vunpack.c.l.b16 %v479
      %v1056 = vunpack.c.l.b16 %v480
      %v1057 = vunpack.c.l.b16 %v481
      %v1058 = vunpack.c.l.b16 %v482
      %v1059 = vunpack.c.l.b16 %v483
      %v1060 = vunpack.c.l.b16 %v484
      %v1061 = vunpack.c.l.b16 %v485
      %v1062 = vunpack.c.l.b16 %v486
      %v1063 = vunpack.c.l.b16 %v487
      %v1064 = vunpack.c.l.b16 %v488
      %v1065 = vunpack.c.l.b16 %v489
      %v1066 = vunpack.c.l.b16 %v490
      %v1067 = vunpack.c.l.b16 %v491
      %v1068 = vunpack.c.l.b16 %v492
      %v1069 = vunpack.c.l.b16 %v493
      %v1070 = vunpack.c.l.b16 %v494
      %v1071 = vunpack.c.l.b16 %v495
      %v1072 = vunpack.c.l.b16 %v496
      %v1073 = vunpack.c.l.b16 %v497
      %v1074 = vunpack.c.l.b16 %v498
      %v1075 = vunpack.c.l.b16 %v499
      %v1076 = vunpack.c.l.b16 %v500
      %v1077 = vunpack.c.l.b16 %v501
      %v1078 = vunpack.c.l.b16 %v502
      %v1079 = vunpack.c.l.b16 %v503
      %v1080 = vunpack.c.l.b16 %v504
      %v1081 = vunpack.c.l.b16 %v505
      %v1082 = vunpack.c.l.b16 %v506
      %v1083 = vunpack.c.l.b16 %v507
      %v1084 = vunpack.c.l.b16 %v508
      %v1085 = vunpack.c.l.b16 %v509
      %v1086 = vunpack.c.l.b16 %v510
      %v1087 = vunpack.c.l.b16 %v511
      %v1088 = vunpack.c.l.b16 %v512
      %v1089 = vunpack.c.l.b16 %v513
      %v1090 = vunpack.c.l.b16 %v514
      %v1091 = vunpack.c.l.b16 %v515
      %v1092 = vunpack.c.l.b16 %v516
      %v1093 = vunpack.c.l.b16 %v517
      %v1094 = vunpack.c.l.b16 %v518
      %v1095 = vunpack.c.l.b16 %v519
      %v1096 = vunpack.c.l.b16 %v520
      %v1097 = vunpack.c.l.b16 %v521
      %v1098 = vunpack.c.l.b16 %v522
      %v1099 = vunpack.c.l.b16 %v523
      %v1100 = vunpack.c.l.b16 %v524
      %v1101 = vunpack.c.l.b16 %v525
      %v1102 = vunpack.c.l.b16 %v526
      %v1103 = vunpack.c.l.b16 %v527
      %v1104 = vunpack.c.l.b16 %v528
      %v1105 = vunpack.c.l.b16 %v529
      %v1106 = vunpack.c.l.b16 %v530
      %v1107 = vunpack.c.l.b16 %v531
      %v1108 = vunpack.c.l.b16 %v532
      %v1109 = vunpack.c.l.b16 %v533
      %v1110 = vunpack.c.l.b16 %v534
      %v1111 = vunpack.c.l.b16 %v535
      %v1112 = vunpack.c.l.b16 %v536
      %v1113 = vunpack.c.l.b16 %v537
      %v1114 = vunpack.c.l.b16 %v538
      %v1115 = vunpack.c.l.b16 %v539
      %v1116 = vunpack.c.l.b16 %v540
      %v1117 = vunpack.c.l.b16 %v541
      %v1118 = vunpack.c.l.b16 %v542
      %v1119 = vunpack.c.l.b16 %v543
      %v1120 = vunpack.c.l.b16 %v544
      %v1121 = vunpack.c.l.b16 %v545
      %v1122 = vunpack.c.l.b16 %v546
      %v1123 = vunpack.c.l.b16 %v547
      %v1124 = vunpack.c.l.b16 %v548
      %v1125 = vunpack.c.l.b16 %v549
      %v1126 = vunpack.c.l.b16 %v550
      %v1127 = vunpack.c.l.b16 %v551
      %v1128 = vunpack.c.l.b16 %v552
      %v1129 = vunpack.c.l.b16 %v553
      %v1130 = vunpack.c.l.b16 %v554
      %v1131 = vunpack.c.l.b16 %v555
      %v1132 = vunpack.c.l.b16 %v556
      %v1133 = vunpack.c.l.b16 %v557
      %v1134 = vunpack.c.l.b16 %v558
      %v1135 = vunpack.c.l.b16 %v559
      %v1136 = vunpack.c.l.b16 %v560
      %v1137 = vunpack.c.l.b16 %v561
      %v1138 = vunpack.c.l.b16 %v562
      %v1139 = vunpack.c.l.b16 %v563
      %v1140 = vunpack.c.l.b16 %v564
      %v1141 = vunpack.c.l.b16 %v565
      %v1142 = vunpack.c.l.b16 %v566
      %v1143 = vunpack.c.l.b16 %v567
      %v1144 = vunpack.c.l.b16 %v568
      %v1145 = vunpack.c.l.b16 %v569
      %v1146 = vunpack.c.l.b16 %v570
      %v1147 = vunpack.c.l.b16 %v571
      %v1148 = vunpack.c.l.b16 %v572
      %v1149 = vunpack.c.l.b16 %v573
      %v1150 = vunpack.c.l.b16 %v574
      %v1151 = vunpack.c.l.b16 %v575
      %v1152 = vunpack.c.l.b16 %v576
      %v1153 = vunpack.c.l.b16 %v577
      %v1154 = vunpack.c.l.b16 %v578
      %v1155 = vunpack.c.l.b16 %v579
      %v1156 = vunpack.c.l.b16 %v580
      %v1157 = vunpack.c.l.b16 %v581
      %v1158 = vunpack.c.l.b16 %v582
      %v1159 = vunpack.c.l.b16 %v583
      %v1160 = vunpack.c.l.b16 %v584
      %v1161 = vunpack.c.l.b16 %v585
      %v1162 = vunpack.c.l.b16 %v586
      %v1163 = vunpack.c.l.b16 %v587
      %v1164 = vunpack.c.l.b16 %v588
      %v1165 = vunpack.c.l.b16 %v589
      %v1166 = vunpack.c.l.b16 %v590
      %v1167 = vunpack.c.l.b16 %v591
      %v1168 = vunpack.c.l.b16 %v592
      %v1169 = vunpack.c.l.b16 %v593
      %v1170 = vunpack.c.l.b16 %v594
      %v1171 = vunpack.c.l.b16 %v595
      %v1172 = vunpack.c.l.b16 %v596
      %v1173 = vunpack.c.l.b16 %v597
      %v1174 = vunpack.c.l.b16 %v598
      %v1175 = vunpack.c.l.b16 %v599
      %v1176 = vunpack.c.l.b16 %v600
      %v1177 = vunpack.c.l.b16 %v601
      %v1178 = vunpack.c.l.b16 %v602
      %v1179 = vunpack.c.l.b16 %v603
      %v1180 = vunpack.c.l.b16 %v604
      %v1181 = vunpack.c.l.b16 %v605
      %v1182 = vunpack.c.l.b16 %v606
      %v1183 = vpack.c.b16 %v1056, %v1055
      %v1184 = vpack.c.b16 %v1058, %v1057
      %v1185 = vpack.c.b16 %v1060, %v1059
      %v1186 = vpack.c.b16 %v1062, %v1061
      %v1187 = vpack.c.b16 %v1064, %v1063
      %v1188 = vpack.c.b16 %v1066, %v1065
      %v1189 = vpack.c.b16 %v1068, %v1067
      %v1190 = vpack.c.b16 %v1070, %v1069
      %v1191 = vpack.c.b16 %v1072, %v1071
      %v1192 = vpack.c.b16 %v1074, %v1073
      %v1193 = vpack.c.b16 %v1076, %v1075
      %v1194 = vpack.c.b16 %v1078, %v1077
      %v1195 = vpack.c.b16 %v1080, %v1079
      %v1196 = vpack.c.b16 %v1082, %v1081
      %v1197 = vpack.c.b16 %v1084, %v1083
      %v1198 = vpack.c.b16 %v1086, %v1085
      %v1199 = vpack.c.b16 %v1088, %v1087
      %v1200 = vpack.c.b16 %v1090, %v1089
      %v1201 = vpack.c.b16 %v1092, %v1091
      %v1202 = vpack.c.b16 %v1094, %v1093
      %v1203 = vpack.c.b16 %v1096, %v1095
      %v1204 = vpack.c.b16 %v1098, %v1097
      %v1205 = vpack.c.b16 %v1100, %v1099
      %v1206 = vpack.c.b16 %v1102, %v1101
      %v1207 = vpack.c.b16 %v1104, %v1103
      %v1208 = vpack.c.b16 %v1106, %v1105
      %v1209 = vpack.c.b16 %v1108, %v1107
      %v1210 = vpack.c.b16 %v1110, %v1109
      %v1211 = vpack.c.b16 %v1112, %v1111
      %v1212 = vpack.c.b16 %v1114, %v1113
      %v1213 = vpack.c.b16 %v1116, %v1115
      %v1214 = vpack.c.b16 %v1118, %v1117
      %v1215 = vpack.c.b16 %v1120, %v1119
      %v1216 = vpack.c.b16 %v1122, %v1121
      %v1217 = vpack.c.b16 %v1124, %v1123
      %v1218 = vpack.c.b16 %v1126, %v1125
      %v1219 = vpack.c.b16 %v1128, %v1127
      %v1220 = vpack.c.b16 %v1130, %v1129
      %v1221 = vpack.c.b16 %v1132, %v1131
      %v1222 = vpack.c.b16 %v1134, %v1133
      %v1223 = vpack.c.b16 %v1136, %v1135
      %v1224 = vpack.c.b16 %v1138, %v1137
      %v1225 = vpack.c.b16 %v1140, %v1139
      %v1226 = vpack.c.b16 %v1142, %v1141
      %v1227 = vpack.c.b16 %v1144, %v1143
      %v1228 = vpack.c.b16 %v1146, %v1145
      %v1229 = vpack.c.b16 %v1148, %v1147
      %v1230 = vpack.c.b16 %v1150, %v1149
      %v1231 = vpack.c.b16 %v1152, %v1151
      %v1232 = vpack.c.b16 %v1154, %v1153
      %v1233 = vpack.c.b16 %v1156, %v1155
      %v1234 = vpack.c.b16 %v1158, %v1157
      %v1235 = vpack.c.b16 %v1160, %v1159
      %v1236 = vpack.c.b16 %v1162, %v1161
      %v1237 = vpack.c.b16 %v1164, %v1163
      %v1238 = vpack.c.b16 %v1166, %v1165
      %v1239 = vpack.c.b16 %v1168, %v1167
      %v1240 = vpack.c.b16 %v1170, %v1169
      %v1241 = vpack.c.b16 %v1172, %v1171
      %v1242 = vpack.c.b16 %v1174, %v1173
      %v1243 = vpack.c.b16 %v1176, %v1175
      %v1244 = vpack.c.b16 %v1178, %v1177
      %v1245 = vpack.c.b16 %v1180, %v1179
      %v1246 = vpack.c.b16 %v1182, %v1181
      %1311 = vmatprep.subr.bf16.mxu0 0
      %1312 = vmatpush1.bf16.msra.mxu0 %v1190
      %1313 = vmatprep.subr.bf16.mxu0 0
      %1314 = vmatpush1.bf16.msra.mxu0 %v1189
      %1315 = vmatprep.subr.bf16.mxu0 0
      %1316 = vmatpush1.bf16.msra.mxu0 %v1188
      %1317 = vmatprep.subr.bf16.mxu0 0
      %1318 = vmatpush1.bf16.msra.mxu0 %v1187
      %1319 = vmatprep.subr.bf16.mxu0 0
      %1320 = vmatpush1.bf16.msra.mxu0 %v1186
      %1321 = vmatprep.subr.bf16.mxu0 0
      %1322 = vmatpush1.bf16.msra.mxu0 %v1185
      %1323 = vmatprep.subr.bf16.mxu0 0
      %1324 = vmatpush1.bf16.msra.mxu0 %v1184
      %1325 = vmatprep.subr.bf16.mxu0 0
      %1326 = vmatpush1.bf16.msra.mxu0 %v1183
      %1327 = vmatprep.subr.bf16.mxu0 0
      %1328 = vmatpush2.bf16.msra.mxu0 %v1198
      %1329 = vmatprep.subr.bf16.mxu0 0
      %1330 = vmatpush2.bf16.msra.mxu0 %v1197
      %1331 = vmatprep.subr.bf16.mxu0 0
      %1332 = vmatpush2.bf16.msra.mxu0 %v1196
      %1333 = vmatprep.subr.bf16.mxu0 0
      %1334 = vmatpush2.bf16.msra.mxu0 %v1195
      %1335 = vmatprep.subr.bf16.mxu0 0
      %1336 = vmatpush2.bf16.msra.mxu0 %v1194
      %1337 = vmatprep.subr.bf16.mxu0 0
      %1338 = vmatpush2.bf16.msra.mxu0 %v1193
      %1339 = vmatprep.subr.bf16.mxu0 0
      %1340 = vmatpush2.bf16.msra.mxu0 %v1192
      %1341 = vmatprep.subr.bf16.mxu0 0
      %1342 = vmatpush2.bf16.msra.mxu0 %v1191
      %1343 = vmatprep.mubr.bf16.mxu0 %v800
      %1344 = vmatmul.mubr.bf16.gmra.mxu0 %v799
      %v1345 = vpop.f32.mrf.mxu0
      %v1346 = vadd.f32 0.0, %v1345
      %v1347 = vpop.f32.mrf.mxu0
      %v1348 = vpop.f32.mrf.mxu0
      %v1349 = vadd.f32 0.0, %v1348
      %v1350 = vpop.f32.mrf.mxu0
      %1351 = vmatprep.mubr.bf16.mxu0 %v808
      %1352 = vmatmul.mubr.bf16.gmra.mxu0 %v807
      %v1353 = vpop.f32.mrf.mxu0
      %v1354 = vadd.f32 0.0, %v1353
      %v1355 = vpop.f32.mrf.mxu0
      %v1356 = vpop.f32.mrf.mxu0
      %v1357 = vadd.f32 0.0, %v1356
      %v1358 = vpop.f32.mrf.mxu0
      %1359 = vmatprep.mubr.bf16.mxu0 %v816
      %1360 = vmatmul.mubr.bf16.gmra.mxu0 %v815
      %v1361 = vpop.f32.mrf.mxu0
      %v1362 = vadd.f32 0.0, %v1361
      %v1363 = vpop.f32.mrf.mxu0
      %v1364 = vpop.f32.mrf.mxu0
      %v1365 = vadd.f32 0.0, %v1364
      %v1366 = vpop.f32.mrf.mxu0
      %1367 = vmatprep.mubr.bf16.mxu0 %v824
      %1368 = vmatmul.mubr.bf16.gmra.mxu0 %v823
      %v1369 = vpop.f32.mrf.mxu0
      %v1370 = vadd.f32 0.0, %v1369
      %v1371 = vpop.f32.mrf.mxu0
      %v1372 = vpop.f32.mrf.mxu0
      %v1373 = vadd.f32 0.0, %v1372
      %v1374 = vpop.f32.mrf.mxu0
      %1375 = vmatprep.mubr.bf16.mxu0 %v832
      %1376 = vmatmul.mubr.bf16.gmra.mxu0 %v831
      %v1377 = vpop.f32.mrf.mxu0
      %v1378 = vadd.f32 0.0, %v1377
      %v1379 = vpop.f32.mrf.mxu0
      %v1380 = vpop.f32.mrf.mxu0
      %v1381 = vadd.f32 0.0, %v1380
      %v1382 = vpop.f32.mrf.mxu0
      %1383 = vmatprep.mubr.bf16.mxu0 %v840
      %1384 = vmatmul.mubr.bf16.gmra.mxu0 %v839
      %v1385 = vpop.f32.mrf.mxu0
      %v1386 = vadd.f32 0.0, %v1385
      %v1387 = vpop.f32.mrf.mxu0
      %v1388 = vpop.f32.mrf.mxu0
      %v1389 = vadd.f32 0.0, %v1388
      %v1390 = vpop.f32.mrf.mxu0
      %1391 = vmatprep.mubr.bf16.mxu0 %v848
      %1392 = vmatmul.mubr.bf16.gmra.mxu0 %v847
      %v1393 = vpop.f32.mrf.mxu0
      %v1394 = vadd.f32 0.0, %v1393
      %v1395 = vpop.f32.mrf.mxu0
      %v1396 = vpop.f32.mrf.mxu0
      %v1397 = vadd.f32 0.0, %v1396
      %v1398 = vpop.f32.mrf.mxu0
      %1399 = vmatprep.mubr.bf16.mxu0 %v856
      %1400 = vmatmul.mubr.bf16.gmra.mxu0 %v855
      %v1401 = vpop.f32.mrf.mxu0
      %v1402 = vadd.f32 0.0, %v1401
      %v1403 = vpop.f32.mrf.mxu0
      %v1404 = vpop.f32.mrf.mxu0
      %v1405 = vadd.f32 0.0, %v1404
      %v1406 = vpop.f32.mrf.mxu0
      %1407 = vdwg.mxu0
      %1408 = vmatprep.subr.bf16.mxu0 0
      %1409 = vmatpush1.bf16.msra.mxu0 %v1206
      %1410 = vmatprep.subr.bf16.mxu0 0
      %1411 = vmatpush1.bf16.msra.mxu0 %v1205
      %1412 = vmatprep.subr.bf16.mxu0 0
      %1413 = vmatpush1.bf16.msra.mxu0 %v1204
      %1414 = vmatprep.subr.bf16.mxu0 0
      %1415 = vmatpush1.bf16.msra.mxu0 %v1203
      %1416 = vmatprep.subr.bf16.mxu0 0
      %1417 = vmatpush1.bf16.msra.mxu0 %v1202
      %1418 = vmatprep.subr.bf16.mxu0 0
      %1419 = vmatpush1.bf16.msra.mxu0 %v1201
      %1420 = vmatprep.subr.bf16.mxu0 0
      %1421 = vmatpush1.bf16.msra.mxu0 %v1200
      %1422 = vmatprep.subr.bf16.mxu0 0
      %1423 = vmatpush1.bf16.msra.mxu0 %v1199
      %1424 = vmatprep.subr.bf16.mxu0 0
      %1425 = vmatpush2.bf16.msra.mxu0 %v1214
      %1426 = vmatprep.subr.bf16.mxu0 0
      %1427 = vmatpush2.bf16.msra.mxu0 %v1213
      %1428 = vmatprep.subr.bf16.mxu0 0
      %1429 = vmatpush2.bf16.msra.mxu0 %v1212
      %1430 = vmatprep.subr.bf16.mxu0 0
      %1431 = vmatpush2.bf16.msra.mxu0 %v1211
      %1432 = vmatprep.subr.bf16.mxu0 0
      %1433 = vmatpush2.bf16.msra.mxu0 %v1210
      %1434 = vmatprep.subr.bf16.mxu0 0
      %1435 = vmatpush2.bf16.msra.mxu0 %v1209
      %1436 = vmatprep.subr.bf16.mxu0 0
      %1437 = vmatpush2.bf16.msra.mxu0 %v1208
      %1438 = vmatprep.subr.bf16.mxu0 0
      %1439 = vmatpush2.bf16.msra.mxu0 %v1207
      %1440 = vmatprep.mubr.bf16.mxu0 %v802
      %1441 = vmatmul.mubr.bf16.gmra.mxu0 %v801
      %v1442 = vpop.f32.mrf.mxu0
      %v1443 = vadd.f32 %v1346, %v1442
      %v1444 = vpop.f32.mrf.mxu0
      %v1445 = vpop.f32.mrf.mxu0
      %v1446 = vadd.f32 %v1349, %v1445
      %v1447 = vpop.f32.mrf.mxu0
      %1448 = vmatprep.mubr.bf16.mxu0 %v810
      %1449 = vmatmul.mubr.bf16.gmra.mxu0 %v809
      %v1450 = vpop.f32.mrf.mxu0
      %v1451 = vadd.f32 %v1354, %v1450
      %v1452 = vpop.f32.mrf.mxu0
      %v1453 = vpop.f32.mrf.mxu0
      %v1454 = vadd.f32 %v1357, %v1453
      %v1455 = vpop.f32.mrf.mxu0
      %1456 = vmatprep.mubr.bf16.mxu0 %v818
      %1457 = vmatmul.mubr.bf16.gmra.mxu0 %v817
      %v1458 = vpop.f32.mrf.mxu0
      %v1459 = vadd.f32 %v1362, %v1458
      %v1460 = vpop.f32.mrf.mxu0
      %v1461 = vpop.f32.mrf.mxu0
      %v1462 = vadd.f32 %v1365, %v1461
      %v1463 = vpop.f32.mrf.mxu0
      %1464 = vmatprep.mubr.bf16.mxu0 %v826
      %1465 = vmatmul.mubr.bf16.gmra.mxu0 %v825
      %v1466 = vpop.f32.mrf.mxu0
      %v1467 = vadd.f32 %v1370, %v1466
      %v1468 = vpop.f32.mrf.mxu0
      %v1469 = vpop.f32.mrf.mxu0
      %v1470 = vadd.f32 %v1373, %v1469
      %v1471 = vpop.f32.mrf.mxu0
      %1472 = vmatprep.mubr.bf16.mxu0 %v834
      %1473 = vmatmul.mubr.bf16.gmra.mxu0 %v833
      %v1474 = vpop.f32.mrf.mxu0
      %v1475 = vadd.f32 %v1378, %v1474
      %v1476 = vpop.f32.mrf.mxu0
      %v1477 = vpop.f32.mrf.mxu0
      %v1478 = vadd.f32 %v1381, %v1477
      %v1479 = vpop.f32.mrf.mxu0
      %1480 = vmatprep.mubr.bf16.mxu0 %v842
      %1481 = vmatmul.mubr.bf16.gmra.mxu0 %v841
      %v1482 = vpop.f32.mrf.mxu0
      %v1483 = vadd.f32 %v1386, %v1482
      %v1484 = vpop.f32.mrf.mxu0
      %v1485 = vpop.f32.mrf.mxu0
      %v1486 = vadd.f32 %v1389, %v1485
      %v1487 = vpop.f32.mrf.mxu0
      %1488 = vmatprep.mubr.bf16.mxu0 %v850
      %1489 = vmatmul.mubr.bf16.gmra.mxu0 %v849
      %v1490 = vpop.f32.mrf.mxu0
      %v1491 = vadd.f32 %v1394, %v1490
      %v1492 = vpop.f32.mrf.mxu0
      %v1493 = vpop.f32.mrf.mxu0
      %v1494 = vadd.f32 %v1397, %v1493
      %v1495 = vpop.f32.mrf.mxu0
      %1496 = vmatprep.mubr.bf16.mxu0 %v858
      %1497 = vmatmul.mubr.bf16.gmra.mxu0 %v857
      %v1498 = vpop.f32.mrf.mxu0
      %v1499 = vadd.f32 %v1402, %v1498
      %v1500 = vpop.f32.mrf.mxu0
      %v1501 = vpop.f32.mrf.mxu0
      %v1502 = vadd.f32 %v1405, %v1501
      %v1503 = vpop.f32.mrf.mxu0
      %1504 = vdwg.mxu0
      %1505 = vmatprep.subr.bf16.mxu0 0
      %1506 = vmatpush1.bf16.msra.mxu0 %v1222
      %1507 = vmatprep.subr.bf16.mxu0 0
      %1508 = vmatpush1.bf16.msra.mxu0 %v1221
      %1509 = vmatprep.subr.bf16.mxu0 0
      %1510 = vmatpush1.bf16.msra.mxu0 %v1220
      %1511 = vmatprep.subr.bf16.mxu0 0
      %1512 = vmatpush1.bf16.msra.mxu0 %v1219
      %1513 = vmatprep.subr.bf16.mxu0 0
      %1514 = vmatpush1.bf16.msra.mxu0 %v1218
      %1515 = vmatprep.subr.bf16.mxu0 0
      %1516 = vmatpush1.bf16.msra.mxu0 %v1217
      %1517 = vmatprep.subr.bf16.mxu0 0
      %1518 = vmatpush1.bf16.msra.mxu0 %v1216
      %1519 = vmatprep.subr.bf16.mxu0 0
      %1520 = vmatpush1.bf16.msra.mxu0 %v1215
      %1521 = vmatprep.subr.bf16.mxu0 0
      %1522 = vmatpush2.bf16.msra.mxu0 %v1230
      %1523 = vmatprep.subr.bf16.mxu0 0
      %1524 = vmatpush2.bf16.msra.mxu0 %v1229
      %1525 = vmatprep.subr.bf16.mxu0 0
      %1526 = vmatpush2.bf16.msra.mxu0 %v1228
      %1527 = vmatprep.subr.bf16.mxu0 0
      %1528 = vmatpush2.bf16.msra.mxu0 %v1227
      %1529 = vmatprep.subr.bf16.mxu0 0
      %1530 = vmatpush2.bf16.msra.mxu0 %v1226
      %1531 = vmatprep.subr.bf16.mxu0 0
      %1532 = vmatpush2.bf16.msra.mxu0 %v1225
      %1533 = vmatprep.subr.bf16.mxu0 0
      %1534 = vmatpush2.bf16.msra.mxu0 %v1224
      %1535 = vmatprep.subr.bf16.mxu0 0
      %1536 = vmatpush2.bf16.msra.mxu0 %v1223
      %1537 = vmatprep.mubr.bf16.mxu0 %v804
      %1538 = vmatmul.mubr.bf16.gmra.mxu0 %v803
      %v1539 = vpop.f32.mrf.mxu0
      %v1540 = vadd.f32 %v1443, %v1539
      %v1541 = vpop.f32.mrf.mxu0
      %v1542 = vpop.f32.mrf.mxu0
      %v1543 = vadd.f32 %v1446, %v1542
      %v1544 = vpop.f32.mrf.mxu0
      %1545 = vmatprep.mubr.bf16.mxu0 %v812
      %1546 = vmatmul.mubr.bf16.gmra.mxu0 %v811
      %v1547 = vpop.f32.mrf.mxu0
      %v1548 = vadd.f32 %v1451, %v1547
      %v1549 = vpop.f32.mrf.mxu0
      %v1550 = vpop.f32.mrf.mxu0
      %v1551 = vadd.f32 %v1454, %v1550
      %v1552 = vpop.f32.mrf.mxu0
      %1553 = vmatprep.mubr.bf16.mxu0 %v820
      %1554 = vmatmul.mubr.bf16.gmra.mxu0 %v819
      %v1555 = vpop.f32.mrf.mxu0
      %v1556 = vadd.f32 %v1459, %v1555
      %v1557 = vpop.f32.mrf.mxu0
      %v1558 = vpop.f32.mrf.mxu0
      %v1559 = vadd.f32 %v1462, %v1558
      %v1560 = vpop.f32.mrf.mxu0
      %1561 = vmatprep.mubr.bf16.mxu0 %v828
      %1562 = vmatmul.mubr.bf16.gmra.mxu0 %v827
      %v1563 = vpop.f32.mrf.mxu0
      %v1564 = vadd.f32 %v1467, %v1563
      %v1565 = vpop.f32.mrf.mxu0
      %v1566 = vpop.f32.mrf.mxu0
      %v1567 = vadd.f32 %v1470, %v1566
      %v1568 = vpop.f32.mrf.mxu0
      %1569 = vmatprep.mubr.bf16.mxu0 %v836
      %1570 = vmatmul.mubr.bf16.gmra.mxu0 %v835
      %v1571 = vpop.f32.mrf.mxu0
      %v1572 = vadd.f32 %v1475, %v1571
      %v1573 = vpop.f32.mrf.mxu0
      %v1574 = vpop.f32.mrf.mxu0
      %v1575 = vadd.f32 %v1478, %v1574
      %v1576 = vpop.f32.mrf.mxu0
      %1577 = vmatprep.mubr.bf16.mxu0 %v844
      %1578 = vmatmul.mubr.bf16.gmra.mxu0 %v843
      %v1579 = vpop.f32.mrf.mxu0
      %v1580 = vadd.f32 %v1483, %v1579
      %v1581 = vpop.f32.mrf.mxu0
      %v1582 = vpop.f32.mrf.mxu0
      %v1583 = vadd.f32 %v1486, %v1582
      %v1584 = vpop.f32.mrf.mxu0
      %1585 = vmatprep.mubr.bf16.mxu0 %v852
      %1586 = vmatmul.mubr.bf16.gmra.mxu0 %v851
      %v1587 = vpop.f32.mrf.mxu0
      %v1588 = vadd.f32 %v1491, %v1587
      %v1589 = vpop.f32.mrf.mxu0
      %v1590 = vpop.f32.mrf.mxu0
      %v1591 = vadd.f32 %v1494, %v1590
      %v1592 = vpop.f32.mrf.mxu0
      %1593 = vmatprep.mubr.bf16.mxu0 %v860
      %1594 = vmatmul.mubr.bf16.gmra.mxu0 %v859
      %v1595 = vpop.f32.mrf.mxu0
      %v1596 = vadd.f32 %v1499, %v1595
      %v1597 = vpop.f32.mrf.mxu0
      %v1598 = vpop.f32.mrf.mxu0
      %v1599 = vadd.f32 %v1502, %v1598
      %v1600 = vpop.f32.mrf.mxu0
      %1601 = vdwg.mxu0
      %1602 = vmatprep.subr.bf16.mxu0 0
      %1603 = vmatpush1.bf16.msra.mxu0 %v1238
      %1604 = vmatprep.subr.bf16.mxu0 0
      %1605 = vmatpush1.bf16.msra.mxu0 %v1237
      %1606 = vmatprep.subr.bf16.mxu0 0
      %1607 = vmatpush1.bf16.msra.mxu0 %v1236
      %1608 = vmatprep.subr.bf16.mxu0 0
      %1609 = vmatpush1.bf16.msra.mxu0 %v1235
      %1610 = vmatprep.subr.bf16.mxu0 0
      %1611 = vmatpush1.bf16.msra.mxu0 %v1234
      %1612 = vmatprep.subr.bf16.mxu0 0
      %1613 = vmatpush1.bf16.msra.mxu0 %v1233
      %1614 = vmatprep.subr.bf16.mxu0 0
      %1615 = vmatpush1.bf16.msra.mxu0 %v1232
      %1616 = vmatprep.subr.bf16.mxu0 0
      %1617 = vmatpush1.bf16.msra.mxu0 %v1231
      %1618 = vmatprep.subr.bf16.mxu0 0
      %1619 = vmatpush2.bf16.msra.mxu0 %v1246
      %1620 = vmatprep.subr.bf16.mxu0 0
      %1621 = vmatpush2.bf16.msra.mxu0 %v1245
      %1622 = vmatprep.subr.bf16.mxu0 0
      %1623 = vmatpush2.bf16.msra.mxu0 %v1244
      %1624 = vmatprep.subr.bf16.mxu0 0
      %1625 = vmatpush2.bf16.msra.mxu0 %v1243
      %1626 = vmatprep.subr.bf16.mxu0 0
      %1627 = vmatpush2.bf16.msra.mxu0 %v1242
      %1628 = vmatprep.subr.bf16.mxu0 0
      %1629 = vmatpush2.bf16.msra.mxu0 %v1241
      %1630 = vmatprep.subr.bf16.mxu0 0
      %1631 = vmatpush2.bf16.msra.mxu0 %v1240
      %1632 = vmatprep.subr.bf16.mxu0 0
      %1633 = vmatpush2.bf16.msra.mxu0 %v1239
      %1634 = vmatprep.mubr.bf16.mxu0 %v806
      %1635 = vmatmul.mubr.bf16.gmra.mxu0 %v805
      %v1636 = vpop.f32.mrf.mxu0
      %v1637 = vadd.f32 %v1540, %v1636
      %v1638 = vpop.f32.mrf.mxu0
      %v1639 = vpop.f32.mrf.mxu0
      %v1640 = vadd.f32 %v1543, %v1639
      %v1641 = vpop.f32.mrf.mxu0
      %1642 = vmatprep.mubr.bf16.mxu0 %v814
      %1643 = vmatmul.mubr.bf16.gmra.mxu0 %v813
      %v1644 = vpop.f32.mrf.mxu0
      %v1645 = vadd.f32 %v1548, %v1644
      %v1646 = vpop.f32.mrf.mxu0
      %v1647 = vpop.f32.mrf.mxu0
      %v1648 = vadd.f32 %v1551, %v1647
      %v1649 = vpop.f32.mrf.mxu0
      %1650 = vmatprep.mubr.bf16.mxu0 %v822
      %1651 = vmatmul.mubr.bf16.gmra.mxu0 %v821
      %v1652 = vpop.f32.mrf.mxu0
      %v1653 = vadd.f32 %v1556, %v1652
      %v1654 = vpop.f32.mrf.mxu0
      %v1655 = vpop.f32.mrf.mxu0
      %v1656 = vadd.f32 %v1559, %v1655
      %v1657 = vpop.f32.mrf.mxu0
      %1658 = vmatprep.mubr.bf16.mxu0 %v830
      %1659 = vmatmul.mubr.bf16.gmra.mxu0 %v829
      %v1660 = vpop.f32.mrf.mxu0
      %v1661 = vadd.f32 %v1564, %v1660
      %v1662 = vpop.f32.mrf.mxu0
      %v1663 = vpop.f32.mrf.mxu0
      %v1664 = vadd.f32 %v1567, %v1663
      %v1665 = vpop.f32.mrf.mxu0
      %1666 = vmatprep.mubr.bf16.mxu0 %v838
      %1667 = vmatmul.mubr.bf16.gmra.mxu0 %v837
      %v1668 = vpop.f32.mrf.mxu0
      %v1669 = vadd.f32 %v1572, %v1668
      %v1670 = vpop.f32.mrf.mxu0
      %v1671 = vpop.f32.mrf.mxu0
      %v1672 = vadd.f32 %v1575, %v1671
      %v1673 = vpop.f32.mrf.mxu0
      %1674 = vmatprep.mubr.bf16.mxu0 %v846
      %1675 = vmatmul.mubr.bf16.gmra.mxu0 %v845
      %v1676 = vpop.f32.mrf.mxu0
      %v1677 = vadd.f32 %v1580, %v1676
      %v1678 = vpop.f32.mrf.mxu0
      %v1679 = vpop.f32.mrf.mxu0
      %v1680 = vadd.f32 %v1583, %v1679
      %v1681 = vpop.f32.mrf.mxu0
      %1682 = vmatprep.mubr.bf16.mxu0 %v854
      %1683 = vmatmul.mubr.bf16.gmra.mxu0 %v853
      %v1684 = vpop.f32.mrf.mxu0
      %v1685 = vadd.f32 %v1588, %v1684
      %v1686 = vpop.f32.mrf.mxu0
      %v1687 = vpop.f32.mrf.mxu0
      %v1688 = vadd.f32 %v1591, %v1687
      %v1689 = vpop.f32.mrf.mxu0
      %1690 = vmatprep.mubr.bf16.mxu0 %v862
      %1691 = vmatmul.mubr.bf16.gmra.mxu0 %v861
      %v1692 = vpop.f32.mrf.mxu0
      %v1693 = vadd.f32 %v1596, %v1692
      %v1694 = vpop.f32.mrf.mxu0
      %v1695 = vpop.f32.mrf.mxu0
      %v1696 = vadd.f32 %v1599, %v1695
      %v1697 = vpop.f32.mrf.mxu0
      %1698 = vdwg.mxu0
      %v1699 = vadd.f32 %v399, %v1637
      %v1700 = vadd.f32 %v400, %v1640
      %v1701 = vadd.f32 %v401, %v1645
      %v1702 = vadd.f32 %v402, %v1648
      %v1703 = vadd.f32 %v403, %v1653
      %v1704 = vadd.f32 %v404, %v1656
      %v1705 = vadd.f32 %v405, %v1661
      %v1706 = vadd.f32 %v406, %v1664
      %v1707 = vadd.f32 %v407, %v1669
      %v1708 = vadd.f32 %v408, %v1672
      %v1709 = vadd.f32 %v409, %v1677
      %v1710 = vadd.f32 %v410, %v1680
      %v1711 = vadd.f32 %v411, %v1685
      %v1712 = vadd.f32 %v412, %v1688
      %v1713 = vadd.f32 %v413, %v1693
      %v1714 = vadd.f32 %v414, %v1696
      %1715 = vst [vmem:[#allocation2] sm:$0xff] %v1699
      %1716 = vst [vmem:[#allocation2 + $0x8] sm:$0xff] %v1700
      %1717 = vst [vmem:[#allocation2 + $0x10] sm:$0xff] %v1701
      %1718 = vst [vmem:[#allocation2 + $0x18] sm:$0xff] %v1702
      %1719 = vst [vmem:[#allocation2 + $0x20] sm:$0xff] %v1703
      %1720 = vst [vmem:[#allocation2 + $0x28] sm:$0xff] %v1704
      %1721 = vst [vmem:[#allocation2 + $0x30] sm:$0xff] %v1705
      %1722 = vst [vmem:[#allocation2 + $0x38] sm:$0xff] %v1706
      %1723 = vst [vmem:[#allocation2 + $0x40] sm:$0xff] %v1707
      %1724 = vst [vmem:[#allocation2 + $0x48] sm:$0xff] %v1708
      %1725 = vst [vmem:[#allocation2 + $0x50] sm:$0xff] %v1709
      %1726 = vst [vmem:[#allocation2 + $0x58] sm:$0xff] %v1710
      %1727 = vst [vmem:[#allocation2 + $0x60] sm:$0xff] %v1711
      %1728 = vst [vmem:[#allocation2 + $0x68] sm:$0xff] %v1712
      %1729 = vst [vmem:[#allocation2 + $0x70] sm:$0xff] %v1713
      %1730 = vst [vmem:[#allocation2 + $0x78] sm:$0xff] %v1714
      // Predicated region
      $region33: #{generator_forward.13} parent=27 // pred_check
        %p1731 = pneg %p379
      $region34: #{generator_forward.13} parent=27 // pred_check_branch
        %1733 = sbr.rel (%p1731) target = $region36
      $region35: #{generator_forward.13} parent=27 // pred_region
        %v1734 = vld [vmem:[#allocation2] sm:$0xff]
        %v1735 = vld [vmem:[#allocation2 + $0x8] sm:$0xff]
        %v1736 = vld [vmem:[#allocation2 + $0x10] sm:$0xff]
        %v1737 = vld [vmem:[#allocation2 + $0x18] sm:$0xff]
        %v1738 = vld [vmem:[#allocation2 + $0x20] sm:$0xff]
        %v1739 = vld [vmem:[#allocation2 + $0x28] sm:$0xff]
        %v1740 = vld [vmem:[#allocation2 + $0x30] sm:$0xff]
        %v1741 = vld [vmem:[#allocation2 + $0x38] sm:$0xff]
        %v1742 = vld [vmem:[#allocation2 + $0x40] sm:$0xff]
        %v1743 = vld [vmem:[#allocation2 + $0x48] sm:$0xff]
        %v1744 = vld [vmem:[#allocation2 + $0x50] sm:$0xff]
        %v1745 = vld [vmem:[#allocation2 + $0x58] sm:$0xff]
        %v1746 = vld [vmem:[#allocation2 + $0x60] sm:$0xff]
        %v1747 = vld [vmem:[#allocation2 + $0x68] sm:$0xff]
        %v1748 = vld [vmem:[#allocation2 + $0x70] sm:$0xff]
        %v1749 = vld [vmem:[#allocation2 + $0x78] sm:$0xff]
        %v1750 = vpack.c.bf16 %v1735, %v1734
        %v1751 = vpack.c.bf16 %v1737, %v1736
        %v1752 = vpack.c.bf16 %v1739, %v1738
        %v1753 = vpack.c.bf16 %v1741, %v1740
        %v1754 = vpack.c.bf16 %v1743, %v1742
        %v1755 = vpack.c.bf16 %v1745, %v1744
        %v1756 = vpack.c.bf16 %v1747, %v1746
        %v1757 = vpack.c.bf16 %v1749, %v1748
        %v1766 = vunpack.c.l.b16 %v1750
        %v1767 = vunpack.c.h.b16 %v1750
        %v1768 = vunpack.c.l.b16 %v1751
        %v1769 = vunpack.c.h.b16 %v1751
        %v1770 = vunpack.c.l.b16 %v1752
        %v1771 = vunpack.c.h.b16 %v1752
        %v1772 = vunpack.c.l.b16 %v1753
        %v1773 = vunpack.c.h.b16 %v1753
        %v1774 = vunpack.c.l.b16 %v1754
        %v1775 = vunpack.c.h.b16 %v1754
        %v1776 = vunpack.c.l.b16 %v1755
        %v1777 = vunpack.c.h.b16 %v1755
        %v1778 = vunpack.c.l.b16 %v1756
        %v1779 = vunpack.c.h.b16 %v1756
        %v1780 = vunpack.c.l.b16 %v1757
        %v1781 = vunpack.c.h.b16 %v1757
        %v1782 = vpack.c.b16 %v1766, %v1766
        %v1783 = vpack.c.b16 %v1767, %v1767
        %v1784 = vpack.c.b16 %v1768, %v1768
        %v1785 = vpack.c.b16 %v1769, %v1769
        %v1786 = vpack.c.b16 %v1770, %v1770
        %v1787 = vpack.c.b16 %v1771, %v1771
        %v1788 = vpack.c.b16 %v1772, %v1772
        %v1789 = vpack.c.b16 %v1773, %v1773
        %v1790 = vpack.c.b16 %v1774, %v1774
        %v1791 = vpack.c.b16 %v1775, %v1775
        %v1792 = vpack.c.b16 %v1776, %v1776
        %v1793 = vpack.c.b16 %v1777, %v1777
        %v1794 = vpack.c.b16 %v1778, %v1778
        %v1795 = vpack.c.b16 %v1779, %v1779
        %v1796 = vpack.c.b16 %v1780, %v1780
        %v1797 = vpack.c.b16 %v1781, %v1781
        %1814 = vst [vmem:[%s356] sm:$0xf] %v1782
        %1815 = vst [vmem:[%s356 + $0x4] sm:$0xf] %v1783
        %1816 = vst [vmem:[%s356 + $0x8] sm:$0xf] %v1784
        %1817 = vst [vmem:[%s356 + $0xc] sm:$0xf] %v1785
        %1818 = vst [vmem:[%s356 + $0x10] sm:$0xf] %v1786
        %1819 = vst [vmem:[%s356 + $0x14] sm:$0xf] %v1787
        %1820 = vst [vmem:[%s356 + $0x18] sm:$0xf] %v1788
        %1821 = vst [vmem:[%s356 + $0x1c] sm:$0xf] %v1789
        %1822 = vst [vmem:[%s356 + $0x20] sm:$0xf] %v1790
        %1823 = vst [vmem:[%s356 + $0x24] sm:$0xf] %v1791
        %1824 = vst [vmem:[%s356 + $0x28] sm:$0xf] %v1792
        %1825 = vst [vmem:[%s356 + $0x2c] sm:$0xf] %v1793
        %1826 = vst [vmem:[%s356 + $0x30] sm:$0xf] %v1794
        %1827 = vst [vmem:[%s356 + $0x34] sm:$0xf] %v1795
        %1828 = vst [vmem:[%s356 + $0x38] sm:$0xf] %v1796
        %1829 = vst [vmem:[%s356 + $0x3c] sm:$0xf] %v1797
        %v1830 = vadd.f32 %v1734, %v1735
        %v1831 = vadd.f32 %v1830, %v1736
        %v1832 = vadd.f32 %v1831, %v1737
        %v1833 = vadd.f32 %v1832, %v1738
        %v1834 = vadd.f32 %v1833, %v1739
        %v1835 = vadd.f32 %v1834, %v1740
        %v1836 = vadd.f32 %v1835, %v1741
        %v1837 = vadd.f32 %v1836, %v1742
        %v1838 = vadd.f32 %v1837, %v1743
        %v1839 = vadd.f32 %v1838, %v1744
        %v1840 = vadd.f32 %v1839, %v1745
        %v1841 = vadd.f32 %v1840, %v1746
        %v1842 = vadd.f32 %v1841, %v1747
        %v1843 = vadd.f32 %v1842, %v1748
        %v1844 = vadd.f32 %v1843, %v1749
        %v1845 = vrot.slane %v1844, 4
        %v1846 = vadd.f32 %v1844, %v1845
        %v1847 = vrot.slane %v1846, 2
        %v1848 = vadd.f32 %v1846, %v1847
        %v1849 = vrot.slane %v1848, 1
        %v1850 = vadd.f32 %v1848, %v1849
        %v1851 = vmul.f32 %v1734, %v1734
        %v1852 = vmul.f32 %v1735, %v1735
        %v1853 = vmul.f32 %v1736, %v1736
        %v1854 = vmul.f32 %v1737, %v1737
        %v1855 = vmul.f32 %v1738, %v1738
        %v1856 = vmul.f32 %v1739, %v1739
        %v1857 = vmul.f32 %v1740, %v1740
        %v1858 = vmul.f32 %v1741, %v1741
        %v1859 = vmul.f32 %v1742, %v1742
        %v1860 = vmul.f32 %v1743, %v1743
        %v1861 = vmul.f32 %v1744, %v1744
        %v1862 = vmul.f32 %v1745, %v1745
        %v1863 = vmul.f32 %v1746, %v1746
        %v1864 = vmul.f32 %v1747, %v1747
        %v1865 = vmul.f32 %v1748, %v1748
        %v1866 = vmul.f32 %v1749, %v1749
        %v1867 = vadd.f32 %v1851, %v1852
        %v1868 = vadd.f32 %v1867, %v1853
        %v1869 = vadd.f32 %v1868, %v1854
        %v1870 = vadd.f32 %v1869, %v1855
        %v1871 = vadd.f32 %v1870, %v1856
        %v1872 = vadd.f32 %v1871, %v1857
        %v1873 = vadd.f32 %v1872, %v1858
        %v1874 = vadd.f32 %v1873, %v1859
        %v1875 = vadd.f32 %v1874, %v1860
        %v1876 = vadd.f32 %v1875, %v1861
        %v1877 = vadd.f32 %v1876, %v1862
        %v1878 = vadd.f32 %v1877, %v1863
        %v1879 = vadd.f32 %v1878, %v1864
        %v1880 = vadd.f32 %v1879, %v1865
        %v1881 = vadd.f32 %v1880, %v1866
        %v1882 = vrot.slane %v1881, 4
        %v1883 = vadd.f32 %v1881, %v1882
        %v1884 = vrot.slane %v1883, 2
        %v1885 = vadd.f32 %v1883, %v1884
        %v1886 = vrot.slane %v1885, 1
        %v1887 = vadd.f32 %v1885, %v1886
        %1888 = vst [vmem:[%s367] sm:$0xff] %v1850
        %1889 = vst [vmem:[%s377] sm:$0xff] %v1887
      $region36: #{generator_forward.13} parent=27 // pred_fallthru
        _
      %s1890 = smul.u32 16, %s23
      %p1891 = scmp.lt.s32.totalorder %s22, 3
      %s1892 = scalar_select %p1891, %s22, 3
      %p1893 = scmp.lt.s32.totalorder %s1890, 15
      %s1894 = scalar_select %p1893, %s1890, 15
      %p1895 = scmp.lt.s32.totalorder %s24, 0
      %s1896 = scalar_select %p1895, %s24, 0
      %s1897 = sadd.s32 %s1896, %s1894
      %s1898 = smul.addr %s1892, 16
      %s1899 = sadd.s32 %s1897, %s1898
      %s1900 = smul.addr %s1899, 4
      %s1901 = scalar_lea.vmem %s2, %s1900
      %p1902 = scmp.lt.s32.totalorder %s22, 3
      %s1903 = scalar_select %p1902, %s22, 3
      %p1904 = scmp.lt.s32.totalorder %s23, 0
      %s1905 = scalar_select %p1904, %s23, 0
      %p1906 = scmp.lt.s32.totalorder %s24, 0
      %s1907 = scalar_select %p1906, %s24, 0
      %s1908 = sadd.s32 %s1907, %s1905
      %s1909 = sadd.s32 %s1908, %s1903
      %s1910 = smul.addr %s1909, 8
      %s1911 = scalar_lea.vmem %s3, %s1910
      %p1912 = scmp.lt.s32.totalorder %s22, 3
      %s1913 = scalar_select %p1912, %s22, 3
      %p1914 = scmp.lt.s32.totalorder %s23, 0
      %s1915 = scalar_select %p1914, %s23, 0
      %p1916 = scmp.lt.s32.totalorder %s24, 0
      %s1917 = scalar_select %p1916, %s24, 0
      %s1918 = sadd.s32 %s1917, %s1915
      %s1919 = sadd.s32 %s1918, %s1913
      %s1920 = smul.addr %s1919, 8
      %s1921 = scalar_lea.vmem %s4, %s1920
      // Predicated region
      $region37: #{generator_forward.13} parent=27 // pred_check
        %p1922 = pneg %p124
      $region38: #{generator_forward.13} parent=27 // pred_check_branch
        %1924 = sbr.rel (%p1922) target = $region40
      $region39: #{generator_forward.13} parent=27 // pred_region
        %s1925 = smul.u32 16, %s23
      $region40: #{generator_forward.13} parent=27 // pred_fallthru
        _
      // Predicated region
      $region41: #{generator_forward.13} parent=27 // pred_check
        %p1926 = pneg %p154
      $region42: #{generator_forward.13} parent=27 // pred_check_branch
        %1928 = sbr.rel (%p1926) target = $region44
      $region43: #{generator_forward.13} parent=27 // pred_region
        _
      $region44: #{generator_forward.13} parent=27 // pred_fallthru
        _
      // Predicated region
      $region45: #{generator_forward.13} parent=27 // pred_check
        %p1929 = pneg %p184
      $region46: #{generator_forward.13} parent=27 // pred_check_branch
        %1931 = sbr.rel (%p1929) target = $region48
      $region47: #{generator_forward.13} parent=27 // pred_region
        _
      $region48: #{generator_forward.13} parent=27 // pred_fallthru
        _
    $region28: #{generator_forward.13} parent=5 // pred_fallthru
      _
    %p1932 = scmp.le.s32.totalorder 2, %s11
    // Predicated region
    $region49: #{generator_forward.13} parent=5 // pred_check
      %p1933 = pneg %p1932
    $region50: #{generator_forward.13} parent=5 // pred_check_branch
      %1935 = sbr.rel (%p1933) target = $region52
    $region51: #{generator_forward.13} parent=5 // pred_region
      %s1936 = ssub.s32 %s11, 2
      // Predicated region
      $region53: #{generator_forward.13} parent=51 // pred_check
        %p1937 = pneg %p130
      $region54: #{generator_forward.13} parent=51 // pred_check_branch
        %1939 = sbr.rel (%p1937) target = $region56
      $region55: #{generator_forward.13} parent=51 // pred_region
        %s1940 = smul.u32 16, %s27
        %p1941 = scmp.lt.s32.totalorder %s26, 3
        %s1942 = scalar_select %p1941, %s26, 3
        %p1943 = scmp.lt.s32.totalorder %s1940, 15
        %s1944 = scalar_select %p1943, %s1940, 15
        %p1945 = scmp.lt.s32.totalorder %s28, 0
        %s1946 = scalar_select %p1945, %s28, 0
        %s1947 = sadd.s32 %s1946, %s1944
        %s1948 = smul.addr %s1942, 16
        %s1949 = sadd.s32 %s1947, %s1948
        %s1950 = smul.addr %s1949, 4
        %s1951 = scalar_lea.vmem %s2, %s1950
      $region56: #{generator_forward.13} parent=51 // pred_fallthru
        _
      // Predicated region
      $region57: #{generator_forward.13} parent=51 // pred_check
        %p1952 = pneg %p160
      $region58: #{generator_forward.13} parent=51 // pred_check_branch
        %1954 = sbr.rel (%p1952) target = $region60
      $region59: #{generator_forward.13} parent=51 // pred_region
        %p1955 = scmp.lt.s32.totalorder %s26, 3
        %s1956 = scalar_select %p1955, %s26, 3
        %p1957 = scmp.lt.s32.totalorder %s27, 0
        %s1958 = scalar_select %p1957, %s27, 0
        %p1959 = scmp.lt.s32.totalorder %s28, 0
        %s1960 = scalar_select %p1959, %s28, 0
        %s1961 = sadd.s32 %s1960, %s1958
        %s1962 = sadd.s32 %s1961, %s1956
        %s1963 = smul.addr %s1962, 8
        %s1964 = scalar_lea.vmem %s3, %s1963
      $region60: #{generator_forward.13} parent=51 // pred_fallthru
        _
      // Predicated region
      $region61: #{generator_forward.13} parent=51 // pred_check
        %p1965 = pneg %p190
      $region62: #{generator_forward.13} parent=51 // pred_check_branch
        %1967 = sbr.rel (%p1965) target = $region64
      $region63: #{generator_forward.13} parent=51 // pred_region
        %p1968 = scmp.lt.s32.totalorder %s26, 3
        %s1969 = scalar_select %p1968, %s26, 3
        %p1970 = scmp.lt.s32.totalorder %s27, 0
        %s1971 = scalar_select %p1970, %s27, 0
        %p1972 = scmp.lt.s32.totalorder %s28, 0
        %s1973 = scalar_select %p1972, %s28, 0
        %s1974 = sadd.s32 %s1973, %s1971
        %s1975 = sadd.s32 %s1974, %s1969
        %s1976 = smul.addr %s1975, 8
        %s1977 = scalar_lea.vmem %s4, %s1976
      $region64: #{generator_forward.13} parent=51 // pred_fallthru
        _
    $region52: #{generator_forward.13} parent=5 // pred_fallthru
      _
  $region6: #{generator_forward.13} parent=0 // loop_footer
    %s15 = sadd.s32 1, %s11
  $region7: #{generator_forward.13} parent=0 // loop_footer_branch
    %10 = sbr.rel target = $region3
  $region8: #{generator_forward.13} parent=0 // loop_exit
    _

// kernel: tile.13
$region0: #{tile.13}
  #allocation0 [shape = 's32[1]{0}', space=sflag, size = 0x4, scoped, tag = 'scoped memory for tile.13']
  %s0 = inlined_call_operand.vmem [shape: f32[64], index: 0, kind: input, shape index: {}]
  %s1 = inlined_call_operand.vmem [shape: f32[2,64], index: 1, kind: output, shape index: {}]
  // Predicated region
  $region2: #{tile.13} parent=0 // pred_check
    _
  $region3: #{tile.13} parent=0 // pred_check_branch
    %3 = sbr.rel (0) target = $region5
  $region4: #{tile.13} parent=0 // pred_region
    _
  $region5: #{tile.13} parent=0 // pred_fallthru
    _
  %v4 = vld [vmem:[%s0] ss:$0 sm:$0xff]
  %5 = vst [vmem:[%s1] sm:$0x3] %v4

// kernel: tile.18
$region0: #{tile.18}
  %s0 = inlined_call_operand.vmem [shape: f32[2,64], index: 0, kind: input, shape index: {}]
  %s1 = inlined_call_operand.vmem [shape: f32[1,128], index: 1, kind: output, shape index: {}]
  $region1: #{tile.18} parent=0
    #allocation0 [shape = 'u8[4096]{0}', space=vmem, size = 0x1000, scoped, tag = 'scoped mem for output reshape']
    #allocation1 [shape = 'u8[4096]{0}', space=vmem, size = 0x1000, scoped, tag = 'scoped mem for input reshape']
    %s3 = sshll.u32 1, 2
    %s4 = ssub.s32 %s3, 1
    %v5 = vld [vmem:[%s0] sm:%s4]
    %6 = vst [vmem:[#allocation1] sm:%s4] %v5
    %v7 = vld [vmem:[#allocation1] sm:$0x1]
    %vm8 = vcmask 523264
    %9 = vst.msk [vmem:[#allocation0] sm:$0x1] %vm8, %v7
    %s10 = scalar_lea.vmem [#allocation1], 1
    %v11 = vld [vmem:[%s10] sm:$0x1]
    %12 = vrot.lane.b32.xlu0 %v11, 64
    %v13 = vpop.permute.xlu0 %12
    %vm14 = vcmask 1048064
    %15 = vst.msk [vmem:[#allocation0] sm:$0x1] %vm14, %v13
    %s17 = sshll.u32 1, 1
    %s18 = ssub.s32 %s17, 1
    %v20 = vld [vmem:[#allocation0] sm:%s18]
    %s21 = sshll.u32 1, 1
    %s22 = ssub.s32 %s21, 1
    %23 = vst [vmem:[%s1] sm:%s22] %v20

// kernel: generator_forward.15
$region0: #{generator_forward.15}
  #allocation0 [shape = 'u32[]', space=smem, size = 0x4, offset = 0x4, fixed_abs, tag = 'smem constant byte address 0x4 - core index']
  #allocation1 [shape = 'u32[144,128]{1,0:T(1,128)}', space=vmem, size = 0x12000, scoped, tag = 'internal scratch']
  #allocation2 [shape = 'f32[256,64]{1,0:T(8,128)}', space=vmem, size = 0x20000, scoped, tag = 'scratch operand']
  %s0 = inlined_call_operand.vmem [shape: bf16[4,512,512], index: 0, kind: input, shape index: {}]
  %s1 = inlined_call_operand.vmem [shape: bf16[4,512,64], index: 1, kind: input, shape index: {}]
  %s2 = inlined_call_operand.vmem [shape: bf16[4,512,64], index: 2, kind: output, shape index: {0}]
  %s3 = inlined_call_operand.vmem [shape: f32[4,16,64], index: 3, kind: output, shape index: {1}]
  %s4 = inlined_call_operand.vmem [shape: f32[4,16,64], index: 4, kind: output, shape index: {2}]
  %5 = xla_tuple %s2, %s3, %s4
  %s6 = sld [smem:[#allocation0]]
  $region65: #{generator_forward.15} parent=0
    _
  %s8 = ssub.s32 1, %s6
  %s9 = scalar_select 0, %s8, %s6
  loop: start=0, step=1, limit=10
  $region2: #{generator_forward.15} parent=0 // loop_pre_header
    _
  $region3: #{generator_forward.15} parent=0 // loop_header
    %s11 = sphi 0, %s15
    %p12 = scmp.ge.s32.totalorder %s11, 10
    %s18 = sphi 0, %s44
    %s19 = sphi 0, %s40
    %s20 = sphi 0, %s36
    %s21 = sphi 0, %s32
    %s22 = sphi 0, %s18
    %s23 = sphi 0, %s19
    %s24 = sphi 0, %s20
    %s25 = sphi 0, %s21
    %s26 = sphi 0, %s22
    %s27 = sphi 0, %s23
    %s28 = sphi 0, %s24
    %s29 = sphi 0, %s25
    %s51 = sphi 0, %s53
    %s54 = sphi 0, %s51
    %s55 = sphi 0, %s54
    %s71 = sphi 0, %s55
    %s81 = sphi 0, %s83
    %s84 = sphi 0, %s81
    %s85 = sphi 0, %s84
    %s101 = sphi 0, %s85
    %s111 = sphi 0, %s113
    %s114 = sphi 0, %s111
    %s115 = sphi 0, %s114
    %s131 = sphi 0, %s115
    %s141 = sphi 0, %s143
    %s144 = sphi 0, %s141
    %s145 = sphi 0, %s144
    %s161 = sphi 0, %s145
    %s171 = sphi 0, %s173
    %s174 = sphi 0, %s171
    %s175 = sphi 0, %s174
    %s191 = sphi 0, %s175
  $region4: #{generator_forward.15} parent=0 // loop_header_branch
    %14 = sbr.rel (%p12) target = $region8
  $region5: #{generator_forward.15} parent=0 // loop_body
    %s16 = ssub.s32 %s11, 1
    %s17 = ssub.s32 %s11, 2
    %s30 = sadd.s32 1, %s21
    %p31 = scmp.ge.s32.totalorder %s30, 1
    %s32 = scalar_select %p31, 0, %s30
    %s33 = sadd.s32 1, %s20
    %s34 = scalar_select %p31, %s33, %s20
    %p35 = scmp.ge.s32.totalorder %s34, 1
    %s36 = scalar_select %p35, 0, %s34
    %s37 = sadd.s32 1, %s19
    %s38 = scalar_select %p35, %s37, %s19
    %p39 = scmp.ge.s32.totalorder %s38, 2
    %s40 = scalar_select %p39, 0, %s38
    %s41 = sadd.s32 1, %s18
    %s42 = scalar_select %p39, %s41, %s18
    %p43 = scmp.ge.s32.totalorder %s42, 4
    %s44 = scalar_select %p43, 0, %s42
    %s45 = ssub.s32 %s18, %s44
    %s46 = ssub.s32 %s19, %s40
    %s47 = sor.u32 %s45, %s46
    %s48 = ssub.s32 %s21, %s32
    %s49 = sor.u32 %s47, %s48
    %p50 = scmp.eq.s32.totalorder %s49, 0
    %s52 = sadd.s32 %s51, 1
    %s53 = scalar_select %p50, %s51, %s52
    %p56 = pneg %p50
    %p57 = scmp.eq.s32.totalorder %s11, 7
    %p58 = por %p56, %p57
    %p59 = scmp.ne.s32.totalorder %s51, %s54
    %p60 = scmp.eq.s32.totalorder %s11, 0
    %p61 = por %p59, %p60
    %p62 = scmp.ne.s32.totalorder %s51, %s54
    %p63 = scmp.eq.s32.totalorder %s16, 7
    %p64 = por %p62, %p63
    %p65 = scmp.ne.s32.totalorder %s54, %s55
    %p66 = scmp.eq.s32.totalorder %s16, 0
    %p67 = por %p65, %p66
    %p68 = scmp.ne.s32.totalorder %s54, %s55
    %p69 = scmp.eq.s32.totalorder %s17, 7
    %p70 = por %p68, %p69
    %p72 = scmp.ne.s32.totalorder %s55, %s71
    %p73 = scmp.eq.s32.totalorder %s17, 0
    %p74 = por %p72, %p73
    %s75 = ssub.s32 %s18, %s44
    %s76 = ssub.s32 %s21, %s32
    %s77 = sor.u32 %s75, %s76
    %s78 = ssub.s32 %s20, %s36
    %s79 = sor.u32 %s77, %s78
    %p80 = scmp.eq.s32.totalorder %s79, 0
    %s82 = sadd.s32 %s81, 1
    %s83 = scalar_select %p80, %s81, %s82
    %p86 = pneg %p80
    %p87 = scmp.eq.s32.totalorder %s11, 7
    %p88 = por %p86, %p87
    %p89 = scmp.ne.s32.totalorder %s81, %s84
    %p90 = scmp.eq.s32.totalorder %s11, 0
    %p91 = por %p89, %p90
    %p92 = scmp.ne.s32.totalorder %s81, %s84
    %p93 = scmp.eq.s32.totalorder %s16, 7
    %p94 = por %p92, %p93
    %p95 = scmp.ne.s32.totalorder %s84, %s85
    %p96 = scmp.eq.s32.totalorder %s16, 0
    %p97 = por %p95, %p96
    %p98 = scmp.ne.s32.totalorder %s84, %s85
    %p99 = scmp.eq.s32.totalorder %s17, 7
    %p100 = por %p98, %p99
    %p102 = scmp.ne.s32.totalorder %s85, %s101
    %p103 = scmp.eq.s32.totalorder %s17, 0
    %p104 = por %p102, %p103
    %s105 = ssub.s32 %s18, %s44
    %s106 = ssub.s32 %s19, %s40
    %s107 = sor.u32 %s105, %s106
    %s108 = ssub.s32 %s20, %s36
    %s109 = sor.u32 %s107, %s108
    %p110 = scmp.eq.s32.totalorder %s109, 0
    %s112 = sadd.s32 %s111, 1
    %s113 = scalar_select %p110, %s111, %s112
    %p116 = pneg %p110
    %p117 = scmp.eq.s32.totalorder %s11, 7
    %p118 = por %p116, %p117
    %p119 = scmp.ne.s32.totalorder %s111, %s114
    %p120 = scmp.eq.s32.totalorder %s11, 0
    %p121 = por %p119, %p120
    %p122 = scmp.ne.s32.totalorder %s111, %s114
    %p123 = scmp.eq.s32.totalorder %s16, 7
    %p124 = por %p122, %p123
    %p125 = scmp.ne.s32.totalorder %s114, %s115
    %p126 = scmp.eq.s32.totalorder %s16, 0
    %p127 = por %p125, %p126
    %p128 = scmp.ne.s32.totalorder %s114, %s115
    %p129 = scmp.eq.s32.totalorder %s17, 7
    %p130 = por %p128, %p129
    %p132 = scmp.ne.s32.totalorder %s115, %s131
    %p133 = scmp.eq.s32.totalorder %s17, 0
    %p134 = por %p132, %p133
    %s135 = ssub.s32 %s18, %s44
    %s136 = ssub.s32 %s19, %s40
    %s137 = sor.u32 %s135, %s136
    %s138 = ssub.s32 %s20, %s36
    %s139 = sor.u32 %s137, %s138
    %p140 = scmp.eq.s32.totalorder %s139, 0
    %s142 = sadd.s32 %s141, 1
    %s143 = scalar_select %p140, %s141, %s142
    %p146 = pneg %p140
    %p147 = scmp.eq.s32.totalorder %s11, 7
    %p148 = por %p146, %p147
    %p149 = scmp.ne.s32.totalorder %s141, %s144
    %p150 = scmp.eq.s32.totalorder %s11, 0
    %p151 = por %p149, %p150
    %p152 = scmp.ne.s32.totalorder %s141, %s144
    %p153 = scmp.eq.s32.totalorder %s16, 7
    %p154 = por %p152, %p153
    %p155 = scmp.ne.s32.totalorder %s144, %s145
    %p156 = scmp.eq.s32.totalorder %s16, 0
    %p157 = por %p155, %p156
    %p158 = scmp.ne.s32.totalorder %s144, %s145
    %p159 = scmp.eq.s32.totalorder %s17, 7
    %p160 = por %p158, %p159
    %p162 = scmp.ne.s32.totalorder %s145, %s161
    %p163 = scmp.eq.s32.totalorder %s17, 0
    %p164 = por %p162, %p163
    %s165 = ssub.s32 %s18, %s44
    %s166 = ssub.s32 %s19, %s40
    %s167 = sor.u32 %s165, %s166
    %s168 = ssub.s32 %s20, %s36
    %s169 = sor.u32 %s167, %s168
    %p170 = scmp.eq.s32.totalorder %s169, 0
    %s172 = sadd.s32 %s171, 1
    %s173 = scalar_select %p170, %s171, %s172
    %p176 = pneg %p170
    %p177 = scmp.eq.s32.totalorder %s11, 7
    %p178 = por %p176, %p177
    %p179 = scmp.ne.s32.totalorder %s171, %s174
    %p180 = scmp.eq.s32.totalorder %s11, 0
    %p181 = por %p179, %p180
    %p182 = scmp.ne.s32.totalorder %s171, %s174
    %p183 = scmp.eq.s32.totalorder %s16, 7
    %p184 = por %p182, %p183
    %p185 = scmp.ne.s32.totalorder %s174, %s175
    %p186 = scmp.eq.s32.totalorder %s16, 0
    %p187 = por %p185, %p186
    %p188 = scmp.ne.s32.totalorder %s174, %s175
    %p189 = scmp.eq.s32.totalorder %s17, 7
    %p190 = por %p188, %p189
    %p192 = scmp.ne.s32.totalorder %s175, %s191
    %p193 = scmp.eq.s32.totalorder %s17, 0
    %p194 = por %p192, %p193
    %p195 = scmp.le.s32.totalorder 1, %s11
    %p196 = scmp.lt.s32.totalorder %s11, 9
    %p197 = pnand %p195, %p196
    %p198 = pneg %p197
    // Predicated region
    $region9: #{generator_forward.15} parent=5 // pred_check
      _
    $region10: #{generator_forward.15} parent=5 // pred_check_branch
      %200 = sbr.rel (%p197) target = $region12
    $region11: #{generator_forward.15} parent=5 // pred_region
      %s201 = ssub.s32 %s11, 1
    $region12: #{generator_forward.15} parent=5 // pred_fallthru
      _
    %p202 = scmp.lt.s32.totalorder %s11, 8
    // Predicated region
    $region13: #{generator_forward.15} parent=5 // pred_check
      %p203 = pneg %p202
    $region14: #{generator_forward.15} parent=5 // pred_check_branch
      %205 = sbr.rel (%p203) target = $region16
    $region15: #{generator_forward.15} parent=5 // pred_region
      // Predicated region
      $region17: #{generator_forward.15} parent=15 // pred_check
        %p206 = pneg %p61
      $region18: #{generator_forward.15} parent=15 // pred_check_branch
        %208 = sbr.rel (%p206) target = $region20
      $region19: #{generator_forward.15} parent=15 // pred_region
        %s209 = smul.u32 32, %s19
        %s210 = smul.u32 4, %s21
        %p211 = scmp.lt.s32.totalorder %s18, 3
        %s212 = scalar_select %p211, %s18, 3
        %p213 = scmp.lt.s32.totalorder %s209, 63
        %s214 = scalar_select %p213, %s209, 63
        %p215 = scmp.lt.s32.totalorder %s210, 3
        %s216 = scalar_select %p215, %s210, 3
        %s217 = smul.addr %s214, 4
        %s218 = sadd.s32 %s216, %s217
        %s219 = smul.addr %s212, 256
        %s220 = sadd.s32 %s218, %s219
        %s221 = smul.addr %s220, 4
        %s222 = scalar_lea.vmem %s0, %s221
        %s223 = smul.u32 32, %s19
        %s224 = smul.u32 4, %s21
      $region20: #{generator_forward.15} parent=15 // pred_fallthru
        _
      // Predicated region
      $region21: #{generator_forward.15} parent=15 // pred_check
        %p225 = pneg %p91
      $region22: #{generator_forward.15} parent=15 // pred_check_branch
        %227 = sbr.rel (%p225) target = $region24
      $region23: #{generator_forward.15} parent=15 // pred_region
        %s228 = smul.u32 64, %s21
        %p229 = scmp.lt.s32.totalorder %s18, 3
        %s230 = scalar_select %p229, %s18, 3
        %p231 = scmp.lt.s32.totalorder %s228, 63
        %s232 = scalar_select %p231, %s228, 63
        %p233 = scmp.lt.s32.totalorder %s20, 0
        %s234 = scalar_select %p233, %s20, 0
        %s235 = sadd.s32 %s234, %s232
        %s236 = smul.addr %s230, 64
        %s237 = sadd.s32 %s235, %s236
        %s238 = smul.addr %s237, 4
        %s239 = scalar_lea.vmem %s1, %s238
        %s240 = smul.u32 64, %s21
      $region24: #{generator_forward.15} parent=15 // pred_fallthru
        _
    $region16: #{generator_forward.15} parent=5 // pred_fallthru
      _
    %p241 = scmp.le.s32.totalorder 1, %s11
    %p242 = scmp.lt.s32.totalorder %s11, 9
    %p243 = pnand %p241, %p242
    %p244 = pneg %p243
    // Predicated region
    $region25: #{generator_forward.15} parent=5 // pred_check
      _
    $region26: #{generator_forward.15} parent=5 // pred_check_branch
      %246 = sbr.rel (%p243) target = $region28
    $region27: #{generator_forward.15} parent=5 // pred_region
      %s247 = ssub.s32 %s11, 1
      %s248 = smul.u32 32, %s23
      %s249 = smul.u32 4, %s25
      %p250 = scmp.lt.s32.totalorder %s22, 3
      %s251 = scalar_select %p250, %s22, 3
      %p252 = scmp.lt.s32.totalorder %s248, 63
      %s253 = scalar_select %p252, %s248, 63
      %p254 = scmp.lt.s32.totalorder %s249, 3
      %s255 = scalar_select %p254, %s249, 3
      %s256 = smul.addr %s253, 4
      %s257 = sadd.s32 %s255, %s256
      %s258 = smul.addr %s251, 256
      %s259 = sadd.s32 %s257, %s258
      %s260 = smul.addr %s259, 4
      %s261 = scalar_lea.vmem %s0, %s260
      %p262 = pneg %p67
      %p263 = pneg %p64
      %s264 = smul.u32 64, %s25
      %p265 = scmp.lt.s32.totalorder %s22, 3
      %s266 = scalar_select %p265, %s22, 3
      %p267 = scmp.lt.s32.totalorder %s264, 63
      %s268 = scalar_select %p267, %s264, 63
      %p269 = scmp.lt.s32.totalorder %s24, 0
      %s270 = scalar_select %p269, %s24, 0
      %s271 = sadd.s32 %s270, %s268
      %s272 = smul.addr %s266, 64
      %s273 = sadd.s32 %s271, %s272
      %s274 = smul.addr %s273, 4
      %s275 = scalar_lea.vmem %s1, %s274
      %p276 = pneg %p97
      %p277 = pneg %p94
      %p278 = pneg %p127
      %p279 = pneg %p124
      %s280 = smul.u32 32, %s23
      %p281 = scmp.lt.s32.totalorder %s22, 3
      %s282 = scalar_select %p281, %s22, 3
      %p283 = scmp.lt.s32.totalorder %s280, 63
      %s284 = scalar_select %p283, %s280, 63
      %p285 = scmp.lt.s32.totalorder %s24, 0
      %s286 = scalar_select %p285, %s24, 0
      %s287 = sadd.s32 %s286, %s284
      %s288 = smul.addr %s282, 64
      %s289 = sadd.s32 %s287, %s288
      %s290 = smul.addr %s289, 4
      %s291 = scalar_lea.vmem %s2, %s290
      %p292 = pneg %p157
      %p293 = pneg %p154
      %p294 = scmp.lt.s32.totalorder %s22, 3
      %s295 = scalar_select %p294, %s22, 3
      %p296 = scmp.lt.s32.totalorder %s23, 1
      %s297 = scalar_select %p296, %s23, 1
      %p298 = scmp.lt.s32.totalorder %s24, 0
      %s299 = scalar_select %p298, %s24, 0
      %s300 = sadd.s32 %s299, %s297
      %s301 = smul.addr %s295, 2
      %s302 = sadd.s32 %s300, %s301
      %s303 = smul.addr %s302, 8
      %s304 = scalar_lea.vmem %s3, %s303
      %p305 = pneg %p187
      %p306 = pneg %p184
      %p307 = scmp.lt.s32.totalorder %s22, 3
      %s308 = scalar_select %p307, %s22, 3
      %p309 = scmp.lt.s32.totalorder %s23, 1
      %s310 = scalar_select %p309, %s23, 1
      %p311 = scmp.lt.s32.totalorder %s24, 0
      %s312 = scalar_select %p311, %s24, 0
      %s313 = sadd.s32 %s312, %s310
      %s314 = smul.addr %s308, 2
      %s315 = sadd.s32 %s313, %s314
      %s316 = smul.addr %s315, 8
      %s317 = scalar_lea.vmem %s4, %s316
      %s318 = smul.u32 32, %s23
      %s319 = smul.u32 4, %s25
      %p320 = scmp.lt.s32.totalorder %s22, 3
      %s321 = scalar_select %p320, %s22, 3
      %p322 = scmp.lt.s32.totalorder %s318, 63
      %s323 = scalar_select %p322, %s318, 63
      %p324 = scmp.lt.s32.totalorder %s319, 3
      %s325 = scalar_select %p324, %s319, 3
      %s326 = smul.addr %s323, 4
      %s327 = sadd.s32 %s325, %s326
      %s328 = smul.addr %s321, 256
      %s329 = sadd.s32 %s327, %s328
      %s330 = smul.addr %s329, 4
      %s331 = scalar_lea.vmem %s0, %s330
      %s332 = smul.u32 32, %s23
      %s333 = smul.u32 4, %s25
      %s334 = smul.u32 64, %s25
      %p335 = scmp.lt.s32.totalorder %s22, 3
      %s336 = scalar_select %p335, %s22, 3
      %p337 = scmp.lt.s32.totalorder %s334, 63
      %s338 = scalar_select %p337, %s334, 63
      %p339 = scmp.lt.s32.totalorder %s24, 0
      %s340 = scalar_select %p339, %s24, 0
      %s341 = sadd.s32 %s340, %s338
      %s342 = smul.addr %s336, 64
      %s343 = sadd.s32 %s341, %s342
      %s344 = smul.addr %s343, 4
      %s345 = scalar_lea.vmem %s1, %s344
      %s346 = smul.u32 64, %s25
      %s347 = smul.u32 32, %s23
      %p348 = scmp.lt.s32.totalorder %s22, 3
      %s349 = scalar_select %p348, %s22, 3
      %p350 = scmp.lt.s32.totalorder %s347, 63
      %s351 = scalar_select %p350, %s347, 63
      %p352 = scmp.lt.s32.totalorder %s24, 0
      %s353 = scalar_select %p352, %s24, 0
      %s354 = sadd.s32 %s353, %s351
      %s355 = smul.addr %s349, 64
      %s356 = sadd.s32 %s354, %s355
      %s357 = smul.addr %s356, 4
      %s358 = scalar_lea.vmem %s2, %s357
      %s359 = smul.u32 32, %s23
      %p360 = scmp.lt.s32.totalorder %s22, 3
      %s361 = scalar_select %p360, %s22, 3
      %p362 = scmp.lt.s32.totalorder %s23, 1
      %s363 = scalar_select %p362, %s23, 1
      %p364 = scmp.lt.s32.totalorder %s24, 0
      %s365 = scalar_select %p364, %s24, 0
      %s366 = sadd.s32 %s365, %s363
      %s367 = smul.addr %s361, 2
      %s368 = sadd.s32 %s366, %s367
      %s369 = smul.addr %s368, 8
      %s370 = scalar_lea.vmem %s3, %s369
      %p371 = scmp.lt.s32.totalorder %s22, 3
      %s372 = scalar_select %p371, %s22, 3
      %p373 = scmp.lt.s32.totalorder %s23, 1
      %s374 = scalar_select %p373, %s23, 1
      %p375 = scmp.lt.s32.totalorder %s24, 0
      %s376 = scalar_select %p375, %s24, 0
      %s377 = sadd.s32 %s376, %s374
      %s378 = smul.addr %s372, 2
      %s379 = sadd.s32 %s377, %s378
      %s380 = smul.addr %s379, 8
      %s381 = scalar_lea.vmem %s4, %s380
      %p383 = scmp.eq.s32.totalorder %s25, 0
      // Predicated region
      $region29: #{generator_forward.15} parent=27 // pred_check
        %p384 = pneg %p383
      $region30: #{generator_forward.15} parent=27 // pred_check_branch
        %386 = sbr.rel (%p384) target = $region32
      $region31: #{generator_forward.15} parent=27 // pred_region
        %vm387 = vcmask 523264
        %388 = vst.msk [vmem:[#allocation2] sm:$0xff] %vm387, 0.0
        %389 = vst.msk [vmem:[#allocation2 + $0x8] sm:$0xff] %vm387, 0.0
        %390 = vst.msk [vmem:[#allocation2 + $0x10] sm:$0xff] %vm387, 0.0
        %391 = vst.msk [vmem:[#allocation2 + $0x18] sm:$0xff] %vm387, 0.0
        %392 = vst.msk [vmem:[#allocation2 + $0x20] sm:$0xff] %vm387, 0.0
        %393 = vst.msk [vmem:[#allocation2 + $0x28] sm:$0xff] %vm387, 0.0
        %394 = vst.msk [vmem:[#allocation2 + $0x30] sm:$0xff] %vm387, 0.0
        %395 = vst.msk [vmem:[#allocation2 + $0x38] sm:$0xff] %vm387, 0.0
        %396 = vst.msk [vmem:[#allocation2 + $0x40] sm:$0xff] %vm387, 0.0
        %397 = vst.msk [vmem:[#allocation2 + $0x48] sm:$0xff] %vm387, 0.0
        %398 = vst.msk [vmem:[#allocation2 + $0x50] sm:$0xff] %vm387, 0.0
        %399 = vst.msk [vmem:[#allocation2 + $0x58] sm:$0xff] %vm387, 0.0
        %400 = vst.msk [vmem:[#allocation2 + $0x60] sm:$0xff] %vm387, 0.0
        %401 = vst.msk [vmem:[#allocation2 + $0x68] sm:$0xff] %vm387, 0.0
        %402 = vst.msk [vmem:[#allocation2 + $0x70] sm:$0xff] %vm387, 0.0
        %403 = vst.msk [vmem:[#allocation2 + $0x78] sm:$0xff] %vm387, 0.0
        %404 = vst.msk [vmem:[#allocation2 + $0x80] sm:$0xff] %vm387, 0.0
        %405 = vst.msk [vmem:[#allocation2 + $0x88] sm:$0xff] %vm387, 0.0
        %406 = vst.msk [vmem:[#allocation2 + $0x90] sm:$0xff] %vm387, 0.0
        %407 = vst.msk [vmem:[#allocation2 + $0x98] sm:$0xff] %vm387, 0.0
        %408 = vst.msk [vmem:[#allocation2 + $0xa0] sm:$0xff] %vm387, 0.0
        %409 = vst.msk [vmem:[#allocation2 + $0xa8] sm:$0xff] %vm387, 0.0
        %410 = vst.msk [vmem:[#allocation2 + $0xb0] sm:$0xff] %vm387, 0.0
        %411 = vst.msk [vmem:[#allocation2 + $0xb8] sm:$0xff] %vm387, 0.0
        %412 = vst.msk [vmem:[#allocation2 + $0xc0] sm:$0xff] %vm387, 0.0
        %413 = vst.msk [vmem:[#allocation2 + $0xc8] sm:$0xff] %vm387, 0.0
        %414 = vst.msk [vmem:[#allocation2 + $0xd0] sm:$0xff] %vm387, 0.0
        %415 = vst.msk [vmem:[#allocation2 + $0xd8] sm:$0xff] %vm387, 0.0
        %416 = vst.msk [vmem:[#allocation2 + $0xe0] sm:$0xff] %vm387, 0.0
        %417 = vst.msk [vmem:[#allocation2 + $0xe8] sm:$0xff] %vm387, 0.0
        %418 = vst.msk [vmem:[#allocation2 + $0xf0] sm:$0xff] %vm387, 0.0
        %419 = vst.msk [vmem:[#allocation2 + $0xf8] sm:$0xff] %vm387, 0.0
      $region32: #{generator_forward.15} parent=27 // pred_fallthru
        _
      %v420 = vld [vmem:[#allocation2] sm:$0xff]
      %v421 = vld [vmem:[#allocation2 + $0x8] sm:$0xff]
      %v422 = vld [vmem:[#allocation2 + $0x10] sm:$0xff]
      %v423 = vld [vmem:[#allocation2 + $0x18] sm:$0xff]
      %v424 = vld [vmem:[#allocation2 + $0x20] sm:$0xff]
      %v425 = vld [vmem:[#allocation2 + $0x28] sm:$0xff]
      %v426 = vld [vmem:[#allocation2 + $0x30] sm:$0xff]
      %v427 = vld [vmem:[#allocation2 + $0x38] sm:$0xff]
      %v428 = vld [vmem:[#allocation2 + $0x40] sm:$0xff]
      %v429 = vld [vmem:[#allocation2 + $0x48] sm:$0xff]
      %v430 = vld [vmem:[#allocation2 + $0x50] sm:$0xff]
      %v431 = vld [vmem:[#allocation2 + $0x58] sm:$0xff]
      %v432 = vld [vmem:[#allocation2 + $0x60] sm:$0xff]
      %v433 = vld [vmem:[#allocation2 + $0x68] sm:$0xff]
      %v434 = vld [vmem:[#allocation2 + $0x70] sm:$0xff]
      %v435 = vld [vmem:[#allocation2 + $0x78] sm:$0xff]
      %v436 = vld [vmem:[#allocation2 + $0x80] sm:$0xff]
      %v437 = vld [vmem:[#allocation2 + $0x88] sm:$0xff]
      %v438 = vld [vmem:[#allocation2 + $0x90] sm:$0xff]
      %v439 = vld [vmem:[#allocation2 + $0x98] sm:$0xff]
      %v440 = vld [vmem:[#allocation2 + $0xa0] sm:$0xff]
      %v441 = vld [vmem:[#allocation2 + $0xa8] sm:$0xff]
      %v442 = vld [vmem:[#allocation2 + $0xb0] sm:$0xff]
      %v443 = vld [vmem:[#allocation2 + $0xb8] sm:$0xff]
      %v444 = vld [vmem:[#allocation2 + $0xc0] sm:$0xff]
      %v445 = vld [vmem:[#allocation2 + $0xc8] sm:$0xff]
      %v446 = vld [vmem:[#allocation2 + $0xd0] sm:$0xff]
      %v447 = vld [vmem:[#allocation2 + $0xd8] sm:$0xff]
      %v448 = vld [vmem:[#allocation2 + $0xe0] sm:$0xff]
      %v449 = vld [vmem:[#allocation2 + $0xe8] sm:$0xff]
      %v450 = vld [vmem:[#allocation2 + $0xf0] sm:$0xff]
      %v451 = vld [vmem:[#allocation2 + $0xf8] sm:$0xff]
      %v452 = vld [vmem:[%s331] sm:$0xff]
      %v453 = vld [vmem:[%s331 + $0x8] sm:$0xff]
      %v454 = vld [vmem:[%s331 + $0x10] sm:$0xff]
      %v455 = vld [vmem:[%s331 + $0x18] sm:$0xff]
      %v456 = vld [vmem:[%s331 + $0x20] sm:$0xff]
      %v457 = vld [vmem:[%s331 + $0x28] sm:$0xff]
      %v458 = vld [vmem:[%s331 + $0x30] sm:$0xff]
      %v459 = vld [vmem:[%s331 + $0x38] sm:$0xff]
      %v460 = vld [vmem:[%s331 + $0x40] sm:$0xff]
      %v461 = vld [vmem:[%s331 + $0x48] sm:$0xff]
      %v462 = vld [vmem:[%s331 + $0x50] sm:$0xff]
      %v463 = vld [vmem:[%s331 + $0x58] sm:$0xff]
      %v464 = vld [vmem:[%s331 + $0x60] sm:$0xff]
      %v465 = vld [vmem:[%s331 + $0x68] sm:$0xff]
      %v466 = vld [vmem:[%s331 + $0x70] sm:$0xff]
      %v467 = vld [vmem:[%s331 + $0x78] sm:$0xff]
      %v468 = vld [vmem:[%s331 + $0x80] sm:$0xff]
      %v469 = vld [vmem:[%s331 + $0x88] sm:$0xff]
      %v470 = vld [vmem:[%s331 + $0x90] sm:$0xff]
      %v471 = vld [vmem:[%s331 + $0x98] sm:$0xff]
      %v472 = vld [vmem:[%s331 + $0xa0] sm:$0xff]
      %v473 = vld [vmem:[%s331 + $0xa8] sm:$0xff]
      %v474 = vld [vmem:[%s331 + $0xb0] sm:$0xff]
      %v475 = vld [vmem:[%s331 + $0xb8] sm:$0xff]
      %v476 = vld [vmem:[%s331 + $0xc0] sm:$0xff]
      %v477 = vld [vmem:[%s331 + $0xc8] sm:$0xff]
      %v478 = vld [vmem:[%s331 + $0xd0] sm:$0xff]
      %v479 = vld [vmem:[%s331 + $0xd8] sm:$0xff]
      %v480 = vld [vmem:[%s331 + $0xe0] sm:$0xff]
      %v481 = vld [vmem:[%s331 + $0xe8] sm:$0xff]
      %v482 = vld [vmem:[%s331 + $0xf0] sm:$0xff]
      %v483 = vld [vmem:[%s331 + $0xf8] sm:$0xff]
      %v484 = vld [vmem:[%s331 + $0x100] sm:$0xff]
      %v485 = vld [vmem:[%s331 + $0x108] sm:$0xff]
      %v486 = vld [vmem:[%s331 + $0x110] sm:$0xff]
      %v487 = vld [vmem:[%s331 + $0x118] sm:$0xff]
      %v488 = vld [vmem:[%s331 + $0x120] sm:$0xff]
      %v489 = vld [vmem:[%s331 + $0x128] sm:$0xff]
      %v490 = vld [vmem:[%s331 + $0x130] sm:$0xff]
      %v491 = vld [vmem:[%s331 + $0x138] sm:$0xff]
      %v492 = vld [vmem:[%s331 + $0x140] sm:$0xff]
      %v493 = vld [vmem:[%s331 + $0x148] sm:$0xff]
      %v494 = vld [vmem:[%s331 + $0x150] sm:$0xff]
      %v495 = vld [vmem:[%s331 + $0x158] sm:$0xff]
      %v496 = vld [vmem:[%s331 + $0x160] sm:$0xff]
      %v497 = vld [vmem:[%s331 + $0x168] sm:$0xff]
      %v498 = vld [vmem:[%s331 + $0x170] sm:$0xff]
      %v499 = vld [vmem:[%s331 + $0x178] sm:$0xff]
      %v500 = vld [vmem:[%s331 + $0x180] sm:$0xff]
      %v501 = vld [vmem:[%s331 + $0x188] sm:$0xff]
      %v502 = vld [vmem:[%s331 + $0x190] sm:$0xff]
      %v503 = vld [vmem:[%s331 + $0x198] sm:$0xff]
      %v504 = vld [vmem:[%s331 + $0x1a0] sm:$0xff]
      %v505 = vld [vmem:[%s331 + $0x1a8] sm:$0xff]
      %v506 = vld [vmem:[%s331 + $0x1b0] sm:$0xff]
      %v507 = vld [vmem:[%s331 + $0x1b8] sm:$0xff]
      %v508 = vld [vmem:[%s331 + $0x1c0] sm:$0xff]
      %v509 = vld [vmem:[%s331 + $0x1c8] sm:$0xff]
      %v510 = vld [vmem:[%s331 + $0x1d0] sm:$0xff]
      %v511 = vld [vmem:[%s331 + $0x1d8] sm:$0xff]
      %v512 = vld [vmem:[%s331 + $0x1e0] sm:$0xff]
      %v513 = vld [vmem:[%s331 + $0x1e8] sm:$0xff]
      %v514 = vld [vmem:[%s331 + $0x1f0] sm:$0xff]
      %v515 = vld [vmem:[%s331 + $0x1f8] sm:$0xff]
      %v516 = vld [vmem:[%s345] sm:$0xf]
      %v517 = vld [vmem:[%s345 + $0x4] sm:$0xf]
      %v518 = vld [vmem:[%s345 + $0x8] sm:$0xf]
      %v519 = vld [vmem:[%s345 + $0xc] sm:$0xf]
      %v520 = vld [vmem:[%s345 + $0x10] sm:$0xf]
      %v521 = vld [vmem:[%s345 + $0x14] sm:$0xf]
      %v522 = vld [vmem:[%s345 + $0x18] sm:$0xf]
      %v523 = vld [vmem:[%s345 + $0x1c] sm:$0xf]
      %v524 = vld [vmem:[%s345 + $0x20] sm:$0xf]
      %v525 = vld [vmem:[%s345 + $0x24] sm:$0xf]
      %v526 = vld [vmem:[%s345 + $0x28] sm:$0xf]
      %v527 = vld [vmem:[%s345 + $0x2c] sm:$0xf]
      %v528 = vld [vmem:[%s345 + $0x30] sm:$0xf]
      %v529 = vld [vmem:[%s345 + $0x34] sm:$0xf]
      %v530 = vld [vmem:[%s345 + $0x38] sm:$0xf]
      %v531 = vld [vmem:[%s345 + $0x3c] sm:$0xf]
      %v532 = vld [vmem:[%s345 + $0x40] sm:$0xf]
      %v533 = vld [vmem:[%s345 + $0x44] sm:$0xf]
      %v534 = vld [vmem:[%s345 + $0x48] sm:$0xf]
      %v535 = vld [vmem:[%s345 + $0x4c] sm:$0xf]
      %v536 = vld [vmem:[%s345 + $0x50] sm:$0xf]
      %v537 = vld [vmem:[%s345 + $0x54] sm:$0xf]
      %v538 = vld [vmem:[%s345 + $0x58] sm:$0xf]
      %v539 = vld [vmem:[%s345 + $0x5c] sm:$0xf]
      %v540 = vld [vmem:[%s345 + $0x60] sm:$0xf]
      %v541 = vld [vmem:[%s345 + $0x64] sm:$0xf]
      %v542 = vld [vmem:[%s345 + $0x68] sm:$0xf]
      %v543 = vld [vmem:[%s345 + $0x6c] sm:$0xf]
      %v544 = vld [vmem:[%s345 + $0x70] sm:$0xf]
      %v545 = vld [vmem:[%s345 + $0x74] sm:$0xf]
      %v546 = vld [vmem:[%s345 + $0x78] sm:$0xf]
      %v547 = vld [vmem:[%s345 + $0x7c] sm:$0xf]
      %v548 = vld [vmem:[%s345 + $0x80] sm:$0xf]
      %v549 = vld [vmem:[%s345 + $0x84] sm:$0xf]
      %v550 = vld [vmem:[%s345 + $0x88] sm:$0xf]
      %v551 = vld [vmem:[%s345 + $0x8c] sm:$0xf]
      %v552 = vld [vmem:[%s345 + $0x90] sm:$0xf]
      %v553 = vld [vmem:[%s345 + $0x94] sm:$0xf]
      %v554 = vld [vmem:[%s345 + $0x98] sm:$0xf]
      %v555 = vld [vmem:[%s345 + $0x9c] sm:$0xf]
      %v556 = vld [vmem:[%s345 + $0xa0] sm:$0xf]
      %v557 = vld [vmem:[%s345 + $0xa4] sm:$0xf]
      %v558 = vld [vmem:[%s345 + $0xa8] sm:$0xf]
      %v559 = vld [vmem:[%s345 + $0xac] sm:$0xf]
      %v560 = vld [vmem:[%s345 + $0xb0] sm:$0xf]
      %v561 = vld [vmem:[%s345 + $0xb4] sm:$0xf]
      %v562 = vld [vmem:[%s345 + $0xb8] sm:$0xf]
      %v563 = vld [vmem:[%s345 + $0xbc] sm:$0xf]
      %v564 = vld [vmem:[%s345 + $0xc0] sm:$0xf]
      %v565 = vld [vmem:[%s345 + $0xc4] sm:$0xf]
      %v566 = vld [vmem:[%s345 + $0xc8] sm:$0xf]
      %v567 = vld [vmem:[%s345 + $0xcc] sm:$0xf]
      %v568 = vld [vmem:[%s345 + $0xd0] sm:$0xf]
      %v569 = vld [vmem:[%s345 + $0xd4] sm:$0xf]
      %v570 = vld [vmem:[%s345 + $0xd8] sm:$0xf]
      %v571 = vld [vmem:[%s345 + $0xdc] sm:$0xf]
      %v572 = vld [vmem:[%s345 + $0xe0] sm:$0xf]
      %v573 = vld [vmem:[%s345 + $0xe4] sm:$0xf]
      %v574 = vld [vmem:[%s345 + $0xe8] sm:$0xf]
      %v575 = vld [vmem:[%s345 + $0xec] sm:$0xf]
      %v576 = vld [vmem:[%s345 + $0xf0] sm:$0xf]
      %v577 = vld [vmem:[%s345 + $0xf4] sm:$0xf]
      %v578 = vld [vmem:[%s345 + $0xf8] sm:$0xf]
      %v579 = vld [vmem:[%s345 + $0xfc] sm:$0xf]
      %v644 = vunpack.c.l.b16 %v452
      %v645 = vunpack.c.h.b16 %v452
      %v646 = vunpack.c.l.b16 %v453
      %v647 = vunpack.c.h.b16 %v453
      %v648 = vunpack.c.l.b16 %v454
      %v649 = vunpack.c.h.b16 %v454
      %v650 = vunpack.c.l.b16 %v455
      %v651 = vunpack.c.h.b16 %v455
      %v652 = vunpack.c.l.b16 %v456
      %v653 = vunpack.c.h.b16 %v456
      %v654 = vunpack.c.l.b16 %v457
      %v655 = vunpack.c.h.b16 %v457
      %v656 = vunpack.c.l.b16 %v458
      %v657 = vunpack.c.h.b16 %v458
      %v658 = vunpack.c.l.b16 %v459
      %v659 = vunpack.c.h.b16 %v459
      %v660 = vunpack.c.l.b16 %v460
      %v661 = vunpack.c.h.b16 %v460
      %v662 = vunpack.c.l.b16 %v461
      %v663 = vunpack.c.h.b16 %v461
      %v664 = vunpack.c.l.b16 %v462
      %v665 = vunpack.c.h.b16 %v462
      %v666 = vunpack.c.l.b16 %v463
      %v667 = vunpack.c.h.b16 %v463
      %v668 = vunpack.c.l.b16 %v464
      %v669 = vunpack.c.h.b16 %v464
      %v670 = vunpack.c.l.b16 %v465
      %v671 = vunpack.c.h.b16 %v465
      %v672 = vunpack.c.l.b16 %v466
      %v673 = vunpack.c.h.b16 %v466
      %v674 = vunpack.c.l.b16 %v467
      %v675 = vunpack.c.h.b16 %v467
      %v676 = vunpack.c.l.b16 %v468
      %v677 = vunpack.c.h.b16 %v468
      %v678 = vunpack.c.l.b16 %v469
      %v679 = vunpack.c.h.b16 %v469
      %v680 = vunpack.c.l.b16 %v470
      %v681 = vunpack.c.h.b16 %v470
      %v682 = vunpack.c.l.b16 %v471
      %v683 = vunpack.c.h.b16 %v471
      %v684 = vunpack.c.l.b16 %v472
      %v685 = vunpack.c.h.b16 %v472
      %v686 = vunpack.c.l.b16 %v473
      %v687 = vunpack.c.h.b16 %v473
      %v688 = vunpack.c.l.b16 %v474
      %v689 = vunpack.c.h.b16 %v474
      %v690 = vunpack.c.l.b16 %v475
      %v691 = vunpack.c.h.b16 %v475
      %v692 = vunpack.c.l.b16 %v476
      %v693 = vunpack.c.h.b16 %v476
      %v694 = vunpack.c.l.b16 %v477
      %v695 = vunpack.c.h.b16 %v477
      %v696 = vunpack.c.l.b16 %v478
      %v697 = vunpack.c.h.b16 %v478
      %v698 = vunpack.c.l.b16 %v479
      %v699 = vunpack.c.h.b16 %v479
      %v700 = vunpack.c.l.b16 %v480
      %v701 = vunpack.c.h.b16 %v480
      %v702 = vunpack.c.l.b16 %v481
      %v703 = vunpack.c.h.b16 %v481
      %v704 = vunpack.c.l.b16 %v482
      %v705 = vunpack.c.h.b16 %v482
      %v706 = vunpack.c.l.b16 %v483
      %v707 = vunpack.c.h.b16 %v483
      %v708 = vunpack.c.l.b16 %v484
      %v709 = vunpack.c.h.b16 %v484
      %v710 = vunpack.c.l.b16 %v485
      %v711 = vunpack.c.h.b16 %v485
      %v712 = vunpack.c.l.b16 %v486
      %v713 = vunpack.c.h.b16 %v486
      %v714 = vunpack.c.l.b16 %v487
      %v715 = vunpack.c.h.b16 %v487
      %v716 = vunpack.c.l.b16 %v488
      %v717 = vunpack.c.h.b16 %v488
      %v718 = vunpack.c.l.b16 %v489
      %v719 = vunpack.c.h.b16 %v489
      %v720 = vunpack.c.l.b16 %v490
      %v721 = vunpack.c.h.b16 %v490
      %v722 = vunpack.c.l.b16 %v491
      %v723 = vunpack.c.h.b16 %v491
      %v724 = vunpack.c.l.b16 %v492
      %v725 = vunpack.c.h.b16 %v492
      %v726 = vunpack.c.l.b16 %v493
      %v727 = vunpack.c.h.b16 %v493
      %v728 = vunpack.c.l.b16 %v494
      %v729 = vunpack.c.h.b16 %v494
      %v730 = vunpack.c.l.b16 %v495
      %v731 = vunpack.c.h.b16 %v495
      %v732 = vunpack.c.l.b16 %v496
      %v733 = vunpack.c.h.b16 %v496
      %v734 = vunpack.c.l.b16 %v497
      %v735 = vunpack.c.h.b16 %v497
      %v736 = vunpack.c.l.b16 %v498
      %v737 = vunpack.c.h.b16 %v498
      %v738 = vunpack.c.l.b16 %v499
      %v739 = vunpack.c.h.b16 %v499
      %v740 = vunpack.c.l.b16 %v500
      %v741 = vunpack.c.h.b16 %v500
      %v742 = vunpack.c.l.b16 %v501
      %v743 = vunpack.c.h.b16 %v501
      %v744 = vunpack.c.l.b16 %v502
      %v745 = vunpack.c.h.b16 %v502
      %v746 = vunpack.c.l.b16 %v503
      %v747 = vunpack.c.h.b16 %v503
      %v748 = vunpack.c.l.b16 %v504
      %v749 = vunpack.c.h.b16 %v504
      %v750 = vunpack.c.l.b16 %v505
      %v751 = vunpack.c.h.b16 %v505
      %v752 = vunpack.c.l.b16 %v506
      %v753 = vunpack.c.h.b16 %v506
      %v754 = vunpack.c.l.b16 %v507
      %v755 = vunpack.c.h.b16 %v507
      %v756 = vunpack.c.l.b16 %v508
      %v757 = vunpack.c.h.b16 %v508
      %v758 = vunpack.c.l.b16 %v509
      %v759 = vunpack.c.h.b16 %v509
      %v760 = vunpack.c.l.b16 %v510
      %v761 = vunpack.c.h.b16 %v510
      %v762 = vunpack.c.l.b16 %v511
      %v763 = vunpack.c.h.b16 %v511
      %v764 = vunpack.c.l.b16 %v512
      %v765 = vunpack.c.h.b16 %v512
      %v766 = vunpack.c.l.b16 %v513
      %v767 = vunpack.c.h.b16 %v513
      %v768 = vunpack.c.l.b16 %v514
      %v769 = vunpack.c.h.b16 %v514
      %v770 = vunpack.c.l.b16 %v515
      %v771 = vunpack.c.h.b16 %v515
      %v772 = vpack.c.b16 %v648, %v644
      %v773 = vpack.c.b16 %v649, %v645
      %v774 = vpack.c.b16 %v650, %v646
      %v775 = vpack.c.b16 %v651, %v647
      %v776 = vpack.c.b16 %v656, %v652
      %v777 = vpack.c.b16 %v657, %v653
      %v778 = vpack.c.b16 %v658, %v654
      %v779 = vpack.c.b16 %v659, %v655
      %v780 = vpack.c.b16 %v664, %v660
      %v781 = vpack.c.b16 %v665, %v661
      %v782 = vpack.c.b16 %v666, %v662
      %v783 = vpack.c.b16 %v667, %v663
      %v784 = vpack.c.b16 %v672, %v668
      %v785 = vpack.c.b16 %v673, %v669
      %v786 = vpack.c.b16 %v674, %v670
      %v787 = vpack.c.b16 %v675, %v671
      %v788 = vpack.c.b16 %v680, %v676
      %v789 = vpack.c.b16 %v681, %v677
      %v790 = vpack.c.b16 %v682, %v678
      %v791 = vpack.c.b16 %v683, %v679
      %v792 = vpack.c.b16 %v688, %v684
      %v793 = vpack.c.b16 %v689, %v685
      %v794 = vpack.c.b16 %v690, %v686
      %v795 = vpack.c.b16 %v691, %v687
      %v796 = vpack.c.b16 %v696, %v692
      %v797 = vpack.c.b16 %v697, %v693
      %v798 = vpack.c.b16 %v698, %v694
      %v799 = vpack.c.b16 %v699, %v695
      %v800 = vpack.c.b16 %v704, %v700
      %v801 = vpack.c.b16 %v705, %v701
      %v802 = vpack.c.b16 %v706, %v702
      %v803 = vpack.c.b16 %v707, %v703
      %v804 = vpack.c.b16 %v712, %v708
      %v805 = vpack.c.b16 %v713, %v709
      %v806 = vpack.c.b16 %v714, %v710
      %v807 = vpack.c.b16 %v715, %v711
      %v808 = vpack.c.b16 %v720, %v716
      %v809 = vpack.c.b16 %v721, %v717
      %v810 = vpack.c.b16 %v722, %v718
      %v811 = vpack.c.b16 %v723, %v719
      %v812 = vpack.c.b16 %v728, %v724
      %v813 = vpack.c.b16 %v729, %v725
      %v814 = vpack.c.b16 %v730, %v726
      %v815 = vpack.c.b16 %v731, %v727
      %v816 = vpack.c.b16 %v736, %v732
      %v817 = vpack.c.b16 %v737, %v733
      %v818 = vpack.c.b16 %v738, %v734
      %v819 = vpack.c.b16 %v739, %v735
      %v820 = vpack.c.b16 %v744, %v740
      %v821 = vpack.c.b16 %v745, %v741
      %v822 = vpack.c.b16 %v746, %v742
      %v823 = vpack.c.b16 %v747, %v743
      %v824 = vpack.c.b16 %v752, %v748
      %v825 = vpack.c.b16 %v753, %v749
      %v826 = vpack.c.b16 %v754, %v750
      %v827 = vpack.c.b16 %v755, %v751
      %v828 = vpack.c.b16 %v760, %v756
      %v829 = vpack.c.b16 %v761, %v757
      %v830 = vpack.c.b16 %v762, %v758
      %v831 = vpack.c.b16 %v763, %v759
      %v832 = vpack.c.b16 %v768, %v764
      %v833 = vpack.c.b16 %v769, %v765
      %v834 = vpack.c.b16 %v770, %v766
      %v835 = vpack.c.b16 %v771, %v767
      %v964 = vunpack.c.l.b16 %v516
      %v965 = vunpack.c.l.b16 %v517
      %v966 = vunpack.c.l.b16 %v518
      %v967 = vunpack.c.l.b16 %v519
      %v968 = vunpack.c.l.b16 %v520
      %v969 = vunpack.c.l.b16 %v521
      %v970 = vunpack.c.l.b16 %v522
      %v971 = vunpack.c.l.b16 %v523
      %v972 = vunpack.c.l.b16 %v524
      %v973 = vunpack.c.l.b16 %v525
      %v974 = vunpack.c.l.b16 %v526
      %v975 = vunpack.c.l.b16 %v527
      %v976 = vunpack.c.l.b16 %v528
      %v977 = vunpack.c.l.b16 %v529
      %v978 = vunpack.c.l.b16 %v530
      %v979 = vunpack.c.l.b16 %v531
      %v980 = vunpack.c.l.b16 %v532
      %v981 = vunpack.c.l.b16 %v533
      %v982 = vunpack.c.l.b16 %v534
      %v983 = vunpack.c.l.b16 %v535
      %v984 = vunpack.c.l.b16 %v536
      %v985 = vunpack.c.l.b16 %v537
      %v986 = vunpack.c.l.b16 %v538
      %v987 = vunpack.c.l.b16 %v539
      %v988 = vunpack.c.l.b16 %v540
      %v989 = vunpack.c.l.b16 %v541
      %v990 = vunpack.c.l.b16 %v542
      %v991 = vunpack.c.l.b16 %v543
      %v992 = vunpack.c.l.b16 %v544
      %v993 = vunpack.c.l.b16 %v545
      %v994 = vunpack.c.l.b16 %v546
      %v995 = vunpack.c.l.b16 %v547
      %v996 = vunpack.c.l.b16 %v548
      %v997 = vunpack.c.l.b16 %v549
      %v998 = vunpack.c.l.b16 %v550
      %v999 = vunpack.c.l.b16 %v551
      %v1000 = vunpack.c.l.b16 %v552
      %v1001 = vunpack.c.l.b16 %v553
      %v1002 = vunpack.c.l.b16 %v554
      %v1003 = vunpack.c.l.b16 %v555
      %v1004 = vunpack.c.l.b16 %v556
      %v1005 = vunpack.c.l.b16 %v557
      %v1006 = vunpack.c.l.b16 %v558
      %v1007 = vunpack.c.l.b16 %v559
      %v1008 = vunpack.c.l.b16 %v560
      %v1009 = vunpack.c.l.b16 %v561
      %v1010 = vunpack.c.l.b16 %v562
      %v1011 = vunpack.c.l.b16 %v563
      %v1012 = vunpack.c.l.b16 %v564
      %v1013 = vunpack.c.l.b16 %v565
      %v1014 = vunpack.c.l.b16 %v566
      %v1015 = vunpack.c.l.b16 %v567
      %v1016 = vunpack.c.l.b16 %v568
      %v1017 = vunpack.c.l.b16 %v569
      %v1018 = vunpack.c.l.b16 %v570
      %v1019 = vunpack.c.l.b16 %v571
      %v1020 = vunpack.c.l.b16 %v572
      %v1021 = vunpack.c.l.b16 %v573
      %v1022 = vunpack.c.l.b16 %v574
      %v1023 = vunpack.c.l.b16 %v575
      %v1024 = vunpack.c.l.b16 %v576
      %v1025 = vunpack.c.l.b16 %v577
      %v1026 = vunpack.c.l.b16 %v578
      %v1027 = vunpack.c.l.b16 %v579
      %v1028 = vpack.c.b16 %v965, %v964
      %v1029 = vpack.c.b16 %v967, %v966
      %v1030 = vpack.c.b16 %v969, %v968
      %v1031 = vpack.c.b16 %v971, %v970
      %v1032 = vpack.c.b16 %v973, %v972
      %v1033 = vpack.c.b16 %v975, %v974
      %v1034 = vpack.c.b16 %v977, %v976
      %v1035 = vpack.c.b16 %v979, %v978
      %v1036 = vpack.c.b16 %v981, %v980
      %v1037 = vpack.c.b16 %v983, %v982
      %v1038 = vpack.c.b16 %v985, %v984
      %v1039 = vpack.c.b16 %v987, %v986
      %v1040 = vpack.c.b16 %v989, %v988
      %v1041 = vpack.c.b16 %v991, %v990
      %v1042 = vpack.c.b16 %v993, %v992
      %v1043 = vpack.c.b16 %v995, %v994
      %v1044 = vpack.c.b16 %v997, %v996
      %v1045 = vpack.c.b16 %v999, %v998
      %v1046 = vpack.c.b16 %v1001, %v1000
      %v1047 = vpack.c.b16 %v1003, %v1002
      %v1048 = vpack.c.b16 %v1005, %v1004
      %v1049 = vpack.c.b16 %v1007, %v1006
      %v1050 = vpack.c.b16 %v1009, %v1008
      %v1051 = vpack.c.b16 %v1011, %v1010
      %v1052 = vpack.c.b16 %v1013, %v1012
      %v1053 = vpack.c.b16 %v1015, %v1014
      %v1054 = vpack.c.b16 %v1017, %v1016
      %v1055 = vpack.c.b16 %v1019, %v1018
      %v1056 = vpack.c.b16 %v1021, %v1020
      %v1057 = vpack.c.b16 %v1023, %v1022
      %v1058 = vpack.c.b16 %v1025, %v1024
      %v1059 = vpack.c.b16 %v1027, %v1026
      %1092 = vmatprep.subr.bf16.mxu0 0
      %1093 = vmatpush1.bf16.msra.mxu0 %v1035
      %1094 = vmatprep.subr.bf16.mxu0 0
      %1095 = vmatpush1.bf16.msra.mxu0 %v1034
      %1096 = vmatprep.subr.bf16.mxu0 0
      %1097 = vmatpush1.bf16.msra.mxu0 %v1033
      %1098 = vmatprep.subr.bf16.mxu0 0
      %1099 = vmatpush1.bf16.msra.mxu0 %v1032
      %1100 = vmatprep.subr.bf16.mxu0 0
      %1101 = vmatpush1.bf16.msra.mxu0 %v1031
      %1102 = vmatprep.subr.bf16.mxu0 0
      %1103 = vmatpush1.bf16.msra.mxu0 %v1030
      %1104 = vmatprep.subr.bf16.mxu0 0
      %1105 = vmatpush1.bf16.msra.mxu0 %v1029
      %1106 = vmatprep.subr.bf16.mxu0 0
      %1107 = vmatpush1.bf16.msra.mxu0 %v1028
      %1108 = vmatprep.subr.bf16.mxu0 0
      %1109 = vmatpush2.bf16.msra.mxu0 %v1043
      %1110 = vmatprep.subr.bf16.mxu0 0
      %1111 = vmatpush2.bf16.msra.mxu0 %v1042
      %1112 = vmatprep.subr.bf16.mxu0 0
      %1113 = vmatpush2.bf16.msra.mxu0 %v1041
      %1114 = vmatprep.subr.bf16.mxu0 0
      %1115 = vmatpush2.bf16.msra.mxu0 %v1040
      %1116 = vmatprep.subr.bf16.mxu0 0
      %1117 = vmatpush2.bf16.msra.mxu0 %v1039
      %1118 = vmatprep.subr.bf16.mxu0 0
      %1119 = vmatpush2.bf16.msra.mxu0 %v1038
      %1120 = vmatprep.subr.bf16.mxu0 0
      %1121 = vmatpush2.bf16.msra.mxu0 %v1037
      %1122 = vmatprep.subr.bf16.mxu0 0
      %1123 = vmatpush2.bf16.msra.mxu0 %v1036
      %1124 = vmatprep.mubr.bf16.mxu0 %v773
      %1125 = vmatmul.mubr.bf16.gmra.mxu0 %v772
      %v1126 = vpop.f32.mrf.mxu0
      %v1127 = vadd.f32 0.0, %v1126
      %v1128 = vpop.f32.mrf.mxu0
      %v1129 = vpop.f32.mrf.mxu0
      %v1130 = vadd.f32 0.0, %v1129
      %v1131 = vpop.f32.mrf.mxu0
      %1132 = vmatprep.mubr.bf16.mxu0 %v777
      %1133 = vmatmul.mubr.bf16.gmra.mxu0 %v776
      %v1134 = vpop.f32.mrf.mxu0
      %v1135 = vadd.f32 0.0, %v1134
      %v1136 = vpop.f32.mrf.mxu0
      %v1137 = vpop.f32.mrf.mxu0
      %v1138 = vadd.f32 0.0, %v1137
      %v1139 = vpop.f32.mrf.mxu0
      %1140 = vmatprep.mubr.bf16.mxu0 %v781
      %1141 = vmatmul.mubr.bf16.gmra.mxu0 %v780
      %v1142 = vpop.f32.mrf.mxu0
      %v1143 = vadd.f32 0.0, %v1142
      %v1144 = vpop.f32.mrf.mxu0
      %v1145 = vpop.f32.mrf.mxu0
      %v1146 = vadd.f32 0.0, %v1145
      %v1147 = vpop.f32.mrf.mxu0
      %1148 = vmatprep.mubr.bf16.mxu0 %v785
      %1149 = vmatmul.mubr.bf16.gmra.mxu0 %v784
      %v1150 = vpop.f32.mrf.mxu0
      %v1151 = vadd.f32 0.0, %v1150
      %v1152 = vpop.f32.mrf.mxu0
      %v1153 = vpop.f32.mrf.mxu0
      %v1154 = vadd.f32 0.0, %v1153
      %v1155 = vpop.f32.mrf.mxu0
      %1156 = vmatprep.mubr.bf16.mxu0 %v789
      %1157 = vmatmul.mubr.bf16.gmra.mxu0 %v788
      %v1158 = vpop.f32.mrf.mxu0
      %v1159 = vadd.f32 0.0, %v1158
      %v1160 = vpop.f32.mrf.mxu0
      %v1161 = vpop.f32.mrf.mxu0
      %v1162 = vadd.f32 0.0, %v1161
      %v1163 = vpop.f32.mrf.mxu0
      %1164 = vmatprep.mubr.bf16.mxu0 %v793
      %1165 = vmatmul.mubr.bf16.gmra.mxu0 %v792
      %v1166 = vpop.f32.mrf.mxu0
      %v1167 = vadd.f32 0.0, %v1166
      %v1168 = vpop.f32.mrf.mxu0
      %v1169 = vpop.f32.mrf.mxu0
      %v1170 = vadd.f32 0.0, %v1169
      %v1171 = vpop.f32.mrf.mxu0
      %1172 = vmatprep.mubr.bf16.mxu0 %v797
      %1173 = vmatmul.mubr.bf16.gmra.mxu0 %v796
      %v1174 = vpop.f32.mrf.mxu0
      %v1175 = vadd.f32 0.0, %v1174
      %v1176 = vpop.f32.mrf.mxu0
      %v1177 = vpop.f32.mrf.mxu0
      %v1178 = vadd.f32 0.0, %v1177
      %v1179 = vpop.f32.mrf.mxu0
      %1180 = vmatprep.mubr.bf16.mxu0 %v801
      %1181 = vmatmul.mubr.bf16.gmra.mxu0 %v800
      %v1182 = vpop.f32.mrf.mxu0
      %v1183 = vadd.f32 0.0, %v1182
      %v1184 = vpop.f32.mrf.mxu0
      %v1185 = vpop.f32.mrf.mxu0
      %v1186 = vadd.f32 0.0, %v1185
      %v1187 = vpop.f32.mrf.mxu0
      %1188 = vmatprep.mubr.bf16.mxu0 %v805
      %1189 = vmatmul.mubr.bf16.gmra.mxu0 %v804
      %v1190 = vpop.f32.mrf.mxu0
      %v1191 = vadd.f32 0.0, %v1190
      %v1192 = vpop.f32.mrf.mxu0
      %v1193 = vpop.f32.mrf.mxu0
      %v1194 = vadd.f32 0.0, %v1193
      %v1195 = vpop.f32.mrf.mxu0
      %1196 = vmatprep.mubr.bf16.mxu0 %v809
      %1197 = vmatmul.mubr.bf16.gmra.mxu0 %v808
      %v1198 = vpop.f32.mrf.mxu0
      %v1199 = vadd.f32 0.0, %v1198
      %v1200 = vpop.f32.mrf.mxu0
      %v1201 = vpop.f32.mrf.mxu0
      %v1202 = vadd.f32 0.0, %v1201
      %v1203 = vpop.f32.mrf.mxu0
      %1204 = vmatprep.mubr.bf16.mxu0 %v813
      %1205 = vmatmul.mubr.bf16.gmra.mxu0 %v812
      %v1206 = vpop.f32.mrf.mxu0
      %v1207 = vadd.f32 0.0, %v1206
      %v1208 = vpop.f32.mrf.mxu0
      %v1209 = vpop.f32.mrf.mxu0
      %v1210 = vadd.f32 0.0, %v1209
      %v1211 = vpop.f32.mrf.mxu0
      %1212 = vmatprep.mubr.bf16.mxu0 %v817
      %1213 = vmatmul.mubr.bf16.gmra.mxu0 %v816
      %v1214 = vpop.f32.mrf.mxu0
      %v1215 = vadd.f32 0.0, %v1214
      %v1216 = vpop.f32.mrf.mxu0
      %v1217 = vpop.f32.mrf.mxu0
      %v1218 = vadd.f32 0.0, %v1217
      %v1219 = vpop.f32.mrf.mxu0
      %1220 = vmatprep.mubr.bf16.mxu0 %v821
      %1221 = vmatmul.mubr.bf16.gmra.mxu0 %v820
      %v1222 = vpop.f32.mrf.mxu0
      %v1223 = vadd.f32 0.0, %v1222
      %v1224 = vpop.f32.mrf.mxu0
      %v1225 = vpop.f32.mrf.mxu0
      %v1226 = vadd.f32 0.0, %v1225
      %v1227 = vpop.f32.mrf.mxu0
      %1228 = vmatprep.mubr.bf16.mxu0 %v825
      %1229 = vmatmul.mubr.bf16.gmra.mxu0 %v824
      %v1230 = vpop.f32.mrf.mxu0
      %v1231 = vadd.f32 0.0, %v1230
      %v1232 = vpop.f32.mrf.mxu0
      %v1233 = vpop.f32.mrf.mxu0
      %v1234 = vadd.f32 0.0, %v1233
      %v1235 = vpop.f32.mrf.mxu0
      %1236 = vmatprep.mubr.bf16.mxu0 %v829
      %1237 = vmatmul.mubr.bf16.gmra.mxu0 %v828
      %v1238 = vpop.f32.mrf.mxu0
      %v1239 = vadd.f32 0.0, %v1238
      %v1240 = vpop.f32.mrf.mxu0
      %v1241 = vpop.f32.mrf.mxu0
      %v1242 = vadd.f32 0.0, %v1241
      %v1243 = vpop.f32.mrf.mxu0
      %1244 = vmatprep.mubr.bf16.mxu0 %v833
      %1245 = vmatmul.mubr.bf16.gmra.mxu0 %v832
      %v1246 = vpop.f32.mrf.mxu0
      %v1247 = vadd.f32 0.0, %v1246
      %v1248 = vpop.f32.mrf.mxu0
      %v1249 = vpop.f32.mrf.mxu0
      %v1250 = vadd.f32 0.0, %v1249
      %v1251 = vpop.f32.mrf.mxu0
      %1252 = vdwg.mxu0
      %1253 = vmatprep.subr.bf16.mxu0 0
      %1254 = vmatpush1.bf16.msra.mxu0 %v1051
      %1255 = vmatprep.subr.bf16.mxu0 0
      %1256 = vmatpush1.bf16.msra.mxu0 %v1050
      %1257 = vmatprep.subr.bf16.mxu0 0
      %1258 = vmatpush1.bf16.msra.mxu0 %v1049
      %1259 = vmatprep.subr.bf16.mxu0 0
      %1260 = vmatpush1.bf16.msra.mxu0 %v1048
      %1261 = vmatprep.subr.bf16.mxu0 0
      %1262 = vmatpush1.bf16.msra.mxu0 %v1047
      %1263 = vmatprep.subr.bf16.mxu0 0
      %1264 = vmatpush1.bf16.msra.mxu0 %v1046
      %1265 = vmatprep.subr.bf16.mxu0 0
      %1266 = vmatpush1.bf16.msra.mxu0 %v1045
      %1267 = vmatprep.subr.bf16.mxu0 0
      %1268 = vmatpush1.bf16.msra.mxu0 %v1044
      %1269 = vmatprep.subr.bf16.mxu0 0
      %1270 = vmatpush2.bf16.msra.mxu0 %v1059
      %1271 = vmatprep.subr.bf16.mxu0 0
      %1272 = vmatpush2.bf16.msra.mxu0 %v1058
      %1273 = vmatprep.subr.bf16.mxu0 0
      %1274 = vmatpush2.bf16.msra.mxu0 %v1057
      %1275 = vmatprep.subr.bf16.mxu0 0
      %1276 = vmatpush2.bf16.msra.mxu0 %v1056
      %1277 = vmatprep.subr.bf16.mxu0 0
      %1278 = vmatpush2.bf16.msra.mxu0 %v1055
      %1279 = vmatprep.subr.bf16.mxu0 0
      %1280 = vmatpush2.bf16.msra.mxu0 %v1054
      %1281 = vmatprep.subr.bf16.mxu0 0
      %1282 = vmatpush2.bf16.msra.mxu0 %v1053
      %1283 = vmatprep.subr.bf16.mxu0 0
      %1284 = vmatpush2.bf16.msra.mxu0 %v1052
      %1285 = vmatprep.mubr.bf16.mxu0 %v775
      %1286 = vmatmul.mubr.bf16.gmra.mxu0 %v774
      %v1287 = vpop.f32.mrf.mxu0
      %v1288 = vadd.f32 %v1127, %v1287
      %v1289 = vpop.f32.mrf.mxu0
      %v1290 = vpop.f32.mrf.mxu0
      %v1291 = vadd.f32 %v1130, %v1290
      %v1292 = vpop.f32.mrf.mxu0
      %1293 = vmatprep.mubr.bf16.mxu0 %v779
      %1294 = vmatmul.mubr.bf16.gmra.mxu0 %v778
      %v1295 = vpop.f32.mrf.mxu0
      %v1296 = vadd.f32 %v1135, %v1295
      %v1297 = vpop.f32.mrf.mxu0
      %v1298 = vpop.f32.mrf.mxu0
      %v1299 = vadd.f32 %v1138, %v1298
      %v1300 = vpop.f32.mrf.mxu0
      %1301 = vmatprep.mubr.bf16.mxu0 %v783
      %1302 = vmatmul.mubr.bf16.gmra.mxu0 %v782
      %v1303 = vpop.f32.mrf.mxu0
      %v1304 = vadd.f32 %v1143, %v1303
      %v1305 = vpop.f32.mrf.mxu0
      %v1306 = vpop.f32.mrf.mxu0
      %v1307 = vadd.f32 %v1146, %v1306
      %v1308 = vpop.f32.mrf.mxu0
      %1309 = vmatprep.mubr.bf16.mxu0 %v787
      %1310 = vmatmul.mubr.bf16.gmra.mxu0 %v786
      %v1311 = vpop.f32.mrf.mxu0
      %v1312 = vadd.f32 %v1151, %v1311
      %v1313 = vpop.f32.mrf.mxu0
      %v1314 = vpop.f32.mrf.mxu0
      %v1315 = vadd.f32 %v1154, %v1314
      %v1316 = vpop.f32.mrf.mxu0
      %1317 = vmatprep.mubr.bf16.mxu0 %v791
      %1318 = vmatmul.mubr.bf16.gmra.mxu0 %v790
      %v1319 = vpop.f32.mrf.mxu0
      %v1320 = vadd.f32 %v1159, %v1319
      %v1321 = vpop.f32.mrf.mxu0
      %v1322 = vpop.f32.mrf.mxu0
      %v1323 = vadd.f32 %v1162, %v1322
      %v1324 = vpop.f32.mrf.mxu0
      %1325 = vmatprep.mubr.bf16.mxu0 %v795
      %1326 = vmatmul.mubr.bf16.gmra.mxu0 %v794
      %v1327 = vpop.f32.mrf.mxu0
      %v1328 = vadd.f32 %v1167, %v1327
      %v1329 = vpop.f32.mrf.mxu0
      %v1330 = vpop.f32.mrf.mxu0
      %v1331 = vadd.f32 %v1170, %v1330
      %v1332 = vpop.f32.mrf.mxu0
      %1333 = vmatprep.mubr.bf16.mxu0 %v799
      %1334 = vmatmul.mubr.bf16.gmra.mxu0 %v798
      %v1335 = vpop.f32.mrf.mxu0
      %v1336 = vadd.f32 %v1175, %v1335
      %v1337 = vpop.f32.mrf.mxu0
      %v1338 = vpop.f32.mrf.mxu0
      %v1339 = vadd.f32 %v1178, %v1338
      %v1340 = vpop.f32.mrf.mxu0
      %1341 = vmatprep.mubr.bf16.mxu0 %v803
      %1342 = vmatmul.mubr.bf16.gmra.mxu0 %v802
      %v1343 = vpop.f32.mrf.mxu0
      %v1344 = vadd.f32 %v1183, %v1343
      %v1345 = vpop.f32.mrf.mxu0
      %v1346 = vpop.f32.mrf.mxu0
      %v1347 = vadd.f32 %v1186, %v1346
      %v1348 = vpop.f32.mrf.mxu0
      %1349 = vmatprep.mubr.bf16.mxu0 %v807
      %1350 = vmatmul.mubr.bf16.gmra.mxu0 %v806
      %v1351 = vpop.f32.mrf.mxu0
      %v1352 = vadd.f32 %v1191, %v1351
      %v1353 = vpop.f32.mrf.mxu0
      %v1354 = vpop.f32.mrf.mxu0
      %v1355 = vadd.f32 %v1194, %v1354
      %v1356 = vpop.f32.mrf.mxu0
      %1357 = vmatprep.mubr.bf16.mxu0 %v811
      %1358 = vmatmul.mubr.bf16.gmra.mxu0 %v810
      %v1359 = vpop.f32.mrf.mxu0
      %v1360 = vadd.f32 %v1199, %v1359
      %v1361 = vpop.f32.mrf.mxu0
      %v1362 = vpop.f32.mrf.mxu0
      %v1363 = vadd.f32 %v1202, %v1362
      %v1364 = vpop.f32.mrf.mxu0
      %1365 = vmatprep.mubr.bf16.mxu0 %v815
      %1366 = vmatmul.mubr.bf16.gmra.mxu0 %v814
      %v1367 = vpop.f32.mrf.mxu0
      %v1368 = vadd.f32 %v1207, %v1367
      %v1369 = vpop.f32.mrf.mxu0
      %v1370 = vpop.f32.mrf.mxu0
      %v1371 = vadd.f32 %v1210, %v1370
      %v1372 = vpop.f32.mrf.mxu0
      %1373 = vmatprep.mubr.bf16.mxu0 %v819
      %1374 = vmatmul.mubr.bf16.gmra.mxu0 %v818
      %v1375 = vpop.f32.mrf.mxu0
      %v1376 = vadd.f32 %v1215, %v1375
      %v1377 = vpop.f32.mrf.mxu0
      %v1378 = vpop.f32.mrf.mxu0
      %v1379 = vadd.f32 %v1218, %v1378
      %v1380 = vpop.f32.mrf.mxu0
      %1381 = vmatprep.mubr.bf16.mxu0 %v823
      %1382 = vmatmul.mubr.bf16.gmra.mxu0 %v822
      %v1383 = vpop.f32.mrf.mxu0
      %v1384 = vadd.f32 %v1223, %v1383
      %v1385 = vpop.f32.mrf.mxu0
      %v1386 = vpop.f32.mrf.mxu0
      %v1387 = vadd.f32 %v1226, %v1386
      %v1388 = vpop.f32.mrf.mxu0
      %1389 = vmatprep.mubr.bf16.mxu0 %v827
      %1390 = vmatmul.mubr.bf16.gmra.mxu0 %v826
      %v1391 = vpop.f32.mrf.mxu0
      %v1392 = vadd.f32 %v1231, %v1391
      %v1393 = vpop.f32.mrf.mxu0
      %v1394 = vpop.f32.mrf.mxu0
      %v1395 = vadd.f32 %v1234, %v1394
      %v1396 = vpop.f32.mrf.mxu0
      %1397 = vmatprep.mubr.bf16.mxu0 %v831
      %1398 = vmatmul.mubr.bf16.gmra.mxu0 %v830
      %v1399 = vpop.f32.mrf.mxu0
      %v1400 = vadd.f32 %v1239, %v1399
      %v1401 = vpop.f32.mrf.mxu0
      %v1402 = vpop.f32.mrf.mxu0
      %v1403 = vadd.f32 %v1242, %v1402
      %v1404 = vpop.f32.mrf.mxu0
      %1405 = vmatprep.mubr.bf16.mxu0 %v835
      %1406 = vmatmul.mubr.bf16.gmra.mxu0 %v834
      %v1407 = vpop.f32.mrf.mxu0
      %v1408 = vadd.f32 %v1247, %v1407
      %v1409 = vpop.f32.mrf.mxu0
      %v1410 = vpop.f32.mrf.mxu0
      %v1411 = vadd.f32 %v1250, %v1410
      %v1412 = vpop.f32.mrf.mxu0
      %1413 = vdwg.mxu0
      %v1414 = vadd.f32 %v420, %v1288
      %v1415 = vadd.f32 %v421, %v1291
      %v1416 = vadd.f32 %v422, %v1296
      %v1417 = vadd.f32 %v423, %v1299
      %v1418 = vadd.f32 %v424, %v1304
      %v1419 = vadd.f32 %v425, %v1307
      %v1420 = vadd.f32 %v426, %v1312
      %v1421 = vadd.f32 %v427, %v1315
      %v1422 = vadd.f32 %v428, %v1320
      %v1423 = vadd.f32 %v429, %v1323
      %v1424 = vadd.f32 %v430, %v1328
      %v1425 = vadd.f32 %v431, %v1331
      %v1426 = vadd.f32 %v432, %v1336
      %v1427 = vadd.f32 %v433, %v1339
      %v1428 = vadd.f32 %v434, %v1344
      %v1429 = vadd.f32 %v435, %v1347
      %v1430 = vadd.f32 %v436, %v1352
      %v1431 = vadd.f32 %v437, %v1355
      %v1432 = vadd.f32 %v438, %v1360
      %v1433 = vadd.f32 %v439, %v1363
      %v1434 = vadd.f32 %v440, %v1368
      %v1435 = vadd.f32 %v441, %v1371
      %v1436 = vadd.f32 %v442, %v1376
      %v1437 = vadd.f32 %v443, %v1379
      %v1438 = vadd.f32 %v444, %v1384
      %v1439 = vadd.f32 %v445, %v1387
      %v1440 = vadd.f32 %v446, %v1392
      %v1441 = vadd.f32 %v447, %v1395
      %v1442 = vadd.f32 %v448, %v1400
      %v1443 = vadd.f32 %v449, %v1403
      %v1444 = vadd.f32 %v450, %v1408
      %v1445 = vadd.f32 %v451, %v1411
      %vm1446 = vcmask 523264
      %1447 = vst.msk [vmem:[#allocation2] sm:$0xff] %vm1446, %v1414
      %1448 = vst.msk [vmem:[#allocation2 + $0x8] sm:$0xff] %vm1446, %v1415
      %1449 = vst.msk [vmem:[#allocation2 + $0x10] sm:$0xff] %vm1446, %v1416
      %1450 = vst.msk [vmem:[#allocation2 + $0x18] sm:$0xff] %vm1446, %v1417
      %1451 = vst.msk [vmem:[#allocation2 + $0x20] sm:$0xff] %vm1446, %v1418
      %1452 = vst.msk [vmem:[#allocation2 + $0x28] sm:$0xff] %vm1446, %v1419
      %1453 = vst.msk [vmem:[#allocation2 + $0x30] sm:$0xff] %vm1446, %v1420
      %1454 = vst.msk [vmem:[#allocation2 + $0x38] sm:$0xff] %vm1446, %v1421
      %1455 = vst.msk [vmem:[#allocation2 + $0x40] sm:$0xff] %vm1446, %v1422
      %1456 = vst.msk [vmem:[#allocation2 + $0x48] sm:$0xff] %vm1446, %v1423
      %1457 = vst.msk [vmem:[#allocation2 + $0x50] sm:$0xff] %vm1446, %v1424
      %1458 = vst.msk [vmem:[#allocation2 + $0x58] sm:$0xff] %vm1446, %v1425
      %1459 = vst.msk [vmem:[#allocation2 + $0x60] sm:$0xff] %vm1446, %v1426
      %1460 = vst.msk [vmem:[#allocation2 + $0x68] sm:$0xff] %vm1446, %v1427
      %1461 = vst.msk [vmem:[#allocation2 + $0x70] sm:$0xff] %vm1446, %v1428
      %1462 = vst.msk [vmem:[#allocation2 + $0x78] sm:$0xff] %vm1446, %v1429
      %1463 = vst.msk [vmem:[#allocation2 + $0x80] sm:$0xff] %vm1446, %v1430
      %1464 = vst.msk [vmem:[#allocation2 + $0x88] sm:$0xff] %vm1446, %v1431
      %1465 = vst.msk [vmem:[#allocation2 + $0x90] sm:$0xff] %vm1446, %v1432
      %1466 = vst.msk [vmem:[#allocation2 + $0x98] sm:$0xff] %vm1446, %v1433
      %1467 = vst.msk [vmem:[#allocation2 + $0xa0] sm:$0xff] %vm1446, %v1434
      %1468 = vst.msk [vmem:[#allocation2 + $0xa8] sm:$0xff] %vm1446, %v1435
      %1469 = vst.msk [vmem:[#allocation2 + $0xb0] sm:$0xff] %vm1446, %v1436
      %1470 = vst.msk [vmem:[#allocation2 + $0xb8] sm:$0xff] %vm1446, %v1437
      %1471 = vst.msk [vmem:[#allocation2 + $0xc0] sm:$0xff] %vm1446, %v1438
      %1472 = vst.msk [vmem:[#allocation2 + $0xc8] sm:$0xff] %vm1446, %v1439
      %1473 = vst.msk [vmem:[#allocation2 + $0xd0] sm:$0xff] %vm1446, %v1440
      %1474 = vst.msk [vmem:[#allocation2 + $0xd8] sm:$0xff] %vm1446, %v1441
      %1475 = vst.msk [vmem:[#allocation2 + $0xe0] sm:$0xff] %vm1446, %v1442
      %1476 = vst.msk [vmem:[#allocation2 + $0xe8] sm:$0xff] %vm1446, %v1443
      %1477 = vst.msk [vmem:[#allocation2 + $0xf0] sm:$0xff] %vm1446, %v1444
      %1478 = vst.msk [vmem:[#allocation2 + $0xf8] sm:$0xff] %vm1446, %v1445
      // Predicated region
      $region33: #{generator_forward.15} parent=27 // pred_check
        %p1479 = pneg %p383
      $region34: #{generator_forward.15} parent=27 // pred_check_branch
        %1481 = sbr.rel (%p1479) target = $region36
      $region35: #{generator_forward.15} parent=27 // pred_region
        %v1482 = vld [vmem:[#allocation2] sm:$0xff]
        %v1483 = vld [vmem:[#allocation2 + $0x8] sm:$0xff]
        %v1484 = vld [vmem:[#allocation2 + $0x10] sm:$0xff]
        %v1485 = vld [vmem:[#allocation2 + $0x18] sm:$0xff]
        %v1486 = vld [vmem:[#allocation2 + $0x20] sm:$0xff]
        %v1487 = vld [vmem:[#allocation2 + $0x28] sm:$0xff]
        %v1488 = vld [vmem:[#allocation2 + $0x30] sm:$0xff]
        %v1489 = vld [vmem:[#allocation2 + $0x38] sm:$0xff]
        %v1490 = vld [vmem:[#allocation2 + $0x40] sm:$0xff]
        %v1491 = vld [vmem:[#allocation2 + $0x48] sm:$0xff]
        %v1492 = vld [vmem:[#allocation2 + $0x50] sm:$0xff]
        %v1493 = vld [vmem:[#allocation2 + $0x58] sm:$0xff]
        %v1494 = vld [vmem:[#allocation2 + $0x60] sm:$0xff]
        %v1495 = vld [vmem:[#allocation2 + $0x68] sm:$0xff]
        %v1496 = vld [vmem:[#allocation2 + $0x70] sm:$0xff]
        %v1497 = vld [vmem:[#allocation2 + $0x78] sm:$0xff]
        %v1498 = vld [vmem:[#allocation2 + $0x80] sm:$0xff]
        %v1499 = vld [vmem:[#allocation2 + $0x88] sm:$0xff]
        %v1500 = vld [vmem:[#allocation2 + $0x90] sm:$0xff]
        %v1501 = vld [vmem:[#allocation2 + $0x98] sm:$0xff]
        %v1502 = vld [vmem:[#allocation2 + $0xa0] sm:$0xff]
        %v1503 = vld [vmem:[#allocation2 + $0xa8] sm:$0xff]
        %v1504 = vld [vmem:[#allocation2 + $0xb0] sm:$0xff]
        %v1505 = vld [vmem:[#allocation2 + $0xb8] sm:$0xff]
        %v1506 = vld [vmem:[#allocation2 + $0xc0] sm:$0xff]
        %v1507 = vld [vmem:[#allocation2 + $0xc8] sm:$0xff]
        %v1508 = vld [vmem:[#allocation2 + $0xd0] sm:$0xff]
        %v1509 = vld [vmem:[#allocation2 + $0xd8] sm:$0xff]
        %v1510 = vld [vmem:[#allocation2 + $0xe0] sm:$0xff]
        %v1511 = vld [vmem:[#allocation2 + $0xe8] sm:$0xff]
        %v1512 = vld [vmem:[#allocation2 + $0xf0] sm:$0xff]
        %v1513 = vld [vmem:[#allocation2 + $0xf8] sm:$0xff]
        %v1514 = vpack.c.bf16 %v1483, %v1482
        %v1515 = vpack.c.bf16 %v1485, %v1484
        %v1516 = vpack.c.bf16 %v1487, %v1486
        %v1517 = vpack.c.bf16 %v1489, %v1488
        %v1518 = vpack.c.bf16 %v1491, %v1490
        %v1519 = vpack.c.bf16 %v1493, %v1492
        %v1520 = vpack.c.bf16 %v1495, %v1494
        %v1521 = vpack.c.bf16 %v1497, %v1496
        %v1522 = vpack.c.bf16 %v1499, %v1498
        %v1523 = vpack.c.bf16 %v1501, %v1500
        %v1524 = vpack.c.bf16 %v1503, %v1502
        %v1525 = vpack.c.bf16 %v1505, %v1504
        %v1526 = vpack.c.bf16 %v1507, %v1506
        %v1527 = vpack.c.bf16 %v1509, %v1508
        %v1528 = vpack.c.bf16 %v1511, %v1510
        %v1529 = vpack.c.bf16 %v1513, %v1512
        %v1546 = vunpack.c.l.b16 %v1514
        %v1547 = vunpack.c.h.b16 %v1514
        %v1548 = vunpack.c.l.b16 %v1515
        %v1549 = vunpack.c.h.b16 %v1515
        %v1550 = vunpack.c.l.b16 %v1516
        %v1551 = vunpack.c.h.b16 %v1516
        %v1552 = vunpack.c.l.b16 %v1517
        %v1553 = vunpack.c.h.b16 %v1517
        %v1554 = vunpack.c.l.b16 %v1518
        %v1555 = vunpack.c.h.b16 %v1518
        %v1556 = vunpack.c.l.b16 %v1519
        %v1557 = vunpack.c.h.b16 %v1519
        %v1558 = vunpack.c.l.b16 %v1520
        %v1559 = vunpack.c.h.b16 %v1520
        %v1560 = vunpack.c.l.b16 %v1521
        %v1561 = vunpack.c.h.b16 %v1521
        %v1562 = vunpack.c.l.b16 %v1522
        %v1563 = vunpack.c.h.b16 %v1522
        %v1564 = vunpack.c.l.b16 %v1523
        %v1565 = vunpack.c.h.b16 %v1523
        %v1566 = vunpack.c.l.b16 %v1524
        %v1567 = vunpack.c.h.b16 %v1524
        %v1568 = vunpack.c.l.b16 %v1525
        %v1569 = vunpack.c.h.b16 %v1525
        %v1570 = vunpack.c.l.b16 %v1526
        %v1571 = vunpack.c.h.b16 %v1526
        %v1572 = vunpack.c.l.b16 %v1527
        %v1573 = vunpack.c.h.b16 %v1527
        %v1574 = vunpack.c.l.b16 %v1528
        %v1575 = vunpack.c.h.b16 %v1528
        %v1576 = vunpack.c.l.b16 %v1529
        %v1577 = vunpack.c.h.b16 %v1529
        %v1578 = vpack.c.b16 %v1546, %v1546
        %v1579 = vpack.c.b16 %v1547, %v1547
        %v1580 = vpack.c.b16 %v1548, %v1548
        %v1581 = vpack.c.b16 %v1549, %v1549
        %v1582 = vpack.c.b16 %v1550, %v1550
        %v1583 = vpack.c.b16 %v1551, %v1551
        %v1584 = vpack.c.b16 %v1552, %v1552
        %v1585 = vpack.c.b16 %v1553, %v1553
        %v1586 = vpack.c.b16 %v1554, %v1554
        %v1587 = vpack.c.b16 %v1555, %v1555
        %v1588 = vpack.c.b16 %v1556, %v1556
        %v1589 = vpack.c.b16 %v1557, %v1557
        %v1590 = vpack.c.b16 %v1558, %v1558
        %v1591 = vpack.c.b16 %v1559, %v1559
        %v1592 = vpack.c.b16 %v1560, %v1560
        %v1593 = vpack.c.b16 %v1561, %v1561
        %v1594 = vpack.c.b16 %v1562, %v1562
        %v1595 = vpack.c.b16 %v1563, %v1563
        %v1596 = vpack.c.b16 %v1564, %v1564
        %v1597 = vpack.c.b16 %v1565, %v1565
        %v1598 = vpack.c.b16 %v1566, %v1566
        %v1599 = vpack.c.b16 %v1567, %v1567
        %v1600 = vpack.c.b16 %v1568, %v1568
        %v1601 = vpack.c.b16 %v1569, %v1569
        %v1602 = vpack.c.b16 %v1570, %v1570
        %v1603 = vpack.c.b16 %v1571, %v1571
        %v1604 = vpack.c.b16 %v1572, %v1572
        %v1605 = vpack.c.b16 %v1573, %v1573
        %v1606 = vpack.c.b16 %v1574, %v1574
        %v1607 = vpack.c.b16 %v1575, %v1575
        %v1608 = vpack.c.b16 %v1576, %v1576
        %v1609 = vpack.c.b16 %v1577, %v1577
        %vm1642 = vcmask 519168
        %1643 = vst.msk [vmem:[%s358] sm:$0xf] %vm1642, %v1578
        %1644 = vst.msk [vmem:[%s358 + $0x4] sm:$0xf] %vm1642, %v1579
        %1645 = vst.msk [vmem:[%s358 + $0x8] sm:$0xf] %vm1642, %v1580
        %1646 = vst.msk [vmem:[%s358 + $0xc] sm:$0xf] %vm1642, %v1581
        %1647 = vst.msk [vmem:[%s358 + $0x10] sm:$0xf] %vm1642, %v1582
        %1648 = vst.msk [vmem:[%s358 + $0x14] sm:$0xf] %vm1642, %v1583
        %1649 = vst.msk [vmem:[%s358 + $0x18] sm:$0xf] %vm1642, %v1584
        %1650 = vst.msk [vmem:[%s358 + $0x1c] sm:$0xf] %vm1642, %v1585
        %1651 = vst.msk [vmem:[%s358 + $0x20] sm:$0xf] %vm1642, %v1586
        %1652 = vst.msk [vmem:[%s358 + $0x24] sm:$0xf] %vm1642, %v1587
        %1653 = vst.msk [vmem:[%s358 + $0x28] sm:$0xf] %vm1642, %v1588
        %1654 = vst.msk [vmem:[%s358 + $0x2c] sm:$0xf] %vm1642, %v1589
        %1655 = vst.msk [vmem:[%s358 + $0x30] sm:$0xf] %vm1642, %v1590
        %1656 = vst.msk [vmem:[%s358 + $0x34] sm:$0xf] %vm1642, %v1591
        %1657 = vst.msk [vmem:[%s358 + $0x38] sm:$0xf] %vm1642, %v1592
        %1658 = vst.msk [vmem:[%s358 + $0x3c] sm:$0xf] %vm1642, %v1593
        %1659 = vst.msk [vmem:[%s358 + $0x40] sm:$0xf] %vm1642, %v1594
        %1660 = vst.msk [vmem:[%s358 + $0x44] sm:$0xf] %vm1642, %v1595
        %1661 = vst.msk [vmem:[%s358 + $0x48] sm:$0xf] %vm1642, %v1596
        %1662 = vst.msk [vmem:[%s358 + $0x4c] sm:$0xf] %vm1642, %v1597
        %1663 = vst.msk [vmem:[%s358 + $0x50] sm:$0xf] %vm1642, %v1598
        %1664 = vst.msk [vmem:[%s358 + $0x54] sm:$0xf] %vm1642, %v1599
        %1665 = vst.msk [vmem:[%s358 + $0x58] sm:$0xf] %vm1642, %v1600
        %1666 = vst.msk [vmem:[%s358 + $0x5c] sm:$0xf] %vm1642, %v1601
        %1667 = vst.msk [vmem:[%s358 + $0x60] sm:$0xf] %vm1642, %v1602
        %1668 = vst.msk [vmem:[%s358 + $0x64] sm:$0xf] %vm1642, %v1603
        %1669 = vst.msk [vmem:[%s358 + $0x68] sm:$0xf] %vm1642, %v1604
        %1670 = vst.msk [vmem:[%s358 + $0x6c] sm:$0xf] %vm1642, %v1605
        %1671 = vst.msk [vmem:[%s358 + $0x70] sm:$0xf] %vm1642, %v1606
        %1672 = vst.msk [vmem:[%s358 + $0x74] sm:$0xf] %vm1642, %v1607
        %1673 = vst.msk [vmem:[%s358 + $0x78] sm:$0xf] %vm1642, %v1608
        %1674 = vst.msk [vmem:[%s358 + $0x7c] sm:$0xf] %vm1642, %v1609
        %v1675 = vsel %vm1446, %v1482, 0.0
        %v1676 = vsel %vm1446, %v1483, 0.0
        %v1677 = vadd.f32 %v1675, %v1676
        %v1678 = vsel %vm1446, %v1484, 0.0
        %v1679 = vadd.f32 %v1677, %v1678
        %v1680 = vsel %vm1446, %v1485, 0.0
        %v1681 = vadd.f32 %v1679, %v1680
        %v1682 = vsel %vm1446, %v1486, 0.0
        %v1683 = vadd.f32 %v1681, %v1682
        %v1684 = vsel %vm1446, %v1487, 0.0
        %v1685 = vadd.f32 %v1683, %v1684
        %v1686 = vsel %vm1446, %v1488, 0.0
        %v1687 = vadd.f32 %v1685, %v1686
        %v1688 = vsel %vm1446, %v1489, 0.0
        %v1689 = vadd.f32 %v1687, %v1688
        %v1690 = vsel %vm1446, %v1490, 0.0
        %v1691 = vadd.f32 %v1689, %v1690
        %v1692 = vsel %vm1446, %v1491, 0.0
        %v1693 = vadd.f32 %v1691, %v1692
        %v1694 = vsel %vm1446, %v1492, 0.0
        %v1695 = vadd.f32 %v1693, %v1694
        %v1696 = vsel %vm1446, %v1493, 0.0
        %v1697 = vadd.f32 %v1695, %v1696
        %v1698 = vsel %vm1446, %v1494, 0.0
        %v1699 = vadd.f32 %v1697, %v1698
        %v1700 = vsel %vm1446, %v1495, 0.0
        %v1701 = vadd.f32 %v1699, %v1700
        %v1702 = vsel %vm1446, %v1496, 0.0
        %v1703 = vadd.f32 %v1701, %v1702
        %v1704 = vsel %vm1446, %v1497, 0.0
        %v1705 = vadd.f32 %v1703, %v1704
        %v1706 = vsel %vm1446, %v1498, 0.0
        %v1707 = vadd.f32 %v1705, %v1706
        %v1708 = vsel %vm1446, %v1499, 0.0
        %v1709 = vadd.f32 %v1707, %v1708
        %v1710 = vsel %vm1446, %v1500, 0.0
        %v1711 = vadd.f32 %v1709, %v1710
        %v1712 = vsel %vm1446, %v1501, 0.0
        %v1713 = vadd.f32 %v1711, %v1712
        %v1714 = vsel %vm1446, %v1502, 0.0
        %v1715 = vadd.f32 %v1713, %v1714
        %v1716 = vsel %vm1446, %v1503, 0.0
        %v1717 = vadd.f32 %v1715, %v1716
        %v1718 = vsel %vm1446, %v1504, 0.0
        %v1719 = vadd.f32 %v1717, %v1718
        %v1720 = vsel %vm1446, %v1505, 0.0
        %v1721 = vadd.f32 %v1719, %v1720
        %v1722 = vsel %vm1446, %v1506, 0.0
        %v1723 = vadd.f32 %v1721, %v1722
        %v1724 = vsel %vm1446, %v1507, 0.0
        %v1725 = vadd.f32 %v1723, %v1724
        %v1726 = vsel %vm1446, %v1508, 0.0
        %v1727 = vadd.f32 %v1725, %v1726
        %v1728 = vsel %vm1446, %v1509, 0.0
        %v1729 = vadd.f32 %v1727, %v1728
        %v1730 = vsel %vm1446, %v1510, 0.0
        %v1731 = vadd.f32 %v1729, %v1730
        %v1732 = vsel %vm1446, %v1511, 0.0
        %v1733 = vadd.f32 %v1731, %v1732
        %v1734 = vsel %vm1446, %v1512, 0.0
        %v1735 = vadd.f32 %v1733, %v1734
        %v1736 = vsel %vm1446, %v1513, 0.0
        %v1737 = vadd.f32 %v1735, %v1736
        %v1738 = vrot.slane %v1737, 4
        %v1739 = vadd.f32 %v1737, %v1738
        %v1740 = vrot.slane %v1739, 2
        %v1741 = vadd.f32 %v1739, %v1740
        %v1742 = vrot.slane %v1741, 1
        %v1743 = vadd.f32 %v1741, %v1742
        %v1744 = vmul.f32 %v1482, %v1482
        %v1745 = vmul.f32 %v1483, %v1483
        %v1746 = vmul.f32 %v1484, %v1484
        %v1747 = vmul.f32 %v1485, %v1485
        %v1748 = vmul.f32 %v1486, %v1486
        %v1749 = vmul.f32 %v1487, %v1487
        %v1750 = vmul.f32 %v1488, %v1488
        %v1751 = vmul.f32 %v1489, %v1489
        %v1752 = vmul.f32 %v1490, %v1490
        %v1753 = vmul.f32 %v1491, %v1491
        %v1754 = vmul.f32 %v1492, %v1492
        %v1755 = vmul.f32 %v1493, %v1493
        %v1756 = vmul.f32 %v1494, %v1494
        %v1757 = vmul.f32 %v1495, %v1495
        %v1758 = vmul.f32 %v1496, %v1496
        %v1759 = vmul.f32 %v1497, %v1497
        %v1760 = vmul.f32 %v1498, %v1498
        %v1761 = vmul.f32 %v1499, %v1499
        %v1762 = vmul.f32 %v1500, %v1500
        %v1763 = vmul.f32 %v1501, %v1501
        %v1764 = vmul.f32 %v1502, %v1502
        %v1765 = vmul.f32 %v1503, %v1503
        %v1766 = vmul.f32 %v1504, %v1504
        %v1767 = vmul.f32 %v1505, %v1505
        %v1768 = vmul.f32 %v1506, %v1506
        %v1769 = vmul.f32 %v1507, %v1507
        %v1770 = vmul.f32 %v1508, %v1508
        %v1771 = vmul.f32 %v1509, %v1509
        %v1772 = vmul.f32 %v1510, %v1510
        %v1773 = vmul.f32 %v1511, %v1511
        %v1774 = vmul.f32 %v1512, %v1512
        %v1775 = vmul.f32 %v1513, %v1513
        %v1776 = vsel %vm1446, %v1744, 0.0
        %v1777 = vsel %vm1446, %v1745, 0.0
        %v1778 = vadd.f32 %v1776, %v1777
        %v1779 = vsel %vm1446, %v1746, 0.0
        %v1780 = vadd.f32 %v1778, %v1779
        %v1781 = vsel %vm1446, %v1747, 0.0
        %v1782 = vadd.f32 %v1780, %v1781
        %v1783 = vsel %vm1446, %v1748, 0.0
        %v1784 = vadd.f32 %v1782, %v1783
        %v1785 = vsel %vm1446, %v1749, 0.0
        %v1786 = vadd.f32 %v1784, %v1785
        %v1787 = vsel %vm1446, %v1750, 0.0
        %v1788 = vadd.f32 %v1786, %v1787
        %v1789 = vsel %vm1446, %v1751, 0.0
        %v1790 = vadd.f32 %v1788, %v1789
        %v1791 = vsel %vm1446, %v1752, 0.0
        %v1792 = vadd.f32 %v1790, %v1791
        %v1793 = vsel %vm1446, %v1753, 0.0
        %v1794 = vadd.f32 %v1792, %v1793
        %v1795 = vsel %vm1446, %v1754, 0.0
        %v1796 = vadd.f32 %v1794, %v1795
        %v1797 = vsel %vm1446, %v1755, 0.0
        %v1798 = vadd.f32 %v1796, %v1797
        %v1799 = vsel %vm1446, %v1756, 0.0
        %v1800 = vadd.f32 %v1798, %v1799
        %v1801 = vsel %vm1446, %v1757, 0.0
        %v1802 = vadd.f32 %v1800, %v1801
        %v1803 = vsel %vm1446, %v1758, 0.0
        %v1804 = vadd.f32 %v1802, %v1803
        %v1805 = vsel %vm1446, %v1759, 0.0
        %v1806 = vadd.f32 %v1804, %v1805
        %v1807 = vsel %vm1446, %v1760, 0.0
        %v1808 = vadd.f32 %v1806, %v1807
        %v1809 = vsel %vm1446, %v1761, 0.0
        %v1810 = vadd.f32 %v1808, %v1809
        %v1811 = vsel %vm1446, %v1762, 0.0
        %v1812 = vadd.f32 %v1810, %v1811
        %v1813 = vsel %vm1446, %v1763, 0.0
        %v1814 = vadd.f32 %v1812, %v1813
        %v1815 = vsel %vm1446, %v1764, 0.0
        %v1816 = vadd.f32 %v1814, %v1815
        %v1817 = vsel %vm1446, %v1765, 0.0
        %v1818 = vadd.f32 %v1816, %v1817
        %v1819 = vsel %vm1446, %v1766, 0.0
        %v1820 = vadd.f32 %v1818, %v1819
        %v1821 = vsel %vm1446, %v1767, 0.0
        %v1822 = vadd.f32 %v1820, %v1821
        %v1823 = vsel %vm1446, %v1768, 0.0
        %v1824 = vadd.f32 %v1822, %v1823
        %v1825 = vsel %vm1446, %v1769, 0.0
        %v1826 = vadd.f32 %v1824, %v1825
        %v1827 = vsel %vm1446, %v1770, 0.0
        %v1828 = vadd.f32 %v1826, %v1827
        %v1829 = vsel %vm1446, %v1771, 0.0
        %v1830 = vadd.f32 %v1828, %v1829
        %v1831 = vsel %vm1446, %v1772, 0.0
        %v1832 = vadd.f32 %v1830, %v1831
        %v1833 = vsel %vm1446, %v1773, 0.0
        %v1834 = vadd.f32 %v1832, %v1833
        %v1835 = vsel %vm1446, %v1774, 0.0
        %v1836 = vadd.f32 %v1834, %v1835
        %v1837 = vsel %vm1446, %v1775, 0.0
        %v1838 = vadd.f32 %v1836, %v1837
        %v1839 = vrot.slane %v1838, 4
        %v1840 = vadd.f32 %v1838, %v1839
        %v1841 = vrot.slane %v1840, 2
        %v1842 = vadd.f32 %v1840, %v1841
        %v1843 = vrot.slane %v1842, 1
        %v1844 = vadd.f32 %v1842, %v1843
        %1845 = vst.msk [vmem:[%s370] sm:$0xff] %vm1446, %v1743
        %1846 = vst.msk [vmem:[%s381] sm:$0xff] %vm1446, %v1844
      $region36: #{generator_forward.15} parent=27 // pred_fallthru
        _
      %s1847 = smul.u32 32, %s23
      %p1848 = scmp.lt.s32.totalorder %s22, 3
      %s1849 = scalar_select %p1848, %s22, 3
      %p1850 = scmp.lt.s32.totalorder %s1847, 63
      %s1851 = scalar_select %p1850, %s1847, 63
      %p1852 = scmp.lt.s32.totalorder %s24, 0
      %s1853 = scalar_select %p1852, %s24, 0
      %s1854 = sadd.s32 %s1853, %s1851
      %s1855 = smul.addr %s1849, 64
      %s1856 = sadd.s32 %s1854, %s1855
      %s1857 = smul.addr %s1856, 4
      %s1858 = scalar_lea.vmem %s2, %s1857
      %p1859 = scmp.lt.s32.totalorder %s22, 3
      %s1860 = scalar_select %p1859, %s22, 3
      %p1861 = scmp.lt.s32.totalorder %s23, 1
      %s1862 = scalar_select %p1861, %s23, 1
      %p1863 = scmp.lt.s32.totalorder %s24, 0
      %s1864 = scalar_select %p1863, %s24, 0
      %s1865 = sadd.s32 %s1864, %s1862
      %s1866 = smul.addr %s1860, 2
      %s1867 = sadd.s32 %s1865, %s1866
      %s1868 = smul.addr %s1867, 8
      %s1869 = scalar_lea.vmem %s3, %s1868
      %p1870 = scmp.lt.s32.totalorder %s22, 3
      %s1871 = scalar_select %p1870, %s22, 3
      %p1872 = scmp.lt.s32.totalorder %s23, 1
      %s1873 = scalar_select %p1872, %s23, 1
      %p1874 = scmp.lt.s32.totalorder %s24, 0
      %s1875 = scalar_select %p1874, %s24, 0
      %s1876 = sadd.s32 %s1875, %s1873
      %s1877 = smul.addr %s1871, 2
      %s1878 = sadd.s32 %s1876, %s1877
      %s1879 = smul.addr %s1878, 8
      %s1880 = scalar_lea.vmem %s4, %s1879
      // Predicated region
      $region37: #{generator_forward.15} parent=27 // pred_check
        %p1881 = pneg %p124
      $region38: #{generator_forward.15} parent=27 // pred_check_branch
        %1883 = sbr.rel (%p1881) target = $region40
      $region39: #{generator_forward.15} parent=27 // pred_region
        %s1884 = smul.u32 32, %s23
      $region40: #{generator_forward.15} parent=27 // pred_fallthru
        _
      // Predicated region
      $region41: #{generator_forward.15} parent=27 // pred_check
        %p1885 = pneg %p154
      $region42: #{generator_forward.15} parent=27 // pred_check_branch
        %1887 = sbr.rel (%p1885) target = $region44
      $region43: #{generator_forward.15} parent=27 // pred_region
        _
      $region44: #{generator_forward.15} parent=27 // pred_fallthru
        _
      // Predicated region
      $region45: #{generator_forward.15} parent=27 // pred_check
        %p1888 = pneg %p184
      $region46: #{generator_forward.15} parent=27 // pred_check_branch
        %1890 = sbr.rel (%p1888) target = $region48
      $region47: #{generator_forward.15} parent=27 // pred_region
        _
      $region48: #{generator_forward.15} parent=27 // pred_fallthru
        _
    $region28: #{generator_forward.15} parent=5 // pred_fallthru
      _
    %p1891 = scmp.le.s32.totalorder 2, %s11
    // Predicated region
    $region49: #{generator_forward.15} parent=5 // pred_check
      %p1892 = pneg %p1891
    $region50: #{generator_forward.15} parent=5 // pred_check_branch
      %1894 = sbr.rel (%p1892) target = $region52
    $region51: #{generator_forward.15} parent=5 // pred_region
      %s1895 = ssub.s32 %s11, 2
      // Predicated region
      $region53: #{generator_forward.15} parent=51 // pred_check
        %p1896 = pneg %p130
      $region54: #{generator_forward.15} parent=51 // pred_check_branch
        %1898 = sbr.rel (%p1896) target = $region56
      $region55: #{generator_forward.15} parent=51 // pred_region
        %s1899 = smul.u32 32, %s27
        %p1900 = scmp.lt.s32.totalorder %s26, 3
        %s1901 = scalar_select %p1900, %s26, 3
        %p1902 = scmp.lt.s32.totalorder %s1899, 63
        %s1903 = scalar_select %p1902, %s1899, 63
        %p1904 = scmp.lt.s32.totalorder %s28, 0
        %s1905 = scalar_select %p1904, %s28, 0
        %s1906 = sadd.s32 %s1905, %s1903
        %s1907 = smul.addr %s1901, 64
        %s1908 = sadd.s32 %s1906, %s1907
        %s1909 = smul.addr %s1908, 4
        %s1910 = scalar_lea.vmem %s2, %s1909
      $region56: #{generator_forward.15} parent=51 // pred_fallthru
        _
      // Predicated region
      $region57: #{generator_forward.15} parent=51 // pred_check
        %p1911 = pneg %p160
      $region58: #{generator_forward.15} parent=51 // pred_check_branch
        %1913 = sbr.rel (%p1911) target = $region60
      $region59: #{generator_forward.15} parent=51 // pred_region
        %p1914 = scmp.lt.s32.totalorder %s26, 3
        %s1915 = scalar_select %p1914, %s26, 3
        %p1916 = scmp.lt.s32.totalorder %s27, 1
        %s1917 = scalar_select %p1916, %s27, 1
        %p1918 = scmp.lt.s32.totalorder %s28, 0
        %s1919 = scalar_select %p1918, %s28, 0
        %s1920 = sadd.s32 %s1919, %s1917
        %s1921 = smul.addr %s1915, 2
        %s1922 = sadd.s32 %s1920, %s1921
        %s1923 = smul.addr %s1922, 8
        %s1924 = scalar_lea.vmem %s3, %s1923
      $region60: #{generator_forward.15} parent=51 // pred_fallthru
        _
      // Predicated region
      $region61: #{generator_forward.15} parent=51 // pred_check
        %p1925 = pneg %p190
      $region62: #{generator_forward.15} parent=51 // pred_check_branch
        %1927 = sbr.rel (%p1925) target = $region64
      $region63: #{generator_forward.15} parent=51 // pred_region
        %p1928 = scmp.lt.s32.totalorder %s26, 3
        %s1929 = scalar_select %p1928, %s26, 3
        %p1930 = scmp.lt.s32.totalorder %s27, 1
        %s1931 = scalar_select %p1930, %s27, 1
        %p1932 = scmp.lt.s32.totalorder %s28, 0
        %s1933 = scalar_select %p1932, %s28, 0
        %s1934 = sadd.s32 %s1933, %s1931
        %s1935 = smul.addr %s1929, 2
        %s1936 = sadd.s32 %s1934, %s1935
        %s1937 = smul.addr %s1936, 8
        %s1938 = scalar_lea.vmem %s4, %s1937
      $region64: #{generator_forward.15} parent=51 // pred_fallthru
        _
    $region52: #{generator_forward.15} parent=5 // pred_fallthru
      _
  $region6: #{generator_forward.15} parent=0 // loop_footer
    %s15 = sadd.s32 1, %s11
  $region7: #{generator_forward.15} parent=0 // loop_footer_branch
    %10 = sbr.rel target = $region3
  $region8: #{generator_forward.15} parent=0 // loop_exit
    _

// kernel: generator_forward.16
$region0: #{generator_forward.16}
  #allocation0 [shape = 'u32[]', space=smem, size = 0x4, offset = 0x4, fixed_abs, tag = 'smem constant byte address 0x4 - core index']
  #allocation1 [shape = 'u32[144,128]{1,0:T(1,128)}', space=vmem, size = 0x12000, scoped, tag = 'internal scratch']
  %s0 = inlined_call_operand.vmem [shape: bf16[1024,128], index: 0, kind: input, shape index: {}]
  %s1 = inlined_call_operand.vmem [shape: f32[1,128], index: 1, kind: input, shape index: {}]
  %s2 = inlined_call_operand.vmem [shape: f32[1,128], index: 2, kind: input, shape index: {}]
  %s3 = inlined_call_operand.vmem [shape: bf16[1024,128], index: 3, kind: output, shape index: {}]
  %s4 = sld [smem:[#allocation0]]
  $region22: #{generator_forward.16} parent=0
    _
  %s6 = ssub.s32 1, %s4
  %s7 = scalar_select 0, %s6, %s4
  // Predicated region
  $region2: #{generator_forward.16} parent=0 // pred_check
    _
  $region3: #{generator_forward.16} parent=0 // pred_check_branch
    %9 = sbr.rel (0) target = $region5
  $region4: #{generator_forward.16} parent=0 // pred_region
    _
  $region5: #{generator_forward.16} parent=0 // pred_fallthru
    _
  // Predicated region
  $region6: #{generator_forward.16} parent=0 // pred_check
    _
  $region7: #{generator_forward.16} parent=0 // pred_check_branch
    %11 = sbr.rel (0) target = $region9
  $region8: #{generator_forward.16} parent=0 // pred_region
    _
  $region9: #{generator_forward.16} parent=0 // pred_fallthru
    _
  // Predicated region
  $region10: #{generator_forward.16} parent=0 // pred_check
    _
  $region11: #{generator_forward.16} parent=0 // pred_check_branch
    %13 = sbr.rel (0) target = $region13
  $region12: #{generator_forward.16} parent=0 // pred_region
    _
  $region13: #{generator_forward.16} parent=0 // pred_fallthru
    _
  %v14 = vld [vmem:[%s0] sm:$0xf]
  %v15 = vld [vmem:[%s0 + $0x4] sm:$0xf]
  %v16 = vld [vmem:[%s0 + $0x8] sm:$0xf]
  %v17 = vld [vmem:[%s0 + $0xc] sm:$0xf]
  %v18 = vld [vmem:[%s0 + $0x10] sm:$0xf]
  %v19 = vld [vmem:[%s0 + $0x14] sm:$0xf]
  %v20 = vld [vmem:[%s0 + $0x18] sm:$0xf]
  %v21 = vld [vmem:[%s0 + $0x1c] sm:$0xf]
  %v22 = vld [vmem:[%s0 + $0x20] sm:$0xf]
  %v23 = vld [vmem:[%s0 + $0x24] sm:$0xf]
  %v24 = vld [vmem:[%s0 + $0x28] sm:$0xf]
  %v25 = vld [vmem:[%s0 + $0x2c] sm:$0xf]
  %v26 = vld [vmem:[%s0 + $0x30] sm:$0xf]
  %v27 = vld [vmem:[%s0 + $0x34] sm:$0xf]
  %v28 = vld [vmem:[%s0 + $0x38] sm:$0xf]
  %v29 = vld [vmem:[%s0 + $0x3c] sm:$0xf]
  %v30 = vld [vmem:[%s0 + $0x40] sm:$0xf]
  %v31 = vld [vmem:[%s0 + $0x44] sm:$0xf]
  %v32 = vld [vmem:[%s0 + $0x48] sm:$0xf]
  %v33 = vld [vmem:[%s0 + $0x4c] sm:$0xf]
  %v34 = vld [vmem:[%s0 + $0x50] sm:$0xf]
  %v35 = vld [vmem:[%s0 + $0x54] sm:$0xf]
  %v36 = vld [vmem:[%s0 + $0x58] sm:$0xf]
  %v37 = vld [vmem:[%s0 + $0x5c] sm:$0xf]
  %v38 = vld [vmem:[%s0 + $0x60] sm:$0xf]
  %v39 = vld [vmem:[%s0 + $0x64] sm:$0xf]
  %v40 = vld [vmem:[%s0 + $0x68] sm:$0xf]
  %v41 = vld [vmem:[%s0 + $0x6c] sm:$0xf]
  %v42 = vld [vmem:[%s0 + $0x70] sm:$0xf]
  %v43 = vld [vmem:[%s0 + $0x74] sm:$0xf]
  %v44 = vld [vmem:[%s0 + $0x78] sm:$0xf]
  %v45 = vld [vmem:[%s0 + $0x7c] sm:$0xf]
  %v46 = vld [vmem:[%s0 + $0x80] sm:$0xf]
  %v47 = vld [vmem:[%s0 + $0x84] sm:$0xf]
  %v48 = vld [vmem:[%s0 + $0x88] sm:$0xf]
  %v49 = vld [vmem:[%s0 + $0x8c] sm:$0xf]
  %v50 = vld [vmem:[%s0 + $0x90] sm:$0xf]
  %v51 = vld [vmem:[%s0 + $0x94] sm:$0xf]
  %v52 = vld [vmem:[%s0 + $0x98] sm:$0xf]
  %v53 = vld [vmem:[%s0 + $0x9c] sm:$0xf]
  %v54 = vld [vmem:[%s0 + $0xa0] sm:$0xf]
  %v55 = vld [vmem:[%s0 + $0xa4] sm:$0xf]
  %v56 = vld [vmem:[%s0 + $0xa8] sm:$0xf]
  %v57 = vld [vmem:[%s0 + $0xac] sm:$0xf]
  %v58 = vld [vmem:[%s0 + $0xb0] sm:$0xf]
  %v59 = vld [vmem:[%s0 + $0xb4] sm:$0xf]
  %v60 = vld [vmem:[%s0 + $0xb8] sm:$0xf]
  %v61 = vld [vmem:[%s0 + $0xbc] sm:$0xf]
  %v62 = vld [vmem:[%s0 + $0xc0] sm:$0xf]
  %v63 = vld [vmem:[%s0 + $0xc4] sm:$0xf]
  %v64 = vld [vmem:[%s0 + $0xc8] sm:$0xf]
  %v65 = vld [vmem:[%s0 + $0xcc] sm:$0xf]
  %v66 = vld [vmem:[%s0 + $0xd0] sm:$0xf]
  %v67 = vld [vmem:[%s0 + $0xd4] sm:$0xf]
  %v68 = vld [vmem:[%s0 + $0xd8] sm:$0xf]
  %v69 = vld [vmem:[%s0 + $0xdc] sm:$0xf]
  %v70 = vld [vmem:[%s0 + $0xe0] sm:$0xf]
  %v71 = vld [vmem:[%s0 + $0xe4] sm:$0xf]
  %v72 = vld [vmem:[%s0 + $0xe8] sm:$0xf]
  %v73 = vld [vmem:[%s0 + $0xec] sm:$0xf]
  %v74 = vld [vmem:[%s0 + $0xf0] sm:$0xf]
  %v75 = vld [vmem:[%s0 + $0xf4] sm:$0xf]
  %v76 = vld [vmem:[%s0 + $0xf8] sm:$0xf]
  %v77 = vld [vmem:[%s0 + $0xfc] sm:$0xf]
  %v78 = vld [vmem:[%s0 + $0x100] sm:$0xf]
  %v79 = vld [vmem:[%s0 + $0x104] sm:$0xf]
  %v80 = vld [vmem:[%s0 + $0x108] sm:$0xf]
  %v81 = vld [vmem:[%s0 + $0x10c] sm:$0xf]
  %v82 = vld [vmem:[%s0 + $0x110] sm:$0xf]
  %v83 = vld [vmem:[%s0 + $0x114] sm:$0xf]
  %v84 = vld [vmem:[%s0 + $0x118] sm:$0xf]
  %v85 = vld [vmem:[%s0 + $0x11c] sm:$0xf]
  %v86 = vld [vmem:[%s0 + $0x120] sm:$0xf]
  %v87 = vld [vmem:[%s0 + $0x124] sm:$0xf]
  %v88 = vld [vmem:[%s0 + $0x128] sm:$0xf]
  %v89 = vld [vmem:[%s0 + $0x12c] sm:$0xf]
  %v90 = vld [vmem:[%s0 + $0x130] sm:$0xf]
  %v91 = vld [vmem:[%s0 + $0x134] sm:$0xf]
  %v92 = vld [vmem:[%s0 + $0x138] sm:$0xf]
  %v93 = vld [vmem:[%s0 + $0x13c] sm:$0xf]
  %v94 = vld [vmem:[%s0 + $0x140] sm:$0xf]
  %v95 = vld [vmem:[%s0 + $0x144] sm:$0xf]
  %v96 = vld [vmem:[%s0 + $0x148] sm:$0xf]
  %v97 = vld [vmem:[%s0 + $0x14c] sm:$0xf]
  %v98 = vld [vmem:[%s0 + $0x150] sm:$0xf]
  %v99 = vld [vmem:[%s0 + $0x154] sm:$0xf]
  %v100 = vld [vmem:[%s0 + $0x158] sm:$0xf]
  %v101 = vld [vmem:[%s0 + $0x15c] sm:$0xf]
  %v102 = vld [vmem:[%s0 + $0x160] sm:$0xf]
  %v103 = vld [vmem:[%s0 + $0x164] sm:$0xf]
  %v104 = vld [vmem:[%s0 + $0x168] sm:$0xf]
  %v105 = vld [vmem:[%s0 + $0x16c] sm:$0xf]
  %v106 = vld [vmem:[%s0 + $0x170] sm:$0xf]
  %v107 = vld [vmem:[%s0 + $0x174] sm:$0xf]
  %v108 = vld [vmem:[%s0 + $0x178] sm:$0xf]
  %v109 = vld [vmem:[%s0 + $0x17c] sm:$0xf]
  %v110 = vld [vmem:[%s0 + $0x180] sm:$0xf]
  %v111 = vld [vmem:[%s0 + $0x184] sm:$0xf]
  %v112 = vld [vmem:[%s0 + $0x188] sm:$0xf]
  %v113 = vld [vmem:[%s0 + $0x18c] sm:$0xf]
  %v114 = vld [vmem:[%s0 + $0x190] sm:$0xf]
  %v115 = vld [vmem:[%s0 + $0x194] sm:$0xf]
  %v116 = vld [vmem:[%s0 + $0x198] sm:$0xf]
  %v117 = vld [vmem:[%s0 + $0x19c] sm:$0xf]
  %v118 = vld [vmem:[%s0 + $0x1a0] sm:$0xf]
  %v119 = vld [vmem:[%s0 + $0x1a4] sm:$0xf]
  %v120 = vld [vmem:[%s0 + $0x1a8] sm:$0xf]
  %v121 = vld [vmem:[%s0 + $0x1ac] sm:$0xf]
  %v122 = vld [vmem:[%s0 + $0x1b0] sm:$0xf]
  %v123 = vld [vmem:[%s0 + $0x1b4] sm:$0xf]
  %v124 = vld [vmem:[%s0 + $0x1b8] sm:$0xf]
  %v125 = vld [vmem:[%s0 + $0x1bc] sm:$0xf]
  %v126 = vld [vmem:[%s0 + $0x1c0] sm:$0xf]
  %v127 = vld [vmem:[%s0 + $0x1c4] sm:$0xf]
  %v128 = vld [vmem:[%s0 + $0x1c8] sm:$0xf]
  %v129 = vld [vmem:[%s0 + $0x1cc] sm:$0xf]
  %v130 = vld [vmem:[%s0 + $0x1d0] sm:$0xf]
  %v131 = vld [vmem:[%s0 + $0x1d4] sm:$0xf]
  %v132 = vld [vmem:[%s0 + $0x1d8] sm:$0xf]
  %v133 = vld [vmem:[%s0 + $0x1dc] sm:$0xf]
  %v134 = vld [vmem:[%s0 + $0x1e0] sm:$0xf]
  %v135 = vld [vmem:[%s0 + $0x1e4] sm:$0xf]
  %v136 = vld [vmem:[%s0 + $0x1e8] sm:$0xf]
  %v137 = vld [vmem:[%s0 + $0x1ec] sm:$0xf]
  %v138 = vld [vmem:[%s0 + $0x1f0] sm:$0xf]
  %v139 = vld [vmem:[%s0 + $0x1f4] sm:$0xf]
  %v140 = vld [vmem:[%s0 + $0x1f8] sm:$0xf]
  %v141 = vld [vmem:[%s0 + $0x1fc] sm:$0xf]
  %v142 = vunpack.c.l.bf16 %v14
  %v143 = vunpack.c.l.bf16 %v15
  %v144 = vunpack.c.l.bf16 %v16
  %v145 = vunpack.c.l.bf16 %v17
  %v146 = vunpack.c.l.bf16 %v18
  %v147 = vunpack.c.l.bf16 %v19
  %v148 = vunpack.c.l.bf16 %v20
  %v149 = vunpack.c.l.bf16 %v21
  %v150 = vunpack.c.l.bf16 %v22
  %v151 = vunpack.c.l.bf16 %v23
  %v152 = vunpack.c.l.bf16 %v24
  %v153 = vunpack.c.l.bf16 %v25
  %v154 = vunpack.c.l.bf16 %v26
  %v155 = vunpack.c.l.bf16 %v27
  %v156 = vunpack.c.l.bf16 %v28
  %v157 = vunpack.c.l.bf16 %v29
  %v158 = vunpack.c.l.bf16 %v30
  %v159 = vunpack.c.l.bf16 %v31
  %v160 = vunpack.c.l.bf16 %v32
  %v161 = vunpack.c.l.bf16 %v33
  %v162 = vunpack.c.l.bf16 %v34
  %v163 = vunpack.c.l.bf16 %v35
  %v164 = vunpack.c.l.bf16 %v36
  %v165 = vunpack.c.l.bf16 %v37
  %v166 = vunpack.c.l.bf16 %v38
  %v167 = vunpack.c.l.bf16 %v39
  %v168 = vunpack.c.l.bf16 %v40
  %v169 = vunpack.c.l.bf16 %v41
  %v170 = vunpack.c.l.bf16 %v42
  %v171 = vunpack.c.l.bf16 %v43
  %v172 = vunpack.c.l.bf16 %v44
  %v173 = vunpack.c.l.bf16 %v45
  %v174 = vunpack.c.l.bf16 %v46
  %v175 = vunpack.c.l.bf16 %v47
  %v176 = vunpack.c.l.bf16 %v48
  %v177 = vunpack.c.l.bf16 %v49
  %v178 = vunpack.c.l.bf16 %v50
  %v179 = vunpack.c.l.bf16 %v51
  %v180 = vunpack.c.l.bf16 %v52
  %v181 = vunpack.c.l.bf16 %v53
  %v182 = vunpack.c.l.bf16 %v54
  %v183 = vunpack.c.l.bf16 %v55
  %v184 = vunpack.c.l.bf16 %v56
  %v185 = vunpack.c.l.bf16 %v57
  %v186 = vunpack.c.l.bf16 %v58
  %v187 = vunpack.c.l.bf16 %v59
  %v188 = vunpack.c.l.bf16 %v60
  %v189 = vunpack.c.l.bf16 %v61
  %v190 = vunpack.c.l.bf16 %v62
  %v191 = vunpack.c.l.bf16 %v63
  %v192 = vunpack.c.l.bf16 %v64
  %v193 = vunpack.c.l.bf16 %v65
  %v194 = vunpack.c.l.bf16 %v66
  %v195 = vunpack.c.l.bf16 %v67
  %v196 = vunpack.c.l.bf16 %v68
  %v197 = vunpack.c.l.bf16 %v69
  %v198 = vunpack.c.l.bf16 %v70
  %v199 = vunpack.c.l.bf16 %v71
  %v200 = vunpack.c.l.bf16 %v72
  %v201 = vunpack.c.l.bf16 %v73
  %v202 = vunpack.c.l.bf16 %v74
  %v203 = vunpack.c.l.bf16 %v75
  %v204 = vunpack.c.l.bf16 %v76
  %v205 = vunpack.c.l.bf16 %v77
  %v206 = vunpack.c.l.bf16 %v78
  %v207 = vunpack.c.l.bf16 %v79
  %v208 = vunpack.c.l.bf16 %v80
  %v209 = vunpack.c.l.bf16 %v81
  %v210 = vunpack.c.l.bf16 %v82
  %v211 = vunpack.c.l.bf16 %v83
  %v212 = vunpack.c.l.bf16 %v84
  %v213 = vunpack.c.l.bf16 %v85
  %v214 = vunpack.c.l.bf16 %v86
  %v215 = vunpack.c.l.bf16 %v87
  %v216 = vunpack.c.l.bf16 %v88
  %v217 = vunpack.c.l.bf16 %v89
  %v218 = vunpack.c.l.bf16 %v90
  %v219 = vunpack.c.l.bf16 %v91
  %v220 = vunpack.c.l.bf16 %v92
  %v221 = vunpack.c.l.bf16 %v93
  %v222 = vunpack.c.l.bf16 %v94
  %v223 = vunpack.c.l.bf16 %v95
  %v224 = vunpack.c.l.bf16 %v96
  %v225 = vunpack.c.l.bf16 %v97
  %v226 = vunpack.c.l.bf16 %v98
  %v227 = vunpack.c.l.bf16 %v99
  %v228 = vunpack.c.l.bf16 %v100
  %v229 = vunpack.c.l.bf16 %v101
  %v230 = vunpack.c.l.bf16 %v102
  %v231 = vunpack.c.l.bf16 %v103
  %v232 = vunpack.c.l.bf16 %v104
  %v233 = vunpack.c.l.bf16 %v105
  %v234 = vunpack.c.l.bf16 %v106
  %v235 = vunpack.c.l.bf16 %v107
  %v236 = vunpack.c.l.bf16 %v108
  %v237 = vunpack.c.l.bf16 %v109
  %v238 = vunpack.c.l.bf16 %v110
  %v239 = vunpack.c.l.bf16 %v111
  %v240 = vunpack.c.l.bf16 %v112
  %v241 = vunpack.c.l.bf16 %v113
  %v242 = vunpack.c.l.bf16 %v114
  %v243 = vunpack.c.l.bf16 %v115
  %v244 = vunpack.c.l.bf16 %v116
  %v245 = vunpack.c.l.bf16 %v117
  %v246 = vunpack.c.l.bf16 %v118
  %v247 = vunpack.c.l.bf16 %v119
  %v248 = vunpack.c.l.bf16 %v120
  %v249 = vunpack.c.l.bf16 %v121
  %v250 = vunpack.c.l.bf16 %v122
  %v251 = vunpack.c.l.bf16 %v123
  %v252 = vunpack.c.l.bf16 %v124
  %v253 = vunpack.c.l.bf16 %v125
  %v254 = vunpack.c.l.bf16 %v126
  %v255 = vunpack.c.l.bf16 %v127
  %v256 = vunpack.c.l.bf16 %v128
  %v257 = vunpack.c.l.bf16 %v129
  %v258 = vunpack.c.l.bf16 %v130
  %v259 = vunpack.c.l.bf16 %v131
  %v260 = vunpack.c.l.bf16 %v132
  %v261 = vunpack.c.l.bf16 %v133
  %v262 = vunpack.c.l.bf16 %v134
  %v263 = vunpack.c.l.bf16 %v135
  %v264 = vunpack.c.l.bf16 %v136
  %v265 = vunpack.c.l.bf16 %v137
  %v266 = vunpack.c.l.bf16 %v138
  %v267 = vunpack.c.l.bf16 %v139
  %v268 = vunpack.c.l.bf16 %v140
  %v269 = vunpack.c.l.bf16 %v141
  %v270 = vld [vmem:[%s1] sm:$0x1]
  %v272 = vlaneseq
  %v273 = vshrl.u32 %v272, 7
  %v274 = vsub.s32 0, %v273
  %v275 = vrot.slane %v270, %v274
  %v277 = vmul.f32 %v142, %v275
  %v278 = vmul.f32 %v143, %v275
  %v279 = vmul.f32 %v144, %v275
  %v280 = vmul.f32 %v145, %v275
  %v281 = vmul.f32 %v146, %v275
  %v282 = vmul.f32 %v147, %v275
  %v283 = vmul.f32 %v148, %v275
  %v284 = vmul.f32 %v149, %v275
  %v285 = vmul.f32 %v150, %v275
  %v286 = vmul.f32 %v151, %v275
  %v287 = vmul.f32 %v152, %v275
  %v288 = vmul.f32 %v153, %v275
  %v289 = vmul.f32 %v154, %v275
  %v290 = vmul.f32 %v155, %v275
  %v291 = vmul.f32 %v156, %v275
  %v292 = vmul.f32 %v157, %v275
  %v293 = vmul.f32 %v158, %v275
  %v294 = vmul.f32 %v159, %v275
  %v295 = vmul.f32 %v160, %v275
  %v296 = vmul.f32 %v161, %v275
  %v297 = vmul.f32 %v162, %v275
  %v298 = vmul.f32 %v163, %v275
  %v299 = vmul.f32 %v164, %v275
  %v300 = vmul.f32 %v165, %v275
  %v301 = vmul.f32 %v166, %v275
  %v302 = vmul.f32 %v167, %v275
  %v303 = vmul.f32 %v168, %v275
  %v304 = vmul.f32 %v169, %v275
  %v305 = vmul.f32 %v170, %v275
  %v306 = vmul.f32 %v171, %v275
  %v307 = vmul.f32 %v172, %v275
  %v308 = vmul.f32 %v173, %v275
  %v309 = vmul.f32 %v174, %v275
  %v310 = vmul.f32 %v175, %v275
  %v311 = vmul.f32 %v176, %v275
  %v312 = vmul.f32 %v177, %v275
  %v313 = vmul.f32 %v178, %v275
  %v314 = vmul.f32 %v179, %v275
  %v315 = vmul.f32 %v180, %v275
  %v316 = vmul.f32 %v181, %v275
  %v317 = vmul.f32 %v182, %v275
  %v318 = vmul.f32 %v183, %v275
  %v319 = vmul.f32 %v184, %v275
  %v320 = vmul.f32 %v185, %v275
  %v321 = vmul.f32 %v186, %v275
  %v322 = vmul.f32 %v187, %v275
  %v323 = vmul.f32 %v188, %v275
  %v324 = vmul.f32 %v189, %v275
  %v325 = vmul.f32 %v190, %v275
  %v326 = vmul.f32 %v191, %v275
  %v327 = vmul.f32 %v192, %v275
  %v328 = vmul.f32 %v193, %v275
  %v329 = vmul.f32 %v194, %v275
  %v330 = vmul.f32 %v195, %v275
  %v331 = vmul.f32 %v196, %v275
  %v332 = vmul.f32 %v197, %v275
  %v333 = vmul.f32 %v198, %v275
  %v334 = vmul.f32 %v199, %v275
  %v335 = vmul.f32 %v200, %v275
  %v336 = vmul.f32 %v201, %v275
  %v337 = vmul.f32 %v202, %v275
  %v338 = vmul.f32 %v203, %v275
  %v339 = vmul.f32 %v204, %v275
  %v340 = vmul.f32 %v205, %v275
  %v341 = vmul.f32 %v206, %v275
  %v342 = vmul.f32 %v207, %v275
  %v343 = vmul.f32 %v208, %v275
  %v344 = vmul.f32 %v209, %v275
  %v345 = vmul.f32 %v210, %v275
  %v346 = vmul.f32 %v211, %v275
  %v347 = vmul.f32 %v212, %v275
  %v348 = vmul.f32 %v213, %v275
  %v349 = vmul.f32 %v214, %v275
  %v350 = vmul.f32 %v215, %v275
  %v351 = vmul.f32 %v216, %v275
  %v352 = vmul.f32 %v217, %v275
  %v353 = vmul.f32 %v218, %v275
  %v354 = vmul.f32 %v219, %v275
  %v355 = vmul.f32 %v220, %v275
  %v356 = vmul.f32 %v221, %v275
  %v357 = vmul.f32 %v222, %v275
  %v358 = vmul.f32 %v223, %v275
  %v359 = vmul.f32 %v224, %v275
  %v360 = vmul.f32 %v225, %v275
  %v361 = vmul.f32 %v226, %v275
  %v362 = vmul.f32 %v227, %v275
  %v363 = vmul.f32 %v228, %v275
  %v364 = vmul.f32 %v229, %v275
  %v365 = vmul.f32 %v230, %v275
  %v366 = vmul.f32 %v231, %v275
  %v367 = vmul.f32 %v232, %v275
  %v368 = vmul.f32 %v233, %v275
  %v369 = vmul.f32 %v234, %v275
  %v370 = vmul.f32 %v235, %v275
  %v371 = vmul.f32 %v236, %v275
  %v372 = vmul.f32 %v237, %v275
  %v373 = vmul.f32 %v238, %v275
  %v374 = vmul.f32 %v239, %v275
  %v375 = vmul.f32 %v240, %v275
  %v376 = vmul.f32 %v241, %v275
  %v377 = vmul.f32 %v242, %v275
  %v378 = vmul.f32 %v243, %v275
  %v379 = vmul.f32 %v244, %v275
  %v380 = vmul.f32 %v245, %v275
  %v381 = vmul.f32 %v246, %v275
  %v382 = vmul.f32 %v247, %v275
  %v383 = vmul.f32 %v248, %v275
  %v384 = vmul.f32 %v249, %v275
  %v385 = vmul.f32 %v250, %v275
  %v386 = vmul.f32 %v251, %v275
  %v387 = vmul.f32 %v252, %v275
  %v388 = vmul.f32 %v253, %v275
  %v389 = vmul.f32 %v254, %v275
  %v390 = vmul.f32 %v255, %v275
  %v391 = vmul.f32 %v256, %v275
  %v392 = vmul.f32 %v257, %v275
  %v393 = vmul.f32 %v258, %v275
  %v394 = vmul.f32 %v259, %v275
  %v395 = vmul.f32 %v260, %v275
  %v396 = vmul.f32 %v261, %v275
  %v397 = vmul.f32 %v262, %v275
  %v398 = vmul.f32 %v263, %v275
  %v399 = vmul.f32 %v264, %v275
  %v400 = vmul.f32 %v265, %v275
  %v401 = vmul.f32 %v266, %v275
  %v402 = vmul.f32 %v267, %v275
  %v403 = vmul.f32 %v268, %v275
  %v404 = vmul.f32 %v269, %v275
  %v405 = vld [vmem:[%s2] sm:$0x1]
  %v407 = vlaneseq
  %v408 = vshrl.u32 %v407, 7
  %v409 = vsub.s32 0, %v408
  %v410 = vrot.slane %v405, %v409
  %v412 = vadd.f32 %v277, %v410
  %v413 = vadd.f32 %v278, %v410
  %v414 = vadd.f32 %v279, %v410
  %v415 = vadd.f32 %v280, %v410
  %v416 = vadd.f32 %v281, %v410
  %v417 = vadd.f32 %v282, %v410
  %v418 = vadd.f32 %v283, %v410
  %v419 = vadd.f32 %v284, %v410
  %v420 = vadd.f32 %v285, %v410
  %v421 = vadd.f32 %v286, %v410
  %v422 = vadd.f32 %v287, %v410
  %v423 = vadd.f32 %v288, %v410
  %v424 = vadd.f32 %v289, %v410
  %v425 = vadd.f32 %v290, %v410
  %v426 = vadd.f32 %v291, %v410
  %v427 = vadd.f32 %v292, %v410
  %v428 = vadd.f32 %v293, %v410
  %v429 = vadd.f32 %v294, %v410
  %v430 = vadd.f32 %v295, %v410
  %v431 = vadd.f32 %v296, %v410
  %v432 = vadd.f32 %v297, %v410
  %v433 = vadd.f32 %v298, %v410
  %v434 = vadd.f32 %v299, %v410
  %v435 = vadd.f32 %v300, %v410
  %v436 = vadd.f32 %v301, %v410
  %v437 = vadd.f32 %v302, %v410
  %v438 = vadd.f32 %v303, %v410
  %v439 = vadd.f32 %v304, %v410
  %v440 = vadd.f32 %v305, %v410
  %v441 = vadd.f32 %v306, %v410
  %v442 = vadd.f32 %v307, %v410
  %v443 = vadd.f32 %v308, %v410
  %v444 = vadd.f32 %v309, %v410
  %v445 = vadd.f32 %v310, %v410
  %v446 = vadd.f32 %v311, %v410
  %v447 = vadd.f32 %v312, %v410
  %v448 = vadd.f32 %v313, %v410
  %v449 = vadd.f32 %v314, %v410
  %v450 = vadd.f32 %v315, %v410
  %v451 = vadd.f32 %v316, %v410
  %v452 = vadd.f32 %v317, %v410
  %v453 = vadd.f32 %v318, %v410
  %v454 = vadd.f32 %v319, %v410
  %v455 = vadd.f32 %v320, %v410
  %v456 = vadd.f32 %v321, %v410
  %v457 = vadd.f32 %v322, %v410
  %v458 = vadd.f32 %v323, %v410
  %v459 = vadd.f32 %v324, %v410
  %v460 = vadd.f32 %v325, %v410
  %v461 = vadd.f32 %v326, %v410
  %v462 = vadd.f32 %v327, %v410
  %v463 = vadd.f32 %v328, %v410
  %v464 = vadd.f32 %v329, %v410
  %v465 = vadd.f32 %v330, %v410
  %v466 = vadd.f32 %v331, %v410
  %v467 = vadd.f32 %v332, %v410
  %v468 = vadd.f32 %v333, %v410
  %v469 = vadd.f32 %v334, %v410
  %v470 = vadd.f32 %v335, %v410
  %v471 = vadd.f32 %v336, %v410
  %v472 = vadd.f32 %v337, %v410
  %v473 = vadd.f32 %v338, %v410
  %v474 = vadd.f32 %v339, %v410
  %v475 = vadd.f32 %v340, %v410
  %v476 = vadd.f32 %v341, %v410
  %v477 = vadd.f32 %v342, %v410
  %v478 = vadd.f32 %v343, %v410
  %v479 = vadd.f32 %v344, %v410
  %v480 = vadd.f32 %v345, %v410
  %v481 = vadd.f32 %v346, %v410
  %v482 = vadd.f32 %v347, %v410
  %v483 = vadd.f32 %v348, %v410
  %v484 = vadd.f32 %v349, %v410
  %v485 = vadd.f32 %v350, %v410
  %v486 = vadd.f32 %v351, %v410
  %v487 = vadd.f32 %v352, %v410
  %v488 = vadd.f32 %v353, %v410
  %v489 = vadd.f32 %v354, %v410
  %v490 = vadd.f32 %v355, %v410
  %v491 = vadd.f32 %v356, %v410
  %v492 = vadd.f32 %v357, %v410
  %v493 = vadd.f32 %v358, %v410
  %v494 = vadd.f32 %v359, %v410
  %v495 = vadd.f32 %v360, %v410
  %v496 = vadd.f32 %v361, %v410
  %v497 = vadd.f32 %v362, %v410
  %v498 = vadd.f32 %v363, %v410
  %v499 = vadd.f32 %v364, %v410
  %v500 = vadd.f32 %v365, %v410
  %v501 = vadd.f32 %v366, %v410
  %v502 = vadd.f32 %v367, %v410
  %v503 = vadd.f32 %v368, %v410
  %v504 = vadd.f32 %v369, %v410
  %v505 = vadd.f32 %v370, %v410
  %v506 = vadd.f32 %v371, %v410
  %v507 = vadd.f32 %v372, %v410
  %v508 = vadd.f32 %v373, %v410
  %v509 = vadd.f32 %v374, %v410
  %v510 = vadd.f32 %v375, %v410
  %v511 = vadd.f32 %v376, %v410
  %v512 = vadd.f32 %v377, %v410
  %v513 = vadd.f32 %v378, %v410
  %v514 = vadd.f32 %v379, %v410
  %v515 = vadd.f32 %v380, %v410
  %v516 = vadd.f32 %v381, %v410
  %v517 = vadd.f32 %v382, %v410
  %v518 = vadd.f32 %v383, %v410
  %v519 = vadd.f32 %v384, %v410
  %v520 = vadd.f32 %v385, %v410
  %v521 = vadd.f32 %v386, %v410
  %v522 = vadd.f32 %v387, %v410
  %v523 = vadd.f32 %v388, %v410
  %v524 = vadd.f32 %v389, %v410
  %v525 = vadd.f32 %v390, %v410
  %v526 = vadd.f32 %v391, %v410
  %v527 = vadd.f32 %v392, %v410
  %v528 = vadd.f32 %v393, %v410
  %v529 = vadd.f32 %v394, %v410
  %v530 = vadd.f32 %v395, %v410
  %v531 = vadd.f32 %v396, %v410
  %v532 = vadd.f32 %v397, %v410
  %v533 = vadd.f32 %v398, %v410
  %v534 = vadd.f32 %v399, %v410
  %v535 = vadd.f32 %v400, %v410
  %v536 = vadd.f32 %v401, %v410
  %v537 = vadd.f32 %v402, %v410
  %v538 = vadd.f32 %v403, %v410
  %v539 = vadd.f32 %v404, %v410
  %v540 = vmax.f32 %v412, 0.0
  %v541 = vmax.f32 %v413, 0.0
  %v542 = vmax.f32 %v414, 0.0
  %v543 = vmax.f32 %v415, 0.0
  %v544 = vmax.f32 %v416, 0.0
  %v545 = vmax.f32 %v417, 0.0
  %v546 = vmax.f32 %v418, 0.0
  %v547 = vmax.f32 %v419, 0.0
  %v548 = vmax.f32 %v420, 0.0
  %v549 = vmax.f32 %v421, 0.0
  %v550 = vmax.f32 %v422, 0.0
  %v551 = vmax.f32 %v423, 0.0
  %v552 = vmax.f32 %v424, 0.0
  %v553 = vmax.f32 %v425, 0.0
  %v554 = vmax.f32 %v426, 0.0
  %v555 = vmax.f32 %v427, 0.0
  %v556 = vmax.f32 %v428, 0.0
  %v557 = vmax.f32 %v429, 0.0
  %v558 = vmax.f32 %v430, 0.0
  %v559 = vmax.f32 %v431, 0.0
  %v560 = vmax.f32 %v432, 0.0
  %v561 = vmax.f32 %v433, 0.0
  %v562 = vmax.f32 %v434, 0.0
  %v563 = vmax.f32 %v435, 0.0
  %v564 = vmax.f32 %v436, 0.0
  %v565 = vmax.f32 %v437, 0.0
  %v566 = vmax.f32 %v438, 0.0
  %v567 = vmax.f32 %v439, 0.0
  %v568 = vmax.f32 %v440, 0.0
  %v569 = vmax.f32 %v441, 0.0
  %v570 = vmax.f32 %v442, 0.0
  %v571 = vmax.f32 %v443, 0.0
  %v572 = vmax.f32 %v444, 0.0
  %v573 = vmax.f32 %v445, 0.0
  %v574 = vmax.f32 %v446, 0.0
  %v575 = vmax.f32 %v447, 0.0
  %v576 = vmax.f32 %v448, 0.0
  %v577 = vmax.f32 %v449, 0.0
  %v578 = vmax.f32 %v450, 0.0
  %v579 = vmax.f32 %v451, 0.0
  %v580 = vmax.f32 %v452, 0.0
  %v581 = vmax.f32 %v453, 0.0
  %v582 = vmax.f32 %v454, 0.0
  %v583 = vmax.f32 %v455, 0.0
  %v584 = vmax.f32 %v456, 0.0
  %v585 = vmax.f32 %v457, 0.0
  %v586 = vmax.f32 %v458, 0.0
  %v587 = vmax.f32 %v459, 0.0
  %v588 = vmax.f32 %v460, 0.0
  %v589 = vmax.f32 %v461, 0.0
  %v590 = vmax.f32 %v462, 0.0
  %v591 = vmax.f32 %v463, 0.0
  %v592 = vmax.f32 %v464, 0.0
  %v593 = vmax.f32 %v465, 0.0
  %v594 = vmax.f32 %v466, 0.0
  %v595 = vmax.f32 %v467, 0.0
  %v596 = vmax.f32 %v468, 0.0
  %v597 = vmax.f32 %v469, 0.0
  %v598 = vmax.f32 %v470, 0.0
  %v599 = vmax.f32 %v471, 0.0
  %v600 = vmax.f32 %v472, 0.0
  %v601 = vmax.f32 %v473, 0.0
  %v602 = vmax.f32 %v474, 0.0
  %v603 = vmax.f32 %v475, 0.0
  %v604 = vmax.f32 %v476, 0.0
  %v605 = vmax.f32 %v477, 0.0
  %v606 = vmax.f32 %v478, 0.0
  %v607 = vmax.f32 %v479, 0.0
  %v608 = vmax.f32 %v480, 0.0
  %v609 = vmax.f32 %v481, 0.0
  %v610 = vmax.f32 %v482, 0.0
  %v611 = vmax.f32 %v483, 0.0
  %v612 = vmax.f32 %v484, 0.0
  %v613 = vmax.f32 %v485, 0.0
  %v614 = vmax.f32 %v486, 0.0
  %v615 = vmax.f32 %v487, 0.0
  %v616 = vmax.f32 %v488, 0.0
  %v617 = vmax.f32 %v489, 0.0
  %v618 = vmax.f32 %v490, 0.0
  %v619 = vmax.f32 %v491, 0.0
  %v620 = vmax.f32 %v492, 0.0
  %v621 = vmax.f32 %v493, 0.0
  %v622 = vmax.f32 %v494, 0.0
  %v623 = vmax.f32 %v495, 0.0
  %v624 = vmax.f32 %v496, 0.0
  %v625 = vmax.f32 %v497, 0.0
  %v626 = vmax.f32 %v498, 0.0
  %v627 = vmax.f32 %v499, 0.0
  %v628 = vmax.f32 %v500, 0.0
  %v629 = vmax.f32 %v501, 0.0
  %v630 = vmax.f32 %v502, 0.0
  %v631 = vmax.f32 %v503, 0.0
  %v632 = vmax.f32 %v504, 0.0
  %v633 = vmax.f32 %v505, 0.0
  %v634 = vmax.f32 %v506, 0.0
  %v635 = vmax.f32 %v507, 0.0
  %v636 = vmax.f32 %v508, 0.0
  %v637 = vmax.f32 %v509, 0.0
  %v638 = vmax.f32 %v510, 0.0
  %v639 = vmax.f32 %v511, 0.0
  %v640 = vmax.f32 %v512, 0.0
  %v641 = vmax.f32 %v513, 0.0
  %v642 = vmax.f32 %v514, 0.0
  %v643 = vmax.f32 %v515, 0.0
  %v644 = vmax.f32 %v516, 0.0
  %v645 = vmax.f32 %v517, 0.0
  %v646 = vmax.f32 %v518, 0.0
  %v647 = vmax.f32 %v519, 0.0
  %v648 = vmax.f32 %v520, 0.0
  %v649 = vmax.f32 %v521, 0.0
  %v650 = vmax.f32 %v522, 0.0
  %v651 = vmax.f32 %v523, 0.0
  %v652 = vmax.f32 %v524, 0.0
  %v653 = vmax.f32 %v525, 0.0
  %v654 = vmax.f32 %v526, 0.0
  %v655 = vmax.f32 %v527, 0.0
  %v656 = vmax.f32 %v528, 0.0
  %v657 = vmax.f32 %v529, 0.0
  %v658 = vmax.f32 %v530, 0.0
  %v659 = vmax.f32 %v531, 0.0
  %v660 = vmax.f32 %v532, 0.0
  %v661 = vmax.f32 %v533, 0.0
  %v662 = vmax.f32 %v534, 0.0
  %v663 = vmax.f32 %v535, 0.0
  %v664 = vmax.f32 %v536, 0.0
  %v665 = vmax.f32 %v537, 0.0
  %v666 = vmax.f32 %v538, 0.0
  %v667 = vmax.f32 %v539, 0.0
  %v668 = vpack.c.bf16 %v541, %v540
  %v669 = vpack.c.bf16 %v543, %v542
  %v670 = vpack.c.bf16 %v545, %v544
  %v671 = vpack.c.bf16 %v547, %v546
  %v672 = vpack.c.bf16 %v549, %v548
  %v673 = vpack.c.bf16 %v551, %v550
  %v674 = vpack.c.bf16 %v553, %v552
  %v675 = vpack.c.bf16 %v555, %v554
  %v676 = vpack.c.bf16 %v557, %v556
  %v677 = vpack.c.bf16 %v559, %v558
  %v678 = vpack.c.bf16 %v561, %v560
  %v679 = vpack.c.bf16 %v563, %v562
  %v680 = vpack.c.bf16 %v565, %v564
  %v681 = vpack.c.bf16 %v567, %v566
  %v682 = vpack.c.bf16 %v569, %v568
  %v683 = vpack.c.bf16 %v571, %v570
  %v684 = vpack.c.bf16 %v573, %v572
  %v685 = vpack.c.bf16 %v575, %v574
  %v686 = vpack.c.bf16 %v577, %v576
  %v687 = vpack.c.bf16 %v579, %v578
  %v688 = vpack.c.bf16 %v581, %v580
  %v689 = vpack.c.bf16 %v583, %v582
  %v690 = vpack.c.bf16 %v585, %v584
  %v691 = vpack.c.bf16 %v587, %v586
  %v692 = vpack.c.bf16 %v589, %v588
  %v693 = vpack.c.bf16 %v591, %v590
  %v694 = vpack.c.bf16 %v593, %v592
  %v695 = vpack.c.bf16 %v595, %v594
  %v696 = vpack.c.bf16 %v597, %v596
  %v697 = vpack.c.bf16 %v599, %v598
  %v698 = vpack.c.bf16 %v601, %v600
  %v699 = vpack.c.bf16 %v603, %v602
  %v700 = vpack.c.bf16 %v605, %v604
  %v701 = vpack.c.bf16 %v607, %v606
  %v702 = vpack.c.bf16 %v609, %v608
  %v703 = vpack.c.bf16 %v611, %v610
  %v704 = vpack.c.bf16 %v613, %v612
  %v705 = vpack.c.bf16 %v615, %v614
  %v706 = vpack.c.bf16 %v617, %v616
  %v707 = vpack.c.bf16 %v619, %v618
  %v708 = vpack.c.bf16 %v621, %v620
  %v709 = vpack.c.bf16 %v623, %v622
  %v710 = vpack.c.bf16 %v625, %v624
  %v711 = vpack.c.bf16 %v627, %v626
  %v712 = vpack.c.bf16 %v629, %v628
  %v713 = vpack.c.bf16 %v631, %v630
  %v714 = vpack.c.bf16 %v633, %v632
  %v715 = vpack.c.bf16 %v635, %v634
  %v716 = vpack.c.bf16 %v637, %v636
  %v717 = vpack.c.bf16 %v639, %v638
  %v718 = vpack.c.bf16 %v641, %v640
  %v719 = vpack.c.bf16 %v643, %v642
  %v720 = vpack.c.bf16 %v645, %v644
  %v721 = vpack.c.bf16 %v647, %v646
  %v722 = vpack.c.bf16 %v649, %v648
  %v723 = vpack.c.bf16 %v651, %v650
  %v724 = vpack.c.bf16 %v653, %v652
  %v725 = vpack.c.bf16 %v655, %v654
  %v726 = vpack.c.bf16 %v657, %v656
  %v727 = vpack.c.bf16 %v659, %v658
  %v728 = vpack.c.bf16 %v661, %v660
  %v729 = vpack.c.bf16 %v663, %v662
  %v730 = vpack.c.bf16 %v665, %v664
  %v731 = vpack.c.bf16 %v667, %v666
  %v796 = vunpack.c.l.b16 %v668
  %v797 = vunpack.c.h.b16 %v668
  %v798 = vunpack.c.l.b16 %v669
  %v799 = vunpack.c.h.b16 %v669
  %v800 = vunpack.c.l.b16 %v670
  %v801 = vunpack.c.h.b16 %v670
  %v802 = vunpack.c.l.b16 %v671
  %v803 = vunpack.c.h.b16 %v671
  %v804 = vunpack.c.l.b16 %v672
  %v805 = vunpack.c.h.b16 %v672
  %v806 = vunpack.c.l.b16 %v673
  %v807 = vunpack.c.h.b16 %v673
  %v808 = vunpack.c.l.b16 %v674
  %v809 = vunpack.c.h.b16 %v674
  %v810 = vunpack.c.l.b16 %v675
  %v811 = vunpack.c.h.b16 %v675
  %v812 = vunpack.c.l.b16 %v676
  %v813 = vunpack.c.h.b16 %v676
  %v814 = vunpack.c.l.b16 %v677
  %v815 = vunpack.c.h.b16 %v677
  %v816 = vunpack.c.l.b16 %v678
  %v817 = vunpack.c.h.b16 %v678
  %v818 = vunpack.c.l.b16 %v679
  %v819 = vunpack.c.h.b16 %v679
  %v820 = vunpack.c.l.b16 %v680
  %v821 = vunpack.c.h.b16 %v680
  %v822 = vunpack.c.l.b16 %v681
  %v823 = vunpack.c.h.b16 %v681
  %v824 = vunpack.c.l.b16 %v682
  %v825 = vunpack.c.h.b16 %v682
  %v826 = vunpack.c.l.b16 %v683
  %v827 = vunpack.c.h.b16 %v683
  %v828 = vunpack.c.l.b16 %v684
  %v829 = vunpack.c.h.b16 %v684
  %v830 = vunpack.c.l.b16 %v685
  %v831 = vunpack.c.h.b16 %v685
  %v832 = vunpack.c.l.b16 %v686
  %v833 = vunpack.c.h.b16 %v686
  %v834 = vunpack.c.l.b16 %v687
  %v835 = vunpack.c.h.b16 %v687
  %v836 = vunpack.c.l.b16 %v688
  %v837 = vunpack.c.h.b16 %v688
  %v838 = vunpack.c.l.b16 %v689
  %v839 = vunpack.c.h.b16 %v689
  %v840 = vunpack.c.l.b16 %v690
  %v841 = vunpack.c.h.b16 %v690
  %v842 = vunpack.c.l.b16 %v691
  %v843 = vunpack.c.h.b16 %v691
  %v844 = vunpack.c.l.b16 %v692
  %v845 = vunpack.c.h.b16 %v692
  %v846 = vunpack.c.l.b16 %v693
  %v847 = vunpack.c.h.b16 %v693
  %v848 = vunpack.c.l.b16 %v694
  %v849 = vunpack.c.h.b16 %v694
  %v850 = vunpack.c.l.b16 %v695
  %v851 = vunpack.c.h.b16 %v695
  %v852 = vunpack.c.l.b16 %v696
  %v853 = vunpack.c.h.b16 %v696
  %v854 = vunpack.c.l.b16 %v697
  %v855 = vunpack.c.h.b16 %v697
  %v856 = vunpack.c.l.b16 %v698
  %v857 = vunpack.c.h.b16 %v698
  %v858 = vunpack.c.l.b16 %v699
  %v859 = vunpack.c.h.b16 %v699
  %v860 = vunpack.c.l.b16 %v700
  %v861 = vunpack.c.h.b16 %v700
  %v862 = vunpack.c.l.b16 %v701
  %v863 = vunpack.c.h.b16 %v701
  %v864 = vunpack.c.l.b16 %v702
  %v865 = vunpack.c.h.b16 %v702
  %v866 = vunpack.c.l.b16 %v703
  %v867 = vunpack.c.h.b16 %v703
  %v868 = vunpack.c.l.b16 %v704
  %v869 = vunpack.c.h.b16 %v704
  %v870 = vunpack.c.l.b16 %v705
  %v871 = vunpack.c.h.b16 %v705
  %v872 = vunpack.c.l.b16 %v706
  %v873 = vunpack.c.h.b16 %v706
  %v874 = vunpack.c.l.b16 %v707
  %v875 = vunpack.c.h.b16 %v707
  %v876 = vunpack.c.l.b16 %v708
  %v877 = vunpack.c.h.b16 %v708
  %v878 = vunpack.c.l.b16 %v709
  %v879 = vunpack.c.h.b16 %v709
  %v880 = vunpack.c.l.b16 %v710
  %v881 = vunpack.c.h.b16 %v710
  %v882 = vunpack.c.l.b16 %v711
  %v883 = vunpack.c.h.b16 %v711
  %v884 = vunpack.c.l.b16 %v712
  %v885 = vunpack.c.h.b16 %v712
  %v886 = vunpack.c.l.b16 %v713
  %v887 = vunpack.c.h.b16 %v713
  %v888 = vunpack.c.l.b16 %v714
  %v889 = vunpack.c.h.b16 %v714
  %v890 = vunpack.c.l.b16 %v715
  %v891 = vunpack.c.h.b16 %v715
  %v892 = vunpack.c.l.b16 %v716
  %v893 = vunpack.c.h.b16 %v716
  %v894 = vunpack.c.l.b16 %v717
  %v895 = vunpack.c.h.b16 %v717
  %v896 = vunpack.c.l.b16 %v718
  %v897 = vunpack.c.h.b16 %v718
  %v898 = vunpack.c.l.b16 %v719
  %v899 = vunpack.c.h.b16 %v719
  %v900 = vunpack.c.l.b16 %v720
  %v901 = vunpack.c.h.b16 %v720
  %v902 = vunpack.c.l.b16 %v721
  %v903 = vunpack.c.h.b16 %v721
  %v904 = vunpack.c.l.b16 %v722
  %v905 = vunpack.c.h.b16 %v722
  %v906 = vunpack.c.l.b16 %v723
  %v907 = vunpack.c.h.b16 %v723
  %v908 = vunpack.c.l.b16 %v724
  %v909 = vunpack.c.h.b16 %v724
  %v910 = vunpack.c.l.b16 %v725
  %v911 = vunpack.c.h.b16 %v725
  %v912 = vunpack.c.l.b16 %v726
  %v913 = vunpack.c.h.b16 %v726
  %v914 = vunpack.c.l.b16 %v727
  %v915 = vunpack.c.h.b16 %v727
  %v916 = vunpack.c.l.b16 %v728
  %v917 = vunpack.c.h.b16 %v728
  %v918 = vunpack.c.l.b16 %v729
  %v919 = vunpack.c.h.b16 %v729
  %v920 = vunpack.c.l.b16 %v730
  %v921 = vunpack.c.h.b16 %v730
  %v922 = vunpack.c.l.b16 %v731
  %v923 = vunpack.c.h.b16 %v731
  %v924 = vpack.c.b16 %v796, %v796
  %v925 = vpack.c.b16 %v797, %v797
  %v926 = vpack.c.b16 %v798, %v798
  %v927 = vpack.c.b16 %v799, %v799
  %v928 = vpack.c.b16 %v800, %v800
  %v929 = vpack.c.b16 %v801, %v801
  %v930 = vpack.c.b16 %v802, %v802
  %v931 = vpack.c.b16 %v803, %v803
  %v932 = vpack.c.b16 %v804, %v804
  %v933 = vpack.c.b16 %v805, %v805
  %v934 = vpack.c.b16 %v806, %v806
  %v935 = vpack.c.b16 %v807, %v807
  %v936 = vpack.c.b16 %v808, %v808
  %v937 = vpack.c.b16 %v809, %v809
  %v938 = vpack.c.b16 %v810, %v810
  %v939 = vpack.c.b16 %v811, %v811
  %v940 = vpack.c.b16 %v812, %v812
  %v941 = vpack.c.b16 %v813, %v813
  %v942 = vpack.c.b16 %v814, %v814
  %v943 = vpack.c.b16 %v815, %v815
  %v944 = vpack.c.b16 %v816, %v816
  %v945 = vpack.c.b16 %v817, %v817
  %v946 = vpack.c.b16 %v818, %v818
  %v947 = vpack.c.b16 %v819, %v819
  %v948 = vpack.c.b16 %v820, %v820
  %v949 = vpack.c.b16 %v821, %v821
  %v950 = vpack.c.b16 %v822, %v822
  %v951 = vpack.c.b16 %v823, %v823
  %v952 = vpack.c.b16 %v824, %v824
  %v953 = vpack.c.b16 %v825, %v825
  %v954 = vpack.c.b16 %v826, %v826
  %v955 = vpack.c.b16 %v827, %v827
  %v956 = vpack.c.b16 %v828, %v828
  %v957 = vpack.c.b16 %v829, %v829
  %v958 = vpack.c.b16 %v830, %v830
  %v959 = vpack.c.b16 %v831, %v831
  %v960 = vpack.c.b16 %v832, %v832
  %v961 = vpack.c.b16 %v833, %v833
  %v962 = vpack.c.b16 %v834, %v834
  %v963 = vpack.c.b16 %v835, %v835
  %v964 = vpack.c.b16 %v836, %v836
  %v965 = vpack.c.b16 %v837, %v837
  %v966 = vpack.c.b16 %v838, %v838
  %v967 = vpack.c.b16 %v839, %v839
  %v968 = vpack.c.b16 %v840, %v840
  %v969 = vpack.c.b16 %v841, %v841
  %v970 = vpack.c.b16 %v842, %v842
  %v971 = vpack.c.b16 %v843, %v843
  %v972 = vpack.c.b16 %v844, %v844
  %v973 = vpack.c.b16 %v845, %v845
  %v974 = vpack.c.b16 %v846, %v846
  %v975 = vpack.c.b16 %v847, %v847
  %v976 = vpack.c.b16 %v848, %v848
  %v977 = vpack.c.b16 %v849, %v849
  %v978 = vpack.c.b16 %v850, %v850
  %v979 = vpack.c.b16 %v851, %v851
  %v980 = vpack.c.b16 %v852, %v852
  %v981 = vpack.c.b16 %v853, %v853
  %v982 = vpack.c.b16 %v854, %v854
  %v983 = vpack.c.b16 %v855, %v855
  %v984 = vpack.c.b16 %v856, %v856
  %v985 = vpack.c.b16 %v857, %v857
  %v986 = vpack.c.b16 %v858, %v858
  %v987 = vpack.c.b16 %v859, %v859
  %v988 = vpack.c.b16 %v860, %v860
  %v989 = vpack.c.b16 %v861, %v861
  %v990 = vpack.c.b16 %v862, %v862
  %v991 = vpack.c.b16 %v863, %v863
  %v992 = vpack.c.b16 %v864, %v864
  %v993 = vpack.c.b16 %v865, %v865
  %v994 = vpack.c.b16 %v866, %v866
  %v995 = vpack.c.b16 %v867, %v867
  %v996 = vpack.c.b16 %v868, %v868
  %v997 = vpack.c.b16 %v869, %v869
  %v998 = vpack.c.b16 %v870, %v870
  %v999 = vpack.c.b16 %v871, %v871
  %v1000 = vpack.c.b16 %v872, %v872
  %v1001 = vpack.c.b16 %v873, %v873
  %v1002 = vpack.c.b16 %v874, %v874
  %v1003 = vpack.c.b16 %v875, %v875
  %v1004 = vpack.c.b16 %v876, %v876
  %v1005 = vpack.c.b16 %v877, %v877
  %v1006 = vpack.c.b16 %v878, %v878
  %v1007 = vpack.c.b16 %v879, %v879
  %v1008 = vpack.c.b16 %v880, %v880
  %v1009 = vpack.c.b16 %v881, %v881
  %v1010 = vpack.c.b16 %v882, %v882
  %v1011 = vpack.c.b16 %v883, %v883
  %v1012 = vpack.c.b16 %v884, %v884
  %v1013 = vpack.c.b16 %v885, %v885
  %v1014 = vpack.c.b16 %v886, %v886
  %v1015 = vpack.c.b16 %v887, %v887
  %v1016 = vpack.c.b16 %v888, %v888
  %v1017 = vpack.c.b16 %v889, %v889
  %v1018 = vpack.c.b16 %v890, %v890
  %v1019 = vpack.c.b16 %v891, %v891
  %v1020 = vpack.c.b16 %v892, %v892
  %v1021 = vpack.c.b16 %v893, %v893
  %v1022 = vpack.c.b16 %v894, %v894
  %v1023 = vpack.c.b16 %v895, %v895
  %v1024 = vpack.c.b16 %v896, %v896
  %v1025 = vpack.c.b16 %v897, %v897
  %v1026 = vpack.c.b16 %v898, %v898
  %v1027 = vpack.c.b16 %v899, %v899
  %v1028 = vpack.c.b16 %v900, %v900
  %v1029 = vpack.c.b16 %v901, %v901
  %v1030 = vpack.c.b16 %v902, %v902
  %v1031 = vpack.c.b16 %v903, %v903
  %v1032 = vpack.c.b16 %v904, %v904
  %v1033 = vpack.c.b16 %v905, %v905
  %v1034 = vpack.c.b16 %v906, %v906
  %v1035 = vpack.c.b16 %v907, %v907
  %v1036 = vpack.c.b16 %v908, %v908
  %v1037 = vpack.c.b16 %v909, %v909
  %v1038 = vpack.c.b16 %v910, %v910
  %v1039 = vpack.c.b16 %v911, %v911
  %v1040 = vpack.c.b16 %v912, %v912
  %v1041 = vpack.c.b16 %v913, %v913
  %v1042 = vpack.c.b16 %v914, %v914
  %v1043 = vpack.c.b16 %v915, %v915
  %v1044 = vpack.c.b16 %v916, %v916
  %v1045 = vpack.c.b16 %v917, %v917
  %v1046 = vpack.c.b16 %v918, %v918
  %v1047 = vpack.c.b16 %v919, %v919
  %v1048 = vpack.c.b16 %v920, %v920
  %v1049 = vpack.c.b16 %v921, %v921
  %v1050 = vpack.c.b16 %v922, %v922
  %v1051 = vpack.c.b16 %v923, %v923
  %1180 = vst [vmem:[%s3] sm:$0xf] %v924
  %1181 = vst [vmem:[%s3 + $0x4] sm:$0xf] %v925
  %1182 = vst [vmem:[%s3 + $0x8] sm:$0xf] %v926
  %1183 = vst [vmem:[%s3 + $0xc] sm:$0xf] %v927
  %1184 = vst [vmem:[%s3 + $0x10] sm:$0xf] %v928
  %1185 = vst [vmem:[%s3 + $0x14] sm:$0xf] %v929
  %1186 = vst [vmem:[%s3 + $0x18] sm:$0xf] %v930
  %1187 = vst [vmem:[%s3 + $0x1c] sm:$0xf] %v931
  %1188 = vst [vmem:[%s3 + $0x20] sm:$0xf] %v932
  %1189 = vst [vmem:[%s3 + $0x24] sm:$0xf] %v933
  %1190 = vst [vmem:[%s3 + $0x28] sm:$0xf] %v934
  %1191 = vst [vmem:[%s3 + $0x2c] sm:$0xf] %v935
  %1192 = vst [vmem:[%s3 + $0x30] sm:$0xf] %v936
  %1193 = vst [vmem:[%s3 + $0x34] sm:$0xf] %v937
  %1194 = vst [vmem:[%s3 + $0x38] sm:$0xf] %v938
  %1195 = vst [vmem:[%s3 + $0x3c] sm:$0xf] %v939
  %1196 = vst [vmem:[%s3 + $0x40] sm:$0xf] %v940
  %1197 = vst [vmem:[%s3 + $0x44] sm:$0xf] %v941
  %1198 = vst [vmem:[%s3 + $0x48] sm:$0xf] %v942
  %1199 = vst [vmem:[%s3 + $0x4c] sm:$0xf] %v943
  %1200 = vst [vmem:[%s3 + $0x50] sm:$0xf] %v944
  %1201 = vst [vmem:[%s3 + $0x54] sm:$0xf] %v945
  %1202 = vst [vmem:[%s3 + $0x58] sm:$0xf] %v946
  %1203 = vst [vmem:[%s3 + $0x5c] sm:$0xf] %v947
  %1204 = vst [vmem:[%s3 + $0x60] sm:$0xf] %v948
  %1205 = vst [vmem:[%s3 + $0x64] sm:$0xf] %v949
  %1206 = vst [vmem:[%s3 + $0x68] sm:$0xf] %v950
  %1207 = vst [vmem:[%s3 + $0x6c] sm:$0xf] %v951
  %1208 = vst [vmem:[%s3 + $0x70] sm:$0xf] %v952
  %1209 = vst [vmem:[%s3 + $0x74] sm:$0xf] %v953
  %1210 = vst [vmem:[%s3 + $0x78] sm:$0xf] %v954
  %1211 = vst [vmem:[%s3 + $0x7c] sm:$0xf] %v955
  %1212 = vst [vmem:[%s3 + $0x80] sm:$0xf] %v956
  %1213 = vst [vmem:[%s3 + $0x84] sm:$0xf] %v957
  %1214 = vst [vmem:[%s3 + $0x88] sm:$0xf] %v958
  %1215 = vst [vmem:[%s3 + $0x8c] sm:$0xf] %v959
  %1216 = vst [vmem:[%s3 + $0x90] sm:$0xf] %v960
  %1217 = vst [vmem:[%s3 + $0x94] sm:$0xf] %v961
  %1218 = vst [vmem:[%s3 + $0x98] sm:$0xf] %v962
  %1219 = vst [vmem:[%s3 + $0x9c] sm:$0xf] %v963
  %1220 = vst [vmem:[%s3 + $0xa0] sm:$0xf] %v964
  %1221 = vst [vmem:[%s3 + $0xa4] sm:$0xf] %v965
  %1222 = vst [vmem:[%s3 + $0xa8] sm:$0xf] %v966
  %1223 = vst [vmem:[%s3 + $0xac] sm:$0xf] %v967
  %1224 = vst [vmem:[%s3 + $0xb0] sm:$0xf] %v968
  %1225 = vst [vmem:[%s3 + $0xb4] sm:$0xf] %v969
  %1226 = vst [vmem:[%s3 + $0xb8] sm:$0xf] %v970
  %1227 = vst [vmem:[%s3 + $0xbc] sm:$0xf] %v971
  %1228 = vst [vmem:[%s3 + $0xc0] sm:$0xf] %v972
  %1229 = vst [vmem:[%s3 + $0xc4] sm:$0xf] %v973
  %1230 = vst [vmem:[%s3 + $0xc8] sm:$0xf] %v974
  %1231 = vst [vmem:[%s3 + $0xcc] sm:$0xf] %v975
  %1232 = vst [vmem:[%s3 + $0xd0] sm:$0xf] %v976
  %1233 = vst [vmem:[%s3 + $0xd4] sm:$0xf] %v977
  %1234 = vst [vmem:[%s3 + $0xd8] sm:$0xf] %v978
  %1235 = vst [vmem:[%s3 + $0xdc] sm:$0xf] %v979
  %1236 = vst [vmem:[%s3 + $0xe0] sm:$0xf] %v980
  %1237 = vst [vmem:[%s3 + $0xe4] sm:$0xf] %v981
  %1238 = vst [vmem:[%s3 + $0xe8] sm:$0xf] %v982
  %1239 = vst [vmem:[%s3 + $0xec] sm:$0xf] %v983
  %1240 = vst [vmem:[%s3 + $0xf0] sm:$0xf] %v984
  %1241 = vst [vmem:[%s3 + $0xf4] sm:$0xf] %v985
  %1242 = vst [vmem:[%s3 + $0xf8] sm:$0xf] %v986
  %1243 = vst [vmem:[%s3 + $0xfc] sm:$0xf] %v987
  %1244 = vst [vmem:[%s3 + $0x100] sm:$0xf] %v988
  %1245 = vst [vmem:[%s3 + $0x104] sm:$0xf] %v989
  %1246 = vst [vmem:[%s3 + $0x108] sm:$0xf] %v990
  %1247 = vst [vmem:[%s3 + $0x10c] sm:$0xf] %v991
  %1248 = vst [vmem:[%s3 + $0x110] sm:$0xf] %v992
  %1249 = vst [vmem:[%s3 + $0x114] sm:$0xf] %v993
  %1250 = vst [vmem:[%s3 + $0x118] sm:$0xf] %v994
  %1251 = vst [vmem:[%s3 + $0x11c] sm:$0xf] %v995
  %1252 = vst [vmem:[%s3 + $0x120] sm:$0xf] %v996
  %1253 = vst [vmem:[%s3 + $0x124] sm:$0xf] %v997
  %1254 = vst [vmem:[%s3 + $0x128] sm:$0xf] %v998
  %1255 = vst [vmem:[%s3 + $0x12c] sm:$0xf] %v999
  %1256 = vst [vmem:[%s3 + $0x130] sm:$0xf] %v1000
  %1257 = vst [vmem:[%s3 + $0x134] sm:$0xf] %v1001
  %1258 = vst [vmem:[%s3 + $0x138] sm:$0xf] %v1002
  %1259 = vst [vmem:[%s3 + $0x13c] sm:$0xf] %v1003
  %1260 = vst [vmem:[%s3 + $0x140] sm:$0xf] %v1004
  %1261 = vst [vmem:[%s3 + $0x144] sm:$0xf] %v1005
  %1262 = vst [vmem:[%s3 + $0x148] sm:$0xf] %v1006
  %1263 = vst [vmem:[%s3 + $0x14c] sm:$0xf] %v1007
  %1264 = vst [vmem:[%s3 + $0x150] sm:$0xf] %v1008
  %1265 = vst [vmem:[%s3 + $0x154] sm:$0xf] %v1009
  %1266 = vst [vmem:[%s3 + $0x158] sm:$0xf] %v1010
  %1267 = vst [vmem:[%s3 + $0x15c] sm:$0xf] %v1011
  %1268 = vst [vmem:[%s3 + $0x160] sm:$0xf] %v1012
  %1269 = vst [vmem:[%s3 + $0x164] sm:$0xf] %v1013
  %1270 = vst [vmem:[%s3 + $0x168] sm:$0xf] %v1014
  %1271 = vst [vmem:[%s3 + $0x16c] sm:$0xf] %v1015
  %1272 = vst [vmem:[%s3 + $0x170] sm:$0xf] %v1016
  %1273 = vst [vmem:[%s3 + $0x174] sm:$0xf] %v1017
  %1274 = vst [vmem:[%s3 + $0x178] sm:$0xf] %v1018
  %1275 = vst [vmem:[%s3 + $0x17c] sm:$0xf] %v1019
  %1276 = vst [vmem:[%s3 + $0x180] sm:$0xf] %v1020
  %1277 = vst [vmem:[%s3 + $0x184] sm:$0xf] %v1021
  %1278 = vst [vmem:[%s3 + $0x188] sm:$0xf] %v1022
  %1279 = vst [vmem:[%s3 + $0x18c] sm:$0xf] %v1023
  %1280 = vst [vmem:[%s3 + $0x190] sm:$0xf] %v1024
  %1281 = vst [vmem:[%s3 + $0x194] sm:$0xf] %v1025
  %1282 = vst [vmem:[%s3 + $0x198] sm:$0xf] %v1026
  %1283 = vst [vmem:[%s3 + $0x19c] sm:$0xf] %v1027
  %1284 = vst [vmem:[%s3 + $0x1a0] sm:$0xf] %v1028
  %1285 = vst [vmem:[%s3 + $0x1a4] sm:$0xf] %v1029
  %1286 = vst [vmem:[%s3 + $0x1a8] sm:$0xf] %v1030
  %1287 = vst [vmem:[%s3 + $0x1ac] sm:$0xf] %v1031
  %1288 = vst [vmem:[%s3 + $0x1b0] sm:$0xf] %v1032
  %1289 = vst [vmem:[%s3 + $0x1b4] sm:$0xf] %v1033
  %1290 = vst [vmem:[%s3 + $0x1b8] sm:$0xf] %v1034
  %1291 = vst [vmem:[%s3 + $0x1bc] sm:$0xf] %v1035
  %1292 = vst [vmem:[%s3 + $0x1c0] sm:$0xf] %v1036
  %1293 = vst [vmem:[%s3 + $0x1c4] sm:$0xf] %v1037
  %1294 = vst [vmem:[%s3 + $0x1c8] sm:$0xf] %v1038
  %1295 = vst [vmem:[%s3 + $0x1cc] sm:$0xf] %v1039
  %1296 = vst [vmem:[%s3 + $0x1d0] sm:$0xf] %v1040
  %1297 = vst [vmem:[%s3 + $0x1d4] sm:$0xf] %v1041
  %1298 = vst [vmem:[%s3 + $0x1d8] sm:$0xf] %v1042
  %1299 = vst [vmem:[%s3 + $0x1dc] sm:$0xf] %v1043
  %1300 = vst [vmem:[%s3 + $0x1e0] sm:$0xf] %v1044
  %1301 = vst [vmem:[%s3 + $0x1e4] sm:$0xf] %v1045
  %1302 = vst [vmem:[%s3 + $0x1e8] sm:$0xf] %v1046
  %1303 = vst [vmem:[%s3 + $0x1ec] sm:$0xf] %v1047
  %1304 = vst [vmem:[%s3 + $0x1f0] sm:$0xf] %v1048
  %1305 = vst [vmem:[%s3 + $0x1f4] sm:$0xf] %v1049
  %1306 = vst [vmem:[%s3 + $0x1f8] sm:$0xf] %v1050
  %1307 = vst [vmem:[%s3 + $0x1fc] sm:$0xf] %v1051
  // Predicated region
  $region14: #{generator_forward.16} parent=0 // pred_check
    _
  $region15: #{generator_forward.16} parent=0 // pred_check_branch
    %1309 = sbr.rel (0) target = $region17
  $region16: #{generator_forward.16} parent=0 // pred_region
    _
  $region17: #{generator_forward.16} parent=0 // pred_fallthru
    _
  // Predicated region
  $region18: #{generator_forward.16} parent=0 // pred_check
    _
  $region19: #{generator_forward.16} parent=0 // pred_check_branch
    %1311 = sbr.rel (0) target = $region21
  $region20: #{generator_forward.16} parent=0 // pred_region
    _
  $region21: #{generator_forward.16} parent=0 // pred_fallthru
    _

// kernel: generator_forward.17
$region0: #{generator_forward.17}
  #allocation0 [shape = 'u32[]', space=smem, size = 0x4, offset = 0x4, fixed_abs, tag = 'smem constant byte address 0x4 - core index']
  #allocation1 [shape = 'u32[144,128]{1,0:T(1,128)}', space=vmem, size = 0x12000, scoped, tag = 'internal scratch']
  #allocation2 [shape = 'f32[256,128]{1,0:T(8,128)}', space=vmem, size = 0x20000, scoped, tag = 'scratch operand']
  %s0 = inlined_call_operand.vmem [shape: bf16[4,2048,256], index: 0, kind: input, shape index: {}]
  %s1 = inlined_call_operand.vmem [shape: bf16[4,256,128], index: 1, kind: input, shape index: {}]
  %s2 = inlined_call_operand.vmem [shape: bf16[4,2048,128], index: 2, kind: output, shape index: {0}]
  %s3 = inlined_call_operand.hbm [shape: f32[4,64,128], index: 3, kind: output, shape index: {1}]
  %s4 = inlined_call_operand.hbm [shape: f32[4,64,128], index: 4, kind: output, shape index: {2}]
  %5 = xla_tuple %s2, %s3, %s4
  %s6 = sld [smem:[#allocation0]]
  $region65: #{generator_forward.17} parent=0
    _
  %s8 = ssub.s32 1, %s6
  %s9 = scalar_select 0, %s8, %s6
  $region1: #{generator_forward.17} parent=0
    #allocation3 [shape = 'u8[8192]{0}', space=vmem, size = 0x2000, scoped, tag = 'output window, operand 1']
    #allocation4 [shape = 's32[2]{0}', space=sflag, size = 0x8, scoped, tag = 'scoped memory for generator_forward.17']
    #allocation5 [shape = 'u8[8192]{0}', space=vmem, size = 0x2000, scoped, tag = 'output window, operand 2']
    #allocation6 [shape = 's32[2]{0}', space=sflag, size = 0x8, scoped, tag = 'scoped memory for generator_forward.17']
    %10 = vsyncpa [#allocation4], 0
    %s11 = scalar_lea.sflag [#allocation4], 1
    %12 = vsyncpa %s11, 0
    %13 = vsyncpa [#allocation6], 0
    %s14 = scalar_lea.sflag [#allocation6], 1
    %15 = vsyncpa %s14, 0
    loop: start=0, step=1, limit=34
    $region2: #{generator_forward.17} parent=1 // loop_pre_header
      _
    $region3: #{generator_forward.17} parent=1 // loop_header
      %s17 = sphi 0, %s21
      %p18 = scmp.ge.s32.totalorder %s17, 34
      %s24 = sphi 0, %s50
      %s25 = sphi 0, %s46
      %s26 = sphi 0, %s42
      %s27 = sphi 0, %s38
      %s28 = sphi 0, %s24
      %s29 = sphi 0, %s25
      %s30 = sphi 0, %s26
      %s31 = sphi 0, %s27
      %s32 = sphi 0, %s28
      %s33 = sphi 0, %s29
      %s34 = sphi 0, %s30
      %s35 = sphi 0, %s31
      %s57 = sphi 0, %s59
      %s60 = sphi 0, %s57
      %s61 = sphi 0, %s60
      %s77 = sphi 0, %s61
      %s87 = sphi 0, %s89
      %s90 = sphi 0, %s87
      %s91 = sphi 0, %s90
      %s107 = sphi 0, %s91
      %s117 = sphi 0, %s119
      %s120 = sphi 0, %s117
      %s121 = sphi 0, %s120
      %s137 = sphi 0, %s121
      %s147 = sphi 0, %s149
      %s150 = sphi 0, %s147
      %s151 = sphi 0, %s150
      %s167 = sphi 0, %s151
      %s177 = sphi 0, %s179
      %s180 = sphi 0, %s177
      %s181 = sphi 0, %s180
      %s197 = sphi 0, %s181
    $region4: #{generator_forward.17} parent=1 // loop_header_branch
      %20 = sbr.rel (%p18) target = $region8
    $region5: #{generator_forward.17} parent=1 // loop_body
      %s22 = ssub.s32 %s17, 1
      %s23 = ssub.s32 %s17, 2
      %s36 = sadd.s32 1, %s27
      %p37 = scmp.ge.s32.totalorder %s36, 1
      %s38 = scalar_select %p37, 0, %s36
      %s39 = sadd.s32 1, %s26
      %s40 = scalar_select %p37, %s39, %s26
      %p41 = scmp.ge.s32.totalorder %s40, 1
      %s42 = scalar_select %p41, 0, %s40
      %s43 = sadd.s32 1, %s25
      %s44 = scalar_select %p41, %s43, %s25
      %p45 = scmp.ge.s32.totalorder %s44, 8
      %s46 = scalar_select %p45, 0, %s44
      %s47 = sadd.s32 1, %s24
      %s48 = scalar_select %p45, %s47, %s24
      %p49 = scmp.ge.s32.totalorder %s48, 4
      %s50 = scalar_select %p49, 0, %s48
      %s51 = ssub.s32 %s24, %s50
      %s52 = ssub.s32 %s25, %s46
      %s53 = sor.u32 %s51, %s52
      %s54 = ssub.s32 %s27, %s38
      %s55 = sor.u32 %s53, %s54
      %p56 = scmp.eq.s32.totalorder %s55, 0
      %s58 = sadd.s32 %s57, 1
      %s59 = scalar_select %p56, %s57, %s58
      %p62 = pneg %p56
      %p63 = scmp.eq.s32.totalorder %s17, 31
      %p64 = por %p62, %p63
      %p65 = scmp.ne.s32.totalorder %s57, %s60
      %p66 = scmp.eq.s32.totalorder %s17, 0
      %p67 = por %p65, %p66
      %p68 = scmp.ne.s32.totalorder %s57, %s60
      %p69 = scmp.eq.s32.totalorder %s22, 31
      %p70 = por %p68, %p69
      %p71 = scmp.ne.s32.totalorder %s60, %s61
      %p72 = scmp.eq.s32.totalorder %s22, 0
      %p73 = por %p71, %p72
      %p74 = scmp.ne.s32.totalorder %s60, %s61
      %p75 = scmp.eq.s32.totalorder %s23, 31
      %p76 = por %p74, %p75
      %p78 = scmp.ne.s32.totalorder %s61, %s77
      %p79 = scmp.eq.s32.totalorder %s23, 0
      %p80 = por %p78, %p79
      %s81 = ssub.s32 %s24, %s50
      %s82 = ssub.s32 %s27, %s38
      %s83 = sor.u32 %s81, %s82
      %s84 = ssub.s32 %s26, %s42
      %s85 = sor.u32 %s83, %s84
      %p86 = scmp.eq.s32.totalorder %s85, 0
      %s88 = sadd.s32 %s87, 1
      %s89 = scalar_select %p86, %s87, %s88
      %p92 = pneg %p86
      %p93 = scmp.eq.s32.totalorder %s17, 31
      %p94 = por %p92, %p93
      %p95 = scmp.ne.s32.totalorder %s87, %s90
      %p96 = scmp.eq.s32.totalorder %s17, 0
      %p97 = por %p95, %p96
      %p98 = scmp.ne.s32.totalorder %s87, %s90
      %p99 = scmp.eq.s32.totalorder %s22, 31
      %p100 = por %p98, %p99
      %p101 = scmp.ne.s32.totalorder %s90, %s91
      %p102 = scmp.eq.s32.totalorder %s22, 0
      %p103 = por %p101, %p102
      %p104 = scmp.ne.s32.totalorder %s90, %s91
      %p105 = scmp.eq.s32.totalorder %s23, 31
      %p106 = por %p104, %p105
      %p108 = scmp.ne.s32.totalorder %s91, %s107
      %p109 = scmp.eq.s32.totalorder %s23, 0
      %p110 = por %p108, %p109
      %s111 = ssub.s32 %s24, %s50
      %s112 = ssub.s32 %s25, %s46
      %s113 = sor.u32 %s111, %s112
      %s114 = ssub.s32 %s26, %s42
      %s115 = sor.u32 %s113, %s114
      %p116 = scmp.eq.s32.totalorder %s115, 0
      %s118 = sadd.s32 %s117, 1
      %s119 = scalar_select %p116, %s117, %s118
      %p122 = pneg %p116
      %p123 = scmp.eq.s32.totalorder %s17, 31
      %p124 = por %p122, %p123
      %p125 = scmp.ne.s32.totalorder %s117, %s120
      %p126 = scmp.eq.s32.totalorder %s17, 0
      %p127 = por %p125, %p126
      %p128 = scmp.ne.s32.totalorder %s117, %s120
      %p129 = scmp.eq.s32.totalorder %s22, 31
      %p130 = por %p128, %p129
      %p131 = scmp.ne.s32.totalorder %s120, %s121
      %p132 = scmp.eq.s32.totalorder %s22, 0
      %p133 = por %p131, %p132
      %p134 = scmp.ne.s32.totalorder %s120, %s121
      %p135 = scmp.eq.s32.totalorder %s23, 31
      %p136 = por %p134, %p135
      %p138 = scmp.ne.s32.totalorder %s121, %s137
      %p139 = scmp.eq.s32.totalorder %s23, 0
      %p140 = por %p138, %p139
      %s141 = ssub.s32 %s24, %s50
      %s142 = ssub.s32 %s25, %s46
      %s143 = sor.u32 %s141, %s142
      %s144 = ssub.s32 %s26, %s42
      %s145 = sor.u32 %s143, %s144
      %p146 = scmp.eq.s32.totalorder %s145, 0
      %s148 = sadd.s32 %s147, 1
      %s149 = scalar_select %p146, %s147, %s148
      %p152 = pneg %p146
      %p153 = scmp.eq.s32.totalorder %s17, 31
      %p154 = por %p152, %p153
      %p155 = scmp.ne.s32.totalorder %s147, %s150
      %p156 = scmp.eq.s32.totalorder %s17, 0
      %p157 = por %p155, %p156
      %p158 = scmp.ne.s32.totalorder %s147, %s150
      %p159 = scmp.eq.s32.totalorder %s22, 31
      %p160 = por %p158, %p159
      %p161 = scmp.ne.s32.totalorder %s150, %s151
      %p162 = scmp.eq.s32.totalorder %s22, 0
      %p163 = por %p161, %p162
      %p164 = scmp.ne.s32.totalorder %s150, %s151
      %p165 = scmp.eq.s32.totalorder %s23, 31
      %p166 = por %p164, %p165
      %p168 = scmp.ne.s32.totalorder %s151, %s167
      %p169 = scmp.eq.s32.totalorder %s23, 0
      %p170 = por %p168, %p169
      %s171 = ssub.s32 %s24, %s50
      %s172 = ssub.s32 %s25, %s46
      %s173 = sor.u32 %s171, %s172
      %s174 = ssub.s32 %s26, %s42
      %s175 = sor.u32 %s173, %s174
      %p176 = scmp.eq.s32.totalorder %s175, 0
      %s178 = sadd.s32 %s177, 1
      %s179 = scalar_select %p176, %s177, %s178
      %p182 = pneg %p176
      %p183 = scmp.eq.s32.totalorder %s17, 31
      %p184 = por %p182, %p183
      %p185 = scmp.ne.s32.totalorder %s177, %s180
      %p186 = scmp.eq.s32.totalorder %s17, 0
      %p187 = por %p185, %p186
      %p188 = scmp.ne.s32.totalorder %s177, %s180
      %p189 = scmp.eq.s32.totalorder %s22, 31
      %p190 = por %p188, %p189
      %p191 = scmp.ne.s32.totalorder %s180, %s181
      %p192 = scmp.eq.s32.totalorder %s22, 0
      %p193 = por %p191, %p192
      %p194 = scmp.ne.s32.totalorder %s180, %s181
      %p195 = scmp.eq.s32.totalorder %s23, 31
      %p196 = por %p194, %p195
      %p198 = scmp.ne.s32.totalorder %s181, %s197
      %p199 = scmp.eq.s32.totalorder %s23, 0
      %p200 = por %p198, %p199
      %p201 = scmp.le.s32.totalorder 1, %s17
      %p202 = scmp.lt.s32.totalorder %s17, 33
      %p203 = pnand %p201, %p202
      %p204 = pneg %p203
      // Predicated region
      $region9: #{generator_forward.17} parent=5 // pred_check
        _
      $region10: #{generator_forward.17} parent=5 // pred_check_branch
        %206 = sbr.rel (%p203) target = $region12
      $region11: #{generator_forward.17} parent=5 // pred_region
        %s207 = ssub.s32 %s17, 1
      $region12: #{generator_forward.17} parent=5 // pred_fallthru
        _
      %p208 = scmp.lt.s32.totalorder %s17, 32
      // Predicated region
      $region13: #{generator_forward.17} parent=5 // pred_check
        %p209 = pneg %p208
      $region14: #{generator_forward.17} parent=5 // pred_check_branch
        %211 = sbr.rel (%p209) target = $region16
      $region15: #{generator_forward.17} parent=5 // pred_region
        // Predicated region
        $region17: #{generator_forward.17} parent=15 // pred_check
          %p212 = pneg %p67
        $region18: #{generator_forward.17} parent=15 // pred_check_branch
          %214 = sbr.rel (%p212) target = $region20
        $region19: #{generator_forward.17} parent=15 // pred_region
          %s215 = smul.u32 32, %s25
          %s216 = smul.u32 2, %s27
          %p217 = scmp.lt.s32.totalorder %s24, 3
          %s218 = scalar_select %p217, %s24, 3
          %p219 = scmp.lt.s32.totalorder %s215, 255
          %s220 = scalar_select %p219, %s215, 255
          %p221 = scmp.lt.s32.totalorder %s216, 1
          %s222 = scalar_select %p221, %s216, 1
          %s223 = smul.addr %s220, 2
          %s224 = sadd.s32 %s222, %s223
          %s225 = smul.addr %s218, 512
          %s226 = sadd.s32 %s224, %s225
          %s227 = smul.addr %s226, 4
          %s228 = scalar_lea.vmem %s0, %s227
          %s229 = smul.u32 32, %s25
          %s230 = smul.u32 2, %s27
        $region20: #{generator_forward.17} parent=15 // pred_fallthru
          _
        // Predicated region
        $region21: #{generator_forward.17} parent=15 // pred_check
          %p231 = pneg %p97
        $region22: #{generator_forward.17} parent=15 // pred_check_branch
          %233 = sbr.rel (%p231) target = $region24
        $region23: #{generator_forward.17} parent=15 // pred_region
          %s234 = smul.u32 32, %s27
          %p235 = scmp.lt.s32.totalorder %s24, 3
          %s236 = scalar_select %p235, %s24, 3
          %p237 = scmp.lt.s32.totalorder %s234, 31
          %s238 = scalar_select %p237, %s234, 31
          %p239 = scmp.lt.s32.totalorder %s26, 0
          %s240 = scalar_select %p239, %s26, 0
          %s241 = sadd.s32 %s240, %s238
          %s242 = smul.addr %s236, 32
          %s243 = sadd.s32 %s241, %s242
          %s244 = smul.addr %s243, 4
          %s245 = scalar_lea.vmem %s1, %s244
          %s246 = smul.u32 32, %s27
        $region24: #{generator_forward.17} parent=15 // pred_fallthru
          _
      $region16: #{generator_forward.17} parent=5 // pred_fallthru
        _
      %p247 = scmp.le.s32.totalorder 1, %s17
      %p248 = scmp.lt.s32.totalorder %s17, 33
      %p249 = pnand %p247, %p248
      %p250 = pneg %p249
      // Predicated region
      $region25: #{generator_forward.17} parent=5 // pred_check
        _
      $region26: #{generator_forward.17} parent=5 // pred_check_branch
        %252 = sbr.rel (%p249) target = $region28
      $region27: #{generator_forward.17} parent=5 // pred_region
        %s253 = ssub.s32 %s17, 1
        %s254 = smul.u32 32, %s29
        %s255 = smul.u32 2, %s31
        %p256 = scmp.lt.s32.totalorder %s28, 3
        %s257 = scalar_select %p256, %s28, 3
        %p258 = scmp.lt.s32.totalorder %s254, 255
        %s259 = scalar_select %p258, %s254, 255
        %p260 = scmp.lt.s32.totalorder %s255, 1
        %s261 = scalar_select %p260, %s255, 1
        %s262 = smul.addr %s259, 2
        %s263 = sadd.s32 %s261, %s262
        %s264 = smul.addr %s257, 512
        %s265 = sadd.s32 %s263, %s264
        %s266 = smul.addr %s265, 4
        %s267 = scalar_lea.vmem %s0, %s266
        %p268 = pneg %p73
        %p269 = pneg %p70
        %s270 = smul.u32 32, %s31
        %p271 = scmp.lt.s32.totalorder %s28, 3
        %s272 = scalar_select %p271, %s28, 3
        %p273 = scmp.lt.s32.totalorder %s270, 31
        %s274 = scalar_select %p273, %s270, 31
        %p275 = scmp.lt.s32.totalorder %s30, 0
        %s276 = scalar_select %p275, %s30, 0
        %s277 = sadd.s32 %s276, %s274
        %s278 = smul.addr %s272, 32
        %s279 = sadd.s32 %s277, %s278
        %s280 = smul.addr %s279, 4
        %s281 = scalar_lea.vmem %s1, %s280
        %p282 = pneg %p103
        %p283 = pneg %p100
        %p284 = pneg %p133
        %p285 = pneg %p130
        %s286 = smul.u32 32, %s29
        %p287 = scmp.lt.s32.totalorder %s28, 3
        %s288 = scalar_select %p287, %s28, 3
        %p289 = scmp.lt.s32.totalorder %s286, 255
        %s290 = scalar_select %p289, %s286, 255
        %p291 = scmp.lt.s32.totalorder %s30, 0
        %s292 = scalar_select %p291, %s30, 0
        %s293 = sadd.s32 %s292, %s290
        %s294 = smul.addr %s288, 256
        %s295 = sadd.s32 %s293, %s294
        %s296 = smul.addr %s295, 4
        %s297 = scalar_lea.vmem %s2, %s296
        %p298 = pneg %p163
        %p299 = pneg %p160
        %s300 = sand.u32 %s150, 1
        %s301 = scalar_lea.sflag [#allocation4], %s300
        %s302 = sand.u32 %s150, 1
        %s303 = smul.addr %s302, 8
        %s304 = scalar_lea.vmem [#allocation3], %s303
        %p305 = pneg %p193
        %p306 = pneg %p190
        %s307 = sand.u32 %s180, 1
        %s308 = scalar_lea.sflag [#allocation6], %s307
        %s309 = sand.u32 %s180, 1
        %s310 = smul.addr %s309, 8
        %s311 = scalar_lea.vmem [#allocation5], %s310
        %s312 = smul.u32 32, %s29
        %s313 = smul.u32 2, %s31
        %p314 = scmp.lt.s32.totalorder %s28, 3
        %s315 = scalar_select %p314, %s28, 3
        %p316 = scmp.lt.s32.totalorder %s312, 255
        %s317 = scalar_select %p316, %s312, 255
        %p318 = scmp.lt.s32.totalorder %s313, 1
        %s319 = scalar_select %p318, %s313, 1
        %s320 = smul.addr %s317, 2
        %s321 = sadd.s32 %s319, %s320
        %s322 = smul.addr %s315, 512
        %s323 = sadd.s32 %s321, %s322
        %s324 = smul.addr %s323, 4
        %s325 = scalar_lea.vmem %s0, %s324
        %s326 = smul.u32 32, %s29
        %s327 = smul.u32 2, %s31
        %s328 = smul.u32 32, %s31
        %p329 = scmp.lt.s32.totalorder %s28, 3
        %s330 = scalar_select %p329, %s28, 3
        %p331 = scmp.lt.s32.totalorder %s328, 31
        %s332 = scalar_select %p331, %s328, 31
        %p333 = scmp.lt.s32.totalorder %s30, 0
        %s334 = scalar_select %p333, %s30, 0
        %s335 = sadd.s32 %s334, %s332
        %s336 = smul.addr %s330, 32
        %s337 = sadd.s32 %s335, %s336
        %s338 = smul.addr %s337, 4
        %s339 = scalar_lea.vmem %s1, %s338
        %s340 = smul.u32 32, %s31
        %s341 = smul.u32 32, %s29
        %p342 = scmp.lt.s32.totalorder %s28, 3
        %s343 = scalar_select %p342, %s28, 3
        %p344 = scmp.lt.s32.totalorder %s341, 255
        %s345 = scalar_select %p344, %s341, 255
        %p346 = scmp.lt.s32.totalorder %s30, 0
        %s347 = scalar_select %p346, %s30, 0
        %s348 = sadd.s32 %s347, %s345
        %s349 = smul.addr %s343, 256
        %s350 = sadd.s32 %s348, %s349
        %s351 = smul.addr %s350, 4
        %s352 = scalar_lea.vmem %s2, %s351
        %s353 = smul.u32 32, %s29
        %p355 = scmp.eq.s32.totalorder %s31, 0
        // Predicated region
        $region29: #{generator_forward.17} parent=27 // pred_check
          %p356 = pneg %p355
        $region30: #{generator_forward.17} parent=27 // pred_check_branch
          %358 = sbr.rel (%p356) target = $region32
        $region31: #{generator_forward.17} parent=27 // pred_region
          %359 = vst [vmem:[#allocation2] sm:$0xff] 0.0
          %360 = vst [vmem:[#allocation2 + $0x8] sm:$0xff] 0.0
          %361 = vst [vmem:[#allocation2 + $0x10] sm:$0xff] 0.0
          %362 = vst [vmem:[#allocation2 + $0x18] sm:$0xff] 0.0
          %363 = vst [vmem:[#allocation2 + $0x20] sm:$0xff] 0.0
          %364 = vst [vmem:[#allocation2 + $0x28] sm:$0xff] 0.0
          %365 = vst [vmem:[#allocation2 + $0x30] sm:$0xff] 0.0
          %366 = vst [vmem:[#allocation2 + $0x38] sm:$0xff] 0.0
          %367 = vst [vmem:[#allocation2 + $0x40] sm:$0xff] 0.0
          %368 = vst [vmem:[#allocation2 + $0x48] sm:$0xff] 0.0
          %369 = vst [vmem:[#allocation2 + $0x50] sm:$0xff] 0.0
          %370 = vst [vmem:[#allocation2 + $0x58] sm:$0xff] 0.0
          %371 = vst [vmem:[#allocation2 + $0x60] sm:$0xff] 0.0
          %372 = vst [vmem:[#allocation2 + $0x68] sm:$0xff] 0.0
          %373 = vst [vmem:[#allocation2 + $0x70] sm:$0xff] 0.0
          %374 = vst [vmem:[#allocation2 + $0x78] sm:$0xff] 0.0
          %375 = vst [vmem:[#allocation2 + $0x80] sm:$0xff] 0.0
          %376 = vst [vmem:[#allocation2 + $0x88] sm:$0xff] 0.0
          %377 = vst [vmem:[#allocation2 + $0x90] sm:$0xff] 0.0
          %378 = vst [vmem:[#allocation2 + $0x98] sm:$0xff] 0.0
          %379 = vst [vmem:[#allocation2 + $0xa0] sm:$0xff] 0.0
          %380 = vst [vmem:[#allocation2 + $0xa8] sm:$0xff] 0.0
          %381 = vst [vmem:[#allocation2 + $0xb0] sm:$0xff] 0.0
          %382 = vst [vmem:[#allocation2 + $0xb8] sm:$0xff] 0.0
          %383 = vst [vmem:[#allocation2 + $0xc0] sm:$0xff] 0.0
          %384 = vst [vmem:[#allocation2 + $0xc8] sm:$0xff] 0.0
          %385 = vst [vmem:[#allocation2 + $0xd0] sm:$0xff] 0.0
          %386 = vst [vmem:[#allocation2 + $0xd8] sm:$0xff] 0.0
          %387 = vst [vmem:[#allocation2 + $0xe0] sm:$0xff] 0.0
          %388 = vst [vmem:[#allocation2 + $0xe8] sm:$0xff] 0.0
          %389 = vst [vmem:[#allocation2 + $0xf0] sm:$0xff] 0.0
          %390 = vst [vmem:[#allocation2 + $0xf8] sm:$0xff] 0.0
        $region32: #{generator_forward.17} parent=27 // pred_fallthru
          _
        %v391 = vld [vmem:[#allocation2] sm:$0xff]
        %v392 = vld [vmem:[#allocation2 + $0x8] sm:$0xff]
        %v393 = vld [vmem:[#allocation2 + $0x10] sm:$0xff]
        %v394 = vld [vmem:[#allocation2 + $0x18] sm:$0xff]
        %v395 = vld [vmem:[#allocation2 + $0x20] sm:$0xff]
        %v396 = vld [vmem:[#allocation2 + $0x28] sm:$0xff]
        %v397 = vld [vmem:[#allocation2 + $0x30] sm:$0xff]
        %v398 = vld [vmem:[#allocation2 + $0x38] sm:$0xff]
        %v399 = vld [vmem:[#allocation2 + $0x40] sm:$0xff]
        %v400 = vld [vmem:[#allocation2 + $0x48] sm:$0xff]
        %v401 = vld [vmem:[#allocation2 + $0x50] sm:$0xff]
        %v402 = vld [vmem:[#allocation2 + $0x58] sm:$0xff]
        %v403 = vld [vmem:[#allocation2 + $0x60] sm:$0xff]
        %v404 = vld [vmem:[#allocation2 + $0x68] sm:$0xff]
        %v405 = vld [vmem:[#allocation2 + $0x70] sm:$0xff]
        %v406 = vld [vmem:[#allocation2 + $0x78] sm:$0xff]
        %v407 = vld [vmem:[#allocation2 + $0x80] sm:$0xff]
        %v408 = vld [vmem:[#allocation2 + $0x88] sm:$0xff]
        %v409 = vld [vmem:[#allocation2 + $0x90] sm:$0xff]
        %v410 = vld [vmem:[#allocation2 + $0x98] sm:$0xff]
        %v411 = vld [vmem:[#allocation2 + $0xa0] sm:$0xff]
        %v412 = vld [vmem:[#allocation2 + $0xa8] sm:$0xff]
        %v413 = vld [vmem:[#allocation2 + $0xb0] sm:$0xff]
        %v414 = vld [vmem:[#allocation2 + $0xb8] sm:$0xff]
        %v415 = vld [vmem:[#allocation2 + $0xc0] sm:$0xff]
        %v416 = vld [vmem:[#allocation2 + $0xc8] sm:$0xff]
        %v417 = vld [vmem:[#allocation2 + $0xd0] sm:$0xff]
        %v418 = vld [vmem:[#allocation2 + $0xd8] sm:$0xff]
        %v419 = vld [vmem:[#allocation2 + $0xe0] sm:$0xff]
        %v420 = vld [vmem:[#allocation2 + $0xe8] sm:$0xff]
        %v421 = vld [vmem:[#allocation2 + $0xf0] sm:$0xff]
        %v422 = vld [vmem:[#allocation2 + $0xf8] sm:$0xff]
        %v423 = vld [vmem:[%s325] sm:$0xff]
        %v424 = vld [vmem:[%s325 + $0x8] sm:$0xff]
        %v425 = vld [vmem:[%s325 + $0x10] sm:$0xff]
        %v426 = vld [vmem:[%s325 + $0x18] sm:$0xff]
        %v427 = vld [vmem:[%s325 + $0x20] sm:$0xff]
        %v428 = vld [vmem:[%s325 + $0x28] sm:$0xff]
        %v429 = vld [vmem:[%s325 + $0x30] sm:$0xff]
        %v430 = vld [vmem:[%s325 + $0x38] sm:$0xff]
        %v431 = vld [vmem:[%s325 + $0x40] sm:$0xff]
        %v432 = vld [vmem:[%s325 + $0x48] sm:$0xff]
        %v433 = vld [vmem:[%s325 + $0x50] sm:$0xff]
        %v434 = vld [vmem:[%s325 + $0x58] sm:$0xff]
        %v435 = vld [vmem:[%s325 + $0x60] sm:$0xff]
        %v436 = vld [vmem:[%s325 + $0x68] sm:$0xff]
        %v437 = vld [vmem:[%s325 + $0x70] sm:$0xff]
        %v438 = vld [vmem:[%s325 + $0x78] sm:$0xff]
        %v439 = vld [vmem:[%s325 + $0x80] sm:$0xff]
        %v440 = vld [vmem:[%s325 + $0x88] sm:$0xff]
        %v441 = vld [vmem:[%s325 + $0x90] sm:$0xff]
        %v442 = vld [vmem:[%s325 + $0x98] sm:$0xff]
        %v443 = vld [vmem:[%s325 + $0xa0] sm:$0xff]
        %v444 = vld [vmem:[%s325 + $0xa8] sm:$0xff]
        %v445 = vld [vmem:[%s325 + $0xb0] sm:$0xff]
        %v446 = vld [vmem:[%s325 + $0xb8] sm:$0xff]
        %v447 = vld [vmem:[%s325 + $0xc0] sm:$0xff]
        %v448 = vld [vmem:[%s325 + $0xc8] sm:$0xff]
        %v449 = vld [vmem:[%s325 + $0xd0] sm:$0xff]
        %v450 = vld [vmem:[%s325 + $0xd8] sm:$0xff]
        %v451 = vld [vmem:[%s325 + $0xe0] sm:$0xff]
        %v452 = vld [vmem:[%s325 + $0xe8] sm:$0xff]
        %v453 = vld [vmem:[%s325 + $0xf0] sm:$0xff]
        %v454 = vld [vmem:[%s325 + $0xf8] sm:$0xff]
        %v455 = vld [vmem:[%s339] sm:$0xf]
        %v456 = vld [vmem:[%s339 + $0x4] sm:$0xf]
        %v457 = vld [vmem:[%s339 + $0x8] sm:$0xf]
        %v458 = vld [vmem:[%s339 + $0xc] sm:$0xf]
        %v459 = vld [vmem:[%s339 + $0x10] sm:$0xf]
        %v460 = vld [vmem:[%s339 + $0x14] sm:$0xf]
        %v461 = vld [vmem:[%s339 + $0x18] sm:$0xf]
        %v462 = vld [vmem:[%s339 + $0x1c] sm:$0xf]
        %v463 = vld [vmem:[%s339 + $0x20] sm:$0xf]
        %v464 = vld [vmem:[%s339 + $0x24] sm:$0xf]
        %v465 = vld [vmem:[%s339 + $0x28] sm:$0xf]
        %v466 = vld [vmem:[%s339 + $0x2c] sm:$0xf]
        %v467 = vld [vmem:[%s339 + $0x30] sm:$0xf]
        %v468 = vld [vmem:[%s339 + $0x34] sm:$0xf]
        %v469 = vld [vmem:[%s339 + $0x38] sm:$0xf]
        %v470 = vld [vmem:[%s339 + $0x3c] sm:$0xf]
        %v471 = vld [vmem:[%s339 + $0x40] sm:$0xf]
        %v472 = vld [vmem:[%s339 + $0x44] sm:$0xf]
        %v473 = vld [vmem:[%s339 + $0x48] sm:$0xf]
        %v474 = vld [vmem:[%s339 + $0x4c] sm:$0xf]
        %v475 = vld [vmem:[%s339 + $0x50] sm:$0xf]
        %v476 = vld [vmem:[%s339 + $0x54] sm:$0xf]
        %v477 = vld [vmem:[%s339 + $0x58] sm:$0xf]
        %v478 = vld [vmem:[%s339 + $0x5c] sm:$0xf]
        %v479 = vld [vmem:[%s339 + $0x60] sm:$0xf]
        %v480 = vld [vmem:[%s339 + $0x64] sm:$0xf]
        %v481 = vld [vmem:[%s339 + $0x68] sm:$0xf]
        %v482 = vld [vmem:[%s339 + $0x6c] sm:$0xf]
        %v483 = vld [vmem:[%s339 + $0x70] sm:$0xf]
        %v484 = vld [vmem:[%s339 + $0x74] sm:$0xf]
        %v485 = vld [vmem:[%s339 + $0x78] sm:$0xf]
        %v486 = vld [vmem:[%s339 + $0x7c] sm:$0xf]
        %v519 = vunpack.c.l.b16 %v423
        %v520 = vunpack.c.h.b16 %v423
        %v521 = vunpack.c.l.b16 %v424
        %v522 = vunpack.c.h.b16 %v424
        %v523 = vunpack.c.l.b16 %v425
        %v524 = vunpack.c.h.b16 %v425
        %v525 = vunpack.c.l.b16 %v426
        %v526 = vunpack.c.h.b16 %v426
        %v527 = vunpack.c.l.b16 %v427
        %v528 = vunpack.c.h.b16 %v427
        %v529 = vunpack.c.l.b16 %v428
        %v530 = vunpack.c.h.b16 %v428
        %v531 = vunpack.c.l.b16 %v429
        %v532 = vunpack.c.h.b16 %v429
        %v533 = vunpack.c.l.b16 %v430
        %v534 = vunpack.c.h.b16 %v430
        %v535 = vunpack.c.l.b16 %v431
        %v536 = vunpack.c.h.b16 %v431
        %v537 = vunpack.c.l.b16 %v432
        %v538 = vunpack.c.h.b16 %v432
        %v539 = vunpack.c.l.b16 %v433
        %v540 = vunpack.c.h.b16 %v433
        %v541 = vunpack.c.l.b16 %v434
        %v542 = vunpack.c.h.b16 %v434
        %v543 = vunpack.c.l.b16 %v435
        %v544 = vunpack.c.h.b16 %v435
        %v545 = vunpack.c.l.b16 %v436
        %v546 = vunpack.c.h.b16 %v436
        %v547 = vunpack.c.l.b16 %v437
        %v548 = vunpack.c.h.b16 %v437
        %v549 = vunpack.c.l.b16 %v438
        %v550 = vunpack.c.h.b16 %v438
        %v551 = vunpack.c.l.b16 %v439
        %v552 = vunpack.c.h.b16 %v439
        %v553 = vunpack.c.l.b16 %v440
        %v554 = vunpack.c.h.b16 %v440
        %v555 = vunpack.c.l.b16 %v441
        %v556 = vunpack.c.h.b16 %v441
        %v557 = vunpack.c.l.b16 %v442
        %v558 = vunpack.c.h.b16 %v442
        %v559 = vunpack.c.l.b16 %v443
        %v560 = vunpack.c.h.b16 %v443
        %v561 = vunpack.c.l.b16 %v444
        %v562 = vunpack.c.h.b16 %v444
        %v563 = vunpack.c.l.b16 %v445
        %v564 = vunpack.c.h.b16 %v445
        %v565 = vunpack.c.l.b16 %v446
        %v566 = vunpack.c.h.b16 %v446
        %v567 = vunpack.c.l.b16 %v447
        %v568 = vunpack.c.h.b16 %v447
        %v569 = vunpack.c.l.b16 %v448
        %v570 = vunpack.c.h.b16 %v448
        %v571 = vunpack.c.l.b16 %v449
        %v572 = vunpack.c.h.b16 %v449
        %v573 = vunpack.c.l.b16 %v450
        %v574 = vunpack.c.h.b16 %v450
        %v575 = vunpack.c.l.b16 %v451
        %v576 = vunpack.c.h.b16 %v451
        %v577 = vunpack.c.l.b16 %v452
        %v578 = vunpack.c.h.b16 %v452
        %v579 = vunpack.c.l.b16 %v453
        %v580 = vunpack.c.h.b16 %v453
        %v581 = vunpack.c.l.b16 %v454
        %v582 = vunpack.c.h.b16 %v454
        %v583 = vpack.c.b16 %v521, %v519
        %v584 = vpack.c.b16 %v522, %v520
        %v585 = vpack.c.b16 %v525, %v523
        %v586 = vpack.c.b16 %v526, %v524
        %v587 = vpack.c.b16 %v529, %v527
        %v588 = vpack.c.b16 %v530, %v528
        %v589 = vpack.c.b16 %v533, %v531
        %v590 = vpack.c.b16 %v534, %v532
        %v591 = vpack.c.b16 %v537, %v535
        %v592 = vpack.c.b16 %v538, %v536
        %v593 = vpack.c.b16 %v541, %v539
        %v594 = vpack.c.b16 %v542, %v540
        %v595 = vpack.c.b16 %v545, %v543
        %v596 = vpack.c.b16 %v546, %v544
        %v597 = vpack.c.b16 %v549, %v547
        %v598 = vpack.c.b16 %v550, %v548
        %v599 = vpack.c.b16 %v553, %v551
        %v600 = vpack.c.b16 %v554, %v552
        %v601 = vpack.c.b16 %v557, %v555
        %v602 = vpack.c.b16 %v558, %v556
        %v603 = vpack.c.b16 %v561, %v559
        %v604 = vpack.c.b16 %v562, %v560
        %v605 = vpack.c.b16 %v565, %v563
        %v606 = vpack.c.b16 %v566, %v564
        %v607 = vpack.c.b16 %v569, %v567
        %v608 = vpack.c.b16 %v570, %v568
        %v609 = vpack.c.b16 %v573, %v571
        %v610 = vpack.c.b16 %v574, %v572
        %v611 = vpack.c.b16 %v577, %v575
        %v612 = vpack.c.b16 %v578, %v576
        %v613 = vpack.c.b16 %v581, %v579
        %v614 = vpack.c.b16 %v582, %v580
        %v679 = vunpack.c.l.b16 %v455
        %v680 = vunpack.c.l.b16 %v456
        %v681 = vunpack.c.l.b16 %v457
        %v682 = vunpack.c.l.b16 %v458
        %v683 = vunpack.c.l.b16 %v459
        %v684 = vunpack.c.l.b16 %v460
        %v685 = vunpack.c.l.b16 %v461
        %v686 = vunpack.c.l.b16 %v462
        %v687 = vunpack.c.l.b16 %v463
        %v688 = vunpack.c.l.b16 %v464
        %v689 = vunpack.c.l.b16 %v465
        %v690 = vunpack.c.l.b16 %v466
        %v691 = vunpack.c.l.b16 %v467
        %v692 = vunpack.c.l.b16 %v468
        %v693 = vunpack.c.l.b16 %v469
        %v694 = vunpack.c.l.b16 %v470
        %v695 = vunpack.c.l.b16 %v471
        %v696 = vunpack.c.l.b16 %v472
        %v697 = vunpack.c.l.b16 %v473
        %v698 = vunpack.c.l.b16 %v474
        %v699 = vunpack.c.l.b16 %v475
        %v700 = vunpack.c.l.b16 %v476
        %v701 = vunpack.c.l.b16 %v477
        %v702 = vunpack.c.l.b16 %v478
        %v703 = vunpack.c.l.b16 %v479
        %v704 = vunpack.c.l.b16 %v480
        %v705 = vunpack.c.l.b16 %v481
        %v706 = vunpack.c.l.b16 %v482
        %v707 = vunpack.c.l.b16 %v483
        %v708 = vunpack.c.l.b16 %v484
        %v709 = vunpack.c.l.b16 %v485
        %v710 = vunpack.c.l.b16 %v486
        %v711 = vpack.c.b16 %v680, %v679
        %v712 = vpack.c.b16 %v682, %v681
        %v713 = vpack.c.b16 %v684, %v683
        %v714 = vpack.c.b16 %v686, %v685
        %v715 = vpack.c.b16 %v688, %v687
        %v716 = vpack.c.b16 %v690, %v689
        %v717 = vpack.c.b16 %v692, %v691
        %v718 = vpack.c.b16 %v694, %v693
        %v719 = vpack.c.b16 %v696, %v695
        %v720 = vpack.c.b16 %v698, %v697
        %v721 = vpack.c.b16 %v700, %v699
        %v722 = vpack.c.b16 %v702, %v701
        %v723 = vpack.c.b16 %v704, %v703
        %v724 = vpack.c.b16 %v706, %v705
        %v725 = vpack.c.b16 %v708, %v707
        %v726 = vpack.c.b16 %v710, %v709
        %743 = vmatprep.subr.bf16.mxu0 0
        %744 = vmatpush1.bf16.msra.mxu0 %v718
        %745 = vmatprep.subr.bf16.mxu0 0
        %746 = vmatpush1.bf16.msra.mxu0 %v717
        %747 = vmatprep.subr.bf16.mxu0 0
        %748 = vmatpush1.bf16.msra.mxu0 %v716
        %749 = vmatprep.subr.bf16.mxu0 0
        %750 = vmatpush1.bf16.msra.mxu0 %v715
        %751 = vmatprep.subr.bf16.mxu0 0
        %752 = vmatpush1.bf16.msra.mxu0 %v714
        %753 = vmatprep.subr.bf16.mxu0 0
        %754 = vmatpush1.bf16.msra.mxu0 %v713
        %755 = vmatprep.subr.bf16.mxu0 0
        %756 = vmatpush1.bf16.msra.mxu0 %v712
        %757 = vmatprep.subr.bf16.mxu0 0
        %758 = vmatpush1.bf16.msra.mxu0 %v711
        %759 = vmatprep.subr.bf16.mxu0 0
        %760 = vmatpush2.bf16.msra.mxu0 %v726
        %761 = vmatprep.subr.bf16.mxu0 0
        %762 = vmatpush2.bf16.msra.mxu0 %v725
        %763 = vmatprep.subr.bf16.mxu0 0
        %764 = vmatpush2.bf16.msra.mxu0 %v724
        %765 = vmatprep.subr.bf16.mxu0 0
        %766 = vmatpush2.bf16.msra.mxu0 %v723
        %767 = vmatprep.subr.bf16.mxu0 0
        %768 = vmatpush2.bf16.msra.mxu0 %v722
        %769 = vmatprep.subr.bf16.mxu0 0
        %770 = vmatpush2.bf16.msra.mxu0 %v721
        %771 = vmatprep.subr.bf16.mxu0 0
        %772 = vmatpush2.bf16.msra.mxu0 %v720
        %773 = vmatprep.subr.bf16.mxu0 0
        %774 = vmatpush2.bf16.msra.mxu0 %v719
        %775 = vmatprep.mubr.bf16.mxu0 %v584
        %776 = vmatmul.mubr.bf16.gmra.mxu0 %v583
        %v777 = vpop.f32.mrf.mxu0
        %v778 = vadd.f32 0.0, %v777
        %v779 = vpop.f32.mrf.mxu0
        %v780 = vpop.f32.mrf.mxu0
        %v781 = vadd.f32 0.0, %v780
        %v782 = vpop.f32.mrf.mxu0
        %783 = vmatprep.mubr.bf16.mxu0 %v586
        %784 = vmatmul.mubr.bf16.gmra.mxu0 %v585
        %v785 = vpop.f32.mrf.mxu0
        %v786 = vadd.f32 0.0, %v785
        %v787 = vpop.f32.mrf.mxu0
        %v788 = vpop.f32.mrf.mxu0
        %v789 = vadd.f32 0.0, %v788
        %v790 = vpop.f32.mrf.mxu0
        %791 = vmatprep.mubr.bf16.mxu0 %v588
        %792 = vmatmul.mubr.bf16.gmra.mxu0 %v587
        %v793 = vpop.f32.mrf.mxu0
        %v794 = vadd.f32 0.0, %v793
        %v795 = vpop.f32.mrf.mxu0
        %v796 = vpop.f32.mrf.mxu0
        %v797 = vadd.f32 0.0, %v796
        %v798 = vpop.f32.mrf.mxu0
        %799 = vmatprep.mubr.bf16.mxu0 %v590
        %800 = vmatmul.mubr.bf16.gmra.mxu0 %v589
        %v801 = vpop.f32.mrf.mxu0
        %v802 = vadd.f32 0.0, %v801
        %v803 = vpop.f32.mrf.mxu0
        %v804 = vpop.f32.mrf.mxu0
        %v805 = vadd.f32 0.0, %v804
        %v806 = vpop.f32.mrf.mxu0
        %807 = vmatprep.mubr.bf16.mxu0 %v592
        %808 = vmatmul.mubr.bf16.gmra.mxu0 %v591
        %v809 = vpop.f32.mrf.mxu0
        %v810 = vadd.f32 0.0, %v809
        %v811 = vpop.f32.mrf.mxu0
        %v812 = vpop.f32.mrf.mxu0
        %v813 = vadd.f32 0.0, %v812
        %v814 = vpop.f32.mrf.mxu0
        %815 = vmatprep.mubr.bf16.mxu0 %v594
        %816 = vmatmul.mubr.bf16.gmra.mxu0 %v593
        %v817 = vpop.f32.mrf.mxu0
        %v818 = vadd.f32 0.0, %v817
        %v819 = vpop.f32.mrf.mxu0
        %v820 = vpop.f32.mrf.mxu0
        %v821 = vadd.f32 0.0, %v820
        %v822 = vpop.f32.mrf.mxu0
        %823 = vmatprep.mubr.bf16.mxu0 %v596
        %824 = vmatmul.mubr.bf16.gmra.mxu0 %v595
        %v825 = vpop.f32.mrf.mxu0
        %v826 = vadd.f32 0.0, %v825
        %v827 = vpop.f32.mrf.mxu0
        %v828 = vpop.f32.mrf.mxu0
        %v829 = vadd.f32 0.0, %v828
        %v830 = vpop.f32.mrf.mxu0
        %831 = vmatprep.mubr.bf16.mxu0 %v598
        %832 = vmatmul.mubr.bf16.gmra.mxu0 %v597
        %v833 = vpop.f32.mrf.mxu0
        %v834 = vadd.f32 0.0, %v833
        %v835 = vpop.f32.mrf.mxu0
        %v836 = vpop.f32.mrf.mxu0
        %v837 = vadd.f32 0.0, %v836
        %v838 = vpop.f32.mrf.mxu0
        %839 = vmatprep.mubr.bf16.mxu0 %v600
        %840 = vmatmul.mubr.bf16.gmra.mxu0 %v599
        %v841 = vpop.f32.mrf.mxu0
        %v842 = vadd.f32 0.0, %v841
        %v843 = vpop.f32.mrf.mxu0
        %v844 = vpop.f32.mrf.mxu0
        %v845 = vadd.f32 0.0, %v844
        %v846 = vpop.f32.mrf.mxu0
        %847 = vmatprep.mubr.bf16.mxu0 %v602
        %848 = vmatmul.mubr.bf16.gmra.mxu0 %v601
        %v849 = vpop.f32.mrf.mxu0
        %v850 = vadd.f32 0.0, %v849
        %v851 = vpop.f32.mrf.mxu0
        %v852 = vpop.f32.mrf.mxu0
        %v853 = vadd.f32 0.0, %v852
        %v854 = vpop.f32.mrf.mxu0
        %855 = vmatprep.mubr.bf16.mxu0 %v604
        %856 = vmatmul.mubr.bf16.gmra.mxu0 %v603
        %v857 = vpop.f32.mrf.mxu0
        %v858 = vadd.f32 0.0, %v857
        %v859 = vpop.f32.mrf.mxu0
        %v860 = vpop.f32.mrf.mxu0
        %v861 = vadd.f32 0.0, %v860
        %v862 = vpop.f32.mrf.mxu0
        %863 = vmatprep.mubr.bf16.mxu0 %v606
        %864 = vmatmul.mubr.bf16.gmra.mxu0 %v605
        %v865 = vpop.f32.mrf.mxu0
        %v866 = vadd.f32 0.0, %v865
        %v867 = vpop.f32.mrf.mxu0
        %v868 = vpop.f32.mrf.mxu0
        %v869 = vadd.f32 0.0, %v868
        %v870 = vpop.f32.mrf.mxu0
        %871 = vmatprep.mubr.bf16.mxu0 %v608
        %872 = vmatmul.mubr.bf16.gmra.mxu0 %v607
        %v873 = vpop.f32.mrf.mxu0
        %v874 = vadd.f32 0.0, %v873
        %v875 = vpop.f32.mrf.mxu0
        %v876 = vpop.f32.mrf.mxu0
        %v877 = vadd.f32 0.0, %v876
        %v878 = vpop.f32.mrf.mxu0
        %879 = vmatprep.mubr.bf16.mxu0 %v610
        %880 = vmatmul.mubr.bf16.gmra.mxu0 %v609
        %v881 = vpop.f32.mrf.mxu0
        %v882 = vadd.f32 0.0, %v881
        %v883 = vpop.f32.mrf.mxu0
        %v884 = vpop.f32.mrf.mxu0
        %v885 = vadd.f32 0.0, %v884
        %v886 = vpop.f32.mrf.mxu0
        %887 = vmatprep.mubr.bf16.mxu0 %v612
        %888 = vmatmul.mubr.bf16.gmra.mxu0 %v611
        %v889 = vpop.f32.mrf.mxu0
        %v890 = vadd.f32 0.0, %v889
        %v891 = vpop.f32.mrf.mxu0
        %v892 = vpop.f32.mrf.mxu0
        %v893 = vadd.f32 0.0, %v892
        %v894 = vpop.f32.mrf.mxu0
        %895 = vmatprep.mubr.bf16.mxu0 %v614
        %896 = vmatmul.mubr.bf16.gmra.mxu0 %v613
        %v897 = vpop.f32.mrf.mxu0
        %v898 = vadd.f32 0.0, %v897
        %v899 = vpop.f32.mrf.mxu0
        %v900 = vpop.f32.mrf.mxu0
        %v901 = vadd.f32 0.0, %v900
        %v902 = vpop.f32.mrf.mxu0
        %903 = vdwg.mxu0
        %v904 = vadd.f32 %v391, %v778
        %v905 = vadd.f32 %v392, %v781
        %v906 = vadd.f32 %v393, %v786
        %v907 = vadd.f32 %v394, %v789
        %v908 = vadd.f32 %v395, %v794
        %v909 = vadd.f32 %v396, %v797
        %v910 = vadd.f32 %v397, %v802
        %v911 = vadd.f32 %v398, %v805
        %v912 = vadd.f32 %v399, %v810
        %v913 = vadd.f32 %v400, %v813
        %v914 = vadd.f32 %v401, %v818
        %v915 = vadd.f32 %v402, %v821
        %v916 = vadd.f32 %v403, %v826
        %v917 = vadd.f32 %v404, %v829
        %v918 = vadd.f32 %v405, %v834
        %v919 = vadd.f32 %v406, %v837
        %v920 = vadd.f32 %v407, %v842
        %v921 = vadd.f32 %v408, %v845
        %v922 = vadd.f32 %v409, %v850
        %v923 = vadd.f32 %v410, %v853
        %v924 = vadd.f32 %v411, %v858
        %v925 = vadd.f32 %v412, %v861
        %v926 = vadd.f32 %v413, %v866
        %v927 = vadd.f32 %v414, %v869
        %v928 = vadd.f32 %v415, %v874
        %v929 = vadd.f32 %v416, %v877
        %v930 = vadd.f32 %v417, %v882
        %v931 = vadd.f32 %v418, %v885
        %v932 = vadd.f32 %v419, %v890
        %v933 = vadd.f32 %v420, %v893
        %v934 = vadd.f32 %v421, %v898
        %v935 = vadd.f32 %v422, %v901
        %936 = vst [vmem:[#allocation2] sm:$0xff] %v904
        %937 = vst [vmem:[#allocation2 + $0x8] sm:$0xff] %v905
        %938 = vst [vmem:[#allocation2 + $0x10] sm:$0xff] %v906
        %939 = vst [vmem:[#allocation2 + $0x18] sm:$0xff] %v907
        %940 = vst [vmem:[#allocation2 + $0x20] sm:$0xff] %v908
        %941 = vst [vmem:[#allocation2 + $0x28] sm:$0xff] %v909
        %942 = vst [vmem:[#allocation2 + $0x30] sm:$0xff] %v910
        %943 = vst [vmem:[#allocation2 + $0x38] sm:$0xff] %v911
        %944 = vst [vmem:[#allocation2 + $0x40] sm:$0xff] %v912
        %945 = vst [vmem:[#allocation2 + $0x48] sm:$0xff] %v913
        %946 = vst [vmem:[#allocation2 + $0x50] sm:$0xff] %v914
        %947 = vst [vmem:[#allocation2 + $0x58] sm:$0xff] %v915
        %948 = vst [vmem:[#allocation2 + $0x60] sm:$0xff] %v916
        %949 = vst [vmem:[#allocation2 + $0x68] sm:$0xff] %v917
        %950 = vst [vmem:[#allocation2 + $0x70] sm:$0xff] %v918
        %951 = vst [vmem:[#allocation2 + $0x78] sm:$0xff] %v919
        %952 = vst [vmem:[#allocation2 + $0x80] sm:$0xff] %v920
        %953 = vst [vmem:[#allocation2 + $0x88] sm:$0xff] %v921
        %954 = vst [vmem:[#allocation2 + $0x90] sm:$0xff] %v922
        %955 = vst [vmem:[#allocation2 + $0x98] sm:$0xff] %v923
        %956 = vst [vmem:[#allocation2 + $0xa0] sm:$0xff] %v924
        %957 = vst [vmem:[#allocation2 + $0xa8] sm:$0xff] %v925
        %958 = vst [vmem:[#allocation2 + $0xb0] sm:$0xff] %v926
        %959 = vst [vmem:[#allocation2 + $0xb8] sm:$0xff] %v927
        %960 = vst [vmem:[#allocation2 + $0xc0] sm:$0xff] %v928
        %961 = vst [vmem:[#allocation2 + $0xc8] sm:$0xff] %v929
        %962 = vst [vmem:[#allocation2 + $0xd0] sm:$0xff] %v930
        %963 = vst [vmem:[#allocation2 + $0xd8] sm:$0xff] %v931
        %964 = vst [vmem:[#allocation2 + $0xe0] sm:$0xff] %v932
        %965 = vst [vmem:[#allocation2 + $0xe8] sm:$0xff] %v933
        %966 = vst [vmem:[#allocation2 + $0xf0] sm:$0xff] %v934
        %967 = vst [vmem:[#allocation2 + $0xf8] sm:$0xff] %v935
        // Predicated region
        $region33: #{generator_forward.17} parent=27 // pred_check
          %p968 = pneg %p355
        $region34: #{generator_forward.17} parent=27 // pred_check_branch
          %970 = sbr.rel (%p968) target = $region36
        $region35: #{generator_forward.17} parent=27 // pred_region
          %v971 = vld [vmem:[#allocation2] sm:$0xff]
          %v972 = vld [vmem:[#allocation2 + $0x8] sm:$0xff]
          %v973 = vld [vmem:[#allocation2 + $0x10] sm:$0xff]
          %v974 = vld [vmem:[#allocation2 + $0x18] sm:$0xff]
          %v975 = vld [vmem:[#allocation2 + $0x20] sm:$0xff]
          %v976 = vld [vmem:[#allocation2 + $0x28] sm:$0xff]
          %v977 = vld [vmem:[#allocation2 + $0x30] sm:$0xff]
          %v978 = vld [vmem:[#allocation2 + $0x38] sm:$0xff]
          %v979 = vld [vmem:[#allocation2 + $0x40] sm:$0xff]
          %v980 = vld [vmem:[#allocation2 + $0x48] sm:$0xff]
          %v981 = vld [vmem:[#allocation2 + $0x50] sm:$0xff]
          %v982 = vld [vmem:[#allocation2 + $0x58] sm:$0xff]
          %v983 = vld [vmem:[#allocation2 + $0x60] sm:$0xff]
          %v984 = vld [vmem:[#allocation2 + $0x68] sm:$0xff]
          %v985 = vld [vmem:[#allocation2 + $0x70] sm:$0xff]
          %v986 = vld [vmem:[#allocation2 + $0x78] sm:$0xff]
          %v987 = vld [vmem:[#allocation2 + $0x80] sm:$0xff]
          %v988 = vld [vmem:[#allocation2 + $0x88] sm:$0xff]
          %v989 = vld [vmem:[#allocation2 + $0x90] sm:$0xff]
          %v990 = vld [vmem:[#allocation2 + $0x98] sm:$0xff]
          %v991 = vld [vmem:[#allocation2 + $0xa0] sm:$0xff]
          %v992 = vld [vmem:[#allocation2 + $0xa8] sm:$0xff]
          %v993 = vld [vmem:[#allocation2 + $0xb0] sm:$0xff]
          %v994 = vld [vmem:[#allocation2 + $0xb8] sm:$0xff]
          %v995 = vld [vmem:[#allocation2 + $0xc0] sm:$0xff]
          %v996 = vld [vmem:[#allocation2 + $0xc8] sm:$0xff]
          %v997 = vld [vmem:[#allocation2 + $0xd0] sm:$0xff]
          %v998 = vld [vmem:[#allocation2 + $0xd8] sm:$0xff]
          %v999 = vld [vmem:[#allocation2 + $0xe0] sm:$0xff]
          %v1000 = vld [vmem:[#allocation2 + $0xe8] sm:$0xff]
          %v1001 = vld [vmem:[#allocation2 + $0xf0] sm:$0xff]
          %v1002 = vld [vmem:[#allocation2 + $0xf8] sm:$0xff]
          %v1003 = vtanh.pop %v971
          %v1004 = vtanh.pop %v972
          %v1005 = vtanh.pop %v973
          %v1006 = vtanh.pop %v974
          %v1007 = vtanh.pop %v975
          %v1008 = vtanh.pop %v976
          %v1009 = vtanh.pop %v977
          %v1010 = vtanh.pop %v978
          %v1011 = vtanh.pop %v979
          %v1012 = vtanh.pop %v980
          %v1013 = vtanh.pop %v981
          %v1014 = vtanh.pop %v982
          %v1015 = vtanh.pop %v983
          %v1016 = vtanh.pop %v984
          %v1017 = vtanh.pop %v985
          %v1018 = vtanh.pop %v986
          %v1019 = vtanh.pop %v987
          %v1020 = vtanh.pop %v988
          %v1021 = vtanh.pop %v989
          %v1022 = vtanh.pop %v990
          %v1023 = vtanh.pop %v991
          %v1024 = vtanh.pop %v992
          %v1025 = vtanh.pop %v993
          %v1026 = vtanh.pop %v994
          %v1027 = vtanh.pop %v995
          %v1028 = vtanh.pop %v996
          %v1029 = vtanh.pop %v997
          %v1030 = vtanh.pop %v998
          %v1031 = vtanh.pop %v999
          %v1032 = vtanh.pop %v1000
          %v1033 = vtanh.pop %v1001
          %v1034 = vtanh.pop %v1002
          %v1035 = vpack.c.bf16 %v1004, %v1003
          %v1036 = vpack.c.bf16 %v1006, %v1005
          %v1037 = vpack.c.bf16 %v1008, %v1007
          %v1038 = vpack.c.bf16 %v1010, %v1009
          %v1039 = vpack.c.bf16 %v1012, %v1011
          %v1040 = vpack.c.bf16 %v1014, %v1013
          %v1041 = vpack.c.bf16 %v1016, %v1015
          %v1042 = vpack.c.bf16 %v1018, %v1017
          %v1043 = vpack.c.bf16 %v1020, %v1019
          %v1044 = vpack.c.bf16 %v1022, %v1021
          %v1045 = vpack.c.bf16 %v1024, %v1023
          %v1046 = vpack.c.bf16 %v1026, %v1025
          %v1047 = vpack.c.bf16 %v1028, %v1027
          %v1048 = vpack.c.bf16 %v1030, %v1029
          %v1049 = vpack.c.bf16 %v1032, %v1031
          %v1050 = vpack.c.bf16 %v1034, %v1033
          %v1067 = vunpack.c.l.b16 %v1035
          %v1068 = vunpack.c.h.b16 %v1035
          %v1069 = vunpack.c.l.b16 %v1036
          %v1070 = vunpack.c.h.b16 %v1036
          %v1071 = vunpack.c.l.b16 %v1037
          %v1072 = vunpack.c.h.b16 %v1037
          %v1073 = vunpack.c.l.b16 %v1038
          %v1074 = vunpack.c.h.b16 %v1038
          %v1075 = vunpack.c.l.b16 %v1039
          %v1076 = vunpack.c.h.b16 %v1039
          %v1077 = vunpack.c.l.b16 %v1040
          %v1078 = vunpack.c.h.b16 %v1040
          %v1079 = vunpack.c.l.b16 %v1041
          %v1080 = vunpack.c.h.b16 %v1041
          %v1081 = vunpack.c.l.b16 %v1042
          %v1082 = vunpack.c.h.b16 %v1042
          %v1083 = vunpack.c.l.b16 %v1043
          %v1084 = vunpack.c.h.b16 %v1043
          %v1085 = vunpack.c.l.b16 %v1044
          %v1086 = vunpack.c.h.b16 %v1044
          %v1087 = vunpack.c.l.b16 %v1045
          %v1088 = vunpack.c.h.b16 %v1045
          %v1089 = vunpack.c.l.b16 %v1046
          %v1090 = vunpack.c.h.b16 %v1046
          %v1091 = vunpack.c.l.b16 %v1047
          %v1092 = vunpack.c.h.b16 %v1047
          %v1093 = vunpack.c.l.b16 %v1048
          %v1094 = vunpack.c.h.b16 %v1048
          %v1095 = vunpack.c.l.b16 %v1049
          %v1096 = vunpack.c.h.b16 %v1049
          %v1097 = vunpack.c.l.b16 %v1050
          %v1098 = vunpack.c.h.b16 %v1050
          %v1099 = vpack.c.b16 %v1067, %v1067
          %v1100 = vpack.c.b16 %v1068, %v1068
          %v1101 = vpack.c.b16 %v1069, %v1069
          %v1102 = vpack.c.b16 %v1070, %v1070
          %v1103 = vpack.c.b16 %v1071, %v1071
          %v1104 = vpack.c.b16 %v1072, %v1072
          %v1105 = vpack.c.b16 %v1073, %v1073
          %v1106 = vpack.c.b16 %v1074, %v1074
          %v1107 = vpack.c.b16 %v1075, %v1075
          %v1108 = vpack.c.b16 %v1076, %v1076
          %v1109 = vpack.c.b16 %v1077, %v1077
          %v1110 = vpack.c.b16 %v1078, %v1078
          %v1111 = vpack.c.b16 %v1079, %v1079
          %v1112 = vpack.c.b16 %v1080, %v1080
          %v1113 = vpack.c.b16 %v1081, %v1081
          %v1114 = vpack.c.b16 %v1082, %v1082
          %v1115 = vpack.c.b16 %v1083, %v1083
          %v1116 = vpack.c.b16 %v1084, %v1084
          %v1117 = vpack.c.b16 %v1085, %v1085
          %v1118 = vpack.c.b16 %v1086, %v1086
          %v1119 = vpack.c.b16 %v1087, %v1087
          %v1120 = vpack.c.b16 %v1088, %v1088
          %v1121 = vpack.c.b16 %v1089, %v1089
          %v1122 = vpack.c.b16 %v1090, %v1090
          %v1123 = vpack.c.b16 %v1091, %v1091
          %v1124 = vpack.c.b16 %v1092, %v1092
          %v1125 = vpack.c.b16 %v1093, %v1093
          %v1126 = vpack.c.b16 %v1094, %v1094
          %v1127 = vpack.c.b16 %v1095, %v1095
          %v1128 = vpack.c.b16 %v1096, %v1096
          %v1129 = vpack.c.b16 %v1097, %v1097
          %v1130 = vpack.c.b16 %v1098, %v1098
          %1163 = vst [vmem:[%s352] sm:$0xf] %v1099
          %1164 = vst [vmem:[%s352 + $0x4] sm:$0xf] %v1100
          %1165 = vst [vmem:[%s352 + $0x8] sm:$0xf] %v1101
          %1166 = vst [vmem:[%s352 + $0xc] sm:$0xf] %v1102
          %1167 = vst [vmem:[%s352 + $0x10] sm:$0xf] %v1103
          %1168 = vst [vmem:[%s352 + $0x14] sm:$0xf] %v1104
          %1169 = vst [vmem:[%s352 + $0x18] sm:$0xf] %v1105
          %1170 = vst [vmem:[%s352 + $0x1c] sm:$0xf] %v1106
          %1171 = vst [vmem:[%s352 + $0x20] sm:$0xf] %v1107
          %1172 = vst [vmem:[%s352 + $0x24] sm:$0xf] %v1108
          %1173 = vst [vmem:[%s352 + $0x28] sm:$0xf] %v1109
          %1174 = vst [vmem:[%s352 + $0x2c] sm:$0xf] %v1110
          %1175 = vst [vmem:[%s352 + $0x30] sm:$0xf] %v1111
          %1176 = vst [vmem:[%s352 + $0x34] sm:$0xf] %v1112
          %1177 = vst [vmem:[%s352 + $0x38] sm:$0xf] %v1113
          %1178 = vst [vmem:[%s352 + $0x3c] sm:$0xf] %v1114
          %1179 = vst [vmem:[%s352 + $0x40] sm:$0xf] %v1115
          %1180 = vst [vmem:[%s352 + $0x44] sm:$0xf] %v1116
          %1181 = vst [vmem:[%s352 + $0x48] sm:$0xf] %v1117
          %1182 = vst [vmem:[%s352 + $0x4c] sm:$0xf] %v1118
          %1183 = vst [vmem:[%s352 + $0x50] sm:$0xf] %v1119
          %1184 = vst [vmem:[%s352 + $0x54] sm:$0xf] %v1120
          %1185 = vst [vmem:[%s352 + $0x58] sm:$0xf] %v1121
          %1186 = vst [vmem:[%s352 + $0x5c] sm:$0xf] %v1122
          %1187 = vst [vmem:[%s352 + $0x60] sm:$0xf] %v1123
          %1188 = vst [vmem:[%s352 + $0x64] sm:$0xf] %v1124
          %1189 = vst [vmem:[%s352 + $0x68] sm:$0xf] %v1125
          %1190 = vst [vmem:[%s352 + $0x6c] sm:$0xf] %v1126
          %1191 = vst [vmem:[%s352 + $0x70] sm:$0xf] %v1127
          %1192 = vst [vmem:[%s352 + $0x74] sm:$0xf] %v1128
          %1193 = vst [vmem:[%s352 + $0x78] sm:$0xf] %v1129
          %1194 = vst [vmem:[%s352 + $0x7c] sm:$0xf] %v1130
          %v1195 = vadd.f32 %v1003, %v1004
          %v1196 = vadd.f32 %v1195, %v1005
          %v1197 = vadd.f32 %v1196, %v1006
          %v1198 = vadd.f32 %v1197, %v1007
          %v1199 = vadd.f32 %v1198, %v1008
          %v1200 = vadd.f32 %v1199, %v1009
          %v1201 = vadd.f32 %v1200, %v1010
          %v1202 = vadd.f32 %v1201, %v1011
          %v1203 = vadd.f32 %v1202, %v1012
          %v1204 = vadd.f32 %v1203, %v1013
          %v1205 = vadd.f32 %v1204, %v1014
          %v1206 = vadd.f32 %v1205, %v1015
          %v1207 = vadd.f32 %v1206, %v1016
          %v1208 = vadd.f32 %v1207, %v1017
          %v1209 = vadd.f32 %v1208, %v1018
          %v1210 = vadd.f32 %v1209, %v1019
          %v1211 = vadd.f32 %v1210, %v1020
          %v1212 = vadd.f32 %v1211, %v1021
          %v1213 = vadd.f32 %v1212, %v1022
          %v1214 = vadd.f32 %v1213, %v1023
          %v1215 = vadd.f32 %v1214, %v1024
          %v1216 = vadd.f32 %v1215, %v1025
          %v1217 = vadd.f32 %v1216, %v1026
          %v1218 = vadd.f32 %v1217, %v1027
          %v1219 = vadd.f32 %v1218, %v1028
          %v1220 = vadd.f32 %v1219, %v1029
          %v1221 = vadd.f32 %v1220, %v1030
          %v1222 = vadd.f32 %v1221, %v1031
          %v1223 = vadd.f32 %v1222, %v1032
          %v1224 = vadd.f32 %v1223, %v1033
          %v1225 = vadd.f32 %v1224, %v1034
          %v1226 = vrot.slane %v1225, 4
          %v1227 = vadd.f32 %v1225, %v1226
          %v1228 = vrot.slane %v1227, 2
          %v1229 = vadd.f32 %v1227, %v1228
          %v1230 = vrot.slane %v1229, 1
          %v1231 = vadd.f32 %v1229, %v1230
          %v1232 = vmul.f32 %v1003, %v1003
          %v1233 = vmul.f32 %v1004, %v1004
          %v1234 = vmul.f32 %v1005, %v1005
          %v1235 = vmul.f32 %v1006, %v1006
          %v1236 = vmul.f32 %v1007, %v1007
          %v1237 = vmul.f32 %v1008, %v1008
          %v1238 = vmul.f32 %v1009, %v1009
          %v1239 = vmul.f32 %v1010, %v1010
          %v1240 = vmul.f32 %v1011, %v1011
          %v1241 = vmul.f32 %v1012, %v1012
          %v1242 = vmul.f32 %v1013, %v1013
          %v1243 = vmul.f32 %v1014, %v1014
          %v1244 = vmul.f32 %v1015, %v1015
          %v1245 = vmul.f32 %v1016, %v1016
          %v1246 = vmul.f32 %v1017, %v1017
          %v1247 = vmul.f32 %v1018, %v1018
          %v1248 = vmul.f32 %v1019, %v1019
          %v1249 = vmul.f32 %v1020, %v1020
          %v1250 = vmul.f32 %v1021, %v1021
          %v1251 = vmul.f32 %v1022, %v1022
          %v1252 = vmul.f32 %v1023, %v1023
          %v1253 = vmul.f32 %v1024, %v1024
          %v1254 = vmul.f32 %v1025, %v1025
          %v1255 = vmul.f32 %v1026, %v1026
          %v1256 = vmul.f32 %v1027, %v1027
          %v1257 = vmul.f32 %v1028, %v1028
          %v1258 = vmul.f32 %v1029, %v1029
          %v1259 = vmul.f32 %v1030, %v1030
          %v1260 = vmul.f32 %v1031, %v1031
          %v1261 = vmul.f32 %v1032, %v1032
          %v1262 = vmul.f32 %v1033, %v1033
          %v1263 = vmul.f32 %v1034, %v1034
          %v1264 = vadd.f32 %v1232, %v1233
          %v1265 = vadd.f32 %v1264, %v1234
          %v1266 = vadd.f32 %v1265, %v1235
          %v1267 = vadd.f32 %v1266, %v1236
          %v1268 = vadd.f32 %v1267, %v1237
          %v1269 = vadd.f32 %v1268, %v1238
          %v1270 = vadd.f32 %v1269, %v1239
          %v1271 = vadd.f32 %v1270, %v1240
          %v1272 = vadd.f32 %v1271, %v1241
          %v1273 = vadd.f32 %v1272, %v1242
          %v1274 = vadd.f32 %v1273, %v1243
          %v1275 = vadd.f32 %v1274, %v1244
          %v1276 = vadd.f32 %v1275, %v1245
          %v1277 = vadd.f32 %v1276, %v1246
          %v1278 = vadd.f32 %v1277, %v1247
          %v1279 = vadd.f32 %v1278, %v1248
          %v1280 = vadd.f32 %v1279, %v1249
          %v1281 = vadd.f32 %v1280, %v1250
          %v1282 = vadd.f32 %v1281, %v1251
          %v1283 = vadd.f32 %v1282, %v1252
          %v1284 = vadd.f32 %v1283, %v1253
          %v1285 = vadd.f32 %v1284, %v1254
          %v1286 = vadd.f32 %v1285, %v1255
          %v1287 = vadd.f32 %v1286, %v1256
          %v1288 = vadd.f32 %v1287, %v1257
          %v1289 = vadd.f32 %v1288, %v1258
          %v1290 = vadd.f32 %v1289, %v1259
          %v1291 = vadd.f32 %v1290, %v1260
          %v1292 = vadd.f32 %v1291, %v1261
          %v1293 = vadd.f32 %v1292, %v1262
          %v1294 = vadd.f32 %v1293, %v1263
          %v1295 = vrot.slane %v1294, 4
          %v1296 = vadd.f32 %v1294, %v1295
          %v1297 = vrot.slane %v1296, 2
          %v1298 = vadd.f32 %v1296, %v1297
          %v1299 = vrot.slane %v1298, 1
          %v1300 = vadd.f32 %v1298, %v1299
          %1301 = vst [vmem:[%s304] sm:$0xff] %v1231
          %1302 = vst [vmem:[%s311] sm:$0xff] %v1300
        $region36: #{generator_forward.17} parent=27 // pred_fallthru
          _
        %s1303 = smul.u32 32, %s29
        %p1304 = scmp.lt.s32.totalorder %s28, 3
        %s1305 = scalar_select %p1304, %s28, 3
        %p1306 = scmp.lt.s32.totalorder %s1303, 255
        %s1307 = scalar_select %p1306, %s1303, 255
        %p1308 = scmp.lt.s32.totalorder %s30, 0
        %s1309 = scalar_select %p1308, %s30, 0
        %s1310 = sadd.s32 %s1309, %s1307
        %s1311 = smul.addr %s1305, 256
        %s1312 = sadd.s32 %s1310, %s1311
        %s1313 = smul.addr %s1312, 4
        %s1314 = scalar_lea.vmem %s2, %s1313
        %s1315 = sand.u32 %s150, 1
        %s1316 = scalar_lea.sflag [#allocation4], %s1315
        %s1317 = sand.u32 %s150, 1
        %s1318 = smul.addr %s1317, 8
        %s1319 = scalar_lea.vmem [#allocation3], %s1318
        %s1320 = sand.u32 %s180, 1
        %s1321 = scalar_lea.sflag [#allocation6], %s1320
        %s1322 = sand.u32 %s180, 1
        %s1323 = smul.addr %s1322, 8
        %s1324 = scalar_lea.vmem [#allocation5], %s1323
        // Predicated region
        $region37: #{generator_forward.17} parent=27 // pred_check
          %p1325 = pneg %p130
        $region38: #{generator_forward.17} parent=27 // pred_check_branch
          %1327 = sbr.rel (%p1325) target = $region40
        $region39: #{generator_forward.17} parent=27 // pred_region
          %s1328 = smul.u32 32, %s29
        $region40: #{generator_forward.17} parent=27 // pred_fallthru
          _
        // Predicated region
        $region41: #{generator_forward.17} parent=27 // pred_check
          %p1329 = pneg %p160
        $region42: #{generator_forward.17} parent=27 // pred_check_branch
          %1331 = sbr.rel (%p1329) target = $region44
        $region43: #{generator_forward.17} parent=27 // pred_region
          %s1333 = ssub.s32 128, 128
          %1334 = vsyncadd %s1316, %s1333
          %s1335 = sadd.s32 %s30, %s29
          %s1336 = smul.addr %s28, 8
          %s1337 = sadd.s32 %s1335, %s1336
          %s1338 = smul.addr %s1337, 128
          %s1339 = scalar_lea.hbm %s3, %s1338
          %s1341 = sshll.u32 %s1319, 4
          %s1342 = int_to_ptr.vmem [resolvable:$true] %s1341
          %1344 = dma.vmem_to_hbm [thread:$0]  %s1342, 128, %s1339, %s1316
        $region44: #{generator_forward.17} parent=27 // pred_fallthru
          _
        // Predicated region
        $region45: #{generator_forward.17} parent=27 // pred_check
          %p1345 = pneg %p190
        $region46: #{generator_forward.17} parent=27 // pred_check_branch
          %1347 = sbr.rel (%p1345) target = $region48
        $region47: #{generator_forward.17} parent=27 // pred_region
          %s1349 = ssub.s32 128, 128
          %1350 = vsyncadd %s1321, %s1349
          %s1351 = sadd.s32 %s30, %s29
          %s1352 = smul.addr %s28, 8
          %s1353 = sadd.s32 %s1351, %s1352
          %s1354 = smul.addr %s1353, 128
          %s1355 = scalar_lea.hbm %s4, %s1354
          %s1357 = sshll.u32 %s1324, 4
          %s1358 = int_to_ptr.vmem [resolvable:$true] %s1357
          %1360 = dma.vmem_to_hbm [thread:$0]  %s1358, 128, %s1355, %s1321
        $region48: #{generator_forward.17} parent=27 // pred_fallthru
          _
      $region28: #{generator_forward.17} parent=5 // pred_fallthru
        _
      %p1361 = scmp.le.s32.totalorder 2, %s17
      // Predicated region
      $region49: #{generator_forward.17} parent=5 // pred_check
        %p1362 = pneg %p1361
      $region50: #{generator_forward.17} parent=5 // pred_check_branch
        %1364 = sbr.rel (%p1362) target = $region52
      $region51: #{generator_forward.17} parent=5 // pred_region
        %s1365 = ssub.s32 %s17, 2
        // Predicated region
        $region53: #{generator_forward.17} parent=51 // pred_check
          %p1366 = pneg %p136
        $region54: #{generator_forward.17} parent=51 // pred_check_branch
          %1368 = sbr.rel (%p1366) target = $region56
        $region55: #{generator_forward.17} parent=51 // pred_region
          %s1369 = smul.u32 32, %s33
          %p1370 = scmp.lt.s32.totalorder %s32, 3
          %s1371 = scalar_select %p1370, %s32, 3
          %p1372 = scmp.lt.s32.totalorder %s1369, 255
          %s1373 = scalar_select %p1372, %s1369, 255
          %p1374 = scmp.lt.s32.totalorder %s34, 0
          %s1375 = scalar_select %p1374, %s34, 0
          %s1376 = sadd.s32 %s1375, %s1373
          %s1377 = smul.addr %s1371, 256
          %s1378 = sadd.s32 %s1376, %s1377
          %s1379 = smul.addr %s1378, 4
          %s1380 = scalar_lea.vmem %s2, %s1379
        $region56: #{generator_forward.17} parent=51 // pred_fallthru
          _
        // Predicated region
        $region57: #{generator_forward.17} parent=51 // pred_check
          %p1381 = pneg %p166
        $region58: #{generator_forward.17} parent=51 // pred_check_branch
          %1383 = sbr.rel (%p1381) target = $region60
        $region59: #{generator_forward.17} parent=51 // pred_region
          %s1384 = sand.u32 %s151, 1
          %s1385 = scalar_lea.sflag [#allocation4], %s1384
          %s1386 = sand.u32 %s151, 1
          %s1387 = smul.addr %s1386, 8
          %s1388 = scalar_lea.vmem [#allocation3], %s1387
          %1389 = dma.done %s1385, 128
        $region60: #{generator_forward.17} parent=51 // pred_fallthru
          _
        // Predicated region
        $region61: #{generator_forward.17} parent=51 // pred_check
          %p1390 = pneg %p196
        $region62: #{generator_forward.17} parent=51 // pred_check_branch
          %1392 = sbr.rel (%p1390) target = $region64
        $region63: #{generator_forward.17} parent=51 // pred_region
          %s1393 = sand.u32 %s181, 1
          %s1394 = scalar_lea.sflag [#allocation6], %s1393
          %s1395 = sand.u32 %s181, 1
          %s1396 = smul.addr %s1395, 8
          %s1397 = scalar_lea.vmem [#allocation5], %s1396
          %1398 = dma.done %s1394, 128
        $region64: #{generator_forward.17} parent=51 // pred_fallthru
          _
      $region52: #{generator_forward.17} parent=5 // pred_fallthru
        _
    $region6: #{generator_forward.17} parent=1 // loop_footer
      %s21 = sadd.s32 1, %s17
    $region7: #{generator_forward.17} parent=1 // loop_footer_branch
      %16 = sbr.rel target = $region3
    $region8: #{generator_forward.17} parent=1 // loop_exit
      _
    %1399 = vsyncpa [#allocation4], 1
    %s1400 = scalar_lea.sflag [#allocation4], 1
    %1401 = vsyncpa %s1400, 1
    %1402 = vsyncpa [#allocation6], 1
    %s1403 = scalar_lea.sflag [#allocation6], 1
    %1404 = vsyncpa %s1403, 1

</llo_original>
